<compile_context>
chip_gen: v5e
topology: v5e:2x2
jax: 0.10.0
libtpu: 0.0.40
codegen_flags: <defaults>
</compile_context>

<pallas_src>
import math

import jax
import jax.numpy as jnp
from jax.experimental import pallas as pl
from jax.experimental.pallas import tpu as pltpu


def _round_up(x: int, m: int) -> int:
    return (x + m - 1) // m * m


def _compiler_params():
    return pltpu.CompilerParams(
        dimension_semantics=("parallel",),
        vmem_limit_bytes=48 * 1024 * 1024,
    )


# ---------------------------------------------------------------------------
# Pallas kernels
# ---------------------------------------------------------------------------

def _gemm_bias_relu_kernel(x_ref, w_ref, b_ref, o_ref):
    """o = relu(x @ w + b) for one row tile; w / b are VMEM-resident."""
    acc = jnp.dot(x_ref[...], w_ref[...], preferred_element_type=jnp.float32)
    o_ref[...] = jnp.maximum(acc + b_ref[...], 0.0)


def _heads_kernel(f_ref,
                  wq1_ref, bq1_ref, wq2_ref, bq2_ref,
                  wi1_ref, bi1_ref, wi2_ref, bi2_ref,
                  q_ref, lsm_ref, i_ref):
    """Both linear heads + log_softmax for one batch tile of flattened features."""
    f = f_ref[...]                                                    # (TB, 3136)

    q_h = jnp.dot(f, wq1_ref[...], preferred_element_type=jnp.float32) + bq1_ref[...]
    q_h = jnp.maximum(q_h, 0.0)
    q_ref[...] = jnp.dot(q_h, wq2_ref[...],
                         preferred_element_type=jnp.float32) + bq2_ref[...]

    i_h = jnp.dot(f, wi1_ref[...], preferred_element_type=jnp.float32) + bi1_ref[...]
    i_h = jnp.maximum(i_h, 0.0)
    i_val = jnp.dot(i_h, wi2_ref[...],
                    preferred_element_type=jnp.float32) + bi2_ref[...]
    i_ref[...] = i_val

    # log_softmax over the action axis, fused in-kernel.
    m = jnp.max(i_val, axis=-1, keepdims=True)
    s = i_val - m
    lsm_ref[...] = s - jnp.log(jnp.sum(jnp.exp(s), axis=-1, keepdims=True))


# ---------------------------------------------------------------------------
# Wrappers
# ---------------------------------------------------------------------------

def _pick_row_tile(m: int, tile_max: int) -> int:
    """Fewest tiles of <= tile_max rows, rounded to the sublane quantum (8)."""
    n_tiles = pl.cdiv(m, tile_max)
    return _round_up(pl.cdiv(m, n_tiles), 8)


def _gemm_bias_relu(x, w, b, *, tile_m=512):
    """relu(x @ w + b) with a row-tiled Pallas GEMM; weights stay VMEM-resident."""
    M, K = x.shape
    N = w.shape[1]

    # Lane-dense output: pad N up to a multiple of 128 (zero weight columns /
    # bias lanes) so stores are unmasked full-vreg writes with contiguous HBM
    # rows.  The extra MXU columns ride along in the same passes.
    Np = _round_up(N, 128)
    if Np != N:
        w = jnp.pad(w, ((0, 0), (0, Np - N)))
        b = jnp.pad(b, ((0, 0), (0, Np - N)))

    tm = _pick_row_tile(M, tile_m)
    mp = _round_up(M, tm)
    if mp != M:
        x = jnp.pad(x, ((0, mp - M), (0, 0)))

    out = pl.pallas_call(
        _gemm_bias_relu_kernel,
        out_shape=jax.ShapeDtypeStruct((mp, Np), jnp.float32),
        grid=(mp // tm,),
        in_specs=[
            pl.BlockSpec((tm, K), lambda i: (i, 0)),    # row tile of patches
            pl.BlockSpec((K, Np), lambda i: (0, 0)),    # resident weight
            pl.BlockSpec((1, Np), lambda i: (0, 0)),    # resident bias
        ],
        out_specs=pl.BlockSpec((tm, Np), lambda i: (i, 0)),
        compiler_params=_compiler_params(),
    )(x, w, b)
    return out[:M, :N]


def _conv2d_relu(x_nhwc, w_hwio, b, *, stride):
    """'VALID' conv + bias + ReLU, as im2col (XLA layout op) + Pallas GEMM."""
    B, H, W, C = x_nhwc.shape
    kh, kw, _, co = w_hwio.shape
    oh = (H - kh) // stride + 1
    ow = (W - kw) // stride + 1
    # TODO(synk): im2col patch extraction stays in XLA; a fully fused conv
    # kernel with in-kernel strided-window loads would avoid this intermediate
    # HBM round trip between layers.
    cols = []
    for i in range(kh):
        for j in range(kw):
            cols.append(jax.lax.slice(
                x_nhwc,
                (0, i, j, 0),
                (B, i + (oh - 1) * stride + 1, j + (ow - 1) * stride + 1, C),
                (1, stride, stride, 1)))
    patches = jnp.concatenate(cols, axis=-1).reshape(B * oh * ow, kh * kw * C)
    w_mat = w_hwio.reshape(kh * kw * C, co)
    y = _gemm_bias_relu(patches, w_mat, b)
    return y.reshape(B, oh, ow, co)


def _heads_forward(feats, params, *, tile_b=128):
    B, K = feats.shape
    H = params["q1_w"].shape[1]
    A = params["q2_w"].shape[1]
    tb = _pick_row_tile(B, tile_b)
    bp = _round_up(B, tb)
    if bp != B:
        feats = jnp.pad(feats, ((0, bp - B), (0, 0)))

    row = lambda n: pl.BlockSpec((tb, n), lambda i: (i, 0))
    res = lambda r, c: pl.BlockSpec((r, c), lambda i: (0, 0))

    q, lsm, i_out = pl.pallas_call(
        _heads_kernel,
        out_shape=(
            jax.ShapeDtypeStruct((bp, A), jnp.float32),
            jax.ShapeDtypeStruct((bp, A), jnp.float32),
            jax.ShapeDtypeStruct((bp, A), jnp.float32),
        ),
        grid=(bp // tb,),
        in_specs=[
            row(K),
            res(K, H), res(1, H), res(H, A), res(1, A),   # q-head params
            res(K, H), res(1, H), res(H, A), res(1, A),   # i-head params
        ],
        out_specs=(row(A), row(A), row(A)),
        compiler_params=_compiler_params(),
    )(feats,
      params["q1_w"], params["q1_b"], params["q2_w"], params["q2_b"],
      params["i1_w"], params["i1_b"], params["i2_w"], params["i2_b"])
    return q[:B], lsm[:B], i_out[:B]


def conv_q_forward(state, params):
    """Pallas forward of Conv_Q: returns (q2(q), log_softmax(i), i)."""
    x = jnp.transpose(state.astype(jnp.float32), (0, 2, 3, 1))        # NCHW -> NHWC
    c = _conv2d_relu(x, params["c1_w"], params["c1_b"], stride=4)     # (B,20,20,32)
    c = _conv2d_relu(c, params["c2_w"], params["c2_b"], stride=2)     # (B, 9, 9,64)
    c = _conv2d_relu(c, params["c3_w"], params["c3_b"], stride=1)     # (B, 7, 7,64)
    B = c.shape[0]
    # Match PyTorch's `c.reshape(-1, 3136)` on an NCHW tensor: channel-major flatten.
    feats = jnp.transpose(c, (0, 3, 1, 2)).reshape(B, -1)             # (B, 3136)
    return _heads_forward(feats, params)


# ---------------------------------------------------------------------------
# Parameters + pure-JAX reference
# ---------------------------------------------------------------------------

def init_conv_q_params(key, frames, num_actions):
    """Deterministic init matching Conv_Q's shapes (weights stored as HWIO /
    (in,out) so kernels compute x @ W, equivalent to PyTorch's x @ W.T)."""
    specs = {
        "c1_w": ((8, 8, frames, 32), 8 * 8 * frames),
        "c1_b": ((1, 32), 8 * 8 * frames),
        "c2_w": ((4, 4, 32, 64), 4 * 4 * 32),
        "c2_b": ((1, 64), 4 * 4 * 32),
        "c3_w": ((3, 3, 64, 64), 3 * 3 * 64),
        "c3_b": ((1, 64), 3 * 3 * 64),
        "q1_w": ((3136, 512), 3136),
        "q1_b": ((1, 512), 3136),
        "q2_w": ((512, num_actions), 512),
        "q2_b": ((1, num_actions), 512),
        "i1_w": ((3136, 512), 3136),
        "i1_b": ((1, 512), 3136),
        "i2_w": ((512, num_actions), 512),
        "i2_b": ((1, num_actions), 512),
    }
    params = {}
    keys = jax.random.split(key, len(specs))
    for k, (name, (shape, fan_in)) in zip(keys, specs.items()):
        bound = 1.0 / math.sqrt(fan_in)
        params[name] = jax.random.uniform(k, shape, jnp.float32, -bound, bound)
    return params


def conv_q_reference(state, params):
    """Independent pure-JAX reference (XLA conv + matmuls) for verification."""
    hp = jax.lax.Precision.HIGHEST
    x = jnp.transpose(state.astype(jnp.float32), (0, 2, 3, 1))

    def conv(x, w, b, s):
        y = jax.lax.conv_general_dilated(
            x, w, window_strides=(s, s), padding="VALID",
            dimension_numbers=("NHWC", "HWIO", "NHWC"), precision=hp)
        return jnp.maximum(y + b, 0.0)

    c = conv(x, params["c1_w"], params["c1_b"], 4)
    c = conv(c, params["c2_w"], params["c2_b"], 2)
    c = conv(c, params["c3_w"], params["c3_b"], 1)
    B = c.shape[0]
    f = jnp.transpose(c, (0, 3, 1, 2)).reshape(B, -1)

    q = jnp.maximum(jnp.dot(f, params["q1_w"], precision=hp) + params["q1_b"], 0.0)
    q_out = jnp.dot(q, params["q2_w"], precision=hp) + params["q2_b"]
    ih = jnp.maximum(jnp.dot(f, params["i1_w"], precision=hp) + params["i1_b"], 0.0)
    i_out = jnp.dot(ih, params["i2_w"], precision=hp) + params["i2_b"]
    lsm = jax.nn.log_softmax(i_out, axis=1)
    return q_out, lsm, i_out


if __name__ == "__main__":
    frames, num_actions = 4, 6
    B = 2                                   # spatial 84x84 is implied by the 3136 flatten

    key = jax.random.PRNGKey(0)
    kp, kx = jax.random.split(key)
    params = init_conv_q_params(kp, frames, num_actions)
    state = jax.random.normal(kx, (B, frames, 84, 84), jnp.float32)

    fwd = jax.jit(conv_q_forward)
    q, log_pi, i_logits = fwd(state, params)
    jax.block_until_ready((q, log_pi, i_logits))

    q_ref, log_pi_ref, i_ref = conv_q_reference(state, params)
    assert q.shape == (B, num_actions), q.shape
    assert log_pi.shape == (B, num_actions), log_pi.shape
    assert i_logits.shape == (B, num_actions), i_logits.shape
    for got, want, name in ((q, q_ref, "q"),
                            (log_pi, log_pi_ref, "log_pi"),
                            (i_logits, i_ref, "i")):
        err = float(jnp.max(jnp.abs(got - want)))
        assert jnp.allclose(got, want, atol=5e-3, rtol=5e-3), (name, err)

    print("KERNEL_OK")
</pallas_src>

<mosaic_0001>
module attributes {stable_mosaic.version = 11 : i64} {
  func.func @_gemm_bias_relu_kernel(%arg0: i32, %arg1: memref<400x256xf32, #tpu.memory_space<vmem>>, %arg2: memref<256x128xf32, #tpu.memory_space<vmem>>, %arg3: memref<1x128xf32, #tpu.memory_space<vmem>>, %arg4: memref<400x128xf32, #tpu.memory_space<vmem>>) attributes {dimension_semantics = [#tpu.dimension_semantics<parallel>], iteration_bounds = array<i64: 2>, scalar_prefetch = 0 : i64, scratch_operands = 0 : i64, tpu.core_type = #tpu.core_type<tc>, window_params = [{transform_indices = @transform_0, window_bounds = array<i64: 400, 256>}, {pipeline_mode = #tpu.pipeline_mode<synchronous>, transform_indices = @transform_1, window_bounds = array<i64: 256, 128>}, {pipeline_mode = #tpu.pipeline_mode<synchronous>, transform_indices = @transform_2, window_bounds = array<i64: 1, 128>}, {transform_indices = @transform_3, window_bounds = array<i64: 400, 128>}]} {
    %c0 = arith.constant 0 : index
    %c0_0 = arith.constant 0 : index
    %0 = vector.load %arg1[%c0, %c0_0] : memref<400x256xf32, #tpu.memory_space<vmem>>, vector<400x256xf32>
    %c0_1 = arith.constant 0 : index
    %c0_2 = arith.constant 0 : index
    %1 = vector.load %arg2[%c0_1, %c0_2] : memref<256x128xf32, #tpu.memory_space<vmem>>, vector<256x128xf32>
    %cst = arith.constant dense<0.000000e+00> : vector<400x128xf32>
    %2 = tpu.matmul %0, %1, %cst {dimension_numbers = #tpu.dot_dimension_numbers<[1], [0], [0], [1], [0, 0, 1, 1], [], []>} : vector<400x256xf32>, vector<256x128xf32>, vector<400x128xf32> -> vector<400x128xf32>
    %c0_3 = arith.constant 0 : index
    %c0_4 = arith.constant 0 : index
    %3 = vector.load %arg3[%c0_3, %c0_4] : memref<1x128xf32, #tpu.memory_space<vmem>>, vector<1x128xf32>
    %4 = vector.broadcast %3 : vector<1x128xf32> to vector<400x128xf32>
    %5 = arith.addf %2, %4 : vector<400x128xf32>
    %cst_5 = arith.constant 0.000000e+00 : f32
    %6 = vector.broadcast %cst_5 : f32 to vector<400x128xf32>
    %7 = arith.maximumf %5, %6 : vector<400x128xf32>
    %c0_6 = arith.constant 0 : index
    %c0_7 = arith.constant 0 : index
    %8 = vector.load %arg4[%c0_6, %c0_7] : memref<400x128xf32, #tpu.memory_space<vmem>>, vector<400x128xf32>
    tpu.vector_store %arg4[%c0_6, %c0_7], %7 {strides = array<i32>} : memref<400x128xf32, #tpu.memory_space<vmem>>, vector<400x128xf32>,
    return
  }
  func.func @transform_0(%arg0: i32) -> (i32, i32) {
    %c0_i32 = arith.constant 0 : i32
    %c0_i32_0 = arith.constant 0 : i32
    return %arg0, %c0_i32 : i32, i32
  }
  func.func @transform_1(%arg0: i32) -> (i32, i32) {
    %c0_i32 = arith.constant 0 : i32
    %c0_i32_0 = arith.constant 0 : i32
    %c0_i32_1 = arith.constant 0 : i32
    return %c0_i32, %c0_i32_0 : i32, i32
  }
  func.func @transform_2(%arg0: i32) -> (i32, i32) {
    %c0_i32 = arith.constant 0 : i32
    %c0_i32_0 = arith.constant 0 : i32
    %c0_i32_1 = arith.constant 0 : i32
    return %c0_i32, %c0_i32_0 : i32, i32
  }
  func.func @transform_3(%arg0: i32) -> (i32, i32) {
    %c0_i32 = arith.constant 0 : i32
    %c0_i32_0 = arith.constant 0 : i32
    return %arg0, %c0_i32 : i32, i32
  }
}

module attributes {stable_mosaic.version = 11 : i64} {
  func.func @_gemm_bias_relu_kernel(%arg0: i32, %arg1: memref<168x512xf32, #tpu.memory_space<vmem>>, %arg2: memref<512x128xf32, #tpu.memory_space<vmem>>, %arg3: memref<1x128xf32, #tpu.memory_space<vmem>>, %arg4: memref<168x128xf32, #tpu.memory_space<vmem>>) attributes {dimension_semantics = [#tpu.dimension_semantics<parallel>], iteration_bounds = array<i64: 1>, scalar_prefetch = 0 : i64, scratch_operands = 0 : i64, tpu.core_type = #tpu.core_type<tc>, window_params = [{transform_indices = @transform_0, window_bounds = array<i64: 168, 512>}, {pipeline_mode = #tpu.pipeline_mode<synchronous>, transform_indices = @transform_1, window_bounds = array<i64: 512, 128>}, {pipeline_mode = #tpu.pipeline_mode<synchronous>, transform_indices = @transform_2, window_bounds = array<i64: 1, 128>}, {transform_indices = @transform_3, window_bounds = array<i64: 168, 128>}]} {
    %c0 = arith.constant 0 : index
    %c0_0 = arith.constant 0 : index
    %0 = vector.load %arg1[%c0, %c0_0] : memref<168x512xf32, #tpu.memory_space<vmem>>, vector<168x512xf32>
    %c0_1 = arith.constant 0 : index
    %c0_2 = arith.constant 0 : index
    %1 = vector.load %arg2[%c0_1, %c0_2] : memref<512x128xf32, #tpu.memory_space<vmem>>, vector<512x128xf32>
    %cst = arith.constant dense<0.000000e+00> : vector<168x128xf32>
    %2 = tpu.matmul %0, %1, %cst {dimension_numbers = #tpu.dot_dimension_numbers<[1], [0], [0], [1], [0, 0, 1, 1], [], []>} : vector<168x512xf32>, vector<512x128xf32>, vector<168x128xf32> -> vector<168x128xf32>
    %c0_3 = arith.constant 0 : index
    %c0_4 = arith.constant 0 : index
    %3 = vector.load %arg3[%c0_3, %c0_4] : memref<1x128xf32, #tpu.memory_space<vmem>>, vector<1x128xf32>
    %4 = vector.broadcast %3 : vector<1x128xf32> to vector<168x128xf32>
    %5 = arith.addf %2, %4 : vector<168x128xf32>
    %cst_5 = arith.constant 0.000000e+00 : f32
    %6 = vector.broadcast %cst_5 : f32 to vector<168x128xf32>
    %7 = arith.maximumf %5, %6 : vector<168x128xf32>
    %c0_6 = arith.constant 0 : index
    %c0_7 = arith.constant 0 : index
    %8 = vector.load %arg4[%c0_6, %c0_7] : memref<168x128xf32, #tpu.memory_space<vmem>>, vector<168x128xf32>
    tpu.vector_store %arg4[%c0_6, %c0_7], %7 {strides = array<i32>} : memref<168x128xf32, #tpu.memory_space<vmem>>, vector<168x128xf32>,
    return
  }
  func.func @transform_0(%arg0: i32) -> (i32, i32) {
    %c0_i32 = arith.constant 0 : i32
    %c0_i32_0 = arith.constant 0 : i32
    return %arg0, %c0_i32 : i32, i32
  }
  func.func @transform_1(%arg0: i32) -> (i32, i32) {
    %c0_i32 = arith.constant 0 : i32
    %c0_i32_0 = arith.constant 0 : i32
    %c0_i32_1 = arith.constant 0 : i32
    return %c0_i32, %c0_i32_0 : i32, i32
  }
  func.func @transform_2(%arg0: i32) -> (i32, i32) {
    %c0_i32 = arith.constant 0 : i32
    %c0_i32_0 = arith.constant 0 : i32
    %c0_i32_1 = arith.constant 0 : i32
    return %c0_i32, %c0_i32_0 : i32, i32
  }
  func.func @transform_3(%arg0: i32) -> (i32, i32) {
    %c0_i32 = arith.constant 0 : i32
    %c0_i32_0 = arith.constant 0 : i32
    return %arg0, %c0_i32 : i32, i32
  }
}

module attributes {stable_mosaic.version = 11 : i64} {
  func.func @_gemm_bias_relu_kernel(%arg0: i32, %arg1: memref<104x576xf32, #tpu.memory_space<vmem>>, %arg2: memref<576x128xf32, #tpu.memory_space<vmem>>, %arg3: memref<1x128xf32, #tpu.memory_space<vmem>>, %arg4: memref<104x128xf32, #tpu.memory_space<vmem>>) attributes {dimension_semantics = [#tpu.dimension_semantics<parallel>], iteration_bounds = array<i64: 1>, scalar_prefetch = 0 : i64, scratch_operands = 0 : i64, tpu.core_type = #tpu.core_type<tc>, window_params = [{transform_indices = @transform_0, window_bounds = array<i64: 104, 576>}, {pipeline_mode = #tpu.pipeline_mode<synchronous>, transform_indices = @transform_1, window_bounds = array<i64: 576, 128>}, {pipeline_mode = #tpu.pipeline_mode<synchronous>, transform_indices = @transform_2, window_bounds = array<i64: 1, 128>}, {transform_indices = @transform_3, window_bounds = array<i64: 104, 128>}]} {
    %c0 = arith.constant 0 : index
    %c0_0 = arith.constant 0 : index
    %0 = vector.load %arg1[%c0, %c0_0] : memref<104x576xf32, #tpu.memory_space<vmem>>, vector<104x576xf32>
    %c0_1 = arith.constant 0 : index
    %c0_2 = arith.constant 0 : index
    %1 = vector.load %arg2[%c0_1, %c0_2] : memref<576x128xf32, #tpu.memory_space<vmem>>, vector<576x128xf32>
    %cst = arith.constant dense<0.000000e+00> : vector<104x128xf32>
    %2 = tpu.matmul %0, %1, %cst {dimension_numbers = #tpu.dot_dimension_numbers<[1], [0], [0], [1], [0, 0, 1, 1], [], []>} : vector<104x576xf32>, vector<576x128xf32>, vector<104x128xf32> -> vector<104x128xf32>
    %c0_3 = arith.constant 0 : index
    %c0_4 = arith.constant 0 : index
    %3 = vector.load %arg3[%c0_3, %c0_4] : memref<1x128xf32, #tpu.memory_space<vmem>>, vector<1x128xf32>
    %4 = vector.broadcast %3 : vector<1x128xf32> to vector<104x128xf32>
    %5 = arith.addf %2, %4 : vector<104x128xf32>
    %cst_5 = arith.constant 0.000000e+00 : f32
    %6 = vector.broadcast %cst_5 : f32 to vector<104x128xf32>
    %7 = arith.maximumf %5, %6 : vector<104x128xf32>
    %c0_6 = arith.constant 0 : index
    %c0_7 = arith.constant 0 : index
    %8 = vector.load %arg4[%c0_6, %c0_7] : memref<104x128xf32, #tpu.memory_space<vmem>>, vector<104x128xf32>
    tpu.vector_store %arg4[%c0_6, %c0_7], %7 {strides = array<i32>} : memref<104x128xf32, #tpu.memory_space<vmem>>, vector<104x128xf32>,
    return
  }
  func.func @transform_0(%arg0: i32) -> (i32, i32) {
    %c0_i32 = arith.constant 0 : i32
    %c0_i32_0 = arith.constant 0 : i32
    return %arg0, %c0_i32 : i32, i32
  }
  func.func @transform_1(%arg0: i32) -> (i32, i32) {
    %c0_i32 = arith.constant 0 : i32
    %c0_i32_0 = arith.constant 0 : i32
    %c0_i32_1 = arith.constant 0 : i32
    return %c0_i32, %c0_i32_0 : i32, i32
  }
  func.func @transform_2(%arg0: i32) -> (i32, i32) {
    %c0_i32 = arith.constant 0 : i32
    %c0_i32_0 = arith.constant 0 : i32
    %c0_i32_1 = arith.constant 0 : i32
    return %c0_i32, %c0_i32_0 : i32, i32
  }
  func.func @transform_3(%arg0: i32) -> (i32, i32) {
    %c0_i32 = arith.constant 0 : i32
    %c0_i32_0 = arith.constant 0 : i32
    return %arg0, %c0_i32 : i32, i32
  }
}

module attributes {stable_mosaic.version = 11 : i64} {
  func.func @_heads_kernel(%arg0: i32, %arg1: memref<8x3136xf32, #tpu.memory_space<vmem>>, %arg2: memref<3136x512xf32, #tpu.memory_space<vmem>>, %arg3: memref<1x512xf32, #tpu.memory_space<vmem>>, %arg4: memref<512x6xf32, #tpu.memory_space<vmem>>, %arg5: memref<1x6xf32, #tpu.memory_space<vmem>>, %arg6: memref<3136x512xf32, #tpu.memory_space<vmem>>, %arg7: memref<1x512xf32, #tpu.memory_space<vmem>>, %arg8: memref<512x6xf32, #tpu.memory_space<vmem>>, %arg9: memref<1x6xf32, #tpu.memory_space<vmem>>, %arg10: memref<8x6xf32, #tpu.memory_space<vmem>>, %arg11: memref<8x6xf32, #tpu.memory_space<vmem>>, %arg12: memref<8x6xf32, #tpu.memory_space<vmem>>) attributes {dimension_semantics = [#tpu.dimension_semantics<parallel>], iteration_bounds = array<i64: 1>, scalar_prefetch = 0 : i64, scratch_operands = 0 : i64, tpu.core_type = #tpu.core_type<tc>, window_params = [{transform_indices = @transform_0, window_bounds = array<i64: 8, 3136>}, {pipeline_mode = #tpu.pipeline_mode<synchronous>, transform_indices = @transform_1, window_bounds = array<i64: 3136, 512>}, {pipeline_mode = #tpu.pipeline_mode<synchronous>, transform_indices = @transform_2, window_bounds = array<i64: 1, 512>}, {pipeline_mode = #tpu.pipeline_mode<synchronous>, transform_indices = @transform_3, window_bounds = array<i64: 512, 6>}, {pipeline_mode = #tpu.pipeline_mode<synchronous>, transform_indices = @transform_4, window_bounds = array<i64: 1, 6>}, {pipeline_mode = #tpu.pipeline_mode<synchronous>, transform_indices = @transform_5, window_bounds = array<i64: 3136, 512>}, {pipeline_mode = #tpu.pipeline_mode<synchronous>, transform_indices = @transform_6, window_bounds = array<i64: 1, 512>}, {pipeline_mode = #tpu.pipeline_mode<synchronous>, transform_indices = @transform_7, window_bounds = array<i64: 512, 6>}, {pipeline_mode = #tpu.pipeline_mode<synchronous>, transform_indices = @transform_8, window_bounds = array<i64: 1, 6>}, {transform_indices = @transform_9, window_bounds = array<i64: 8, 6>}, {transform_indices = @transform_10, window_bounds = array<i64: 8, 6>}, {transform_indices = @transform_11, window_bounds = array<i64: 8, 6>}]} {
    %c0 = arith.constant 0 : index
    %c0_0 = arith.constant 0 : index
    %0 = vector.load %arg1[%c0, %c0_0] : memref<8x3136xf32, #tpu.memory_space<vmem>>, vector<8x3136xf32>
    %c0_1 = arith.constant 0 : index
    %c0_2 = arith.constant 0 : index
    %1 = vector.load %arg2[%c0_1, %c0_2] : memref<3136x512xf32, #tpu.memory_space<vmem>>, vector<3136x512xf32>
    %cst = arith.constant dense<0.000000e+00> : vector<8x512xf32>
    %2 = tpu.matmul %0, %1, %cst {dimension_numbers = #tpu.dot_dimension_numbers<[1], [0], [0], [1], [0, 0, 1, 1], [], []>} : vector<8x3136xf32>, vector<3136x512xf32>, vector<8x512xf32> -> vector<8x512xf32>
    %c0_3 = arith.constant 0 : index
    %c0_4 = arith.constant 0 : index
    %3 = vector.load %arg3[%c0_3, %c0_4] : memref<1x512xf32, #tpu.memory_space<vmem>>, vector<1x512xf32>
    %4 = vector.broadcast %3 : vector<1x512xf32> to vector<8x512xf32>
    %5 = arith.addf %2, %4 : vector<8x512xf32>
    %cst_5 = arith.constant 0.000000e+00 : f32
    %6 = vector.broadcast %cst_5 : f32 to vector<8x512xf32>
    %7 = arith.maximumf %5, %6 : vector<8x512xf32>
    %c0_6 = arith.constant 0 : index
    %c0_7 = arith.constant 0 : index
    %8 = vector.load %arg4[%c0_6, %c0_7] : memref<512x6xf32, #tpu.memory_space<vmem>>, vector<512x6xf32>
    %cst_8 = arith.constant dense<0.000000e+00> : vector<8x6xf32>
    %9 = tpu.matmul %7, %8, %cst_8 {dimension_numbers = #tpu.dot_dimension_numbers<[1], [0], [0], [1], [0, 0, 1, 1], [], []>} : vector<8x512xf32>, vector<512x6xf32>, vector<8x6xf32> -> vector<8x6xf32>
    %c0_9 = arith.constant 0 : index
    %c0_10 = arith.constant 0 : index
    %10 = vector.load %arg5[%c0_9, %c0_10] : memref<1x6xf32, #tpu.memory_space<vmem>>, vector<1x6xf32>
    %11 = vector.broadcast %10 : vector<1x6xf32> to vector<8x6xf32>
    %12 = arith.addf %9, %11 : vector<8x6xf32>
    %c0_11 = arith.constant 0 : index
    %c0_12 = arith.constant 0 : index
    %13 = vector.load %arg10[%c0_11, %c0_12] : memref<8x6xf32, #tpu.memory_space<vmem>>, vector<8x6xf32>
    tpu.vector_store %arg10[%c0_11, %c0_12], %12 {strides = array<i32>} : memref<8x6xf32, #tpu.memory_space<vmem>>, vector<8x6xf32>,
    %c0_13 = arith.constant 0 : index
    %c0_14 = arith.constant 0 : index
    %14 = vector.load %arg6[%c0_13, %c0_14] : memref<3136x512xf32, #tpu.memory_space<vmem>>, vector<3136x512xf32>
    %cst_15 = arith.constant dense<0.000000e+00> : vector<8x512xf32>
    %15 = tpu.matmul %0, %14, %cst_15 {dimension_numbers = #tpu.dot_dimension_numbers<[1], [0], [0], [1], [0, 0, 1, 1], [], []>} : vector<8x3136xf32>, vector<3136x512xf32>, vector<8x512xf32> -> vector<8x512xf32>
    %c0_16 = arith.constant 0 : index
    %c0_17 = arith.constant 0 : index
    %16 = vector.load %arg7[%c0_16, %c0_17] : memref<1x512xf32, #tpu.memory_space<vmem>>, vector<1x512xf32>
    %17 = vector.broadcast %16 : vector<1x512xf32> to vector<8x512xf32>
    %18 = arith.addf %15, %17 : vector<8x512xf32>
    %cst_18 = arith.constant 0.000000e+00 : f32
    %19 = vector.broadcast %cst_18 : f32 to vector<8x512xf32>
    %20 = arith.maximumf %18, %19 : vector<8x512xf32>
    %c0_19 = arith.constant 0 : index
    %c0_20 = arith.constant 0 : index
    %21 = vector.load %arg8[%c0_19, %c0_20] : memref<512x6xf32, #tpu.memory_space<vmem>>, vector<512x6xf32>
    %cst_21 = arith.constant dense<0.000000e+00> : vector<8x6xf32>
    %22 = tpu.matmul %20, %21, %cst_21 {dimension_numbers = #tpu.dot_dimension_numbers<[1], [0], [0], [1], [0, 0, 1, 1], [], []>} : vector<8x512xf32>, vector<512x6xf32>, vector<8x6xf32> -> vector<8x6xf32>
    %c0_22 = arith.constant 0 : index
    %c0_23 = arith.constant 0 : index
    %23 = vector.load %arg9[%c0_22, %c0_23] : memref<1x6xf32, #tpu.memory_space<vmem>>, vector<1x6xf32>
    %24 = vector.broadcast %23 : vector<1x6xf32> to vector<8x6xf32>
    %25 = arith.addf %22, %24 : vector<8x6xf32>
    %c0_24 = arith.constant 0 : index
    %c0_25 = arith.constant 0 : index
    %26 = vector.load %arg12[%c0_24, %c0_25] : memref<8x6xf32, #tpu.memory_space<vmem>>, vector<8x6xf32>
    tpu.vector_store %arg12[%c0_24, %c0_25], %25 {strides = array<i32>} : memref<8x6xf32, #tpu.memory_space<vmem>>, vector<8x6xf32>,
    %cst_26 = arith.constant dense<0xFF800000> : vector<8xf32>
    %27 = vector.multi_reduction <maximumf>, %25, %cst_26 [1] : vector<8x6xf32> to vector<8xf32>
    %28 = vector.shape_cast %27 : vector<8xf32> to vector<8x1xf32>
    %29 = vector.broadcast %28 : vector<8x1xf32> to vector<8x6xf32>
    %30 = arith.subf %25, %29 : vector<8x6xf32>
    %31 = math.exp %30 : vector<8x6xf32>
    %cst_27 = arith.constant dense<0.000000e+00> : vector<8xf32>
    %32 = vector.multi_reduction <add>, %31, %cst_27 [1] : vector<8x6xf32> to vector<8xf32>
    %33 = vector.shape_cast %32 : vector<8xf32> to vector<8x1xf32>
    %34 = math.log %33 : vector<8x1xf32>
    %35 = vector.broadcast %34 : vector<8x1xf32> to vector<8x6xf32>
    %36 = arith.subf %30, %35 : vector<8x6xf32>
    %c0_28 = arith.constant 0 : index
    %c0_29 = arith.constant 0 : index
    %37 = vector.load %arg11[%c0_28, %c0_29] : memref<8x6xf32, #tpu.memory_space<vmem>>, vector<8x6xf32>
    tpu.vector_store %arg11[%c0_28, %c0_29], %36 {strides = array<i32>} : memref<8x6xf32, #tpu.memory_space<vmem>>, vector<8x6xf32>,
    return
  }
  func.func @transform_0(%arg0: i32) -> (i32, i32) {
    %c0_i32 = arith.constant 0 : i32
    %c0_i32_0 = arith.constant 0 : i32
    return %arg0, %c0_i32 : i32, i32
  }
  func.func @transform_1(%arg0: i32) -> (i32, i32) {
    %c0_i32 = arith.constant 0 : i32
    %c0_i32_0 = arith.constant 0 : i32
    %c0_i32_1 = arith.constant 0 : i32
    return %c0_i32, %c0_i32_0 : i32, i32
  }
  func.func @transform_2(%arg0: i32) -> (i32, i32) {
    %c0_i32 = arith.constant 0 : i32
    %c0_i32_0 = arith.constant 0 : i32
    %c0_i32_1 = arith.constant 0 : i32
    return %c0_i32, %c0_i32_0 : i32, i32
  }
  func.func @transform_3(%arg0: i32) -> (i32, i32) {
    %c0_i32 = arith.constant 0 : i32
    %c0_i32_0 = arith.constant 0 : i32
    %c0_i32_1 = arith.constant 0 : i32
    return %c0_i32, %c0_i32_0 : i32, i32
  }
  func.func @transform_4(%arg0: i32) -> (i32, i32) {
    %c0_i32 = arith.constant 0 : i32
    %c0_i32_0 = arith.constant 0 : i32
    %c0_i32_1 = arith.constant 0 : i32
    return %c0_i32, %c0_i32_0 : i32, i32
  }
  func.func @transform_5(%arg0: i32) -> (i32, i32) {
    %c0_i32 = arith.constant 0 : i32
    %c0_i32_0 = arith.constant 0 : i32
    %c0_i32_1 = arith.constant 0 : i32
    return %c0_i32, %c0_i32_0 : i32, i32
  }
  func.func @transform_6(%arg0: i32) -> (i32, i32) {
    %c0_i32 = arith.constant 0 : i32
    %c0_i32_0 = arith.constant 0 : i32
    %c0_i32_1 = arith.constant 0 : i32
    return %c0_i32, %c0_i32_0 : i32, i32
  }
  func.func @transform_7(%arg0: i32) -> (i32, i32) {
    %c0_i32 = arith.constant 0 : i32
    %c0_i32_0 = arith.constant 0 : i32
    %c0_i32_1 = arith.constant 0 : i32
    return %c0_i32, %c0_i32_0 : i32, i32
  }
  func.func @transform_8(%arg0: i32) -> (i32, i32) {
    %c0_i32 = arith.constant 0 : i32
    %c0_i32_0 = arith.constant 0 : i32
    %c0_i32_1 = arith.constant 0 : i32
    return %c0_i32, %c0_i32_0 : i32, i32
  }
  func.func @transform_9(%arg0: i32) -> (i32, i32) {
    %c0_i32 = arith.constant 0 : i32
    %c0_i32_0 = arith.constant 0 : i32
    return %arg0, %c0_i32 : i32, i32
  }
  func.func @transform_10(%arg0: i32) -> (i32, i32) {
    %c0_i32 = arith.constant 0 : i32
    %c0_i32_0 = arith.constant 0 : i32
    return %arg0, %c0_i32 : i32, i32
  }
  func.func @transform_11(%arg0: i32) -> (i32, i32) {
    %c0_i32 = arith.constant 0 : i32
    %c0_i32_0 = arith.constant 0 : i32
    return %arg0, %c0_i32 : i32, i32
  }
}

</mosaic_0001>

<llo_original>
// kernel: conv_q_forward.4
$region0: #{conv_q_forward.4}
  #allocation0 [shape = 'u32[]', space=smem, size = 0x4, offset = 0x4, fixed_abs, tag = 'smem constant byte address 0x4 - core index']
  #allocation1 [shape = 'u32[72,128]{1,0:T(1,128)}', space=vmem, size = 0x9000, scoped, tag = 'internal scratch']
  %s0 = inlined_call_operand.vmem [shape: f32[800,256], index: 0, kind: input, shape index: {}]
  %s1 = inlined_call_operand.vmem [shape: f32[256,128], index: 1, kind: input, shape index: {}]
  %s2 = inlined_call_operand.vmem [shape: f32[1,128], index: 2, kind: input, shape index: {}]
  %s3 = inlined_call_operand.vmem [shape: f32[800,128], index: 3, kind: output, shape index: {}]
  %s4 = sld [smem:[#allocation0]]
  $region45: #{conv_q_forward.4} parent=0
    _
  %s6 = ssub.s32 1, %s4
  %s7 = scalar_select 0, %s6, %s4
  loop: start=0, step=1, limit=4
  $region2: #{conv_q_forward.4} parent=0 // loop_pre_header
    _
  $region3: #{conv_q_forward.4} parent=0 // loop_header
    %s9 = sphi 0, %s13
    %p10 = scmp.ge.s32.totalorder %s9, 4
    %s19 = sphi 0, %s21
    %s22 = sphi 0, %s19
    %s23 = sphi 0, %s22
    %s39 = sphi 0, %s23
    %s43 = sphi 0, %s43
    %s45 = sphi 0, %s43
    %s46 = sphi 0, %s45
    %s60 = sphi 0, %s46
    %s64 = sphi 0, %s64
    %s66 = sphi 0, %s64
    %s67 = sphi 0, %s66
    %s81 = sphi 0, %s67
    %s87 = sphi 0, %s89
    %s90 = sphi 0, %s87
    %s91 = sphi 0, %s90
    %s107 = sphi 0, %s91
  $region4: #{conv_q_forward.4} parent=0 // loop_header_branch
    %12 = sbr.rel (%p10) target = $region8
  $region5: #{conv_q_forward.4} parent=0 // loop_body
    %s14 = ssub.s32 %s9, 1
    %s15 = ssub.s32 %s9, 2
    %s16 = sadd.s32 %s9, 1
    %s17 = ssub.s32 %s9, %s16
    %p18 = scmp.eq.s32.totalorder %s17, 0
    %s20 = sadd.s32 %s19, 1
    %s21 = scalar_select %p18, %s19, %s20
    %p24 = pneg %p18
    %p25 = scmp.eq.s32.totalorder %s9, 1
    %p26 = por %p24, %p25
    %p27 = scmp.ne.s32.totalorder %s19, %s22
    %p28 = scmp.eq.s32.totalorder %s9, 0
    %p29 = por %p27, %p28
    %p30 = scmp.ne.s32.totalorder %s19, %s22
    %p31 = scmp.eq.s32.totalorder %s14, 1
    %p32 = por %p30, %p31
    %p33 = scmp.ne.s32.totalorder %s22, %s23
    %p34 = scmp.eq.s32.totalorder %s14, 0
    %p35 = por %p33, %p34
    %p36 = scmp.ne.s32.totalorder %s22, %s23
    %p37 = scmp.eq.s32.totalorder %s15, 1
    %p38 = por %p36, %p37
    %p40 = scmp.ne.s32.totalorder %s23, %s39
    %p41 = scmp.eq.s32.totalorder %s15, 0
    %p42 = por %p40, %p41
    %s44 = sadd.s32 %s43, 1
    %p47 = scmp.eq.s32.totalorder %s9, 1
    %p48 = scmp.ne.s32.totalorder %s43, %s45
    %p49 = scmp.eq.s32.totalorder %s9, 0
    %p50 = por %p48, %p49
    %p51 = scmp.ne.s32.totalorder %s43, %s45
    %p52 = scmp.eq.s32.totalorder %s14, 1
    %p53 = por %p51, %p52
    %p54 = scmp.ne.s32.totalorder %s45, %s46
    %p55 = scmp.eq.s32.totalorder %s14, 0
    %p56 = por %p54, %p55
    %p57 = scmp.ne.s32.totalorder %s45, %s46
    %p58 = scmp.eq.s32.totalorder %s15, 1
    %p59 = por %p57, %p58
    %p61 = scmp.ne.s32.totalorder %s46, %s60
    %p62 = scmp.eq.s32.totalorder %s15, 0
    %p63 = por %p61, %p62
    %s65 = sadd.s32 %s64, 1
    %p68 = scmp.eq.s32.totalorder %s9, 1
    %p69 = scmp.ne.s32.totalorder %s64, %s66
    %p70 = scmp.eq.s32.totalorder %s9, 0
    %p71 = por %p69, %p70
    %p72 = scmp.ne.s32.totalorder %s64, %s66
    %p73 = scmp.eq.s32.totalorder %s14, 1
    %p74 = por %p72, %p73
    %p75 = scmp.ne.s32.totalorder %s66, %s67
    %p76 = scmp.eq.s32.totalorder %s14, 0
    %p77 = por %p75, %p76
    %p78 = scmp.ne.s32.totalorder %s66, %s67
    %p79 = scmp.eq.s32.totalorder %s15, 1
    %p80 = por %p78, %p79
    %p82 = scmp.ne.s32.totalorder %s67, %s81
    %p83 = scmp.eq.s32.totalorder %s15, 0
    %p84 = por %p82, %p83
    %s85 = ssub.s32 %s9, %s16
    %p86 = scmp.eq.s32.totalorder %s85, 0
    %s88 = sadd.s32 %s87, 1
    %s89 = scalar_select %p86, %s87, %s88
    %p92 = pneg %p86
    %p93 = scmp.eq.s32.totalorder %s9, 1
    %p94 = por %p92, %p93
    %p95 = scmp.ne.s32.totalorder %s87, %s90
    %p96 = scmp.eq.s32.totalorder %s9, 0
    %p97 = por %p95, %p96
    %p98 = scmp.ne.s32.totalorder %s87, %s90
    %p99 = scmp.eq.s32.totalorder %s14, 1
    %p100 = por %p98, %p99
    %p101 = scmp.ne.s32.totalorder %s90, %s91
    %p102 = scmp.eq.s32.totalorder %s14, 0
    %p103 = por %p101, %p102
    %p104 = scmp.ne.s32.totalorder %s90, %s91
    %p105 = scmp.eq.s32.totalorder %s15, 1
    %p106 = por %p104, %p105
    %p108 = scmp.ne.s32.totalorder %s91, %s107
    %p109 = scmp.eq.s32.totalorder %s15, 0
    %p110 = por %p108, %p109
    %p111 = scmp.le.s32.totalorder 1, %s9
    %p112 = scmp.lt.s32.totalorder %s9, 3
    %p113 = pnand %p111, %p112
    %p114 = pneg %p113
    // Predicated region
    $region9: #{conv_q_forward.4} parent=5 // pred_check
      _
    $region10: #{conv_q_forward.4} parent=5 // pred_check_branch
      %116 = sbr.rel (%p113) target = $region12
    $region11: #{conv_q_forward.4} parent=5 // pred_region
      %s117 = ssub.s32 %s9, 1
      // Predicated region
      $region13: #{conv_q_forward.4} parent=11 // pred_check
        %p118 = pneg %p56
      $region14: #{conv_q_forward.4} parent=11 // pred_check_branch
        %120 = sbr.rel (%p118) target = $region16
      $region15: #{conv_q_forward.4} parent=11 // pred_region
        _
      $region16: #{conv_q_forward.4} parent=11 // pred_fallthru
        _
      // Predicated region
      $region17: #{conv_q_forward.4} parent=11 // pred_check
        %p121 = pneg %p77
      $region18: #{conv_q_forward.4} parent=11 // pred_check_branch
        %123 = sbr.rel (%p121) target = $region20
      $region19: #{conv_q_forward.4} parent=11 // pred_region
        _
      $region20: #{conv_q_forward.4} parent=11 // pred_fallthru
        _
    $region12: #{conv_q_forward.4} parent=5 // pred_fallthru
      _
    %p124 = scmp.lt.s32.totalorder %s9, 2
    // Predicated region
    $region21: #{conv_q_forward.4} parent=5 // pred_check
      %p125 = pneg %p124
    $region22: #{conv_q_forward.4} parent=5 // pred_check_branch
      %127 = sbr.rel (%p125) target = $region24
    $region23: #{conv_q_forward.4} parent=5 // pred_region
      // Predicated region
      $region25: #{conv_q_forward.4} parent=23 // pred_check
        %p128 = pneg %p29
      $region26: #{conv_q_forward.4} parent=23 // pred_check_branch
        %130 = sbr.rel (%p128) target = $region28
      $region27: #{conv_q_forward.4} parent=23 // pred_region
        %s131 = smul.u32 50, %s9
        %p132 = scmp.lt.s32.totalorder %s131, 99
        %s133 = scalar_select %p132, %s131, 99
        %s134 = smul.addr %s133, 2
        %s135 = smul.addr %s134, 8
        %s136 = scalar_lea.vmem %s0, %s135
        %s137 = smul.u32 50, %s9
      $region28: #{conv_q_forward.4} parent=23 // pred_fallthru
        _
    $region24: #{conv_q_forward.4} parent=5 // pred_fallthru
      _
    %p138 = scmp.le.s32.totalorder 1, %s9
    %p139 = scmp.lt.s32.totalorder %s9, 3
    %p140 = pnand %p138, %p139
    %p141 = pneg %p140
    // Predicated region
    $region29: #{conv_q_forward.4} parent=5 // pred_check
      _
    $region30: #{conv_q_forward.4} parent=5 // pred_check_branch
      %143 = sbr.rel (%p140) target = $region32
    $region31: #{conv_q_forward.4} parent=5 // pred_region
      %s144 = ssub.s32 %s9, 1
      %s145 = smul.u32 50, %s14
      %p146 = scmp.lt.s32.totalorder %s145, 99
      %s147 = scalar_select %p146, %s145, 99
      %s148 = smul.addr %s147, 2
      %s149 = smul.addr %s148, 8
      %s150 = scalar_lea.vmem %s0, %s149
      %p151 = pneg %p35
      %p152 = pneg %p32
      %p153 = pneg %p56
      %p154 = pneg %p53
      %p155 = pneg %p77
      %p156 = pneg %p74
      %p157 = pneg %p103
      %p158 = pneg %p100
      %s159 = smul.u32 50, %s14
      %p160 = scmp.lt.s32.totalorder %s159, 99
      %s161 = scalar_select %p160, %s159, 99
      %s162 = smul.addr %s161, 8
      %s163 = scalar_lea.vmem %s3, %s162
      %s164 = smul.u32 50, %s14
      %p165 = scmp.lt.s32.totalorder %s164, 99
      %s166 = scalar_select %p165, %s164, 99
      %s167 = smul.addr %s166, 2
      %s168 = smul.addr %s167, 8
      %s169 = scalar_lea.vmem %s0, %s168
      %s170 = smul.u32 50, %s14
      %s171 = smul.u32 50, %s14
      %p172 = scmp.lt.s32.totalorder %s171, 99
      %s173 = scalar_select %p172, %s171, 99
      %s174 = smul.addr %s173, 8
      %s175 = scalar_lea.vmem %s3, %s174
      %s176 = smul.u32 50, %s14
      %v177 = vld [vmem:[%s169] sm:$0xff]
      %v178 = vld [vmem:[%s169 + $0x8] sm:$0xff]
      %v179 = vld [vmem:[%s169 + $0x10] sm:$0xff]
      %v180 = vld [vmem:[%s169 + $0x18] sm:$0xff]
      %v181 = vld [vmem:[%s169 + $0x20] sm:$0xff]
      %v182 = vld [vmem:[%s169 + $0x28] sm:$0xff]
      %v183 = vld [vmem:[%s169 + $0x30] sm:$0xff]
      %v184 = vld [vmem:[%s169 + $0x38] sm:$0xff]
      %v185 = vld [vmem:[%s169 + $0x40] sm:$0xff]
      %v186 = vld [vmem:[%s169 + $0x48] sm:$0xff]
      %v187 = vld [vmem:[%s169 + $0x50] sm:$0xff]
      %v188 = vld [vmem:[%s169 + $0x58] sm:$0xff]
      %v189 = vld [vmem:[%s169 + $0x60] sm:$0xff]
      %v190 = vld [vmem:[%s169 + $0x68] sm:$0xff]
      %v191 = vld [vmem:[%s169 + $0x70] sm:$0xff]
      %v192 = vld [vmem:[%s169 + $0x78] sm:$0xff]
      %v193 = vld [vmem:[%s169 + $0x80] sm:$0xff]
      %v194 = vld [vmem:[%s169 + $0x88] sm:$0xff]
      %v195 = vld [vmem:[%s169 + $0x90] sm:$0xff]
      %v196 = vld [vmem:[%s169 + $0x98] sm:$0xff]
      %v197 = vld [vmem:[%s169 + $0xa0] sm:$0xff]
      %v198 = vld [vmem:[%s169 + $0xa8] sm:$0xff]
      %v199 = vld [vmem:[%s169 + $0xb0] sm:$0xff]
      %v200 = vld [vmem:[%s169 + $0xb8] sm:$0xff]
      %v201 = vld [vmem:[%s169 + $0xc0] sm:$0xff]
      %v202 = vld [vmem:[%s169 + $0xc8] sm:$0xff]
      %v203 = vld [vmem:[%s169 + $0xd0] sm:$0xff]
      %v204 = vld [vmem:[%s169 + $0xd8] sm:$0xff]
      %v205 = vld [vmem:[%s169 + $0xe0] sm:$0xff]
      %v206 = vld [vmem:[%s169 + $0xe8] sm:$0xff]
      %v207 = vld [vmem:[%s169 + $0xf0] sm:$0xff]
      %v208 = vld [vmem:[%s169 + $0xf8] sm:$0xff]
      %v209 = vld [vmem:[%s169 + $0x100] sm:$0xff]
      %v210 = vld [vmem:[%s169 + $0x108] sm:$0xff]
      %v211 = vld [vmem:[%s169 + $0x110] sm:$0xff]
      %v212 = vld [vmem:[%s169 + $0x118] sm:$0xff]
      %v213 = vld [vmem:[%s169 + $0x120] sm:$0xff]
      %v214 = vld [vmem:[%s169 + $0x128] sm:$0xff]
      %v215 = vld [vmem:[%s169 + $0x130] sm:$0xff]
      %v216 = vld [vmem:[%s169 + $0x138] sm:$0xff]
      %v217 = vld [vmem:[%s169 + $0x140] sm:$0xff]
      %v218 = vld [vmem:[%s169 + $0x148] sm:$0xff]
      %v219 = vld [vmem:[%s169 + $0x150] sm:$0xff]
      %v220 = vld [vmem:[%s169 + $0x158] sm:$0xff]
      %v221 = vld [vmem:[%s169 + $0x160] sm:$0xff]
      %v222 = vld [vmem:[%s169 + $0x168] sm:$0xff]
      %v223 = vld [vmem:[%s169 + $0x170] sm:$0xff]
      %v224 = vld [vmem:[%s169 + $0x178] sm:$0xff]
      %v225 = vld [vmem:[%s169 + $0x180] sm:$0xff]
      %v226 = vld [vmem:[%s169 + $0x188] sm:$0xff]
      %v227 = vld [vmem:[%s169 + $0x190] sm:$0xff]
      %v228 = vld [vmem:[%s169 + $0x198] sm:$0xff]
      %v229 = vld [vmem:[%s169 + $0x1a0] sm:$0xff]
      %v230 = vld [vmem:[%s169 + $0x1a8] sm:$0xff]
      %v231 = vld [vmem:[%s169 + $0x1b0] sm:$0xff]
      %v232 = vld [vmem:[%s169 + $0x1b8] sm:$0xff]
      %v233 = vld [vmem:[%s169 + $0x1c0] sm:$0xff]
      %v234 = vld [vmem:[%s169 + $0x1c8] sm:$0xff]
      %v235 = vld [vmem:[%s169 + $0x1d0] sm:$0xff]
      %v236 = vld [vmem:[%s169 + $0x1d8] sm:$0xff]
      %v237 = vld [vmem:[%s169 + $0x1e0] sm:$0xff]
      %v238 = vld [vmem:[%s169 + $0x1e8] sm:$0xff]
      %v239 = vld [vmem:[%s169 + $0x1f0] sm:$0xff]
      %v240 = vld [vmem:[%s169 + $0x1f8] sm:$0xff]
      %v241 = vld [vmem:[%s169 + $0x200] sm:$0xff]
      %v242 = vld [vmem:[%s169 + $0x208] sm:$0xff]
      %v243 = vld [vmem:[%s169 + $0x210] sm:$0xff]
      %v244 = vld [vmem:[%s169 + $0x218] sm:$0xff]
      %v245 = vld [vmem:[%s169 + $0x220] sm:$0xff]
      %v246 = vld [vmem:[%s169 + $0x228] sm:$0xff]
      %v247 = vld [vmem:[%s169 + $0x230] sm:$0xff]
      %v248 = vld [vmem:[%s169 + $0x238] sm:$0xff]
      %v249 = vld [vmem:[%s169 + $0x240] sm:$0xff]
      %v250 = vld [vmem:[%s169 + $0x248] sm:$0xff]
      %v251 = vld [vmem:[%s169 + $0x250] sm:$0xff]
      %v252 = vld [vmem:[%s169 + $0x258] sm:$0xff]
      %v253 = vld [vmem:[%s169 + $0x260] sm:$0xff]
      %v254 = vld [vmem:[%s169 + $0x268] sm:$0xff]
      %v255 = vld [vmem:[%s169 + $0x270] sm:$0xff]
      %v256 = vld [vmem:[%s169 + $0x278] sm:$0xff]
      %v257 = vld [vmem:[%s169 + $0x280] sm:$0xff]
      %v258 = vld [vmem:[%s169 + $0x288] sm:$0xff]
      %v259 = vld [vmem:[%s169 + $0x290] sm:$0xff]
      %v260 = vld [vmem:[%s169 + $0x298] sm:$0xff]
      %v261 = vld [vmem:[%s169 + $0x2a0] sm:$0xff]
      %v262 = vld [vmem:[%s169 + $0x2a8] sm:$0xff]
      %v263 = vld [vmem:[%s169 + $0x2b0] sm:$0xff]
      %v264 = vld [vmem:[%s169 + $0x2b8] sm:$0xff]
      %v265 = vld [vmem:[%s169 + $0x2c0] sm:$0xff]
      %v266 = vld [vmem:[%s169 + $0x2c8] sm:$0xff]
      %v267 = vld [vmem:[%s169 + $0x2d0] sm:$0xff]
      %v268 = vld [vmem:[%s169 + $0x2d8] sm:$0xff]
      %v269 = vld [vmem:[%s169 + $0x2e0] sm:$0xff]
      %v270 = vld [vmem:[%s169 + $0x2e8] sm:$0xff]
      %v271 = vld [vmem:[%s169 + $0x2f0] sm:$0xff]
      %v272 = vld [vmem:[%s169 + $0x2f8] sm:$0xff]
      %v273 = vld [vmem:[%s169 + $0x300] sm:$0xff]
      %v274 = vld [vmem:[%s169 + $0x308] sm:$0xff]
      %v275 = vld [vmem:[%s169 + $0x310] sm:$0xff]
      %v276 = vld [vmem:[%s169 + $0x318] sm:$0xff]
      %v277 = vld [vmem:[%s1] sm:$0xff]
      %v278 = vld [vmem:[%s1 + $0x8] sm:$0xff]
      %v279 = vld [vmem:[%s1 + $0x10] sm:$0xff]
      %v280 = vld [vmem:[%s1 + $0x18] sm:$0xff]
      %v281 = vld [vmem:[%s1 + $0x20] sm:$0xff]
      %v282 = vld [vmem:[%s1 + $0x28] sm:$0xff]
      %v283 = vld [vmem:[%s1 + $0x30] sm:$0xff]
      %v284 = vld [vmem:[%s1 + $0x38] sm:$0xff]
      %v285 = vld [vmem:[%s1 + $0x40] sm:$0xff]
      %v286 = vld [vmem:[%s1 + $0x48] sm:$0xff]
      %v287 = vld [vmem:[%s1 + $0x50] sm:$0xff]
      %v288 = vld [vmem:[%s1 + $0x58] sm:$0xff]
      %v289 = vld [vmem:[%s1 + $0x60] sm:$0xff]
      %v290 = vld [vmem:[%s1 + $0x68] sm:$0xff]
      %v291 = vld [vmem:[%s1 + $0x70] sm:$0xff]
      %v292 = vld [vmem:[%s1 + $0x78] sm:$0xff]
      %v293 = vld [vmem:[%s1 + $0x80] sm:$0xff]
      %v294 = vld [vmem:[%s1 + $0x88] sm:$0xff]
      %v295 = vld [vmem:[%s1 + $0x90] sm:$0xff]
      %v296 = vld [vmem:[%s1 + $0x98] sm:$0xff]
      %v297 = vld [vmem:[%s1 + $0xa0] sm:$0xff]
      %v298 = vld [vmem:[%s1 + $0xa8] sm:$0xff]
      %v299 = vld [vmem:[%s1 + $0xb0] sm:$0xff]
      %v300 = vld [vmem:[%s1 + $0xb8] sm:$0xff]
      %v301 = vld [vmem:[%s1 + $0xc0] sm:$0xff]
      %v302 = vld [vmem:[%s1 + $0xc8] sm:$0xff]
      %v303 = vld [vmem:[%s1 + $0xd0] sm:$0xff]
      %v304 = vld [vmem:[%s1 + $0xd8] sm:$0xff]
      %v305 = vld [vmem:[%s1 + $0xe0] sm:$0xff]
      %v306 = vld [vmem:[%s1 + $0xe8] sm:$0xff]
      %v307 = vld [vmem:[%s1 + $0xf0] sm:$0xff]
      %v308 = vld [vmem:[%s1 + $0xf8] sm:$0xff]
      %v309 = vld [vmem:[%s2] sm:$0x1]
      %v311 = vperm.slane %v309, 0
      %313 = vmatpush.msra.mxu0 %v292
      %314 = vmatpush.msra.mxu0 %v291
      %315 = vmatpush.msra.mxu0 %v290
      %316 = vmatpush.msra.mxu0 %v289
      %317 = vmatpush.msra.mxu0 %v288
      %318 = vmatpush.msra.mxu0 %v287
      %319 = vmatpush.msra.mxu0 %v286
      %320 = vmatpush.msra.mxu0 %v285
      %321 = vmatpush.msra.mxu0 %v284
      %322 = vmatpush.msra.mxu0 %v283
      %323 = vmatpush.msra.mxu0 %v282
      %324 = vmatpush.msra.mxu0 %v281
      %325 = vmatpush.msra.mxu0 %v280
      %326 = vmatpush.msra.mxu0 %v279
      %327 = vmatpush.msra.mxu0 %v278
      %328 = vmatpush.msra.mxu0 %v277
      %329 = vmatmul.f32.gmra.mxu0 %v177
      %v330 = vpop.f32.mrf.mxu0
      %v331 = vadd.f32 %v311, %v330
      %332 = vmatmul.f32.gmra.mxu0 %v179
      %v333 = vpop.f32.mrf.mxu0
      %v334 = vadd.f32 %v311, %v333
      %335 = vmatmul.f32.gmra.mxu0 %v181
      %v336 = vpop.f32.mrf.mxu0
      %v337 = vadd.f32 %v311, %v336
      %338 = vmatmul.f32.gmra.mxu0 %v183
      %v339 = vpop.f32.mrf.mxu0
      %v340 = vadd.f32 %v311, %v339
      %341 = vmatmul.f32.gmra.mxu0 %v185
      %v342 = vpop.f32.mrf.mxu0
      %v343 = vadd.f32 %v311, %v342
      %344 = vmatmul.f32.gmra.mxu0 %v187
      %v345 = vpop.f32.mrf.mxu0
      %v346 = vadd.f32 %v311, %v345
      %347 = vmatmul.f32.gmra.mxu0 %v189
      %v348 = vpop.f32.mrf.mxu0
      %v349 = vadd.f32 %v311, %v348
      %350 = vmatmul.f32.gmra.mxu0 %v191
      %v351 = vpop.f32.mrf.mxu0
      %v352 = vadd.f32 %v311, %v351
      %353 = vmatmul.f32.gmra.mxu0 %v193
      %v354 = vpop.f32.mrf.mxu0
      %v355 = vadd.f32 %v311, %v354
      %356 = vmatmul.f32.gmra.mxu0 %v195
      %v357 = vpop.f32.mrf.mxu0
      %v358 = vadd.f32 %v311, %v357
      %359 = vmatmul.f32.gmra.mxu0 %v197
      %v360 = vpop.f32.mrf.mxu0
      %v361 = vadd.f32 %v311, %v360
      %362 = vmatmul.f32.gmra.mxu0 %v199
      %v363 = vpop.f32.mrf.mxu0
      %v364 = vadd.f32 %v311, %v363
      %365 = vmatmul.f32.gmra.mxu0 %v201
      %v366 = vpop.f32.mrf.mxu0
      %v367 = vadd.f32 %v311, %v366
      %368 = vmatmul.f32.gmra.mxu0 %v203
      %v369 = vpop.f32.mrf.mxu0
      %v370 = vadd.f32 %v311, %v369
      %371 = vmatmul.f32.gmra.mxu0 %v205
      %v372 = vpop.f32.mrf.mxu0
      %v373 = vadd.f32 %v311, %v372
      %374 = vmatmul.f32.gmra.mxu0 %v207
      %v375 = vpop.f32.mrf.mxu0
      %v376 = vadd.f32 %v311, %v375
      %377 = vmatmul.f32.gmra.mxu0 %v209
      %v378 = vpop.f32.mrf.mxu0
      %v379 = vadd.f32 %v311, %v378
      %380 = vmatmul.f32.gmra.mxu0 %v211
      %v381 = vpop.f32.mrf.mxu0
      %v382 = vadd.f32 %v311, %v381
      %383 = vmatmul.f32.gmra.mxu0 %v213
      %v384 = vpop.f32.mrf.mxu0
      %v385 = vadd.f32 %v311, %v384
      %386 = vmatmul.f32.gmra.mxu0 %v215
      %v387 = vpop.f32.mrf.mxu0
      %v388 = vadd.f32 %v311, %v387
      %389 = vmatmul.f32.gmra.mxu0 %v217
      %v390 = vpop.f32.mrf.mxu0
      %v391 = vadd.f32 %v311, %v390
      %392 = vmatmul.f32.gmra.mxu0 %v219
      %v393 = vpop.f32.mrf.mxu0
      %v394 = vadd.f32 %v311, %v393
      %395 = vmatmul.f32.gmra.mxu0 %v221
      %v396 = vpop.f32.mrf.mxu0
      %v397 = vadd.f32 %v311, %v396
      %398 = vmatmul.f32.gmra.mxu0 %v223
      %v399 = vpop.f32.mrf.mxu0
      %v400 = vadd.f32 %v311, %v399
      %401 = vmatmul.f32.gmra.mxu0 %v225
      %v402 = vpop.f32.mrf.mxu0
      %v403 = vadd.f32 %v311, %v402
      %404 = vmatmul.f32.gmra.mxu0 %v227
      %v405 = vpop.f32.mrf.mxu0
      %v406 = vadd.f32 %v311, %v405
      %407 = vmatmul.f32.gmra.mxu0 %v229
      %v408 = vpop.f32.mrf.mxu0
      %v409 = vadd.f32 %v311, %v408
      %410 = vmatmul.f32.gmra.mxu0 %v231
      %v411 = vpop.f32.mrf.mxu0
      %v412 = vadd.f32 %v311, %v411
      %413 = vmatmul.f32.gmra.mxu0 %v233
      %v414 = vpop.f32.mrf.mxu0
      %v415 = vadd.f32 %v311, %v414
      %416 = vmatmul.f32.gmra.mxu0 %v235
      %v417 = vpop.f32.mrf.mxu0
      %v418 = vadd.f32 %v311, %v417
      %419 = vmatmul.f32.gmra.mxu0 %v237
      %v420 = vpop.f32.mrf.mxu0
      %v421 = vadd.f32 %v311, %v420
      %422 = vmatmul.f32.gmra.mxu0 %v239
      %v423 = vpop.f32.mrf.mxu0
      %v424 = vadd.f32 %v311, %v423
      %425 = vmatmul.f32.gmra.mxu0 %v241
      %v426 = vpop.f32.mrf.mxu0
      %v427 = vadd.f32 %v311, %v426
      %428 = vmatmul.f32.gmra.mxu0 %v243
      %v429 = vpop.f32.mrf.mxu0
      %v430 = vadd.f32 %v311, %v429
      %431 = vmatmul.f32.gmra.mxu0 %v245
      %v432 = vpop.f32.mrf.mxu0
      %v433 = vadd.f32 %v311, %v432
      %434 = vmatmul.f32.gmra.mxu0 %v247
      %v435 = vpop.f32.mrf.mxu0
      %v436 = vadd.f32 %v311, %v435
      %437 = vmatmul.f32.gmra.mxu0 %v249
      %v438 = vpop.f32.mrf.mxu0
      %v439 = vadd.f32 %v311, %v438
      %440 = vmatmul.f32.gmra.mxu0 %v251
      %v441 = vpop.f32.mrf.mxu0
      %v442 = vadd.f32 %v311, %v441
      %443 = vmatmul.f32.gmra.mxu0 %v253
      %v444 = vpop.f32.mrf.mxu0
      %v445 = vadd.f32 %v311, %v444
      %446 = vmatmul.f32.gmra.mxu0 %v255
      %v447 = vpop.f32.mrf.mxu0
      %v448 = vadd.f32 %v311, %v447
      %449 = vmatmul.f32.gmra.mxu0 %v257
      %v450 = vpop.f32.mrf.mxu0
      %v451 = vadd.f32 %v311, %v450
      %452 = vmatmul.f32.gmra.mxu0 %v259
      %v453 = vpop.f32.mrf.mxu0
      %v454 = vadd.f32 %v311, %v453
      %455 = vmatmul.f32.gmra.mxu0 %v261
      %v456 = vpop.f32.mrf.mxu0
      %v457 = vadd.f32 %v311, %v456
      %458 = vmatmul.f32.gmra.mxu0 %v263
      %v459 = vpop.f32.mrf.mxu0
      %v460 = vadd.f32 %v311, %v459
      %461 = vmatmul.f32.gmra.mxu0 %v265
      %v462 = vpop.f32.mrf.mxu0
      %v463 = vadd.f32 %v311, %v462
      %464 = vmatmul.f32.gmra.mxu0 %v267
      %v465 = vpop.f32.mrf.mxu0
      %v466 = vadd.f32 %v311, %v465
      %467 = vmatmul.f32.gmra.mxu0 %v269
      %v468 = vpop.f32.mrf.mxu0
      %v469 = vadd.f32 %v311, %v468
      %470 = vmatmul.f32.gmra.mxu0 %v271
      %v471 = vpop.f32.mrf.mxu0
      %v472 = vadd.f32 %v311, %v471
      %473 = vmatmul.f32.gmra.mxu0 %v273
      %v474 = vpop.f32.mrf.mxu0
      %v475 = vadd.f32 %v311, %v474
      %476 = vmatmul.f32.gmra.mxu0 %v275
      %v477 = vpop.f32.mrf.mxu0
      %v478 = vadd.f32 %v311, %v477
      %479 = vdwg.mxu0
      %480 = vmatpush.msra.mxu0 %v308
      %481 = vmatpush.msra.mxu0 %v307
      %482 = vmatpush.msra.mxu0 %v306
      %483 = vmatpush.msra.mxu0 %v305
      %484 = vmatpush.msra.mxu0 %v304
      %485 = vmatpush.msra.mxu0 %v303
      %486 = vmatpush.msra.mxu0 %v302
      %487 = vmatpush.msra.mxu0 %v301
      %488 = vmatpush.msra.mxu0 %v300
      %489 = vmatpush.msra.mxu0 %v299
      %490 = vmatpush.msra.mxu0 %v298
      %491 = vmatpush.msra.mxu0 %v297
      %492 = vmatpush.msra.mxu0 %v296
      %493 = vmatpush.msra.mxu0 %v295
      %494 = vmatpush.msra.mxu0 %v294
      %495 = vmatpush.msra.mxu0 %v293
      %496 = vmatmul.f32.gmra.mxu0 %v178
      %v497 = vpop.f32.mrf.mxu0
      %v498 = vadd.f32 %v331, %v497
      %499 = vmatmul.f32.gmra.mxu0 %v180
      %v500 = vpop.f32.mrf.mxu0
      %v501 = vadd.f32 %v334, %v500
      %502 = vmatmul.f32.gmra.mxu0 %v182
      %v503 = vpop.f32.mrf.mxu0
      %v504 = vadd.f32 %v337, %v503
      %505 = vmatmul.f32.gmra.mxu0 %v184
      %v506 = vpop.f32.mrf.mxu0
      %v507 = vadd.f32 %v340, %v506
      %508 = vmatmul.f32.gmra.mxu0 %v186
      %v509 = vpop.f32.mrf.mxu0
      %v510 = vadd.f32 %v343, %v509
      %511 = vmatmul.f32.gmra.mxu0 %v188
      %v512 = vpop.f32.mrf.mxu0
      %v513 = vadd.f32 %v346, %v512
      %514 = vmatmul.f32.gmra.mxu0 %v190
      %v515 = vpop.f32.mrf.mxu0
      %v516 = vadd.f32 %v349, %v515
      %517 = vmatmul.f32.gmra.mxu0 %v192
      %v518 = vpop.f32.mrf.mxu0
      %v519 = vadd.f32 %v352, %v518
      %520 = vmatmul.f32.gmra.mxu0 %v194
      %v521 = vpop.f32.mrf.mxu0
      %v522 = vadd.f32 %v355, %v521
      %523 = vmatmul.f32.gmra.mxu0 %v196
      %v524 = vpop.f32.mrf.mxu0
      %v525 = vadd.f32 %v358, %v524
      %526 = vmatmul.f32.gmra.mxu0 %v198
      %v527 = vpop.f32.mrf.mxu0
      %v528 = vadd.f32 %v361, %v527
      %529 = vmatmul.f32.gmra.mxu0 %v200
      %v530 = vpop.f32.mrf.mxu0
      %v531 = vadd.f32 %v364, %v530
      %532 = vmatmul.f32.gmra.mxu0 %v202
      %v533 = vpop.f32.mrf.mxu0
      %v534 = vadd.f32 %v367, %v533
      %535 = vmatmul.f32.gmra.mxu0 %v204
      %v536 = vpop.f32.mrf.mxu0
      %v537 = vadd.f32 %v370, %v536
      %538 = vmatmul.f32.gmra.mxu0 %v206
      %v539 = vpop.f32.mrf.mxu0
      %v540 = vadd.f32 %v373, %v539
      %541 = vmatmul.f32.gmra.mxu0 %v208
      %v542 = vpop.f32.mrf.mxu0
      %v543 = vadd.f32 %v376, %v542
      %544 = vmatmul.f32.gmra.mxu0 %v210
      %v545 = vpop.f32.mrf.mxu0
      %v546 = vadd.f32 %v379, %v545
      %547 = vmatmul.f32.gmra.mxu0 %v212
      %v548 = vpop.f32.mrf.mxu0
      %v549 = vadd.f32 %v382, %v548
      %550 = vmatmul.f32.gmra.mxu0 %v214
      %v551 = vpop.f32.mrf.mxu0
      %v552 = vadd.f32 %v385, %v551
      %553 = vmatmul.f32.gmra.mxu0 %v216
      %v554 = vpop.f32.mrf.mxu0
      %v555 = vadd.f32 %v388, %v554
      %556 = vmatmul.f32.gmra.mxu0 %v218
      %v557 = vpop.f32.mrf.mxu0
      %v558 = vadd.f32 %v391, %v557
      %559 = vmatmul.f32.gmra.mxu0 %v220
      %v560 = vpop.f32.mrf.mxu0
      %v561 = vadd.f32 %v394, %v560
      %562 = vmatmul.f32.gmra.mxu0 %v222
      %v563 = vpop.f32.mrf.mxu0
      %v564 = vadd.f32 %v397, %v563
      %565 = vmatmul.f32.gmra.mxu0 %v224
      %v566 = vpop.f32.mrf.mxu0
      %v567 = vadd.f32 %v400, %v566
      %568 = vmatmul.f32.gmra.mxu0 %v226
      %v569 = vpop.f32.mrf.mxu0
      %v570 = vadd.f32 %v403, %v569
      %571 = vmatmul.f32.gmra.mxu0 %v228
      %v572 = vpop.f32.mrf.mxu0
      %v573 = vadd.f32 %v406, %v572
      %574 = vmatmul.f32.gmra.mxu0 %v230
      %v575 = vpop.f32.mrf.mxu0
      %v576 = vadd.f32 %v409, %v575
      %577 = vmatmul.f32.gmra.mxu0 %v232
      %v578 = vpop.f32.mrf.mxu0
      %v579 = vadd.f32 %v412, %v578
      %580 = vmatmul.f32.gmra.mxu0 %v234
      %v581 = vpop.f32.mrf.mxu0
      %v582 = vadd.f32 %v415, %v581
      %583 = vmatmul.f32.gmra.mxu0 %v236
      %v584 = vpop.f32.mrf.mxu0
      %v585 = vadd.f32 %v418, %v584
      %586 = vmatmul.f32.gmra.mxu0 %v238
      %v587 = vpop.f32.mrf.mxu0
      %v588 = vadd.f32 %v421, %v587
      %589 = vmatmul.f32.gmra.mxu0 %v240
      %v590 = vpop.f32.mrf.mxu0
      %v591 = vadd.f32 %v424, %v590
      %592 = vmatmul.f32.gmra.mxu0 %v242
      %v593 = vpop.f32.mrf.mxu0
      %v594 = vadd.f32 %v427, %v593
      %595 = vmatmul.f32.gmra.mxu0 %v244
      %v596 = vpop.f32.mrf.mxu0
      %v597 = vadd.f32 %v430, %v596
      %598 = vmatmul.f32.gmra.mxu0 %v246
      %v599 = vpop.f32.mrf.mxu0
      %v600 = vadd.f32 %v433, %v599
      %601 = vmatmul.f32.gmra.mxu0 %v248
      %v602 = vpop.f32.mrf.mxu0
      %v603 = vadd.f32 %v436, %v602
      %604 = vmatmul.f32.gmra.mxu0 %v250
      %v605 = vpop.f32.mrf.mxu0
      %v606 = vadd.f32 %v439, %v605
      %607 = vmatmul.f32.gmra.mxu0 %v252
      %v608 = vpop.f32.mrf.mxu0
      %v609 = vadd.f32 %v442, %v608
      %610 = vmatmul.f32.gmra.mxu0 %v254
      %v611 = vpop.f32.mrf.mxu0
      %v612 = vadd.f32 %v445, %v611
      %613 = vmatmul.f32.gmra.mxu0 %v256
      %v614 = vpop.f32.mrf.mxu0
      %v615 = vadd.f32 %v448, %v614
      %616 = vmatmul.f32.gmra.mxu0 %v258
      %v617 = vpop.f32.mrf.mxu0
      %v618 = vadd.f32 %v451, %v617
      %619 = vmatmul.f32.gmra.mxu0 %v260
      %v620 = vpop.f32.mrf.mxu0
      %v621 = vadd.f32 %v454, %v620
      %622 = vmatmul.f32.gmra.mxu0 %v262
      %v623 = vpop.f32.mrf.mxu0
      %v624 = vadd.f32 %v457, %v623
      %625 = vmatmul.f32.gmra.mxu0 %v264
      %v626 = vpop.f32.mrf.mxu0
      %v627 = vadd.f32 %v460, %v626
      %628 = vmatmul.f32.gmra.mxu0 %v266
      %v629 = vpop.f32.mrf.mxu0
      %v630 = vadd.f32 %v463, %v629
      %631 = vmatmul.f32.gmra.mxu0 %v268
      %v632 = vpop.f32.mrf.mxu0
      %v633 = vadd.f32 %v466, %v632
      %634 = vmatmul.f32.gmra.mxu0 %v270
      %v635 = vpop.f32.mrf.mxu0
      %v636 = vadd.f32 %v469, %v635
      %637 = vmatmul.f32.gmra.mxu0 %v272
      %v638 = vpop.f32.mrf.mxu0
      %v639 = vadd.f32 %v472, %v638
      %640 = vmatmul.f32.gmra.mxu0 %v274
      %v641 = vpop.f32.mrf.mxu0
      %v642 = vadd.f32 %v475, %v641
      %643 = vmatmul.f32.gmra.mxu0 %v276
      %v644 = vpop.f32.mrf.mxu0
      %v645 = vadd.f32 %v478, %v644
      %646 = vdwg.mxu0
      %v647 = vmax.f32 %v498, 0.0
      %v648 = vmax.f32 %v501, 0.0
      %v649 = vmax.f32 %v504, 0.0
      %v650 = vmax.f32 %v507, 0.0
      %v651 = vmax.f32 %v510, 0.0
      %v652 = vmax.f32 %v513, 0.0
      %v653 = vmax.f32 %v516, 0.0
      %v654 = vmax.f32 %v519, 0.0
      %v655 = vmax.f32 %v522, 0.0
      %v656 = vmax.f32 %v525, 0.0
      %v657 = vmax.f32 %v528, 0.0
      %v658 = vmax.f32 %v531, 0.0
      %v659 = vmax.f32 %v534, 0.0
      %v660 = vmax.f32 %v537, 0.0
      %v661 = vmax.f32 %v540, 0.0
      %v662 = vmax.f32 %v543, 0.0
      %v663 = vmax.f32 %v546, 0.0
      %v664 = vmax.f32 %v549, 0.0
      %v665 = vmax.f32 %v552, 0.0
      %v666 = vmax.f32 %v555, 0.0
      %v667 = vmax.f32 %v558, 0.0
      %v668 = vmax.f32 %v561, 0.0
      %v669 = vmax.f32 %v564, 0.0
      %v670 = vmax.f32 %v567, 0.0
      %v671 = vmax.f32 %v570, 0.0
      %v672 = vmax.f32 %v573, 0.0
      %v673 = vmax.f32 %v576, 0.0
      %v674 = vmax.f32 %v579, 0.0
      %v675 = vmax.f32 %v582, 0.0
      %v676 = vmax.f32 %v585, 0.0
      %v677 = vmax.f32 %v588, 0.0
      %v678 = vmax.f32 %v591, 0.0
      %v679 = vmax.f32 %v594, 0.0
      %v680 = vmax.f32 %v597, 0.0
      %v681 = vmax.f32 %v600, 0.0
      %v682 = vmax.f32 %v603, 0.0
      %v683 = vmax.f32 %v606, 0.0
      %v684 = vmax.f32 %v609, 0.0
      %v685 = vmax.f32 %v612, 0.0
      %v686 = vmax.f32 %v615, 0.0
      %v687 = vmax.f32 %v618, 0.0
      %v688 = vmax.f32 %v621, 0.0
      %v689 = vmax.f32 %v624, 0.0
      %v690 = vmax.f32 %v627, 0.0
      %v691 = vmax.f32 %v630, 0.0
      %v692 = vmax.f32 %v633, 0.0
      %v693 = vmax.f32 %v636, 0.0
      %v694 = vmax.f32 %v639, 0.0
      %v695 = vmax.f32 %v642, 0.0
      %v696 = vmax.f32 %v645, 0.0
      %697 = vst [vmem:[%s175] sm:$0xff] %v647
      %698 = vst [vmem:[%s175 + $0x8] sm:$0xff] %v648
      %699 = vst [vmem:[%s175 + $0x10] sm:$0xff] %v649
      %700 = vst [vmem:[%s175 + $0x18] sm:$0xff] %v650
      %701 = vst [vmem:[%s175 + $0x20] sm:$0xff] %v651
      %702 = vst [vmem:[%s175 + $0x28] sm:$0xff] %v652
      %703 = vst [vmem:[%s175 + $0x30] sm:$0xff] %v653
      %704 = vst [vmem:[%s175 + $0x38] sm:$0xff] %v654
      %705 = vst [vmem:[%s175 + $0x40] sm:$0xff] %v655
      %706 = vst [vmem:[%s175 + $0x48] sm:$0xff] %v656
      %707 = vst [vmem:[%s175 + $0x50] sm:$0xff] %v657
      %708 = vst [vmem:[%s175 + $0x58] sm:$0xff] %v658
      %709 = vst [vmem:[%s175 + $0x60] sm:$0xff] %v659
      %710 = vst [vmem:[%s175 + $0x68] sm:$0xff] %v660
      %711 = vst [vmem:[%s175 + $0x70] sm:$0xff] %v661
      %712 = vst [vmem:[%s175 + $0x78] sm:$0xff] %v662
      %713 = vst [vmem:[%s175 + $0x80] sm:$0xff] %v663
      %714 = vst [vmem:[%s175 + $0x88] sm:$0xff] %v664
      %715 = vst [vmem:[%s175 + $0x90] sm:$0xff] %v665
      %716 = vst [vmem:[%s175 + $0x98] sm:$0xff] %v666
      %717 = vst [vmem:[%s175 + $0xa0] sm:$0xff] %v667
      %718 = vst [vmem:[%s175 + $0xa8] sm:$0xff] %v668
      %719 = vst [vmem:[%s175 + $0xb0] sm:$0xff] %v669
      %720 = vst [vmem:[%s175 + $0xb8] sm:$0xff] %v670
      %721 = vst [vmem:[%s175 + $0xc0] sm:$0xff] %v671
      %722 = vst [vmem:[%s175 + $0xc8] sm:$0xff] %v672
      %723 = vst [vmem:[%s175 + $0xd0] sm:$0xff] %v673
      %724 = vst [vmem:[%s175 + $0xd8] sm:$0xff] %v674
      %725 = vst [vmem:[%s175 + $0xe0] sm:$0xff] %v675
      %726 = vst [vmem:[%s175 + $0xe8] sm:$0xff] %v676
      %727 = vst [vmem:[%s175 + $0xf0] sm:$0xff] %v677
      %728 = vst [vmem:[%s175 + $0xf8] sm:$0xff] %v678
      %729 = vst [vmem:[%s175 + $0x100] sm:$0xff] %v679
      %730 = vst [vmem:[%s175 + $0x108] sm:$0xff] %v680
      %731 = vst [vmem:[%s175 + $0x110] sm:$0xff] %v681
      %732 = vst [vmem:[%s175 + $0x118] sm:$0xff] %v682
      %733 = vst [vmem:[%s175 + $0x120] sm:$0xff] %v683
      %734 = vst [vmem:[%s175 + $0x128] sm:$0xff] %v684
      %735 = vst [vmem:[%s175 + $0x130] sm:$0xff] %v685
      %736 = vst [vmem:[%s175 + $0x138] sm:$0xff] %v686
      %737 = vst [vmem:[%s175 + $0x140] sm:$0xff] %v687
      %738 = vst [vmem:[%s175 + $0x148] sm:$0xff] %v688
      %739 = vst [vmem:[%s175 + $0x150] sm:$0xff] %v689
      %740 = vst [vmem:[%s175 + $0x158] sm:$0xff] %v690
      %741 = vst [vmem:[%s175 + $0x160] sm:$0xff] %v691
      %742 = vst [vmem:[%s175 + $0x168] sm:$0xff] %v692
      %743 = vst [vmem:[%s175 + $0x170] sm:$0xff] %v693
      %744 = vst [vmem:[%s175 + $0x178] sm:$0xff] %v694
      %745 = vst [vmem:[%s175 + $0x180] sm:$0xff] %v695
      %746 = vst [vmem:[%s175 + $0x188] sm:$0xff] %v696
      %s747 = smul.u32 50, %s14
      %p748 = scmp.lt.s32.totalorder %s747, 99
      %s749 = scalar_select %p748, %s747, 99
      %s750 = smul.addr %s749, 8
      %s751 = scalar_lea.vmem %s3, %s750
      // Predicated region
      $region33: #{conv_q_forward.4} parent=31 // pred_check
        %p752 = pneg %p100
      $region34: #{conv_q_forward.4} parent=31 // pred_check_branch
        %754 = sbr.rel (%p752) target = $region36
      $region35: #{conv_q_forward.4} parent=31 // pred_region
        %s755 = smul.u32 50, %s14
      $region36: #{conv_q_forward.4} parent=31 // pred_fallthru
        _
    $region32: #{conv_q_forward.4} parent=5 // pred_fallthru
      _
    %p756 = scmp.le.s32.totalorder 2, %s9
    // Predicated region
    $region37: #{conv_q_forward.4} parent=5 // pred_check
      %p757 = pneg %p756
    $region38: #{conv_q_forward.4} parent=5 // pred_check_branch
      %759 = sbr.rel (%p757) target = $region40
    $region39: #{conv_q_forward.4} parent=5 // pred_region
      %s760 = ssub.s32 %s9, 2
      // Predicated region
      $region41: #{conv_q_forward.4} parent=39 // pred_check
        %p761 = pneg %p106
      $region42: #{conv_q_forward.4} parent=39 // pred_check_branch
        %763 = sbr.rel (%p761) target = $region44
      $region43: #{conv_q_forward.4} parent=39 // pred_region
        %s764 = smul.u32 50, %s15
        %p765 = scmp.lt.s32.totalorder %s764, 99
        %s766 = scalar_select %p765, %s764, 99
        %s767 = smul.addr %s766, 8
        %s768 = scalar_lea.vmem %s3, %s767
      $region44: #{conv_q_forward.4} parent=39 // pred_fallthru
        _
    $region40: #{conv_q_forward.4} parent=5 // pred_fallthru
      _
  $region6: #{conv_q_forward.4} parent=0 // loop_footer
    %s13 = sadd.s32 1, %s9
  $region7: #{conv_q_forward.4} parent=0 // loop_footer_branch
    %8 = sbr.rel target = $region3
  $region8: #{conv_q_forward.4} parent=0 // loop_exit
    _

// kernel: conv_q_forward.5
$region0: #{conv_q_forward.5}
  #allocation0 [shape = 'u32[]', space=smem, size = 0x4, offset = 0x4, fixed_abs, tag = 'smem constant byte address 0x4 - core index']
  #allocation1 [shape = 'u32[72,128]{1,0:T(1,128)}', space=vmem, size = 0x9000, scoped, tag = 'internal scratch']
  %s0 = inlined_call_operand.vmem [shape: f32[168,512], index: 0, kind: input, shape index: {}]
  %s1 = inlined_call_operand.vmem [shape: f32[512,128], index: 1, kind: input, shape index: {}]
  %s2 = inlined_call_operand.vmem [shape: f32[1,128], index: 2, kind: input, shape index: {}]
  %s3 = inlined_call_operand.vmem [shape: f32[168,128], index: 3, kind: output, shape index: {}]
  %s4 = sld [smem:[#allocation0]]
  $region22: #{conv_q_forward.5} parent=0
    _
  %s6 = ssub.s32 1, %s4
  %s7 = scalar_select 0, %s6, %s4
  // Predicated region
  $region2: #{conv_q_forward.5} parent=0 // pred_check
    _
  $region3: #{conv_q_forward.5} parent=0 // pred_check_branch
    %9 = sbr.rel (0) target = $region5
  $region4: #{conv_q_forward.5} parent=0 // pred_region
    _
  $region5: #{conv_q_forward.5} parent=0 // pred_fallthru
    _
  // Predicated region
  $region6: #{conv_q_forward.5} parent=0 // pred_check
    _
  $region7: #{conv_q_forward.5} parent=0 // pred_check_branch
    %11 = sbr.rel (0) target = $region9
  $region8: #{conv_q_forward.5} parent=0 // pred_region
    _
  $region9: #{conv_q_forward.5} parent=0 // pred_fallthru
    _
  // Predicated region
  $region10: #{conv_q_forward.5} parent=0 // pred_check
    _
  $region11: #{conv_q_forward.5} parent=0 // pred_check_branch
    %13 = sbr.rel (0) target = $region13
  $region12: #{conv_q_forward.5} parent=0 // pred_region
    _
  $region13: #{conv_q_forward.5} parent=0 // pred_fallthru
    _
  %v14 = vld [vmem:[%s0] sm:$0xff]
  %v15 = vld [vmem:[%s0 + $0x8] sm:$0xff]
  %v16 = vld [vmem:[%s0 + $0x10] sm:$0xff]
  %v17 = vld [vmem:[%s0 + $0x18] sm:$0xff]
  %v18 = vld [vmem:[%s0 + $0x20] sm:$0xff]
  %v19 = vld [vmem:[%s0 + $0x28] sm:$0xff]
  %v20 = vld [vmem:[%s0 + $0x30] sm:$0xff]
  %v21 = vld [vmem:[%s0 + $0x38] sm:$0xff]
  %v22 = vld [vmem:[%s0 + $0x40] sm:$0xff]
  %v23 = vld [vmem:[%s0 + $0x48] sm:$0xff]
  %v24 = vld [vmem:[%s0 + $0x50] sm:$0xff]
  %v25 = vld [vmem:[%s0 + $0x58] sm:$0xff]
  %v26 = vld [vmem:[%s0 + $0x60] sm:$0xff]
  %v27 = vld [vmem:[%s0 + $0x68] sm:$0xff]
  %v28 = vld [vmem:[%s0 + $0x70] sm:$0xff]
  %v29 = vld [vmem:[%s0 + $0x78] sm:$0xff]
  %v30 = vld [vmem:[%s0 + $0x80] sm:$0xff]
  %v31 = vld [vmem:[%s0 + $0x88] sm:$0xff]
  %v32 = vld [vmem:[%s0 + $0x90] sm:$0xff]
  %v33 = vld [vmem:[%s0 + $0x98] sm:$0xff]
  %v34 = vld [vmem:[%s0 + $0xa0] sm:$0xff]
  %v35 = vld [vmem:[%s0 + $0xa8] sm:$0xff]
  %v36 = vld [vmem:[%s0 + $0xb0] sm:$0xff]
  %v37 = vld [vmem:[%s0 + $0xb8] sm:$0xff]
  %v38 = vld [vmem:[%s0 + $0xc0] sm:$0xff]
  %v39 = vld [vmem:[%s0 + $0xc8] sm:$0xff]
  %v40 = vld [vmem:[%s0 + $0xd0] sm:$0xff]
  %v41 = vld [vmem:[%s0 + $0xd8] sm:$0xff]
  %v42 = vld [vmem:[%s0 + $0xe0] sm:$0xff]
  %v43 = vld [vmem:[%s0 + $0xe8] sm:$0xff]
  %v44 = vld [vmem:[%s0 + $0xf0] sm:$0xff]
  %v45 = vld [vmem:[%s0 + $0xf8] sm:$0xff]
  %v46 = vld [vmem:[%s0 + $0x100] sm:$0xff]
  %v47 = vld [vmem:[%s0 + $0x108] sm:$0xff]
  %v48 = vld [vmem:[%s0 + $0x110] sm:$0xff]
  %v49 = vld [vmem:[%s0 + $0x118] sm:$0xff]
  %v50 = vld [vmem:[%s0 + $0x120] sm:$0xff]
  %v51 = vld [vmem:[%s0 + $0x128] sm:$0xff]
  %v52 = vld [vmem:[%s0 + $0x130] sm:$0xff]
  %v53 = vld [vmem:[%s0 + $0x138] sm:$0xff]
  %v54 = vld [vmem:[%s0 + $0x140] sm:$0xff]
  %v55 = vld [vmem:[%s0 + $0x148] sm:$0xff]
  %v56 = vld [vmem:[%s0 + $0x150] sm:$0xff]
  %v57 = vld [vmem:[%s0 + $0x158] sm:$0xff]
  %v58 = vld [vmem:[%s0 + $0x160] sm:$0xff]
  %v59 = vld [vmem:[%s0 + $0x168] sm:$0xff]
  %v60 = vld [vmem:[%s0 + $0x170] sm:$0xff]
  %v61 = vld [vmem:[%s0 + $0x178] sm:$0xff]
  %v62 = vld [vmem:[%s0 + $0x180] sm:$0xff]
  %v63 = vld [vmem:[%s0 + $0x188] sm:$0xff]
  %v64 = vld [vmem:[%s0 + $0x190] sm:$0xff]
  %v65 = vld [vmem:[%s0 + $0x198] sm:$0xff]
  %v66 = vld [vmem:[%s0 + $0x1a0] sm:$0xff]
  %v67 = vld [vmem:[%s0 + $0x1a8] sm:$0xff]
  %v68 = vld [vmem:[%s0 + $0x1b0] sm:$0xff]
  %v69 = vld [vmem:[%s0 + $0x1b8] sm:$0xff]
  %v70 = vld [vmem:[%s0 + $0x1c0] sm:$0xff]
  %v71 = vld [vmem:[%s0 + $0x1c8] sm:$0xff]
  %v72 = vld [vmem:[%s0 + $0x1d0] sm:$0xff]
  %v73 = vld [vmem:[%s0 + $0x1d8] sm:$0xff]
  %v74 = vld [vmem:[%s0 + $0x1e0] sm:$0xff]
  %v75 = vld [vmem:[%s0 + $0x1e8] sm:$0xff]
  %v76 = vld [vmem:[%s0 + $0x1f0] sm:$0xff]
  %v77 = vld [vmem:[%s0 + $0x1f8] sm:$0xff]
  %v78 = vld [vmem:[%s0 + $0x200] sm:$0xff]
  %v79 = vld [vmem:[%s0 + $0x208] sm:$0xff]
  %v80 = vld [vmem:[%s0 + $0x210] sm:$0xff]
  %v81 = vld [vmem:[%s0 + $0x218] sm:$0xff]
  %v82 = vld [vmem:[%s0 + $0x220] sm:$0xff]
  %v83 = vld [vmem:[%s0 + $0x228] sm:$0xff]
  %v84 = vld [vmem:[%s0 + $0x230] sm:$0xff]
  %v85 = vld [vmem:[%s0 + $0x238] sm:$0xff]
  %v86 = vld [vmem:[%s0 + $0x240] sm:$0xff]
  %v87 = vld [vmem:[%s0 + $0x248] sm:$0xff]
  %v88 = vld [vmem:[%s0 + $0x250] sm:$0xff]
  %v89 = vld [vmem:[%s0 + $0x258] sm:$0xff]
  %v90 = vld [vmem:[%s0 + $0x260] sm:$0xff]
  %v91 = vld [vmem:[%s0 + $0x268] sm:$0xff]
  %v92 = vld [vmem:[%s0 + $0x270] sm:$0xff]
  %v93 = vld [vmem:[%s0 + $0x278] sm:$0xff]
  %v94 = vld [vmem:[%s0 + $0x280] sm:$0xff]
  %v95 = vld [vmem:[%s0 + $0x288] sm:$0xff]
  %v96 = vld [vmem:[%s0 + $0x290] sm:$0xff]
  %v97 = vld [vmem:[%s0 + $0x298] sm:$0xff]
  %v98 = vld [vmem:[%s1] sm:$0xff]
  %v99 = vld [vmem:[%s1 + $0x8] sm:$0xff]
  %v100 = vld [vmem:[%s1 + $0x10] sm:$0xff]
  %v101 = vld [vmem:[%s1 + $0x18] sm:$0xff]
  %v102 = vld [vmem:[%s1 + $0x20] sm:$0xff]
  %v103 = vld [vmem:[%s1 + $0x28] sm:$0xff]
  %v104 = vld [vmem:[%s1 + $0x30] sm:$0xff]
  %v105 = vld [vmem:[%s1 + $0x38] sm:$0xff]
  %v106 = vld [vmem:[%s1 + $0x40] sm:$0xff]
  %v107 = vld [vmem:[%s1 + $0x48] sm:$0xff]
  %v108 = vld [vmem:[%s1 + $0x50] sm:$0xff]
  %v109 = vld [vmem:[%s1 + $0x58] sm:$0xff]
  %v110 = vld [vmem:[%s1 + $0x60] sm:$0xff]
  %v111 = vld [vmem:[%s1 + $0x68] sm:$0xff]
  %v112 = vld [vmem:[%s1 + $0x70] sm:$0xff]
  %v113 = vld [vmem:[%s1 + $0x78] sm:$0xff]
  %v114 = vld [vmem:[%s1 + $0x80] sm:$0xff]
  %v115 = vld [vmem:[%s1 + $0x88] sm:$0xff]
  %v116 = vld [vmem:[%s1 + $0x90] sm:$0xff]
  %v117 = vld [vmem:[%s1 + $0x98] sm:$0xff]
  %v118 = vld [vmem:[%s1 + $0xa0] sm:$0xff]
  %v119 = vld [vmem:[%s1 + $0xa8] sm:$0xff]
  %v120 = vld [vmem:[%s1 + $0xb0] sm:$0xff]
  %v121 = vld [vmem:[%s1 + $0xb8] sm:$0xff]
  %v122 = vld [vmem:[%s1 + $0xc0] sm:$0xff]
  %v123 = vld [vmem:[%s1 + $0xc8] sm:$0xff]
  %v124 = vld [vmem:[%s1 + $0xd0] sm:$0xff]
  %v125 = vld [vmem:[%s1 + $0xd8] sm:$0xff]
  %v126 = vld [vmem:[%s1 + $0xe0] sm:$0xff]
  %v127 = vld [vmem:[%s1 + $0xe8] sm:$0xff]
  %v128 = vld [vmem:[%s1 + $0xf0] sm:$0xff]
  %v129 = vld [vmem:[%s1 + $0xf8] sm:$0xff]
  %v130 = vld [vmem:[%s1 + $0x100] sm:$0xff]
  %v131 = vld [vmem:[%s1 + $0x108] sm:$0xff]
  %v132 = vld [vmem:[%s1 + $0x110] sm:$0xff]
  %v133 = vld [vmem:[%s1 + $0x118] sm:$0xff]
  %v134 = vld [vmem:[%s1 + $0x120] sm:$0xff]
  %v135 = vld [vmem:[%s1 + $0x128] sm:$0xff]
  %v136 = vld [vmem:[%s1 + $0x130] sm:$0xff]
  %v137 = vld [vmem:[%s1 + $0x138] sm:$0xff]
  %v138 = vld [vmem:[%s1 + $0x140] sm:$0xff]
  %v139 = vld [vmem:[%s1 + $0x148] sm:$0xff]
  %v140 = vld [vmem:[%s1 + $0x150] sm:$0xff]
  %v141 = vld [vmem:[%s1 + $0x158] sm:$0xff]
  %v142 = vld [vmem:[%s1 + $0x160] sm:$0xff]
  %v143 = vld [vmem:[%s1 + $0x168] sm:$0xff]
  %v144 = vld [vmem:[%s1 + $0x170] sm:$0xff]
  %v145 = vld [vmem:[%s1 + $0x178] sm:$0xff]
  %v146 = vld [vmem:[%s1 + $0x180] sm:$0xff]
  %v147 = vld [vmem:[%s1 + $0x188] sm:$0xff]
  %v148 = vld [vmem:[%s1 + $0x190] sm:$0xff]
  %v149 = vld [vmem:[%s1 + $0x198] sm:$0xff]
  %v150 = vld [vmem:[%s1 + $0x1a0] sm:$0xff]
  %v151 = vld [vmem:[%s1 + $0x1a8] sm:$0xff]
  %v152 = vld [vmem:[%s1 + $0x1b0] sm:$0xff]
  %v153 = vld [vmem:[%s1 + $0x1b8] sm:$0xff]
  %v154 = vld [vmem:[%s1 + $0x1c0] sm:$0xff]
  %v155 = vld [vmem:[%s1 + $0x1c8] sm:$0xff]
  %v156 = vld [vmem:[%s1 + $0x1d0] sm:$0xff]
  %v157 = vld [vmem:[%s1 + $0x1d8] sm:$0xff]
  %v158 = vld [vmem:[%s1 + $0x1e0] sm:$0xff]
  %v159 = vld [vmem:[%s1 + $0x1e8] sm:$0xff]
  %v160 = vld [vmem:[%s1 + $0x1f0] sm:$0xff]
  %v161 = vld [vmem:[%s1 + $0x1f8] sm:$0xff]
  %v162 = vld [vmem:[%s2] sm:$0x1]
  %v164 = vperm.slane %v162, 0
  %166 = vmatpush.msra.mxu0 %v113
  %167 = vmatpush.msra.mxu0 %v112
  %168 = vmatpush.msra.mxu0 %v111
  %169 = vmatpush.msra.mxu0 %v110
  %170 = vmatpush.msra.mxu0 %v109
  %171 = vmatpush.msra.mxu0 %v108
  %172 = vmatpush.msra.mxu0 %v107
  %173 = vmatpush.msra.mxu0 %v106
  %174 = vmatpush.msra.mxu0 %v105
  %175 = vmatpush.msra.mxu0 %v104
  %176 = vmatpush.msra.mxu0 %v103
  %177 = vmatpush.msra.mxu0 %v102
  %178 = vmatpush.msra.mxu0 %v101
  %179 = vmatpush.msra.mxu0 %v100
  %180 = vmatpush.msra.mxu0 %v99
  %181 = vmatpush.msra.mxu0 %v98
  %182 = vmatmul.f32.gmra.mxu0 %v14
  %v183 = vpop.f32.mrf.mxu0
  %v184 = vadd.f32 %v164, %v183
  %185 = vmatmul.f32.gmra.mxu0 %v18
  %v186 = vpop.f32.mrf.mxu0
  %v187 = vadd.f32 %v164, %v186
  %188 = vmatmul.f32.gmra.mxu0 %v22
  %v189 = vpop.f32.mrf.mxu0
  %v190 = vadd.f32 %v164, %v189
  %191 = vmatmul.f32.gmra.mxu0 %v26
  %v192 = vpop.f32.mrf.mxu0
  %v193 = vadd.f32 %v164, %v192
  %194 = vmatmul.f32.gmra.mxu0 %v30
  %v195 = vpop.f32.mrf.mxu0
  %v196 = vadd.f32 %v164, %v195
  %197 = vmatmul.f32.gmra.mxu0 %v34
  %v198 = vpop.f32.mrf.mxu0
  %v199 = vadd.f32 %v164, %v198
  %200 = vmatmul.f32.gmra.mxu0 %v38
  %v201 = vpop.f32.mrf.mxu0
  %v202 = vadd.f32 %v164, %v201
  %203 = vmatmul.f32.gmra.mxu0 %v42
  %v204 = vpop.f32.mrf.mxu0
  %v205 = vadd.f32 %v164, %v204
  %206 = vmatmul.f32.gmra.mxu0 %v46
  %v207 = vpop.f32.mrf.mxu0
  %v208 = vadd.f32 %v164, %v207
  %209 = vmatmul.f32.gmra.mxu0 %v50
  %v210 = vpop.f32.mrf.mxu0
  %v211 = vadd.f32 %v164, %v210
  %212 = vmatmul.f32.gmra.mxu0 %v54
  %v213 = vpop.f32.mrf.mxu0
  %v214 = vadd.f32 %v164, %v213
  %215 = vmatmul.f32.gmra.mxu0 %v58
  %v216 = vpop.f32.mrf.mxu0
  %v217 = vadd.f32 %v164, %v216
  %218 = vmatmul.f32.gmra.mxu0 %v62
  %v219 = vpop.f32.mrf.mxu0
  %v220 = vadd.f32 %v164, %v219
  %221 = vmatmul.f32.gmra.mxu0 %v66
  %v222 = vpop.f32.mrf.mxu0
  %v223 = vadd.f32 %v164, %v222
  %224 = vmatmul.f32.gmra.mxu0 %v70
  %v225 = vpop.f32.mrf.mxu0
  %v226 = vadd.f32 %v164, %v225
  %227 = vmatmul.f32.gmra.mxu0 %v74
  %v228 = vpop.f32.mrf.mxu0
  %v229 = vadd.f32 %v164, %v228
  %230 = vmatmul.f32.gmra.mxu0 %v78
  %v231 = vpop.f32.mrf.mxu0
  %v232 = vadd.f32 %v164, %v231
  %233 = vmatmul.f32.gmra.mxu0 %v82
  %v234 = vpop.f32.mrf.mxu0
  %v235 = vadd.f32 %v164, %v234
  %236 = vmatmul.f32.gmra.mxu0 %v86
  %v237 = vpop.f32.mrf.mxu0
  %v238 = vadd.f32 %v164, %v237
  %239 = vmatmul.f32.gmra.mxu0 %v90
  %v240 = vpop.f32.mrf.mxu0
  %v241 = vadd.f32 %v164, %v240
  %242 = vmatmul.f32.gmra.mxu0 %v94
  %v243 = vpop.f32.mrf.mxu0
  %v244 = vadd.f32 %v164, %v243
  %245 = vdwg.mxu0
  %246 = vmatpush.msra.mxu0 %v129
  %247 = vmatpush.msra.mxu0 %v128
  %248 = vmatpush.msra.mxu0 %v127
  %249 = vmatpush.msra.mxu0 %v126
  %250 = vmatpush.msra.mxu0 %v125
  %251 = vmatpush.msra.mxu0 %v124
  %252 = vmatpush.msra.mxu0 %v123
  %253 = vmatpush.msra.mxu0 %v122
  %254 = vmatpush.msra.mxu0 %v121
  %255 = vmatpush.msra.mxu0 %v120
  %256 = vmatpush.msra.mxu0 %v119
  %257 = vmatpush.msra.mxu0 %v118
  %258 = vmatpush.msra.mxu0 %v117
  %259 = vmatpush.msra.mxu0 %v116
  %260 = vmatpush.msra.mxu0 %v115
  %261 = vmatpush.msra.mxu0 %v114
  %262 = vmatmul.f32.gmra.mxu0 %v15
  %v263 = vpop.f32.mrf.mxu0
  %v264 = vadd.f32 %v184, %v263
  %265 = vmatmul.f32.gmra.mxu0 %v19
  %v266 = vpop.f32.mrf.mxu0
  %v267 = vadd.f32 %v187, %v266
  %268 = vmatmul.f32.gmra.mxu0 %v23
  %v269 = vpop.f32.mrf.mxu0
  %v270 = vadd.f32 %v190, %v269
  %271 = vmatmul.f32.gmra.mxu0 %v27
  %v272 = vpop.f32.mrf.mxu0
  %v273 = vadd.f32 %v193, %v272
  %274 = vmatmul.f32.gmra.mxu0 %v31
  %v275 = vpop.f32.mrf.mxu0
  %v276 = vadd.f32 %v196, %v275
  %277 = vmatmul.f32.gmra.mxu0 %v35
  %v278 = vpop.f32.mrf.mxu0
  %v279 = vadd.f32 %v199, %v278
  %280 = vmatmul.f32.gmra.mxu0 %v39
  %v281 = vpop.f32.mrf.mxu0
  %v282 = vadd.f32 %v202, %v281
  %283 = vmatmul.f32.gmra.mxu0 %v43
  %v284 = vpop.f32.mrf.mxu0
  %v285 = vadd.f32 %v205, %v284
  %286 = vmatmul.f32.gmra.mxu0 %v47
  %v287 = vpop.f32.mrf.mxu0
  %v288 = vadd.f32 %v208, %v287
  %289 = vmatmul.f32.gmra.mxu0 %v51
  %v290 = vpop.f32.mrf.mxu0
  %v291 = vadd.f32 %v211, %v290
  %292 = vmatmul.f32.gmra.mxu0 %v55
  %v293 = vpop.f32.mrf.mxu0
  %v294 = vadd.f32 %v214, %v293
  %295 = vmatmul.f32.gmra.mxu0 %v59
  %v296 = vpop.f32.mrf.mxu0
  %v297 = vadd.f32 %v217, %v296
  %298 = vmatmul.f32.gmra.mxu0 %v63
  %v299 = vpop.f32.mrf.mxu0
  %v300 = vadd.f32 %v220, %v299
  %301 = vmatmul.f32.gmra.mxu0 %v67
  %v302 = vpop.f32.mrf.mxu0
  %v303 = vadd.f32 %v223, %v302
  %304 = vmatmul.f32.gmra.mxu0 %v71
  %v305 = vpop.f32.mrf.mxu0
  %v306 = vadd.f32 %v226, %v305
  %307 = vmatmul.f32.gmra.mxu0 %v75
  %v308 = vpop.f32.mrf.mxu0
  %v309 = vadd.f32 %v229, %v308
  %310 = vmatmul.f32.gmra.mxu0 %v79
  %v311 = vpop.f32.mrf.mxu0
  %v312 = vadd.f32 %v232, %v311
  %313 = vmatmul.f32.gmra.mxu0 %v83
  %v314 = vpop.f32.mrf.mxu0
  %v315 = vadd.f32 %v235, %v314
  %316 = vmatmul.f32.gmra.mxu0 %v87
  %v317 = vpop.f32.mrf.mxu0
  %v318 = vadd.f32 %v238, %v317
  %319 = vmatmul.f32.gmra.mxu0 %v91
  %v320 = vpop.f32.mrf.mxu0
  %v321 = vadd.f32 %v241, %v320
  %322 = vmatmul.f32.gmra.mxu0 %v95
  %v323 = vpop.f32.mrf.mxu0
  %v324 = vadd.f32 %v244, %v323
  %325 = vdwg.mxu0
  %326 = vmatpush.msra.mxu0 %v145
  %327 = vmatpush.msra.mxu0 %v144
  %328 = vmatpush.msra.mxu0 %v143
  %329 = vmatpush.msra.mxu0 %v142
  %330 = vmatpush.msra.mxu0 %v141
  %331 = vmatpush.msra.mxu0 %v140
  %332 = vmatpush.msra.mxu0 %v139
  %333 = vmatpush.msra.mxu0 %v138
  %334 = vmatpush.msra.mxu0 %v137
  %335 = vmatpush.msra.mxu0 %v136
  %336 = vmatpush.msra.mxu0 %v135
  %337 = vmatpush.msra.mxu0 %v134
  %338 = vmatpush.msra.mxu0 %v133
  %339 = vmatpush.msra.mxu0 %v132
  %340 = vmatpush.msra.mxu0 %v131
  %341 = vmatpush.msra.mxu0 %v130
  %342 = vmatmul.f32.gmra.mxu0 %v16
  %v343 = vpop.f32.mrf.mxu0
  %v344 = vadd.f32 %v264, %v343
  %345 = vmatmul.f32.gmra.mxu0 %v20
  %v346 = vpop.f32.mrf.mxu0
  %v347 = vadd.f32 %v267, %v346
  %348 = vmatmul.f32.gmra.mxu0 %v24
  %v349 = vpop.f32.mrf.mxu0
  %v350 = vadd.f32 %v270, %v349
  %351 = vmatmul.f32.gmra.mxu0 %v28
  %v352 = vpop.f32.mrf.mxu0
  %v353 = vadd.f32 %v273, %v352
  %354 = vmatmul.f32.gmra.mxu0 %v32
  %v355 = vpop.f32.mrf.mxu0
  %v356 = vadd.f32 %v276, %v355
  %357 = vmatmul.f32.gmra.mxu0 %v36
  %v358 = vpop.f32.mrf.mxu0
  %v359 = vadd.f32 %v279, %v358
  %360 = vmatmul.f32.gmra.mxu0 %v40
  %v361 = vpop.f32.mrf.mxu0
  %v362 = vadd.f32 %v282, %v361
  %363 = vmatmul.f32.gmra.mxu0 %v44
  %v364 = vpop.f32.mrf.mxu0
  %v365 = vadd.f32 %v285, %v364
  %366 = vmatmul.f32.gmra.mxu0 %v48
  %v367 = vpop.f32.mrf.mxu0
  %v368 = vadd.f32 %v288, %v367
  %369 = vmatmul.f32.gmra.mxu0 %v52
  %v370 = vpop.f32.mrf.mxu0
  %v371 = vadd.f32 %v291, %v370
  %372 = vmatmul.f32.gmra.mxu0 %v56
  %v373 = vpop.f32.mrf.mxu0
  %v374 = vadd.f32 %v294, %v373
  %375 = vmatmul.f32.gmra.mxu0 %v60
  %v376 = vpop.f32.mrf.mxu0
  %v377 = vadd.f32 %v297, %v376
  %378 = vmatmul.f32.gmra.mxu0 %v64
  %v379 = vpop.f32.mrf.mxu0
  %v380 = vadd.f32 %v300, %v379
  %381 = vmatmul.f32.gmra.mxu0 %v68
  %v382 = vpop.f32.mrf.mxu0
  %v383 = vadd.f32 %v303, %v382
  %384 = vmatmul.f32.gmra.mxu0 %v72
  %v385 = vpop.f32.mrf.mxu0
  %v386 = vadd.f32 %v306, %v385
  %387 = vmatmul.f32.gmra.mxu0 %v76
  %v388 = vpop.f32.mrf.mxu0
  %v389 = vadd.f32 %v309, %v388
  %390 = vmatmul.f32.gmra.mxu0 %v80
  %v391 = vpop.f32.mrf.mxu0
  %v392 = vadd.f32 %v312, %v391
  %393 = vmatmul.f32.gmra.mxu0 %v84
  %v394 = vpop.f32.mrf.mxu0
  %v395 = vadd.f32 %v315, %v394
  %396 = vmatmul.f32.gmra.mxu0 %v88
  %v397 = vpop.f32.mrf.mxu0
  %v398 = vadd.f32 %v318, %v397
  %399 = vmatmul.f32.gmra.mxu0 %v92
  %v400 = vpop.f32.mrf.mxu0
  %v401 = vadd.f32 %v321, %v400
  %402 = vmatmul.f32.gmra.mxu0 %v96
  %v403 = vpop.f32.mrf.mxu0
  %v404 = vadd.f32 %v324, %v403
  %405 = vdwg.mxu0
  %406 = vmatpush.msra.mxu0 %v161
  %407 = vmatpush.msra.mxu0 %v160
  %408 = vmatpush.msra.mxu0 %v159
  %409 = vmatpush.msra.mxu0 %v158
  %410 = vmatpush.msra.mxu0 %v157
  %411 = vmatpush.msra.mxu0 %v156
  %412 = vmatpush.msra.mxu0 %v155
  %413 = vmatpush.msra.mxu0 %v154
  %414 = vmatpush.msra.mxu0 %v153
  %415 = vmatpush.msra.mxu0 %v152
  %416 = vmatpush.msra.mxu0 %v151
  %417 = vmatpush.msra.mxu0 %v150
  %418 = vmatpush.msra.mxu0 %v149
  %419 = vmatpush.msra.mxu0 %v148
  %420 = vmatpush.msra.mxu0 %v147
  %421 = vmatpush.msra.mxu0 %v146
  %422 = vmatmul.f32.gmra.mxu0 %v17
  %v423 = vpop.f32.mrf.mxu0
  %v424 = vadd.f32 %v344, %v423
  %425 = vmatmul.f32.gmra.mxu0 %v21
  %v426 = vpop.f32.mrf.mxu0
  %v427 = vadd.f32 %v347, %v426
  %428 = vmatmul.f32.gmra.mxu0 %v25
  %v429 = vpop.f32.mrf.mxu0
  %v430 = vadd.f32 %v350, %v429
  %431 = vmatmul.f32.gmra.mxu0 %v29
  %v432 = vpop.f32.mrf.mxu0
  %v433 = vadd.f32 %v353, %v432
  %434 = vmatmul.f32.gmra.mxu0 %v33
  %v435 = vpop.f32.mrf.mxu0
  %v436 = vadd.f32 %v356, %v435
  %437 = vmatmul.f32.gmra.mxu0 %v37
  %v438 = vpop.f32.mrf.mxu0
  %v439 = vadd.f32 %v359, %v438
  %440 = vmatmul.f32.gmra.mxu0 %v41
  %v441 = vpop.f32.mrf.mxu0
  %v442 = vadd.f32 %v362, %v441
  %443 = vmatmul.f32.gmra.mxu0 %v45
  %v444 = vpop.f32.mrf.mxu0
  %v445 = vadd.f32 %v365, %v444
  %446 = vmatmul.f32.gmra.mxu0 %v49
  %v447 = vpop.f32.mrf.mxu0
  %v448 = vadd.f32 %v368, %v447
  %449 = vmatmul.f32.gmra.mxu0 %v53
  %v450 = vpop.f32.mrf.mxu0
  %v451 = vadd.f32 %v371, %v450
  %452 = vmatmul.f32.gmra.mxu0 %v57
  %v453 = vpop.f32.mrf.mxu0
  %v454 = vadd.f32 %v374, %v453
  %455 = vmatmul.f32.gmra.mxu0 %v61
  %v456 = vpop.f32.mrf.mxu0
  %v457 = vadd.f32 %v377, %v456
  %458 = vmatmul.f32.gmra.mxu0 %v65
  %v459 = vpop.f32.mrf.mxu0
  %v460 = vadd.f32 %v380, %v459
  %461 = vmatmul.f32.gmra.mxu0 %v69
  %v462 = vpop.f32.mrf.mxu0
  %v463 = vadd.f32 %v383, %v462
  %464 = vmatmul.f32.gmra.mxu0 %v73
  %v465 = vpop.f32.mrf.mxu0
  %v466 = vadd.f32 %v386, %v465
  %467 = vmatmul.f32.gmra.mxu0 %v77
  %v468 = vpop.f32.mrf.mxu0
  %v469 = vadd.f32 %v389, %v468
  %470 = vmatmul.f32.gmra.mxu0 %v81
  %v471 = vpop.f32.mrf.mxu0
  %v472 = vadd.f32 %v392, %v471
  %473 = vmatmul.f32.gmra.mxu0 %v85
  %v474 = vpop.f32.mrf.mxu0
  %v475 = vadd.f32 %v395, %v474
  %476 = vmatmul.f32.gmra.mxu0 %v89
  %v477 = vpop.f32.mrf.mxu0
  %v478 = vadd.f32 %v398, %v477
  %479 = vmatmul.f32.gmra.mxu0 %v93
  %v480 = vpop.f32.mrf.mxu0
  %v481 = vadd.f32 %v401, %v480
  %482 = vmatmul.f32.gmra.mxu0 %v97
  %v483 = vpop.f32.mrf.mxu0
  %v484 = vadd.f32 %v404, %v483
  %485 = vdwg.mxu0
  %v486 = vmax.f32 %v424, 0.0
  %v487 = vmax.f32 %v427, 0.0
  %v488 = vmax.f32 %v430, 0.0
  %v489 = vmax.f32 %v433, 0.0
  %v490 = vmax.f32 %v436, 0.0
  %v491 = vmax.f32 %v439, 0.0
  %v492 = vmax.f32 %v442, 0.0
  %v493 = vmax.f32 %v445, 0.0
  %v494 = vmax.f32 %v448, 0.0
  %v495 = vmax.f32 %v451, 0.0
  %v496 = vmax.f32 %v454, 0.0
  %v497 = vmax.f32 %v457, 0.0
  %v498 = vmax.f32 %v460, 0.0
  %v499 = vmax.f32 %v463, 0.0
  %v500 = vmax.f32 %v466, 0.0
  %v501 = vmax.f32 %v469, 0.0
  %v502 = vmax.f32 %v472, 0.0
  %v503 = vmax.f32 %v475, 0.0
  %v504 = vmax.f32 %v478, 0.0
  %v505 = vmax.f32 %v481, 0.0
  %v506 = vmax.f32 %v484, 0.0
  %507 = vst [vmem:[%s3] sm:$0xff] %v486
  %508 = vst [vmem:[%s3 + $0x8] sm:$0xff] %v487
  %509 = vst [vmem:[%s3 + $0x10] sm:$0xff] %v488
  %510 = vst [vmem:[%s3 + $0x18] sm:$0xff] %v489
  %511 = vst [vmem:[%s3 + $0x20] sm:$0xff] %v490
  %512 = vst [vmem:[%s3 + $0x28] sm:$0xff] %v491
  %513 = vst [vmem:[%s3 + $0x30] sm:$0xff] %v492
  %514 = vst [vmem:[%s3 + $0x38] sm:$0xff] %v493
  %515 = vst [vmem:[%s3 + $0x40] sm:$0xff] %v494
  %516 = vst [vmem:[%s3 + $0x48] sm:$0xff] %v495
  %517 = vst [vmem:[%s3 + $0x50] sm:$0xff] %v496
  %518 = vst [vmem:[%s3 + $0x58] sm:$0xff] %v497
  %519 = vst [vmem:[%s3 + $0x60] sm:$0xff] %v498
  %520 = vst [vmem:[%s3 + $0x68] sm:$0xff] %v499
  %521 = vst [vmem:[%s3 + $0x70] sm:$0xff] %v500
  %522 = vst [vmem:[%s3 + $0x78] sm:$0xff] %v501
  %523 = vst [vmem:[%s3 + $0x80] sm:$0xff] %v502
  %524 = vst [vmem:[%s3 + $0x88] sm:$0xff] %v503
  %525 = vst [vmem:[%s3 + $0x90] sm:$0xff] %v504
  %526 = vst [vmem:[%s3 + $0x98] sm:$0xff] %v505
  %527 = vst [vmem:[%s3 + $0xa0] sm:$0xff] %v506
  // Predicated region
  $region14: #{conv_q_forward.5} parent=0 // pred_check
    _
  $region15: #{conv_q_forward.5} parent=0 // pred_check_branch
    %529 = sbr.rel (0) target = $region17
  $region16: #{conv_q_forward.5} parent=0 // pred_region
    _
  $region17: #{conv_q_forward.5} parent=0 // pred_fallthru
    _
  // Predicated region
  $region18: #{conv_q_forward.5} parent=0 // pred_check
    _
  $region19: #{conv_q_forward.5} parent=0 // pred_check_branch
    %531 = sbr.rel (0) target = $region21
  $region20: #{conv_q_forward.5} parent=0 // pred_region
    _
  $region21: #{conv_q_forward.5} parent=0 // pred_fallthru
    _

// kernel: conv_q_forward.6
$region0: #{conv_q_forward.6}
  #allocation0 [shape = 'u32[]', space=smem, size = 0x4, offset = 0x4, fixed_abs, tag = 'smem constant byte address 0x4 - core index']
  #allocation1 [shape = 'u32[72,128]{1,0:T(1,128)}', space=vmem, size = 0x9000, scoped, tag = 'internal scratch']
  %s0 = inlined_call_operand.vmem [shape: f32[104,576], index: 0, kind: input, shape index: {}]
  %s1 = inlined_call_operand.vmem [shape: f32[576,128], index: 1, kind: input, shape index: {}]
  %s2 = inlined_call_operand.vmem [shape: f32[1,128], index: 2, kind: input, shape index: {}]
  %s3 = inlined_call_operand.vmem [shape: f32[104,128], index: 3, kind: output, shape index: {}]
  %s4 = sld [smem:[#allocation0]]
  $region22: #{conv_q_forward.6} parent=0
    _
  %s6 = ssub.s32 1, %s4
  %s7 = scalar_select 0, %s6, %s4
  // Predicated region
  $region2: #{conv_q_forward.6} parent=0 // pred_check
    _
  $region3: #{conv_q_forward.6} parent=0 // pred_check_branch
    %9 = sbr.rel (0) target = $region5
  $region4: #{conv_q_forward.6} parent=0 // pred_region
    _
  $region5: #{conv_q_forward.6} parent=0 // pred_fallthru
    _
  // Predicated region
  $region6: #{conv_q_forward.6} parent=0 // pred_check
    _
  $region7: #{conv_q_forward.6} parent=0 // pred_check_branch
    %11 = sbr.rel (0) target = $region9
  $region8: #{conv_q_forward.6} parent=0 // pred_region
    _
  $region9: #{conv_q_forward.6} parent=0 // pred_fallthru
    _
  // Predicated region
  $region10: #{conv_q_forward.6} parent=0 // pred_check
    _
  $region11: #{conv_q_forward.6} parent=0 // pred_check_branch
    %13 = sbr.rel (0) target = $region13
  $region12: #{conv_q_forward.6} parent=0 // pred_region
    _
  $region13: #{conv_q_forward.6} parent=0 // pred_fallthru
    _
  %v14 = vld [vmem:[%s0] sm:$0xff]
  %v15 = vld [vmem:[%s0 + $0x8] sm:$0xff]
  %v16 = vld [vmem:[%s0 + $0x10] sm:$0xff]
  %v17 = vld [vmem:[%s0 + $0x18] sm:$0xff]
  %v18 = vld [vmem:[%s0 + $0x20] sm:$0xff]
  %v19 = vld [vmem:[%s0 + $0x28] sm:$0xff]
  %v20 = vld [vmem:[%s0 + $0x30] sm:$0xff]
  %v21 = vld [vmem:[%s0 + $0x38] sm:$0xff]
  %v22 = vld [vmem:[%s0 + $0x40] sm:$0xff]
  %v23 = vld [vmem:[%s0 + $0x48] sm:$0xff]
  %v24 = vld [vmem:[%s0 + $0x50] sm:$0xff]
  %v25 = vld [vmem:[%s0 + $0x58] sm:$0xff]
  %v26 = vld [vmem:[%s0 + $0x60] sm:$0xff]
  %v27 = vld [vmem:[%s0 + $0x68] sm:$0xff]
  %v28 = vld [vmem:[%s0 + $0x70] sm:$0xff]
  %v29 = vld [vmem:[%s0 + $0x78] sm:$0xff]
  %v30 = vld [vmem:[%s0 + $0x80] sm:$0xff]
  %v31 = vld [vmem:[%s0 + $0x88] sm:$0xff]
  %v32 = vld [vmem:[%s0 + $0x90] sm:$0xff]
  %v33 = vld [vmem:[%s0 + $0x98] sm:$0xff]
  %v34 = vld [vmem:[%s0 + $0xa0] sm:$0xff]
  %v35 = vld [vmem:[%s0 + $0xa8] sm:$0xff]
  %v36 = vld [vmem:[%s0 + $0xb0] sm:$0xff]
  %v37 = vld [vmem:[%s0 + $0xb8] sm:$0xff]
  %v38 = vld [vmem:[%s0 + $0xc0] sm:$0xff]
  %v39 = vld [vmem:[%s0 + $0xc8] sm:$0xff]
  %v40 = vld [vmem:[%s0 + $0xd0] sm:$0xff]
  %v41 = vld [vmem:[%s0 + $0xd8] sm:$0xff]
  %v42 = vld [vmem:[%s0 + $0xe0] sm:$0xff]
  %v43 = vld [vmem:[%s0 + $0xe8] sm:$0xff]
  %v44 = vld [vmem:[%s0 + $0xf0] sm:$0xff]
  %v45 = vld [vmem:[%s0 + $0xf8] sm:$0xff]
  %v46 = vld [vmem:[%s0 + $0x100] sm:$0xff]
  %v47 = vld [vmem:[%s0 + $0x108] sm:$0xff]
  %v48 = vld [vmem:[%s0 + $0x110] sm:$0xff]
  %v49 = vld [vmem:[%s0 + $0x118] sm:$0xff]
  %v50 = vld [vmem:[%s0 + $0x120] sm:$0xff]
  %v51 = vld [vmem:[%s0 + $0x128] sm:$0xff]
  %v52 = vld [vmem:[%s0 + $0x130] sm:$0xff]
  %v53 = vld [vmem:[%s0 + $0x138] sm:$0xff]
  %v54 = vld [vmem:[%s0 + $0x140] sm:$0xff]
  %v55 = vld [vmem:[%s0 + $0x148] sm:$0xff]
  %v56 = vld [vmem:[%s0 + $0x150] sm:$0xff]
  %v57 = vld [vmem:[%s0 + $0x158] sm:$0xff]
  %v58 = vld [vmem:[%s0 + $0x160] sm:$0xff]
  %v59 = vld [vmem:[%s0 + $0x168] sm:$0xff]
  %v60 = vld [vmem:[%s0 + $0x170] sm:$0xff]
  %v61 = vld [vmem:[%s0 + $0x178] sm:$0xff]
  %v62 = vld [vmem:[%s0 + $0x180] sm:$0xff]
  %v63 = vld [vmem:[%s0 + $0x188] sm:$0xff]
  %v64 = vld [vmem:[%s0 + $0x190] sm:$0xff]
  %v65 = vld [vmem:[%s0 + $0x198] sm:$0xff]
  %v66 = vld [vmem:[%s0 + $0x1a0] sm:$0xff]
  %v67 = vld [vmem:[%s0 + $0x1a8] sm:$0xff]
  %v68 = vld [vmem:[%s0 + $0x1b0] sm:$0xff]
  %v69 = vld [vmem:[%s0 + $0x1b8] sm:$0xff]
  %v70 = vld [vmem:[%s0 + $0x1c0] sm:$0xff]
  %v71 = vld [vmem:[%s0 + $0x1c8] sm:$0xff]
  %v72 = vld [vmem:[%s0 + $0x1d0] sm:$0xff]
  %v73 = vld [vmem:[%s0 + $0x1d8] sm:$0xff]
  %v74 = vld [vmem:[%s0 + $0x1e0] sm:$0xff]
  %v75 = vld [vmem:[%s0 + $0x1e8] sm:$0xff]
  %v76 = vld [vmem:[%s0 + $0x1f0] sm:$0xff]
  %v77 = vld [vmem:[%s0 + $0x1f8] sm:$0xff]
  %v78 = vld [vmem:[%s0 + $0x200] sm:$0xff]
  %v79 = vld [vmem:[%s1] sm:$0xff]
  %v80 = vld [vmem:[%s1 + $0x8] sm:$0xff]
  %v81 = vld [vmem:[%s1 + $0x10] sm:$0xff]
  %v82 = vld [vmem:[%s1 + $0x18] sm:$0xff]
  %v83 = vld [vmem:[%s1 + $0x20] sm:$0xff]
  %v84 = vld [vmem:[%s1 + $0x28] sm:$0xff]
  %v85 = vld [vmem:[%s1 + $0x30] sm:$0xff]
  %v86 = vld [vmem:[%s1 + $0x38] sm:$0xff]
  %v87 = vld [vmem:[%s1 + $0x40] sm:$0xff]
  %v88 = vld [vmem:[%s1 + $0x48] sm:$0xff]
  %v89 = vld [vmem:[%s1 + $0x50] sm:$0xff]
  %v90 = vld [vmem:[%s1 + $0x58] sm:$0xff]
  %v91 = vld [vmem:[%s1 + $0x60] sm:$0xff]
  %v92 = vld [vmem:[%s1 + $0x68] sm:$0xff]
  %v93 = vld [vmem:[%s1 + $0x70] sm:$0xff]
  %v94 = vld [vmem:[%s1 + $0x78] sm:$0xff]
  %v95 = vld [vmem:[%s1 + $0x80] sm:$0xff]
  %v96 = vld [vmem:[%s1 + $0x88] sm:$0xff]
  %v97 = vld [vmem:[%s1 + $0x90] sm:$0xff]
  %v98 = vld [vmem:[%s1 + $0x98] sm:$0xff]
  %v99 = vld [vmem:[%s1 + $0xa0] sm:$0xff]
  %v100 = vld [vmem:[%s1 + $0xa8] sm:$0xff]
  %v101 = vld [vmem:[%s1 + $0xb0] sm:$0xff]
  %v102 = vld [vmem:[%s1 + $0xb8] sm:$0xff]
  %v103 = vld [vmem:[%s1 + $0xc0] sm:$0xff]
  %v104 = vld [vmem:[%s1 + $0xc8] sm:$0xff]
  %v105 = vld [vmem:[%s1 + $0xd0] sm:$0xff]
  %v106 = vld [vmem:[%s1 + $0xd8] sm:$0xff]
  %v107 = vld [vmem:[%s1 + $0xe0] sm:$0xff]
  %v108 = vld [vmem:[%s1 + $0xe8] sm:$0xff]
  %v109 = vld [vmem:[%s1 + $0xf0] sm:$0xff]
  %v110 = vld [vmem:[%s1 + $0xf8] sm:$0xff]
  %v111 = vld [vmem:[%s1 + $0x100] sm:$0xff]
  %v112 = vld [vmem:[%s1 + $0x108] sm:$0xff]
  %v113 = vld [vmem:[%s1 + $0x110] sm:$0xff]
  %v114 = vld [vmem:[%s1 + $0x118] sm:$0xff]
  %v115 = vld [vmem:[%s1 + $0x120] sm:$0xff]
  %v116 = vld [vmem:[%s1 + $0x128] sm:$0xff]
  %v117 = vld [vmem:[%s1 + $0x130] sm:$0xff]
  %v118 = vld [vmem:[%s1 + $0x138] sm:$0xff]
  %v119 = vld [vmem:[%s1 + $0x140] sm:$0xff]
  %v120 = vld [vmem:[%s1 + $0x148] sm:$0xff]
  %v121 = vld [vmem:[%s1 + $0x150] sm:$0xff]
  %v122 = vld [vmem:[%s1 + $0x158] sm:$0xff]
  %v123 = vld [vmem:[%s1 + $0x160] sm:$0xff]
  %v124 = vld [vmem:[%s1 + $0x168] sm:$0xff]
  %v125 = vld [vmem:[%s1 + $0x170] sm:$0xff]
  %v126 = vld [vmem:[%s1 + $0x178] sm:$0xff]
  %v127 = vld [vmem:[%s1 + $0x180] sm:$0xff]
  %v128 = vld [vmem:[%s1 + $0x188] sm:$0xff]
  %v129 = vld [vmem:[%s1 + $0x190] sm:$0xff]
  %v130 = vld [vmem:[%s1 + $0x198] sm:$0xff]
  %v131 = vld [vmem:[%s1 + $0x1a0] sm:$0xff]
  %v132 = vld [vmem:[%s1 + $0x1a8] sm:$0xff]
  %v133 = vld [vmem:[%s1 + $0x1b0] sm:$0xff]
  %v134 = vld [vmem:[%s1 + $0x1b8] sm:$0xff]
  %v135 = vld [vmem:[%s1 + $0x1c0] sm:$0xff]
  %v136 = vld [vmem:[%s1 + $0x1c8] sm:$0xff]
  %v137 = vld [vmem:[%s1 + $0x1d0] sm:$0xff]
  %v138 = vld [vmem:[%s1 + $0x1d8] sm:$0xff]
  %v139 = vld [vmem:[%s1 + $0x1e0] sm:$0xff]
  %v140 = vld [vmem:[%s1 + $0x1e8] sm:$0xff]
  %v141 = vld [vmem:[%s1 + $0x1f0] sm:$0xff]
  %v142 = vld [vmem:[%s1 + $0x1f8] sm:$0xff]
  %v143 = vld [vmem:[%s1 + $0x200] sm:$0xff]
  %v144 = vld [vmem:[%s1 + $0x208] sm:$0xff]
  %v145 = vld [vmem:[%s1 + $0x210] sm:$0xff]
  %v146 = vld [vmem:[%s1 + $0x218] sm:$0xff]
  %v147 = vld [vmem:[%s1 + $0x220] sm:$0xff]
  %v148 = vld [vmem:[%s1 + $0x228] sm:$0xff]
  %v149 = vld [vmem:[%s1 + $0x230] sm:$0xff]
  %v150 = vld [vmem:[%s1 + $0x238] sm:$0xff]
  %v151 = vld [vmem:[%s2] sm:$0x1]
  %v153 = vperm.slane %v151, 0
  %vm155 = vcmask 523264
  %v157 = vsel %vm155, %v18, 0
  %v160 = vsel %vm155, %v23, 0
  %v163 = vsel %vm155, %v28, 0
  %v166 = vsel %vm155, %v33, 0
  %v169 = vsel %vm155, %v38, 0
  %v172 = vsel %vm155, %v43, 0
  %v175 = vsel %vm155, %v48, 0
  %v178 = vsel %vm155, %v53, 0
  %v181 = vsel %vm155, %v58, 0
  %v184 = vsel %vm155, %v63, 0
  %v187 = vsel %vm155, %v68, 0
  %v190 = vsel %vm155, %v73, 0
  %v193 = vsel %vm155, %v78, 0
  %195 = vmatpush.msra.mxu0 %v94
  %196 = vmatpush.msra.mxu0 %v93
  %197 = vmatpush.msra.mxu0 %v92
  %198 = vmatpush.msra.mxu0 %v91
  %199 = vmatpush.msra.mxu0 %v90
  %200 = vmatpush.msra.mxu0 %v89
  %201 = vmatpush.msra.mxu0 %v88
  %202 = vmatpush.msra.mxu0 %v87
  %203 = vmatpush.msra.mxu0 %v86
  %204 = vmatpush.msra.mxu0 %v85
  %205 = vmatpush.msra.mxu0 %v84
  %206 = vmatpush.msra.mxu0 %v83
  %207 = vmatpush.msra.mxu0 %v82
  %208 = vmatpush.msra.mxu0 %v81
  %209 = vmatpush.msra.mxu0 %v80
  %210 = vmatpush.msra.mxu0 %v79
  %211 = vmatmul.f32.gmra.mxu0 %v14
  %v212 = vpop.f32.mrf.mxu0
  %v213 = vadd.f32 %v153, %v212
  %214 = vmatmul.f32.gmra.mxu0 %v19
  %v215 = vpop.f32.mrf.mxu0
  %v216 = vadd.f32 %v153, %v215
  %217 = vmatmul.f32.gmra.mxu0 %v24
  %v218 = vpop.f32.mrf.mxu0
  %v219 = vadd.f32 %v153, %v218
  %220 = vmatmul.f32.gmra.mxu0 %v29
  %v221 = vpop.f32.mrf.mxu0
  %v222 = vadd.f32 %v153, %v221
  %223 = vmatmul.f32.gmra.mxu0 %v34
  %v224 = vpop.f32.mrf.mxu0
  %v225 = vadd.f32 %v153, %v224
  %226 = vmatmul.f32.gmra.mxu0 %v39
  %v227 = vpop.f32.mrf.mxu0
  %v228 = vadd.f32 %v153, %v227
  %229 = vmatmul.f32.gmra.mxu0 %v44
  %v230 = vpop.f32.mrf.mxu0
  %v231 = vadd.f32 %v153, %v230
  %232 = vmatmul.f32.gmra.mxu0 %v49
  %v233 = vpop.f32.mrf.mxu0
  %v234 = vadd.f32 %v153, %v233
  %235 = vmatmul.f32.gmra.mxu0 %v54
  %v236 = vpop.f32.mrf.mxu0
  %v237 = vadd.f32 %v153, %v236
  %238 = vmatmul.f32.gmra.mxu0 %v59
  %v239 = vpop.f32.mrf.mxu0
  %v240 = vadd.f32 %v153, %v239
  %241 = vmatmul.f32.gmra.mxu0 %v64
  %v242 = vpop.f32.mrf.mxu0
  %v243 = vadd.f32 %v153, %v242
  %244 = vmatmul.f32.gmra.mxu0 %v69
  %v245 = vpop.f32.mrf.mxu0
  %v246 = vadd.f32 %v153, %v245
  %247 = vmatmul.f32.gmra.mxu0 %v74
  %v248 = vpop.f32.mrf.mxu0
  %v249 = vadd.f32 %v153, %v248
  %250 = vdwg.mxu0
  %251 = vmatpush.msra.mxu0 %v110
  %252 = vmatpush.msra.mxu0 %v109
  %253 = vmatpush.msra.mxu0 %v108
  %254 = vmatpush.msra.mxu0 %v107
  %255 = vmatpush.msra.mxu0 %v106
  %256 = vmatpush.msra.mxu0 %v105
  %257 = vmatpush.msra.mxu0 %v104
  %258 = vmatpush.msra.mxu0 %v103
  %259 = vmatpush.msra.mxu0 %v102
  %260 = vmatpush.msra.mxu0 %v101
  %261 = vmatpush.msra.mxu0 %v100
  %262 = vmatpush.msra.mxu0 %v99
  %263 = vmatpush.msra.mxu0 %v98
  %264 = vmatpush.msra.mxu0 %v97
  %265 = vmatpush.msra.mxu0 %v96
  %266 = vmatpush.msra.mxu0 %v95
  %267 = vmatmul.f32.gmra.mxu0 %v15
  %v268 = vpop.f32.mrf.mxu0
  %v269 = vadd.f32 %v213, %v268
  %270 = vmatmul.f32.gmra.mxu0 %v20
  %v271 = vpop.f32.mrf.mxu0
  %v272 = vadd.f32 %v216, %v271
  %273 = vmatmul.f32.gmra.mxu0 %v25
  %v274 = vpop.f32.mrf.mxu0
  %v275 = vadd.f32 %v219, %v274
  %276 = vmatmul.f32.gmra.mxu0 %v30
  %v277 = vpop.f32.mrf.mxu0
  %v278 = vadd.f32 %v222, %v277
  %279 = vmatmul.f32.gmra.mxu0 %v35
  %v280 = vpop.f32.mrf.mxu0
  %v281 = vadd.f32 %v225, %v280
  %282 = vmatmul.f32.gmra.mxu0 %v40
  %v283 = vpop.f32.mrf.mxu0
  %v284 = vadd.f32 %v228, %v283
  %285 = vmatmul.f32.gmra.mxu0 %v45
  %v286 = vpop.f32.mrf.mxu0
  %v287 = vadd.f32 %v231, %v286
  %288 = vmatmul.f32.gmra.mxu0 %v50
  %v289 = vpop.f32.mrf.mxu0
  %v290 = vadd.f32 %v234, %v289
  %291 = vmatmul.f32.gmra.mxu0 %v55
  %v292 = vpop.f32.mrf.mxu0
  %v293 = vadd.f32 %v237, %v292
  %294 = vmatmul.f32.gmra.mxu0 %v60
  %v295 = vpop.f32.mrf.mxu0
  %v296 = vadd.f32 %v240, %v295
  %297 = vmatmul.f32.gmra.mxu0 %v65
  %v298 = vpop.f32.mrf.mxu0
  %v299 = vadd.f32 %v243, %v298
  %300 = vmatmul.f32.gmra.mxu0 %v70
  %v301 = vpop.f32.mrf.mxu0
  %v302 = vadd.f32 %v246, %v301
  %303 = vmatmul.f32.gmra.mxu0 %v75
  %v304 = vpop.f32.mrf.mxu0
  %v305 = vadd.f32 %v249, %v304
  %306 = vdwg.mxu0
  %307 = vmatpush.msra.mxu0 %v126
  %308 = vmatpush.msra.mxu0 %v125
  %309 = vmatpush.msra.mxu0 %v124
  %310 = vmatpush.msra.mxu0 %v123
  %311 = vmatpush.msra.mxu0 %v122
  %312 = vmatpush.msra.mxu0 %v121
  %313 = vmatpush.msra.mxu0 %v120
  %314 = vmatpush.msra.mxu0 %v119
  %315 = vmatpush.msra.mxu0 %v118
  %316 = vmatpush.msra.mxu0 %v117
  %317 = vmatpush.msra.mxu0 %v116
  %318 = vmatpush.msra.mxu0 %v115
  %319 = vmatpush.msra.mxu0 %v114
  %320 = vmatpush.msra.mxu0 %v113
  %321 = vmatpush.msra.mxu0 %v112
  %322 = vmatpush.msra.mxu0 %v111
  %323 = vmatmul.f32.gmra.mxu0 %v16
  %v324 = vpop.f32.mrf.mxu0
  %v325 = vadd.f32 %v269, %v324
  %326 = vmatmul.f32.gmra.mxu0 %v21
  %v327 = vpop.f32.mrf.mxu0
  %v328 = vadd.f32 %v272, %v327
  %329 = vmatmul.f32.gmra.mxu0 %v26
  %v330 = vpop.f32.mrf.mxu0
  %v331 = vadd.f32 %v275, %v330
  %332 = vmatmul.f32.gmra.mxu0 %v31
  %v333 = vpop.f32.mrf.mxu0
  %v334 = vadd.f32 %v278, %v333
  %335 = vmatmul.f32.gmra.mxu0 %v36
  %v336 = vpop.f32.mrf.mxu0
  %v337 = vadd.f32 %v281, %v336
  %338 = vmatmul.f32.gmra.mxu0 %v41
  %v339 = vpop.f32.mrf.mxu0
  %v340 = vadd.f32 %v284, %v339
  %341 = vmatmul.f32.gmra.mxu0 %v46
  %v342 = vpop.f32.mrf.mxu0
  %v343 = vadd.f32 %v287, %v342
  %344 = vmatmul.f32.gmra.mxu0 %v51
  %v345 = vpop.f32.mrf.mxu0
  %v346 = vadd.f32 %v290, %v345
  %347 = vmatmul.f32.gmra.mxu0 %v56
  %v348 = vpop.f32.mrf.mxu0
  %v349 = vadd.f32 %v293, %v348
  %350 = vmatmul.f32.gmra.mxu0 %v61
  %v351 = vpop.f32.mrf.mxu0
  %v352 = vadd.f32 %v296, %v351
  %353 = vmatmul.f32.gmra.mxu0 %v66
  %v354 = vpop.f32.mrf.mxu0
  %v355 = vadd.f32 %v299, %v354
  %356 = vmatmul.f32.gmra.mxu0 %v71
  %v357 = vpop.f32.mrf.mxu0
  %v358 = vadd.f32 %v302, %v357
  %359 = vmatmul.f32.gmra.mxu0 %v76
  %v360 = vpop.f32.mrf.mxu0
  %v361 = vadd.f32 %v305, %v360
  %362 = vdwg.mxu0
  %363 = vmatpush.msra.mxu0 %v142
  %364 = vmatpush.msra.mxu0 %v141
  %365 = vmatpush.msra.mxu0 %v140
  %366 = vmatpush.msra.mxu0 %v139
  %367 = vmatpush.msra.mxu0 %v138
  %368 = vmatpush.msra.mxu0 %v137
  %369 = vmatpush.msra.mxu0 %v136
  %370 = vmatpush.msra.mxu0 %v135
  %371 = vmatpush.msra.mxu0 %v134
  %372 = vmatpush.msra.mxu0 %v133
  %373 = vmatpush.msra.mxu0 %v132
  %374 = vmatpush.msra.mxu0 %v131
  %375 = vmatpush.msra.mxu0 %v130
  %376 = vmatpush.msra.mxu0 %v129
  %377 = vmatpush.msra.mxu0 %v128
  %378 = vmatpush.msra.mxu0 %v127
  %379 = vmatmul.f32.gmra.mxu0 %v17
  %v380 = vpop.f32.mrf.mxu0
  %v381 = vadd.f32 %v325, %v380
  %382 = vmatmul.f32.gmra.mxu0 %v22
  %v383 = vpop.f32.mrf.mxu0
  %v384 = vadd.f32 %v328, %v383
  %385 = vmatmul.f32.gmra.mxu0 %v27
  %v386 = vpop.f32.mrf.mxu0
  %v387 = vadd.f32 %v331, %v386
  %388 = vmatmul.f32.gmra.mxu0 %v32
  %v389 = vpop.f32.mrf.mxu0
  %v390 = vadd.f32 %v334, %v389
  %391 = vmatmul.f32.gmra.mxu0 %v37
  %v392 = vpop.f32.mrf.mxu0
  %v393 = vadd.f32 %v337, %v392
  %394 = vmatmul.f32.gmra.mxu0 %v42
  %v395 = vpop.f32.mrf.mxu0
  %v396 = vadd.f32 %v340, %v395
  %397 = vmatmul.f32.gmra.mxu0 %v47
  %v398 = vpop.f32.mrf.mxu0
  %v399 = vadd.f32 %v343, %v398
  %400 = vmatmul.f32.gmra.mxu0 %v52
  %v401 = vpop.f32.mrf.mxu0
  %v402 = vadd.f32 %v346, %v401
  %403 = vmatmul.f32.gmra.mxu0 %v57
  %v404 = vpop.f32.mrf.mxu0
  %v405 = vadd.f32 %v349, %v404
  %406 = vmatmul.f32.gmra.mxu0 %v62
  %v407 = vpop.f32.mrf.mxu0
  %v408 = vadd.f32 %v352, %v407
  %409 = vmatmul.f32.gmra.mxu0 %v67
  %v410 = vpop.f32.mrf.mxu0
  %v411 = vadd.f32 %v355, %v410
  %412 = vmatmul.f32.gmra.mxu0 %v72
  %v413 = vpop.f32.mrf.mxu0
  %v414 = vadd.f32 %v358, %v413
  %415 = vmatmul.f32.gmra.mxu0 %v77
  %v416 = vpop.f32.mrf.mxu0
  %v417 = vadd.f32 %v361, %v416
  %418 = vdwg.mxu0
  %419 = vmatpush.msra.mxu0 0.0
  %420 = vmatpush.msra.mxu0 0.0
  %421 = vmatpush.msra.mxu0 0.0
  %422 = vmatpush.msra.mxu0 0.0
  %423 = vmatpush.msra.mxu0 0.0
  %424 = vmatpush.msra.mxu0 0.0
  %425 = vmatpush.msra.mxu0 0.0
  %426 = vmatpush.msra.mxu0 0.0
  %427 = vmatpush.msra.mxu0 %v150
  %428 = vmatpush.msra.mxu0 %v149
  %429 = vmatpush.msra.mxu0 %v148
  %430 = vmatpush.msra.mxu0 %v147
  %431 = vmatpush.msra.mxu0 %v146
  %432 = vmatpush.msra.mxu0 %v145
  %433 = vmatpush.msra.mxu0 %v144
  %434 = vmatpush.msra.mxu0 %v143
  %435 = vmatmul.f32.gmra.mxu0 %v157
  %v436 = vpop.f32.mrf.mxu0
  %v437 = vadd.f32 %v381, %v436
  %438 = vmatmul.f32.gmra.mxu0 %v160
  %v439 = vpop.f32.mrf.mxu0
  %v440 = vadd.f32 %v384, %v439
  %441 = vmatmul.f32.gmra.mxu0 %v163
  %v442 = vpop.f32.mrf.mxu0
  %v443 = vadd.f32 %v387, %v442
  %444 = vmatmul.f32.gmra.mxu0 %v166
  %v445 = vpop.f32.mrf.mxu0
  %v446 = vadd.f32 %v390, %v445
  %447 = vmatmul.f32.gmra.mxu0 %v169
  %v448 = vpop.f32.mrf.mxu0
  %v449 = vadd.f32 %v393, %v448
  %450 = vmatmul.f32.gmra.mxu0 %v172
  %v451 = vpop.f32.mrf.mxu0
  %v452 = vadd.f32 %v396, %v451
  %453 = vmatmul.f32.gmra.mxu0 %v175
  %v454 = vpop.f32.mrf.mxu0
  %v455 = vadd.f32 %v399, %v454
  %456 = vmatmul.f32.gmra.mxu0 %v178
  %v457 = vpop.f32.mrf.mxu0
  %v458 = vadd.f32 %v402, %v457
  %459 = vmatmul.f32.gmra.mxu0 %v181
  %v460 = vpop.f32.mrf.mxu0
  %v461 = vadd.f32 %v405, %v460
  %462 = vmatmul.f32.gmra.mxu0 %v184
  %v463 = vpop.f32.mrf.mxu0
  %v464 = vadd.f32 %v408, %v463
  %465 = vmatmul.f32.gmra.mxu0 %v187
  %v466 = vpop.f32.mrf.mxu0
  %v467 = vadd.f32 %v411, %v466
  %468 = vmatmul.f32.gmra.mxu0 %v190
  %v469 = vpop.f32.mrf.mxu0
  %v470 = vadd.f32 %v414, %v469
  %471 = vmatmul.f32.gmra.mxu0 %v193
  %v472 = vpop.f32.mrf.mxu0
  %v473 = vadd.f32 %v417, %v472
  %474 = vdwg.mxu0
  %v475 = vmax.f32 %v437, 0.0
  %v476 = vmax.f32 %v440, 0.0
  %v477 = vmax.f32 %v443, 0.0
  %v478 = vmax.f32 %v446, 0.0
  %v479 = vmax.f32 %v449, 0.0
  %v480 = vmax.f32 %v452, 0.0
  %v481 = vmax.f32 %v455, 0.0
  %v482 = vmax.f32 %v458, 0.0
  %v483 = vmax.f32 %v461, 0.0
  %v484 = vmax.f32 %v464, 0.0
  %v485 = vmax.f32 %v467, 0.0
  %v486 = vmax.f32 %v470, 0.0
  %v487 = vmax.f32 %v473, 0.0
  %488 = vst [vmem:[%s3] sm:$0xff] %v475
  %489 = vst [vmem:[%s3 + $0x8] sm:$0xff] %v476
  %490 = vst [vmem:[%s3 + $0x10] sm:$0xff] %v477
  %491 = vst [vmem:[%s3 + $0x18] sm:$0xff] %v478
  %492 = vst [vmem:[%s3 + $0x20] sm:$0xff] %v479
  %493 = vst [vmem:[%s3 + $0x28] sm:$0xff] %v480
  %494 = vst [vmem:[%s3 + $0x30] sm:$0xff] %v481
  %495 = vst [vmem:[%s3 + $0x38] sm:$0xff] %v482
  %496 = vst [vmem:[%s3 + $0x40] sm:$0xff] %v483
  %497 = vst [vmem:[%s3 + $0x48] sm:$0xff] %v484
  %498 = vst [vmem:[%s3 + $0x50] sm:$0xff] %v485
  %499 = vst [vmem:[%s3 + $0x58] sm:$0xff] %v486
  %500 = vst [vmem:[%s3 + $0x60] sm:$0xff] %v487
  // Predicated region
  $region14: #{conv_q_forward.6} parent=0 // pred_check
    _
  $region15: #{conv_q_forward.6} parent=0 // pred_check_branch
    %502 = sbr.rel (0) target = $region17
  $region16: #{conv_q_forward.6} parent=0 // pred_region
    _
  $region17: #{conv_q_forward.6} parent=0 // pred_fallthru
    _
  // Predicated region
  $region18: #{conv_q_forward.6} parent=0 // pred_check
    _
  $region19: #{conv_q_forward.6} parent=0 // pred_check_branch
    %504 = sbr.rel (0) target = $region21
  $region20: #{conv_q_forward.6} parent=0 // pred_region
    _
  $region21: #{conv_q_forward.6} parent=0 // pred_fallthru
    _

// kernel: conv_q_forward.7
$region0: #{conv_q_forward.7}
  #allocation0 [shape = 'u32[]', space=smem, size = 0x4, offset = 0x4, fixed_abs, tag = 'smem constant byte address 0x4 - core index']
  #allocation1 [shape = 'u32[72,128]{1,0:T(1,128)}', space=vmem, size = 0x9000, scoped, tag = 'internal scratch']
  %s0 = inlined_call_operand.vmem [shape: f32[8,3136], index: 0, kind: input, shape index: {}]
  %s1 = inlined_call_operand.vmem [shape: f32[3136,512], index: 1, kind: input, shape index: {}]
  %s2 = inlined_call_operand.vmem [shape: f32[1,512], index: 2, kind: input, shape index: {}]
  %s3 = inlined_call_operand.vmem [shape: f32[512,6], index: 3, kind: input, shape index: {}]
  %s4 = inlined_call_operand.vmem [shape: f32[1,6], index: 4, kind: input, shape index: {}]
  %s5 = inlined_call_operand.vmem [shape: f32[3136,512], index: 5, kind: input, shape index: {}]
  %s6 = inlined_call_operand.vmem [shape: f32[1,512], index: 6, kind: input, shape index: {}]
  %s7 = inlined_call_operand.vmem [shape: f32[512,6], index: 7, kind: input, shape index: {}]
  %s8 = inlined_call_operand.vmem [shape: f32[1,6], index: 8, kind: input, shape index: {}]
  %s9 = inlined_call_operand.vmem [shape: f32[8,6], index: 9, kind: output, shape index: {0}]
  %s10 = inlined_call_operand.vmem [shape: f32[8,6], index: 10, kind: output, shape index: {1}]
  %s11 = inlined_call_operand.vmem [shape: f32[8,6], index: 11, kind: output, shape index: {2}]
  %12 = xla_tuple %s9, %s10, %s11
  %s13 = sld [smem:[#allocation0]]
  $region62: #{conv_q_forward.7} parent=0
    _
  %s15 = ssub.s32 1, %s13
  %s16 = scalar_select 0, %s15, %s13
  // Predicated region
  $region2: #{conv_q_forward.7} parent=0 // pred_check
    _
  $region3: #{conv_q_forward.7} parent=0 // pred_check_branch
    %18 = sbr.rel (0) target = $region5
  $region4: #{conv_q_forward.7} parent=0 // pred_region
    _
  $region5: #{conv_q_forward.7} parent=0 // pred_fallthru
    _
  // Predicated region
  $region6: #{conv_q_forward.7} parent=0 // pred_check
    _
  $region7: #{conv_q_forward.7} parent=0 // pred_check_branch
    %20 = sbr.rel (0) target = $region9
  $region8: #{conv_q_forward.7} parent=0 // pred_region
    _
  $region9: #{conv_q_forward.7} parent=0 // pred_fallthru
    _
  // Predicated region
  $region10: #{conv_q_forward.7} parent=0 // pred_check
    _
  $region11: #{conv_q_forward.7} parent=0 // pred_check_branch
    %22 = sbr.rel (0) target = $region13
  $region12: #{conv_q_forward.7} parent=0 // pred_region
    _
  $region13: #{conv_q_forward.7} parent=0 // pred_fallthru
    _
  // Predicated region
  $region14: #{conv_q_forward.7} parent=0 // pred_check
    _
  $region15: #{conv_q_forward.7} parent=0 // pred_check_branch
    %24 = sbr.rel (0) target = $region17
  $region16: #{conv_q_forward.7} parent=0 // pred_region
    _
  $region17: #{conv_q_forward.7} parent=0 // pred_fallthru
    _
  // Predicated region
  $region18: #{conv_q_forward.7} parent=0 // pred_check
    _
  $region19: #{conv_q_forward.7} parent=0 // pred_check_branch
    %26 = sbr.rel (0) target = $region21
  $region20: #{conv_q_forward.7} parent=0 // pred_region
    _
  $region21: #{conv_q_forward.7} parent=0 // pred_fallthru
    _
  // Predicated region
  $region22: #{conv_q_forward.7} parent=0 // pred_check
    _
  $region23: #{conv_q_forward.7} parent=0 // pred_check_branch
    %28 = sbr.rel (0) target = $region25
  $region24: #{conv_q_forward.7} parent=0 // pred_region
    _
  $region25: #{conv_q_forward.7} parent=0 // pred_fallthru
    _
  // Predicated region
  $region26: #{conv_q_forward.7} parent=0 // pred_check
    _
  $region27: #{conv_q_forward.7} parent=0 // pred_check_branch
    %30 = sbr.rel (0) target = $region29
  $region28: #{conv_q_forward.7} parent=0 // pred_region
    _
  $region29: #{conv_q_forward.7} parent=0 // pred_fallthru
    _
  // Predicated region
  $region30: #{conv_q_forward.7} parent=0 // pred_check
    _
  $region31: #{conv_q_forward.7} parent=0 // pred_check_branch
    %32 = sbr.rel (0) target = $region33
  $region32: #{conv_q_forward.7} parent=0 // pred_region
    _
  $region33: #{conv_q_forward.7} parent=0 // pred_fallthru
    _
  // Predicated region
  $region34: #{conv_q_forward.7} parent=0 // pred_check
    _
  $region35: #{conv_q_forward.7} parent=0 // pred_check_branch
    %34 = sbr.rel (0) target = $region37
  $region36: #{conv_q_forward.7} parent=0 // pred_region
    _
  $region37: #{conv_q_forward.7} parent=0 // pred_fallthru
    _
  %v35 = vld [vmem:[%s0] sm:$0xff]
  %v36 = vld [vmem:[%s0 + $0x8] sm:$0xff]
  %v37 = vld [vmem:[%s0 + $0x10] sm:$0xff]
  %v38 = vld [vmem:[%s0 + $0x18] sm:$0xff]
  %v39 = vld [vmem:[%s0 + $0x20] sm:$0xff]
  %v40 = vld [vmem:[%s0 + $0x28] sm:$0xff]
  %v41 = vld [vmem:[%s0 + $0x30] sm:$0xff]
  %v42 = vld [vmem:[%s0 + $0x38] sm:$0xff]
  %v43 = vld [vmem:[%s0 + $0x40] sm:$0xff]
  %v44 = vld [vmem:[%s0 + $0x48] sm:$0xff]
  %v45 = vld [vmem:[%s0 + $0x50] sm:$0xff]
  %v46 = vld [vmem:[%s0 + $0x58] sm:$0xff]
  %v47 = vld [vmem:[%s0 + $0x60] sm:$0xff]
  %v48 = vld [vmem:[%s0 + $0x68] sm:$0xff]
  %v49 = vld [vmem:[%s0 + $0x70] sm:$0xff]
  %v50 = vld [vmem:[%s0 + $0x78] sm:$0xff]
  %v51 = vld [vmem:[%s0 + $0x80] sm:$0xff]
  %v52 = vld [vmem:[%s0 + $0x88] sm:$0xff]
  %v53 = vld [vmem:[%s0 + $0x90] sm:$0xff]
  %v54 = vld [vmem:[%s0 + $0x98] sm:$0xff]
  %v55 = vld [vmem:[%s0 + $0xa0] sm:$0xff]
  %v56 = vld [vmem:[%s0 + $0xa8] sm:$0xff]
  %v57 = vld [vmem:[%s0 + $0xb0] sm:$0xff]
  %v58 = vld [vmem:[%s0 + $0xb8] sm:$0xff]
  %v59 = vld [vmem:[%s0 + $0xc0] sm:$0xff]
  %v60 = vld [vmem:[%s1] sm:$0xff]
  %v61 = vld [vmem:[%s1 + $0x8] sm:$0xff]
  %v62 = vld [vmem:[%s1 + $0x10] sm:$0xff]
  %v63 = vld [vmem:[%s1 + $0x18] sm:$0xff]
  %v64 = vld [vmem:[%s1 + $0x20] sm:$0xff]
  %v65 = vld [vmem:[%s1 + $0x28] sm:$0xff]
  %v66 = vld [vmem:[%s1 + $0x30] sm:$0xff]
  %v67 = vld [vmem:[%s1 + $0x38] sm:$0xff]
  %v68 = vld [vmem:[%s1 + $0x40] sm:$0xff]
  %v69 = vld [vmem:[%s1 + $0x48] sm:$0xff]
  %v70 = vld [vmem:[%s1 + $0x50] sm:$0xff]
  %v71 = vld [vmem:[%s1 + $0x58] sm:$0xff]
  %v72 = vld [vmem:[%s1 + $0x60] sm:$0xff]
  %v73 = vld [vmem:[%s1 + $0x68] sm:$0xff]
  %v74 = vld [vmem:[%s1 + $0x70] sm:$0xff]
  %v75 = vld [vmem:[%s1 + $0x78] sm:$0xff]
  %v76 = vld [vmem:[%s1 + $0x80] sm:$0xff]
  %v77 = vld [vmem:[%s1 + $0x88] sm:$0xff]
  %v78 = vld [vmem:[%s1 + $0x90] sm:$0xff]
  %v79 = vld [vmem:[%s1 + $0x98] sm:$0xff]
  %v80 = vld [vmem:[%s1 + $0xa0] sm:$0xff]
  %v81 = vld [vmem:[%s1 + $0xa8] sm:$0xff]
  %v82 = vld [vmem:[%s1 + $0xb0] sm:$0xff]
  %v83 = vld [vmem:[%s1 + $0xb8] sm:$0xff]
  %v84 = vld [vmem:[%s1 + $0xc0] sm:$0xff]
  %v85 = vld [vmem:[%s1 + $0xc8] sm:$0xff]
  %v86 = vld [vmem:[%s1 + $0xd0] sm:$0xff]
  %v87 = vld [vmem:[%s1 + $0xd8] sm:$0xff]
  %v88 = vld [vmem:[%s1 + $0xe0] sm:$0xff]
  %v89 = vld [vmem:[%s1 + $0xe8] sm:$0xff]
  %v90 = vld [vmem:[%s1 + $0xf0] sm:$0xff]
  %v91 = vld [vmem:[%s1 + $0xf8] sm:$0xff]
  %v92 = vld [vmem:[%s1 + $0x100] sm:$0xff]
  %v93 = vld [vmem:[%s1 + $0x108] sm:$0xff]
  %v94 = vld [vmem:[%s1 + $0x110] sm:$0xff]
  %v95 = vld [vmem:[%s1 + $0x118] sm:$0xff]
  %v96 = vld [vmem:[%s1 + $0x120] sm:$0xff]
  %v97 = vld [vmem:[%s1 + $0x128] sm:$0xff]
  %v98 = vld [vmem:[%s1 + $0x130] sm:$0xff]
  %v99 = vld [vmem:[%s1 + $0x138] sm:$0xff]
  %v100 = vld [vmem:[%s1 + $0x140] sm:$0xff]
  %v101 = vld [vmem:[%s1 + $0x148] sm:$0xff]
  %v102 = vld [vmem:[%s1 + $0x150] sm:$0xff]
  %v103 = vld [vmem:[%s1 + $0x158] sm:$0xff]
  %v104 = vld [vmem:[%s1 + $0x160] sm:$0xff]
  %v105 = vld [vmem:[%s1 + $0x168] sm:$0xff]
  %v106 = vld [vmem:[%s1 + $0x170] sm:$0xff]
  %v107 = vld [vmem:[%s1 + $0x178] sm:$0xff]
  %v108 = vld [vmem:[%s1 + $0x180] sm:$0xff]
  %v109 = vld [vmem:[%s1 + $0x188] sm:$0xff]
  %v110 = vld [vmem:[%s1 + $0x190] sm:$0xff]
  %v111 = vld [vmem:[%s1 + $0x198] sm:$0xff]
  %v112 = vld [vmem:[%s1 + $0x1a0] sm:$0xff]
  %v113 = vld [vmem:[%s1 + $0x1a8] sm:$0xff]
  %v114 = vld [vmem:[%s1 + $0x1b0] sm:$0xff]
  %v115 = vld [vmem:[%s1 + $0x1b8] sm:$0xff]
  %v116 = vld [vmem:[%s1 + $0x1c0] sm:$0xff]
  %v117 = vld [vmem:[%s1 + $0x1c8] sm:$0xff]
  %v118 = vld [vmem:[%s1 + $0x1d0] sm:$0xff]
  %v119 = vld [vmem:[%s1 + $0x1d8] sm:$0xff]
  %v120 = vld [vmem:[%s1 + $0x1e0] sm:$0xff]
  %v121 = vld [vmem:[%s1 + $0x1e8] sm:$0xff]
  %v122 = vld [vmem:[%s1 + $0x1f0] sm:$0xff]
  %v123 = vld [vmem:[%s1 + $0x1f8] sm:$0xff]
  %v124 = vld [vmem:[%s1 + $0x200] sm:$0xff]
  %v125 = vld [vmem:[%s1 + $0x208] sm:$0xff]
  %v126 = vld [vmem:[%s1 + $0x210] sm:$0xff]
  %v127 = vld [vmem:[%s1 + $0x218] sm:$0xff]
  %v128 = vld [vmem:[%s1 + $0x220] sm:$0xff]
  %v129 = vld [vmem:[%s1 + $0x228] sm:$0xff]
  %v130 = vld [vmem:[%s1 + $0x230] sm:$0xff]
  %v131 = vld [vmem:[%s1 + $0x238] sm:$0xff]
  %v132 = vld [vmem:[%s1 + $0x240] sm:$0xff]
  %v133 = vld [vmem:[%s1 + $0x248] sm:$0xff]
  %v134 = vld [vmem:[%s1 + $0x250] sm:$0xff]
  %v135 = vld [vmem:[%s1 + $0x258] sm:$0xff]
  %v136 = vld [vmem:[%s1 + $0x260] sm:$0xff]
  %v137 = vld [vmem:[%s1 + $0x268] sm:$0xff]
  %v138 = vld [vmem:[%s1 + $0x270] sm:$0xff]
  %v139 = vld [vmem:[%s1 + $0x278] sm:$0xff]
  %v140 = vld [vmem:[%s1 + $0x280] sm:$0xff]
  %v141 = vld [vmem:[%s1 + $0x288] sm:$0xff]
  %v142 = vld [vmem:[%s1 + $0x290] sm:$0xff]
  %v143 = vld [vmem:[%s1 + $0x298] sm:$0xff]
  %v144 = vld [vmem:[%s1 + $0x2a0] sm:$0xff]
  %v145 = vld [vmem:[%s1 + $0x2a8] sm:$0xff]
  %v146 = vld [vmem:[%s1 + $0x2b0] sm:$0xff]
  %v147 = vld [vmem:[%s1 + $0x2b8] sm:$0xff]
  %v148 = vld [vmem:[%s1 + $0x2c0] sm:$0xff]
  %v149 = vld [vmem:[%s1 + $0x2c8] sm:$0xff]
  %v150 = vld [vmem:[%s1 + $0x2d0] sm:$0xff]
  %v151 = vld [vmem:[%s1 + $0x2d8] sm:$0xff]
  %v152 = vld [vmem:[%s1 + $0x2e0] sm:$0xff]
  %v153 = vld [vmem:[%s1 + $0x2e8] sm:$0xff]
  %v154 = vld [vmem:[%s1 + $0x2f0] sm:$0xff]
  %v155 = vld [vmem:[%s1 + $0x2f8] sm:$0xff]
  %v156 = vld [vmem:[%s1 + $0x300] sm:$0xff]
  %v157 = vld [vmem:[%s1 + $0x308] sm:$0xff]
  %v158 = vld [vmem:[%s1 + $0x310] sm:$0xff]
  %v159 = vld [vmem:[%s1 + $0x318] sm:$0xff]
  %v160 = vld [vmem:[%s1 + $0x320] sm:$0xff]
  %v161 = vld [vmem:[%s1 + $0x328] sm:$0xff]
  %v162 = vld [vmem:[%s1 + $0x330] sm:$0xff]
  %v163 = vld [vmem:[%s1 + $0x338] sm:$0xff]
  %v164 = vld [vmem:[%s1 + $0x340] sm:$0xff]
  %v165 = vld [vmem:[%s1 + $0x348] sm:$0xff]
  %v166 = vld [vmem:[%s1 + $0x350] sm:$0xff]
  %v167 = vld [vmem:[%s1 + $0x358] sm:$0xff]
  %v168 = vld [vmem:[%s1 + $0x360] sm:$0xff]
  %v169 = vld [vmem:[%s1 + $0x368] sm:$0xff]
  %v170 = vld [vmem:[%s1 + $0x370] sm:$0xff]
  %v171 = vld [vmem:[%s1 + $0x378] sm:$0xff]
  %v172 = vld [vmem:[%s1 + $0x380] sm:$0xff]
  %v173 = vld [vmem:[%s1 + $0x388] sm:$0xff]
  %v174 = vld [vmem:[%s1 + $0x390] sm:$0xff]
  %v175 = vld [vmem:[%s1 + $0x398] sm:$0xff]
  %v176 = vld [vmem:[%s1 + $0x3a0] sm:$0xff]
  %v177 = vld [vmem:[%s1 + $0x3a8] sm:$0xff]
  %v178 = vld [vmem:[%s1 + $0x3b0] sm:$0xff]
  %v179 = vld [vmem:[%s1 + $0x3b8] sm:$0xff]
  %v180 = vld [vmem:[%s1 + $0x3c0] sm:$0xff]
  %v181 = vld [vmem:[%s1 + $0x3c8] sm:$0xff]
  %v182 = vld [vmem:[%s1 + $0x3d0] sm:$0xff]
  %v183 = vld [vmem:[%s1 + $0x3d8] sm:$0xff]
  %v184 = vld [vmem:[%s1 + $0x3e0] sm:$0xff]
  %v185 = vld [vmem:[%s1 + $0x3e8] sm:$0xff]
  %v186 = vld [vmem:[%s1 + $0x3f0] sm:$0xff]
  %v187 = vld [vmem:[%s1 + $0x3f8] sm:$0xff]
  %v188 = vld [vmem:[%s1 + $0x400] sm:$0xff]
  %v189 = vld [vmem:[%s1 + $0x408] sm:$0xff]
  %v190 = vld [vmem:[%s1 + $0x410] sm:$0xff]
  %v191 = vld [vmem:[%s1 + $0x418] sm:$0xff]
  %v192 = vld [vmem:[%s1 + $0x420] sm:$0xff]
  %v193 = vld [vmem:[%s1 + $0x428] sm:$0xff]
  %v194 = vld [vmem:[%s1 + $0x430] sm:$0xff]
  %v195 = vld [vmem:[%s1 + $0x438] sm:$0xff]
  %v196 = vld [vmem:[%s1 + $0x440] sm:$0xff]
  %v197 = vld [vmem:[%s1 + $0x448] sm:$0xff]
  %v198 = vld [vmem:[%s1 + $0x450] sm:$0xff]
  %v199 = vld [vmem:[%s1 + $0x458] sm:$0xff]
  %v200 = vld [vmem:[%s1 + $0x460] sm:$0xff]
  %v201 = vld [vmem:[%s1 + $0x468] sm:$0xff]
  %v202 = vld [vmem:[%s1 + $0x470] sm:$0xff]
  %v203 = vld [vmem:[%s1 + $0x478] sm:$0xff]
  %v204 = vld [vmem:[%s1 + $0x480] sm:$0xff]
  %v205 = vld [vmem:[%s1 + $0x488] sm:$0xff]
  %v206 = vld [vmem:[%s1 + $0x490] sm:$0xff]
  %v207 = vld [vmem:[%s1 + $0x498] sm:$0xff]
  %v208 = vld [vmem:[%s1 + $0x4a0] sm:$0xff]
  %v209 = vld [vmem:[%s1 + $0x4a8] sm:$0xff]
  %v210 = vld [vmem:[%s1 + $0x4b0] sm:$0xff]
  %v211 = vld [vmem:[%s1 + $0x4b8] sm:$0xff]
  %v212 = vld [vmem:[%s1 + $0x4c0] sm:$0xff]
  %v213 = vld [vmem:[%s1 + $0x4c8] sm:$0xff]
  %v214 = vld [vmem:[%s1 + $0x4d0] sm:$0xff]
  %v215 = vld [vmem:[%s1 + $0x4d8] sm:$0xff]
  %v216 = vld [vmem:[%s1 + $0x4e0] sm:$0xff]
  %v217 = vld [vmem:[%s1 + $0x4e8] sm:$0xff]
  %v218 = vld [vmem:[%s1 + $0x4f0] sm:$0xff]
  %v219 = vld [vmem:[%s1 + $0x4f8] sm:$0xff]
  %v220 = vld [vmem:[%s1 + $0x500] sm:$0xff]
  %v221 = vld [vmem:[%s1 + $0x508] sm:$0xff]
  %v222 = vld [vmem:[%s1 + $0x510] sm:$0xff]
  %v223 = vld [vmem:[%s1 + $0x518] sm:$0xff]
  %v224 = vld [vmem:[%s1 + $0x520] sm:$0xff]
  %v225 = vld [vmem:[%s1 + $0x528] sm:$0xff]
  %v226 = vld [vmem:[%s1 + $0x530] sm:$0xff]
  %v227 = vld [vmem:[%s1 + $0x538] sm:$0xff]
  %v228 = vld [vmem:[%s1 + $0x540] sm:$0xff]
  %v229 = vld [vmem:[%s1 + $0x548] sm:$0xff]
  %v230 = vld [vmem:[%s1 + $0x550] sm:$0xff]
  %v231 = vld [vmem:[%s1 + $0x558] sm:$0xff]
  %v232 = vld [vmem:[%s1 + $0x560] sm:$0xff]
  %v233 = vld [vmem:[%s1 + $0x568] sm:$0xff]
  %v234 = vld [vmem:[%s1 + $0x570] sm:$0xff]
  %v235 = vld [vmem:[%s1 + $0x578] sm:$0xff]
  %v236 = vld [vmem:[%s1 + $0x580] sm:$0xff]
  %v237 = vld [vmem:[%s1 + $0x588] sm:$0xff]
  %v238 = vld [vmem:[%s1 + $0x590] sm:$0xff]
  %v239 = vld [vmem:[%s1 + $0x598] sm:$0xff]
  %v240 = vld [vmem:[%s1 + $0x5a0] sm:$0xff]
  %v241 = vld [vmem:[%s1 + $0x5a8] sm:$0xff]
  %v242 = vld [vmem:[%s1 + $0x5b0] sm:$0xff]
  %v243 = vld [vmem:[%s1 + $0x5b8] sm:$0xff]
  %v244 = vld [vmem:[%s1 + $0x5c0] sm:$0xff]
  %v245 = vld [vmem:[%s1 + $0x5c8] sm:$0xff]
  %v246 = vld [vmem:[%s1 + $0x5d0] sm:$0xff]
  %v247 = vld [vmem:[%s1 + $0x5d8] sm:$0xff]
  %v248 = vld [vmem:[%s1 + $0x5e0] sm:$0xff]
  %v249 = vld [vmem:[%s1 + $0x5e8] sm:$0xff]
  %v250 = vld [vmem:[%s1 + $0x5f0] sm:$0xff]
  %v251 = vld [vmem:[%s1 + $0x5f8] sm:$0xff]
  %v252 = vld [vmem:[%s1 + $0x600] sm:$0xff]
  %v253 = vld [vmem:[%s1 + $0x608] sm:$0xff]
  %v254 = vld [vmem:[%s1 + $0x610] sm:$0xff]
  %v255 = vld [vmem:[%s1 + $0x618] sm:$0xff]
  %v256 = vld [vmem:[%s1 + $0x620] sm:$0xff]
  %v257 = vld [vmem:[%s1 + $0x628] sm:$0xff]
  %v258 = vld [vmem:[%s1 + $0x630] sm:$0xff]
  %v259 = vld [vmem:[%s1 + $0x638] sm:$0xff]
  %v260 = vld [vmem:[%s1 + $0x640] sm:$0xff]
  %v261 = vld [vmem:[%s1 + $0x648] sm:$0xff]
  %v262 = vld [vmem:[%s1 + $0x650] sm:$0xff]
  %v263 = vld [vmem:[%s1 + $0x658] sm:$0xff]
  %v264 = vld [vmem:[%s1 + $0x660] sm:$0xff]
  %v265 = vld [vmem:[%s1 + $0x668] sm:$0xff]
  %v266 = vld [vmem:[%s1 + $0x670] sm:$0xff]
  %v267 = vld [vmem:[%s1 + $0x678] sm:$0xff]
  %v268 = vld [vmem:[%s1 + $0x680] sm:$0xff]
  %v269 = vld [vmem:[%s1 + $0x688] sm:$0xff]
  %v270 = vld [vmem:[%s1 + $0x690] sm:$0xff]
  %v271 = vld [vmem:[%s1 + $0x698] sm:$0xff]
  %v272 = vld [vmem:[%s1 + $0x6a0] sm:$0xff]
  %v273 = vld [vmem:[%s1 + $0x6a8] sm:$0xff]
  %v274 = vld [vmem:[%s1 + $0x6b0] sm:$0xff]
  %v275 = vld [vmem:[%s1 + $0x6b8] sm:$0xff]
  %v276 = vld [vmem:[%s1 + $0x6c0] sm:$0xff]
  %v277 = vld [vmem:[%s1 + $0x6c8] sm:$0xff]
  %v278 = vld [vmem:[%s1 + $0x6d0] sm:$0xff]
  %v279 = vld [vmem:[%s1 + $0x6d8] sm:$0xff]
  %v280 = vld [vmem:[%s1 + $0x6e0] sm:$0xff]
  %v281 = vld [vmem:[%s1 + $0x6e8] sm:$0xff]
  %v282 = vld [vmem:[%s1 + $0x6f0] sm:$0xff]
  %v283 = vld [vmem:[%s1 + $0x6f8] sm:$0xff]
  %v284 = vld [vmem:[%s1 + $0x700] sm:$0xff]
  %v285 = vld [vmem:[%s1 + $0x708] sm:$0xff]
  %v286 = vld [vmem:[%s1 + $0x710] sm:$0xff]
  %v287 = vld [vmem:[%s1 + $0x718] sm:$0xff]
  %v288 = vld [vmem:[%s1 + $0x720] sm:$0xff]
  %v289 = vld [vmem:[%s1 + $0x728] sm:$0xff]
  %v290 = vld [vmem:[%s1 + $0x730] sm:$0xff]
  %v291 = vld [vmem:[%s1 + $0x738] sm:$0xff]
  %v292 = vld [vmem:[%s1 + $0x740] sm:$0xff]
  %v293 = vld [vmem:[%s1 + $0x748] sm:$0xff]
  %v294 = vld [vmem:[%s1 + $0x750] sm:$0xff]
  %v295 = vld [vmem:[%s1 + $0x758] sm:$0xff]
  %v296 = vld [vmem:[%s1 + $0x760] sm:$0xff]
  %v297 = vld [vmem:[%s1 + $0x768] sm:$0xff]
  %v298 = vld [vmem:[%s1 + $0x770] sm:$0xff]
  %v299 = vld [vmem:[%s1 + $0x778] sm:$0xff]
  %v300 = vld [vmem:[%s1 + $0x780] sm:$0xff]
  %v301 = vld [vmem:[%s1 + $0x788] sm:$0xff]
  %v302 = vld [vmem:[%s1 + $0x790] sm:$0xff]
  %v303 = vld [vmem:[%s1 + $0x798] sm:$0xff]
  %v304 = vld [vmem:[%s1 + $0x7a0] sm:$0xff]
  %v305 = vld [vmem:[%s1 + $0x7a8] sm:$0xff]
  %v306 = vld [vmem:[%s1 + $0x7b0] sm:$0xff]
  %v307 = vld [vmem:[%s1 + $0x7b8] sm:$0xff]
  %v308 = vld [vmem:[%s1 + $0x7c0] sm:$0xff]
  %v309 = vld [vmem:[%s1 + $0x7c8] sm:$0xff]
  %v310 = vld [vmem:[%s1 + $0x7d0] sm:$0xff]
  %v311 = vld [vmem:[%s1 + $0x7d8] sm:$0xff]
  %v312 = vld [vmem:[%s1 + $0x7e0] sm:$0xff]
  %v313 = vld [vmem:[%s1 + $0x7e8] sm:$0xff]
  %v314 = vld [vmem:[%s1 + $0x7f0] sm:$0xff]
  %v315 = vld [vmem:[%s1 + $0x7f8] sm:$0xff]
  %v316 = vld [vmem:[%s1 + $0x800] sm:$0xff]
  %v317 = vld [vmem:[%s1 + $0x808] sm:$0xff]
  %v318 = vld [vmem:[%s1 + $0x810] sm:$0xff]
  %v319 = vld [vmem:[%s1 + $0x818] sm:$0xff]
  %v320 = vld [vmem:[%s1 + $0x820] sm:$0xff]
  %v321 = vld [vmem:[%s1 + $0x828] sm:$0xff]
  %v322 = vld [vmem:[%s1 + $0x830] sm:$0xff]
  %v323 = vld [vmem:[%s1 + $0x838] sm:$0xff]
  %v324 = vld [vmem:[%s1 + $0x840] sm:$0xff]
  %v325 = vld [vmem:[%s1 + $0x848] sm:$0xff]
  %v326 = vld [vmem:[%s1 + $0x850] sm:$0xff]
  %v327 = vld [vmem:[%s1 + $0x858] sm:$0xff]
  %v328 = vld [vmem:[%s1 + $0x860] sm:$0xff]
  %v329 = vld [vmem:[%s1 + $0x868] sm:$0xff]
  %v330 = vld [vmem:[%s1 + $0x870] sm:$0xff]
  %v331 = vld [vmem:[%s1 + $0x878] sm:$0xff]
  %v332 = vld [vmem:[%s1 + $0x880] sm:$0xff]
  %v333 = vld [vmem:[%s1 + $0x888] sm:$0xff]
  %v334 = vld [vmem:[%s1 + $0x890] sm:$0xff]
  %v335 = vld [vmem:[%s1 + $0x898] sm:$0xff]
  %v336 = vld [vmem:[%s1 + $0x8a0] sm:$0xff]
  %v337 = vld [vmem:[%s1 + $0x8a8] sm:$0xff]
  %v338 = vld [vmem:[%s1 + $0x8b0] sm:$0xff]
  %v339 = vld [vmem:[%s1 + $0x8b8] sm:$0xff]
  %v340 = vld [vmem:[%s1 + $0x8c0] sm:$0xff]
  %v341 = vld [vmem:[%s1 + $0x8c8] sm:$0xff]
  %v342 = vld [vmem:[%s1 + $0x8d0] sm:$0xff]
  %v343 = vld [vmem:[%s1 + $0x8d8] sm:$0xff]
  %v344 = vld [vmem:[%s1 + $0x8e0] sm:$0xff]
  %v345 = vld [vmem:[%s1 + $0x8e8] sm:$0xff]
  %v346 = vld [vmem:[%s1 + $0x8f0] sm:$0xff]
  %v347 = vld [vmem:[%s1 + $0x8f8] sm:$0xff]
  %v348 = vld [vmem:[%s1 + $0x900] sm:$0xff]
  %v349 = vld [vmem:[%s1 + $0x908] sm:$0xff]
  %v350 = vld [vmem:[%s1 + $0x910] sm:$0xff]
  %v351 = vld [vmem:[%s1 + $0x918] sm:$0xff]
  %v352 = vld [vmem:[%s1 + $0x920] sm:$0xff]
  %v353 = vld [vmem:[%s1 + $0x928] sm:$0xff]
  %v354 = vld [vmem:[%s1 + $0x930] sm:$0xff]
  %v355 = vld [vmem:[%s1 + $0x938] sm:$0xff]
  %v356 = vld [vmem:[%s1 + $0x940] sm:$0xff]
  %v357 = vld [vmem:[%s1 + $0x948] sm:$0xff]
  %v358 = vld [vmem:[%s1 + $0x950] sm:$0xff]
  %v359 = vld [vmem:[%s1 + $0x958] sm:$0xff]
  %v360 = vld [vmem:[%s1 + $0x960] sm:$0xff]
  %v361 = vld [vmem:[%s1 + $0x968] sm:$0xff]
  %v362 = vld [vmem:[%s1 + $0x970] sm:$0xff]
  %v363 = vld [vmem:[%s1 + $0x978] sm:$0xff]
  %v364 = vld [vmem:[%s1 + $0x980] sm:$0xff]
  %v365 = vld [vmem:[%s1 + $0x988] sm:$0xff]
  %v366 = vld [vmem:[%s1 + $0x990] sm:$0xff]
  %v367 = vld [vmem:[%s1 + $0x998] sm:$0xff]
  %v368 = vld [vmem:[%s1 + $0x9a0] sm:$0xff]
  %v369 = vld [vmem:[%s1 + $0x9a8] sm:$0xff]
  %v370 = vld [vmem:[%s1 + $0x9b0] sm:$0xff]
  %v371 = vld [vmem:[%s1 + $0x9b8] sm:$0xff]
  %v372 = vld [vmem:[%s1 + $0x9c0] sm:$0xff]
  %v373 = vld [vmem:[%s1 + $0x9c8] sm:$0xff]
  %v374 = vld [vmem:[%s1 + $0x9d0] sm:$0xff]
  %v375 = vld [vmem:[%s1 + $0x9d8] sm:$0xff]
  %v376 = vld [vmem:[%s1 + $0x9e0] sm:$0xff]
  %v377 = vld [vmem:[%s1 + $0x9e8] sm:$0xff]
  %v378 = vld [vmem:[%s1 + $0x9f0] sm:$0xff]
  %v379 = vld [vmem:[%s1 + $0x9f8] sm:$0xff]
  %v380 = vld [vmem:[%s1 + $0xa00] sm:$0xff]
  %v381 = vld [vmem:[%s1 + $0xa08] sm:$0xff]
  %v382 = vld [vmem:[%s1 + $0xa10] sm:$0xff]
  %v383 = vld [vmem:[%s1 + $0xa18] sm:$0xff]
  %v384 = vld [vmem:[%s1 + $0xa20] sm:$0xff]
  %v385 = vld [vmem:[%s1 + $0xa28] sm:$0xff]
  %v386 = vld [vmem:[%s1 + $0xa30] sm:$0xff]
  %v387 = vld [vmem:[%s1 + $0xa38] sm:$0xff]
  %v388 = vld [vmem:[%s1 + $0xa40] sm:$0xff]
  %v389 = vld [vmem:[%s1 + $0xa48] sm:$0xff]
  %v390 = vld [vmem:[%s1 + $0xa50] sm:$0xff]
  %v391 = vld [vmem:[%s1 + $0xa58] sm:$0xff]
  %v392 = vld [vmem:[%s1 + $0xa60] sm:$0xff]
  %v393 = vld [vmem:[%s1 + $0xa68] sm:$0xff]
  %v394 = vld [vmem:[%s1 + $0xa70] sm:$0xff]
  %v395 = vld [vmem:[%s1 + $0xa78] sm:$0xff]
  %v396 = vld [vmem:[%s1 + $0xa80] sm:$0xff]
  %v397 = vld [vmem:[%s1 + $0xa88] sm:$0xff]
  %v398 = vld [vmem:[%s1 + $0xa90] sm:$0xff]
  %v399 = vld [vmem:[%s1 + $0xa98] sm:$0xff]
  %v400 = vld [vmem:[%s1 + $0xaa0] sm:$0xff]
  %v401 = vld [vmem:[%s1 + $0xaa8] sm:$0xff]
  %v402 = vld [vmem:[%s1 + $0xab0] sm:$0xff]
  %v403 = vld [vmem:[%s1 + $0xab8] sm:$0xff]
  %v404 = vld [vmem:[%s1 + $0xac0] sm:$0xff]
  %v405 = vld [vmem:[%s1 + $0xac8] sm:$0xff]
  %v406 = vld [vmem:[%s1 + $0xad0] sm:$0xff]
  %v407 = vld [vmem:[%s1 + $0xad8] sm:$0xff]
  %v408 = vld [vmem:[%s1 + $0xae0] sm:$0xff]
  %v409 = vld [vmem:[%s1 + $0xae8] sm:$0xff]
  %v410 = vld [vmem:[%s1 + $0xaf0] sm:$0xff]
  %v411 = vld [vmem:[%s1 + $0xaf8] sm:$0xff]
  %v412 = vld [vmem:[%s1 + $0xb00] sm:$0xff]
  %v413 = vld [vmem:[%s1 + $0xb08] sm:$0xff]
  %v414 = vld [vmem:[%s1 + $0xb10] sm:$0xff]
  %v415 = vld [vmem:[%s1 + $0xb18] sm:$0xff]
  %v416 = vld [vmem:[%s1 + $0xb20] sm:$0xff]
  %v417 = vld [vmem:[%s1 + $0xb28] sm:$0xff]
  %v418 = vld [vmem:[%s1 + $0xb30] sm:$0xff]
  %v419 = vld [vmem:[%s1 + $0xb38] sm:$0xff]
  %v420 = vld [vmem:[%s1 + $0xb40] sm:$0xff]
  %v421 = vld [vmem:[%s1 + $0xb48] sm:$0xff]
  %v422 = vld [vmem:[%s1 + $0xb50] sm:$0xff]
  %v423 = vld [vmem:[%s1 + $0xb58] sm:$0xff]
  %v424 = vld [vmem:[%s1 + $0xb60] sm:$0xff]
  %v425 = vld [vmem:[%s1 + $0xb68] sm:$0xff]
  %v426 = vld [vmem:[%s1 + $0xb70] sm:$0xff]
  %v427 = vld [vmem:[%s1 + $0xb78] sm:$0xff]
  %v428 = vld [vmem:[%s1 + $0xb80] sm:$0xff]
  %v429 = vld [vmem:[%s1 + $0xb88] sm:$0xff]
  %v430 = vld [vmem:[%s1 + $0xb90] sm:$0xff]
  %v431 = vld [vmem:[%s1 + $0xb98] sm:$0xff]
  %v432 = vld [vmem:[%s1 + $0xba0] sm:$0xff]
  %v433 = vld [vmem:[%s1 + $0xba8] sm:$0xff]
  %v434 = vld [vmem:[%s1 + $0xbb0] sm:$0xff]
  %v435 = vld [vmem:[%s1 + $0xbb8] sm:$0xff]
  %v436 = vld [vmem:[%s1 + $0xbc0] sm:$0xff]
  %v437 = vld [vmem:[%s1 + $0xbc8] sm:$0xff]
  %v438 = vld [vmem:[%s1 + $0xbd0] sm:$0xff]
  %v439 = vld [vmem:[%s1 + $0xbd8] sm:$0xff]
  %v440 = vld [vmem:[%s1 + $0xbe0] sm:$0xff]
  %v441 = vld [vmem:[%s1 + $0xbe8] sm:$0xff]
  %v442 = vld [vmem:[%s1 + $0xbf0] sm:$0xff]
  %v443 = vld [vmem:[%s1 + $0xbf8] sm:$0xff]
  %v444 = vld [vmem:[%s1 + $0xc00] sm:$0xff]
  %v445 = vld [vmem:[%s1 + $0xc08] sm:$0xff]
  %v446 = vld [vmem:[%s1 + $0xc10] sm:$0xff]
  %v447 = vld [vmem:[%s1 + $0xc18] sm:$0xff]
  %v448 = vld [vmem:[%s1 + $0xc20] sm:$0xff]
  %v449 = vld [vmem:[%s1 + $0xc28] sm:$0xff]
  %v450 = vld [vmem:[%s1 + $0xc30] sm:$0xff]
  %v451 = vld [vmem:[%s1 + $0xc38] sm:$0xff]
  %v452 = vld [vmem:[%s1 + $0xc40] sm:$0xff]
  %v453 = vld [vmem:[%s1 + $0xc48] sm:$0xff]
  %v454 = vld [vmem:[%s1 + $0xc50] sm:$0xff]
  %v455 = vld [vmem:[%s1 + $0xc58] sm:$0xff]
  %v456 = vld [vmem:[%s1 + $0xc60] sm:$0xff]
  %v457 = vld [vmem:[%s1 + $0xc68] sm:$0xff]
  %v458 = vld [vmem:[%s1 + $0xc70] sm:$0xff]
  %v459 = vld [vmem:[%s1 + $0xc78] sm:$0xff]
  %v460 = vld [vmem:[%s1 + $0xc80] sm:$0xff]
  %v461 = vld [vmem:[%s1 + $0xc88] sm:$0xff]
  %v462 = vld [vmem:[%s1 + $0xc90] sm:$0xff]
  %v463 = vld [vmem:[%s1 + $0xc98] sm:$0xff]
  %v464 = vld [vmem:[%s1 + $0xca0] sm:$0xff]
  %v465 = vld [vmem:[%s1 + $0xca8] sm:$0xff]
  %v466 = vld [vmem:[%s1 + $0xcb0] sm:$0xff]
  %v467 = vld [vmem:[%s1 + $0xcb8] sm:$0xff]
  %v468 = vld [vmem:[%s1 + $0xcc0] sm:$0xff]
  %v469 = vld [vmem:[%s1 + $0xcc8] sm:$0xff]
  %v470 = vld [vmem:[%s1 + $0xcd0] sm:$0xff]
  %v471 = vld [vmem:[%s1 + $0xcd8] sm:$0xff]
  %v472 = vld [vmem:[%s1 + $0xce0] sm:$0xff]
  %v473 = vld [vmem:[%s1 + $0xce8] sm:$0xff]
  %v474 = vld [vmem:[%s1 + $0xcf0] sm:$0xff]
  %v475 = vld [vmem:[%s1 + $0xcf8] sm:$0xff]
  %v476 = vld [vmem:[%s1 + $0xd00] sm:$0xff]
  %v477 = vld [vmem:[%s1 + $0xd08] sm:$0xff]
  %v478 = vld [vmem:[%s1 + $0xd10] sm:$0xff]
  %v479 = vld [vmem:[%s1 + $0xd18] sm:$0xff]
  %v480 = vld [vmem:[%s1 + $0xd20] sm:$0xff]
  %v481 = vld [vmem:[%s1 + $0xd28] sm:$0xff]
  %v482 = vld [vmem:[%s1 + $0xd30] sm:$0xff]
  %v483 = vld [vmem:[%s1 + $0xd38] sm:$0xff]
  %v484 = vld [vmem:[%s1 + $0xd40] sm:$0xff]
  %v485 = vld [vmem:[%s1 + $0xd48] sm:$0xff]
  %v486 = vld [vmem:[%s1 + $0xd50] sm:$0xff]
  %v487 = vld [vmem:[%s1 + $0xd58] sm:$0xff]
  %v488 = vld [vmem:[%s1 + $0xd60] sm:$0xff]
  %v489 = vld [vmem:[%s1 + $0xd68] sm:$0xff]
  %v490 = vld [vmem:[%s1 + $0xd70] sm:$0xff]
  %v491 = vld [vmem:[%s1 + $0xd78] sm:$0xff]
  %v492 = vld [vmem:[%s1 + $0xd80] sm:$0xff]
  %v493 = vld [vmem:[%s1 + $0xd88] sm:$0xff]
  %v494 = vld [vmem:[%s1 + $0xd90] sm:$0xff]
  %v495 = vld [vmem:[%s1 + $0xd98] sm:$0xff]
  %v496 = vld [vmem:[%s1 + $0xda0] sm:$0xff]
  %v497 = vld [vmem:[%s1 + $0xda8] sm:$0xff]
  %v498 = vld [vmem:[%s1 + $0xdb0] sm:$0xff]
  %v499 = vld [vmem:[%s1 + $0xdb8] sm:$0xff]
  %v500 = vld [vmem:[%s1 + $0xdc0] sm:$0xff]
  %v501 = vld [vmem:[%s1 + $0xdc8] sm:$0xff]
  %v502 = vld [vmem:[%s1 + $0xdd0] sm:$0xff]
  %v503 = vld [vmem:[%s1 + $0xdd8] sm:$0xff]
  %v504 = vld [vmem:[%s1 + $0xde0] sm:$0xff]
  %v505 = vld [vmem:[%s1 + $0xde8] sm:$0xff]
  %v506 = vld [vmem:[%s1 + $0xdf0] sm:$0xff]
  %v507 = vld [vmem:[%s1 + $0xdf8] sm:$0xff]
  %v508 = vld [vmem:[%s1 + $0xe00] sm:$0xff]
  %v509 = vld [vmem:[%s1 + $0xe08] sm:$0xff]
  %v510 = vld [vmem:[%s1 + $0xe10] sm:$0xff]
  %v511 = vld [vmem:[%s1 + $0xe18] sm:$0xff]
  %v512 = vld [vmem:[%s1 + $0xe20] sm:$0xff]
  %v513 = vld [vmem:[%s1 + $0xe28] sm:$0xff]
  %v514 = vld [vmem:[%s1 + $0xe30] sm:$0xff]
  %v515 = vld [vmem:[%s1 + $0xe38] sm:$0xff]
  %v516 = vld [vmem:[%s1 + $0xe40] sm:$0xff]
  %v517 = vld [vmem:[%s1 + $0xe48] sm:$0xff]
  %v518 = vld [vmem:[%s1 + $0xe50] sm:$0xff]
  %v519 = vld [vmem:[%s1 + $0xe58] sm:$0xff]
  %v520 = vld [vmem:[%s1 + $0xe60] sm:$0xff]
  %v521 = vld [vmem:[%s1 + $0xe68] sm:$0xff]
  %v522 = vld [vmem:[%s1 + $0xe70] sm:$0xff]
  %v523 = vld [vmem:[%s1 + $0xe78] sm:$0xff]
  %v524 = vld [vmem:[%s1 + $0xe80] sm:$0xff]
  %v525 = vld [vmem:[%s1 + $0xe88] sm:$0xff]
  %v526 = vld [vmem:[%s1 + $0xe90] sm:$0xff]
  %v527 = vld [vmem:[%s1 + $0xe98] sm:$0xff]
  %v528 = vld [vmem:[%s1 + $0xea0] sm:$0xff]
  %v529 = vld [vmem:[%s1 + $0xea8] sm:$0xff]
  %v530 = vld [vmem:[%s1 + $0xeb0] sm:$0xff]
  %v531 = vld [vmem:[%s1 + $0xeb8] sm:$0xff]
  %v532 = vld [vmem:[%s1 + $0xec0] sm:$0xff]
  %v533 = vld [vmem:[%s1 + $0xec8] sm:$0xff]
  %v534 = vld [vmem:[%s1 + $0xed0] sm:$0xff]
  %v535 = vld [vmem:[%s1 + $0xed8] sm:$0xff]
  %v536 = vld [vmem:[%s1 + $0xee0] sm:$0xff]
  %v537 = vld [vmem:[%s1 + $0xee8] sm:$0xff]
  %v538 = vld [vmem:[%s1 + $0xef0] sm:$0xff]
  %v539 = vld [vmem:[%s1 + $0xef8] sm:$0xff]
  %v540 = vld [vmem:[%s1 + $0xf00] sm:$0xff]
  %v541 = vld [vmem:[%s1 + $0xf08] sm:$0xff]
  %v542 = vld [vmem:[%s1 + $0xf10] sm:$0xff]
  %v543 = vld [vmem:[%s1 + $0xf18] sm:$0xff]
  %v544 = vld [vmem:[%s1 + $0xf20] sm:$0xff]
  %v545 = vld [vmem:[%s1 + $0xf28] sm:$0xff]
  %v546 = vld [vmem:[%s1 + $0xf30] sm:$0xff]
  %v547 = vld [vmem:[%s1 + $0xf38] sm:$0xff]
  %v548 = vld [vmem:[%s1 + $0xf40] sm:$0xff]
  %v549 = vld [vmem:[%s1 + $0xf48] sm:$0xff]
  %v550 = vld [vmem:[%s1 + $0xf50] sm:$0xff]
  %v551 = vld [vmem:[%s1 + $0xf58] sm:$0xff]
  %v552 = vld [vmem:[%s1 + $0xf60] sm:$0xff]
  %v553 = vld [vmem:[%s1 + $0xf68] sm:$0xff]
  %v554 = vld [vmem:[%s1 + $0xf70] sm:$0xff]
  %v555 = vld [vmem:[%s1 + $0xf78] sm:$0xff]
  %v556 = vld [vmem:[%s1 + $0xf80] sm:$0xff]
  %v557 = vld [vmem:[%s1 + $0xf88] sm:$0xff]
  %v558 = vld [vmem:[%s1 + $0xf90] sm:$0xff]
  %v559 = vld [vmem:[%s1 + $0xf98] sm:$0xff]
  %v560 = vld [vmem:[%s1 + $0xfa0] sm:$0xff]
  %v561 = vld [vmem:[%s1 + $0xfa8] sm:$0xff]
  %v562 = vld [vmem:[%s1 + $0xfb0] sm:$0xff]
  %v563 = vld [vmem:[%s1 + $0xfb8] sm:$0xff]
  %v564 = vld [vmem:[%s1 + $0xfc0] sm:$0xff]
  %v565 = vld [vmem:[%s1 + $0xfc8] sm:$0xff]
  %v566 = vld [vmem:[%s1 + $0xfd0] sm:$0xff]
  %v567 = vld [vmem:[%s1 + $0xfd8] sm:$0xff]
  %v568 = vld [vmem:[%s1 + $0xfe0] sm:$0xff]
  %v569 = vld [vmem:[%s1 + $0xfe8] sm:$0xff]
  %v570 = vld [vmem:[%s1 + $0xff0] sm:$0xff]
  %v571 = vld [vmem:[%s1 + $0xff8] sm:$0xff]
  %v572 = vld [vmem:[%s1 + $0x1000] sm:$0xff]
  %v573 = vld [vmem:[%s1 + $0x1008] sm:$0xff]
  %v574 = vld [vmem:[%s1 + $0x1010] sm:$0xff]
  %v575 = vld [vmem:[%s1 + $0x1018] sm:$0xff]
  %v576 = vld [vmem:[%s1 + $0x1020] sm:$0xff]
  %v577 = vld [vmem:[%s1 + $0x1028] sm:$0xff]
  %v578 = vld [vmem:[%s1 + $0x1030] sm:$0xff]
  %v579 = vld [vmem:[%s1 + $0x1038] sm:$0xff]
  %v580 = vld [vmem:[%s1 + $0x1040] sm:$0xff]
  %v581 = vld [vmem:[%s1 + $0x1048] sm:$0xff]
  %v582 = vld [vmem:[%s1 + $0x1050] sm:$0xff]
  %v583 = vld [vmem:[%s1 + $0x1058] sm:$0xff]
  %v584 = vld [vmem:[%s1 + $0x1060] sm:$0xff]
  %v585 = vld [vmem:[%s1 + $0x1068] sm:$0xff]
  %v586 = vld [vmem:[%s1 + $0x1070] sm:$0xff]
  %v587 = vld [vmem:[%s1 + $0x1078] sm:$0xff]
  %v588 = vld [vmem:[%s1 + $0x1080] sm:$0xff]
  %v589 = vld [vmem:[%s1 + $0x1088] sm:$0xff]
  %v590 = vld [vmem:[%s1 + $0x1090] sm:$0xff]
  %v591 = vld [vmem:[%s1 + $0x1098] sm:$0xff]
  %v592 = vld [vmem:[%s1 + $0x10a0] sm:$0xff]
  %v593 = vld [vmem:[%s1 + $0x10a8] sm:$0xff]
  %v594 = vld [vmem:[%s1 + $0x10b0] sm:$0xff]
  %v595 = vld [vmem:[%s1 + $0x10b8] sm:$0xff]
  %v596 = vld [vmem:[%s1 + $0x10c0] sm:$0xff]
  %v597 = vld [vmem:[%s1 + $0x10c8] sm:$0xff]
  %v598 = vld [vmem:[%s1 + $0x10d0] sm:$0xff]
  %v599 = vld [vmem:[%s1 + $0x10d8] sm:$0xff]
  %v600 = vld [vmem:[%s1 + $0x10e0] sm:$0xff]
  %v601 = vld [vmem:[%s1 + $0x10e8] sm:$0xff]
  %v602 = vld [vmem:[%s1 + $0x10f0] sm:$0xff]
  %v603 = vld [vmem:[%s1 + $0x10f8] sm:$0xff]
  %v604 = vld [vmem:[%s1 + $0x1100] sm:$0xff]
  %v605 = vld [vmem:[%s1 + $0x1108] sm:$0xff]
  %v606 = vld [vmem:[%s1 + $0x1110] sm:$0xff]
  %v607 = vld [vmem:[%s1 + $0x1118] sm:$0xff]
  %v608 = vld [vmem:[%s1 + $0x1120] sm:$0xff]
  %v609 = vld [vmem:[%s1 + $0x1128] sm:$0xff]
  %v610 = vld [vmem:[%s1 + $0x1130] sm:$0xff]
  %v611 = vld [vmem:[%s1 + $0x1138] sm:$0xff]
  %v612 = vld [vmem:[%s1 + $0x1140] sm:$0xff]
  %v613 = vld [vmem:[%s1 + $0x1148] sm:$0xff]
  %v614 = vld [vmem:[%s1 + $0x1150] sm:$0xff]
  %v615 = vld [vmem:[%s1 + $0x1158] sm:$0xff]
  %v616 = vld [vmem:[%s1 + $0x1160] sm:$0xff]
  %v617 = vld [vmem:[%s1 + $0x1168] sm:$0xff]
  %v618 = vld [vmem:[%s1 + $0x1170] sm:$0xff]
  %v619 = vld [vmem:[%s1 + $0x1178] sm:$0xff]
  %v620 = vld [vmem:[%s1 + $0x1180] sm:$0xff]
  %v621 = vld [vmem:[%s1 + $0x1188] sm:$0xff]
  %v622 = vld [vmem:[%s1 + $0x1190] sm:$0xff]
  %v623 = vld [vmem:[%s1 + $0x1198] sm:$0xff]
  %v624 = vld [vmem:[%s1 + $0x11a0] sm:$0xff]
  %v625 = vld [vmem:[%s1 + $0x11a8] sm:$0xff]
  %v626 = vld [vmem:[%s1 + $0x11b0] sm:$0xff]
  %v627 = vld [vmem:[%s1 + $0x11b8] sm:$0xff]
  %v628 = vld [vmem:[%s1 + $0x11c0] sm:$0xff]
  %v629 = vld [vmem:[%s1 + $0x11c8] sm:$0xff]
  %v630 = vld [vmem:[%s1 + $0x11d0] sm:$0xff]
  %v631 = vld [vmem:[%s1 + $0x11d8] sm:$0xff]
  %v632 = vld [vmem:[%s1 + $0x11e0] sm:$0xff]
  %v633 = vld [vmem:[%s1 + $0x11e8] sm:$0xff]
  %v634 = vld [vmem:[%s1 + $0x11f0] sm:$0xff]
  %v635 = vld [vmem:[%s1 + $0x11f8] sm:$0xff]
  %v636 = vld [vmem:[%s1 + $0x1200] sm:$0xff]
  %v637 = vld [vmem:[%s1 + $0x1208] sm:$0xff]
  %v638 = vld [vmem:[%s1 + $0x1210] sm:$0xff]
  %v639 = vld [vmem:[%s1 + $0x1218] sm:$0xff]
  %v640 = vld [vmem:[%s1 + $0x1220] sm:$0xff]
  %v641 = vld [vmem:[%s1 + $0x1228] sm:$0xff]
  %v642 = vld [vmem:[%s1 + $0x1230] sm:$0xff]
  %v643 = vld [vmem:[%s1 + $0x1238] sm:$0xff]
  %v644 = vld [vmem:[%s1 + $0x1240] sm:$0xff]
  %v645 = vld [vmem:[%s1 + $0x1248] sm:$0xff]
  %v646 = vld [vmem:[%s1 + $0x1250] sm:$0xff]
  %v647 = vld [vmem:[%s1 + $0x1258] sm:$0xff]
  %v648 = vld [vmem:[%s1 + $0x1260] sm:$0xff]
  %v649 = vld [vmem:[%s1 + $0x1268] sm:$0xff]
  %v650 = vld [vmem:[%s1 + $0x1270] sm:$0xff]
  %v651 = vld [vmem:[%s1 + $0x1278] sm:$0xff]
  %v652 = vld [vmem:[%s1 + $0x1280] sm:$0xff]
  %v653 = vld [vmem:[%s1 + $0x1288] sm:$0xff]
  %v654 = vld [vmem:[%s1 + $0x1290] sm:$0xff]
  %v655 = vld [vmem:[%s1 + $0x1298] sm:$0xff]
  %v656 = vld [vmem:[%s1 + $0x12a0] sm:$0xff]
  %v657 = vld [vmem:[%s1 + $0x12a8] sm:$0xff]
  %v658 = vld [vmem:[%s1 + $0x12b0] sm:$0xff]
  %v659 = vld [vmem:[%s1 + $0x12b8] sm:$0xff]
  %v660 = vld [vmem:[%s1 + $0x12c0] sm:$0xff]
  %v661 = vld [vmem:[%s1 + $0x12c8] sm:$0xff]
  %v662 = vld [vmem:[%s1 + $0x12d0] sm:$0xff]
  %v663 = vld [vmem:[%s1 + $0x12d8] sm:$0xff]
  %v664 = vld [vmem:[%s1 + $0x12e0] sm:$0xff]
  %v665 = vld [vmem:[%s1 + $0x12e8] sm:$0xff]
  %v666 = vld [vmem:[%s1 + $0x12f0] sm:$0xff]
  %v667 = vld [vmem:[%s1 + $0x12f8] sm:$0xff]
  %v668 = vld [vmem:[%s1 + $0x1300] sm:$0xff]
  %v669 = vld [vmem:[%s1 + $0x1308] sm:$0xff]
  %v670 = vld [vmem:[%s1 + $0x1310] sm:$0xff]
  %v671 = vld [vmem:[%s1 + $0x1318] sm:$0xff]
  %v672 = vld [vmem:[%s1 + $0x1320] sm:$0xff]
  %v673 = vld [vmem:[%s1 + $0x1328] sm:$0xff]
  %v674 = vld [vmem:[%s1 + $0x1330] sm:$0xff]
  %v675 = vld [vmem:[%s1 + $0x1338] sm:$0xff]
  %v676 = vld [vmem:[%s1 + $0x1340] sm:$0xff]
  %v677 = vld [vmem:[%s1 + $0x1348] sm:$0xff]
  %v678 = vld [vmem:[%s1 + $0x1350] sm:$0xff]
  %v679 = vld [vmem:[%s1 + $0x1358] sm:$0xff]
  %v680 = vld [vmem:[%s1 + $0x1360] sm:$0xff]
  %v681 = vld [vmem:[%s1 + $0x1368] sm:$0xff]
  %v682 = vld [vmem:[%s1 + $0x1370] sm:$0xff]
  %v683 = vld [vmem:[%s1 + $0x1378] sm:$0xff]
  %v684 = vld [vmem:[%s1 + $0x1380] sm:$0xff]
  %v685 = vld [vmem:[%s1 + $0x1388] sm:$0xff]
  %v686 = vld [vmem:[%s1 + $0x1390] sm:$0xff]
  %v687 = vld [vmem:[%s1 + $0x1398] sm:$0xff]
  %v688 = vld [vmem:[%s1 + $0x13a0] sm:$0xff]
  %v689 = vld [vmem:[%s1 + $0x13a8] sm:$0xff]
  %v690 = vld [vmem:[%s1 + $0x13b0] sm:$0xff]
  %v691 = vld [vmem:[%s1 + $0x13b8] sm:$0xff]
  %v692 = vld [vmem:[%s1 + $0x13c0] sm:$0xff]
  %v693 = vld [vmem:[%s1 + $0x13c8] sm:$0xff]
  %v694 = vld [vmem:[%s1 + $0x13d0] sm:$0xff]
  %v695 = vld [vmem:[%s1 + $0x13d8] sm:$0xff]
  %v696 = vld [vmem:[%s1 + $0x13e0] sm:$0xff]
  %v697 = vld [vmem:[%s1 + $0x13e8] sm:$0xff]
  %v698 = vld [vmem:[%s1 + $0x13f0] sm:$0xff]
  %v699 = vld [vmem:[%s1 + $0x13f8] sm:$0xff]
  %v700 = vld [vmem:[%s1 + $0x1400] sm:$0xff]
  %v701 = vld [vmem:[%s1 + $0x1408] sm:$0xff]
  %v702 = vld [vmem:[%s1 + $0x1410] sm:$0xff]
  %v703 = vld [vmem:[%s1 + $0x1418] sm:$0xff]
  %v704 = vld [vmem:[%s1 + $0x1420] sm:$0xff]
  %v705 = vld [vmem:[%s1 + $0x1428] sm:$0xff]
  %v706 = vld [vmem:[%s1 + $0x1430] sm:$0xff]
  %v707 = vld [vmem:[%s1 + $0x1438] sm:$0xff]
  %v708 = vld [vmem:[%s1 + $0x1440] sm:$0xff]
  %v709 = vld [vmem:[%s1 + $0x1448] sm:$0xff]
  %v710 = vld [vmem:[%s1 + $0x1450] sm:$0xff]
  %v711 = vld [vmem:[%s1 + $0x1458] sm:$0xff]
  %v712 = vld [vmem:[%s1 + $0x1460] sm:$0xff]
  %v713 = vld [vmem:[%s1 + $0x1468] sm:$0xff]
  %v714 = vld [vmem:[%s1 + $0x1470] sm:$0xff]
  %v715 = vld [vmem:[%s1 + $0x1478] sm:$0xff]
  %v716 = vld [vmem:[%s1 + $0x1480] sm:$0xff]
  %v717 = vld [vmem:[%s1 + $0x1488] sm:$0xff]
  %v718 = vld [vmem:[%s1 + $0x1490] sm:$0xff]
  %v719 = vld [vmem:[%s1 + $0x1498] sm:$0xff]
  %v720 = vld [vmem:[%s1 + $0x14a0] sm:$0xff]
  %v721 = vld [vmem:[%s1 + $0x14a8] sm:$0xff]
  %v722 = vld [vmem:[%s1 + $0x14b0] sm:$0xff]
  %v723 = vld [vmem:[%s1 + $0x14b8] sm:$0xff]
  %v724 = vld [vmem:[%s1 + $0x14c0] sm:$0xff]
  %v725 = vld [vmem:[%s1 + $0x14c8] sm:$0xff]
  %v726 = vld [vmem:[%s1 + $0x14d0] sm:$0xff]
  %v727 = vld [vmem:[%s1 + $0x14d8] sm:$0xff]
  %v728 = vld [vmem:[%s1 + $0x14e0] sm:$0xff]
  %v729 = vld [vmem:[%s1 + $0x14e8] sm:$0xff]
  %v730 = vld [vmem:[%s1 + $0x14f0] sm:$0xff]
  %v731 = vld [vmem:[%s1 + $0x14f8] sm:$0xff]
  %v732 = vld [vmem:[%s1 + $0x1500] sm:$0xff]
  %v733 = vld [vmem:[%s1 + $0x1508] sm:$0xff]
  %v734 = vld [vmem:[%s1 + $0x1510] sm:$0xff]
  %v735 = vld [vmem:[%s1 + $0x1518] sm:$0xff]
  %v736 = vld [vmem:[%s1 + $0x1520] sm:$0xff]
  %v737 = vld [vmem:[%s1 + $0x1528] sm:$0xff]
  %v738 = vld [vmem:[%s1 + $0x1530] sm:$0xff]
  %v739 = vld [vmem:[%s1 + $0x1538] sm:$0xff]
  %v740 = vld [vmem:[%s1 + $0x1540] sm:$0xff]
  %v741 = vld [vmem:[%s1 + $0x1548] sm:$0xff]
  %v742 = vld [vmem:[%s1 + $0x1550] sm:$0xff]
  %v743 = vld [vmem:[%s1 + $0x1558] sm:$0xff]
  %v744 = vld [vmem:[%s1 + $0x1560] sm:$0xff]
  %v745 = vld [vmem:[%s1 + $0x1568] sm:$0xff]
  %v746 = vld [vmem:[%s1 + $0x1570] sm:$0xff]
  %v747 = vld [vmem:[%s1 + $0x1578] sm:$0xff]
  %v748 = vld [vmem:[%s1 + $0x1580] sm:$0xff]
  %v749 = vld [vmem:[%s1 + $0x1588] sm:$0xff]
  %v750 = vld [vmem:[%s1 + $0x1590] sm:$0xff]
  %v751 = vld [vmem:[%s1 + $0x1598] sm:$0xff]
  %v752 = vld [vmem:[%s1 + $0x15a0] sm:$0xff]
  %v753 = vld [vmem:[%s1 + $0x15a8] sm:$0xff]
  %v754 = vld [vmem:[%s1 + $0x15b0] sm:$0xff]
  %v755 = vld [vmem:[%s1 + $0x15b8] sm:$0xff]
  %v756 = vld [vmem:[%s1 + $0x15c0] sm:$0xff]
  %v757 = vld [vmem:[%s1 + $0x15c8] sm:$0xff]
  %v758 = vld [vmem:[%s1 + $0x15d0] sm:$0xff]
  %v759 = vld [vmem:[%s1 + $0x15d8] sm:$0xff]
  %v760 = vld [vmem:[%s1 + $0x15e0] sm:$0xff]
  %v761 = vld [vmem:[%s1 + $0x15e8] sm:$0xff]
  %v762 = vld [vmem:[%s1 + $0x15f0] sm:$0xff]
  %v763 = vld [vmem:[%s1 + $0x15f8] sm:$0xff]
  %v764 = vld [vmem:[%s1 + $0x1600] sm:$0xff]
  %v765 = vld [vmem:[%s1 + $0x1608] sm:$0xff]
  %v766 = vld [vmem:[%s1 + $0x1610] sm:$0xff]
  %v767 = vld [vmem:[%s1 + $0x1618] sm:$0xff]
  %v768 = vld [vmem:[%s1 + $0x1620] sm:$0xff]
  %v769 = vld [vmem:[%s1 + $0x1628] sm:$0xff]
  %v770 = vld [vmem:[%s1 + $0x1630] sm:$0xff]
  %v771 = vld [vmem:[%s1 + $0x1638] sm:$0xff]
  %v772 = vld [vmem:[%s1 + $0x1640] sm:$0xff]
  %v773 = vld [vmem:[%s1 + $0x1648] sm:$0xff]
  %v774 = vld [vmem:[%s1 + $0x1650] sm:$0xff]
  %v775 = vld [vmem:[%s1 + $0x1658] sm:$0xff]
  %v776 = vld [vmem:[%s1 + $0x1660] sm:$0xff]
  %v777 = vld [vmem:[%s1 + $0x1668] sm:$0xff]
  %v778 = vld [vmem:[%s1 + $0x1670] sm:$0xff]
  %v779 = vld [vmem:[%s1 + $0x1678] sm:$0xff]
  %v780 = vld [vmem:[%s1 + $0x1680] sm:$0xff]
  %v781 = vld [vmem:[%s1 + $0x1688] sm:$0xff]
  %v782 = vld [vmem:[%s1 + $0x1690] sm:$0xff]
  %v783 = vld [vmem:[%s1 + $0x1698] sm:$0xff]
  %v784 = vld [vmem:[%s1 + $0x16a0] sm:$0xff]
  %v785 = vld [vmem:[%s1 + $0x16a8] sm:$0xff]
  %v786 = vld [vmem:[%s1 + $0x16b0] sm:$0xff]
  %v787 = vld [vmem:[%s1 + $0x16b8] sm:$0xff]
  %v788 = vld [vmem:[%s1 + $0x16c0] sm:$0xff]
  %v789 = vld [vmem:[%s1 + $0x16c8] sm:$0xff]
  %v790 = vld [vmem:[%s1 + $0x16d0] sm:$0xff]
  %v791 = vld [vmem:[%s1 + $0x16d8] sm:$0xff]
  %v792 = vld [vmem:[%s1 + $0x16e0] sm:$0xff]
  %v793 = vld [vmem:[%s1 + $0x16e8] sm:$0xff]
  %v794 = vld [vmem:[%s1 + $0x16f0] sm:$0xff]
  %v795 = vld [vmem:[%s1 + $0x16f8] sm:$0xff]
  %v796 = vld [vmem:[%s1 + $0x1700] sm:$0xff]
  %v797 = vld [vmem:[%s1 + $0x1708] sm:$0xff]
  %v798 = vld [vmem:[%s1 + $0x1710] sm:$0xff]
  %v799 = vld [vmem:[%s1 + $0x1718] sm:$0xff]
  %v800 = vld [vmem:[%s1 + $0x1720] sm:$0xff]
  %v801 = vld [vmem:[%s1 + $0x1728] sm:$0xff]
  %v802 = vld [vmem:[%s1 + $0x1730] sm:$0xff]
  %v803 = vld [vmem:[%s1 + $0x1738] sm:$0xff]
  %v804 = vld [vmem:[%s1 + $0x1740] sm:$0xff]
  %v805 = vld [vmem:[%s1 + $0x1748] sm:$0xff]
  %v806 = vld [vmem:[%s1 + $0x1750] sm:$0xff]
  %v807 = vld [vmem:[%s1 + $0x1758] sm:$0xff]
  %v808 = vld [vmem:[%s1 + $0x1760] sm:$0xff]
  %v809 = vld [vmem:[%s1 + $0x1768] sm:$0xff]
  %v810 = vld [vmem:[%s1 + $0x1770] sm:$0xff]
  %v811 = vld [vmem:[%s1 + $0x1778] sm:$0xff]
  %v812 = vld [vmem:[%s1 + $0x1780] sm:$0xff]
  %v813 = vld [vmem:[%s1 + $0x1788] sm:$0xff]
  %v814 = vld [vmem:[%s1 + $0x1790] sm:$0xff]
  %v815 = vld [vmem:[%s1 + $0x1798] sm:$0xff]
  %v816 = vld [vmem:[%s1 + $0x17a0] sm:$0xff]
  %v817 = vld [vmem:[%s1 + $0x17a8] sm:$0xff]
  %v818 = vld [vmem:[%s1 + $0x17b0] sm:$0xff]
  %v819 = vld [vmem:[%s1 + $0x17b8] sm:$0xff]
  %v820 = vld [vmem:[%s1 + $0x17c0] sm:$0xff]
  %v821 = vld [vmem:[%s1 + $0x17c8] sm:$0xff]
  %v822 = vld [vmem:[%s1 + $0x17d0] sm:$0xff]
  %v823 = vld [vmem:[%s1 + $0x17d8] sm:$0xff]
  %v824 = vld [vmem:[%s1 + $0x17e0] sm:$0xff]
  %v825 = vld [vmem:[%s1 + $0x17e8] sm:$0xff]
  %v826 = vld [vmem:[%s1 + $0x17f0] sm:$0xff]
  %v827 = vld [vmem:[%s1 + $0x17f8] sm:$0xff]
  %v828 = vld [vmem:[%s1 + $0x1800] sm:$0xff]
  %v829 = vld [vmem:[%s1 + $0x1808] sm:$0xff]
  %v830 = vld [vmem:[%s1 + $0x1810] sm:$0xff]
  %v831 = vld [vmem:[%s1 + $0x1818] sm:$0xff]
  %v832 = vld [vmem:[%s1 + $0x1820] sm:$0xff]
  %v833 = vld [vmem:[%s1 + $0x1828] sm:$0xff]
  %v834 = vld [vmem:[%s1 + $0x1830] sm:$0xff]
  %v835 = vld [vmem:[%s1 + $0x1838] sm:$0xff]
  %v836 = vld [vmem:[%s1 + $0x1840] sm:$0xff]
  %v837 = vld [vmem:[%s1 + $0x1848] sm:$0xff]
  %v838 = vld [vmem:[%s1 + $0x1850] sm:$0xff]
  %v839 = vld [vmem:[%s1 + $0x1858] sm:$0xff]
  %v840 = vld [vmem:[%s1 + $0x1860] sm:$0xff]
  %v841 = vld [vmem:[%s1 + $0x1868] sm:$0xff]
  %v842 = vld [vmem:[%s1 + $0x1870] sm:$0xff]
  %v843 = vld [vmem:[%s1 + $0x1878] sm:$0xff]
  %v844 = vld [vmem:[%s1 + $0x1880] sm:$0xff]
  %v845 = vld [vmem:[%s1 + $0x1888] sm:$0xff]
  %v846 = vld [vmem:[%s1 + $0x1890] sm:$0xff]
  %v847 = vld [vmem:[%s1 + $0x1898] sm:$0xff]
  %v848 = vld [vmem:[%s1 + $0x18a0] sm:$0xff]
  %v849 = vld [vmem:[%s1 + $0x18a8] sm:$0xff]
  %v850 = vld [vmem:[%s1 + $0x18b0] sm:$0xff]
  %v851 = vld [vmem:[%s1 + $0x18b8] sm:$0xff]
  %v852 = vld [vmem:[%s1 + $0x18c0] sm:$0xff]
  %v853 = vld [vmem:[%s1 + $0x18c8] sm:$0xff]
  %v854 = vld [vmem:[%s1 + $0x18d0] sm:$0xff]
  %v855 = vld [vmem:[%s1 + $0x18d8] sm:$0xff]
  %v856 = vld [vmem:[%s1 + $0x18e0] sm:$0xff]
  %v857 = vld [vmem:[%s1 + $0x18e8] sm:$0xff]
  %v858 = vld [vmem:[%s1 + $0x18f0] sm:$0xff]
  %v859 = vld [vmem:[%s1 + $0x18f8] sm:$0xff]
  %v860 = vld [vmem:[%s1 + $0x1900] sm:$0xff]
  %v861 = vld [vmem:[%s1 + $0x1908] sm:$0xff]
  %v862 = vld [vmem:[%s1 + $0x1910] sm:$0xff]
  %v863 = vld [vmem:[%s1 + $0x1918] sm:$0xff]
  %v864 = vld [vmem:[%s1 + $0x1920] sm:$0xff]
  %v865 = vld [vmem:[%s1 + $0x1928] sm:$0xff]
  %v866 = vld [vmem:[%s1 + $0x1930] sm:$0xff]
  %v867 = vld [vmem:[%s1 + $0x1938] sm:$0xff]
  %v868 = vld [vmem:[%s1 + $0x1940] sm:$0xff]
  %v869 = vld [vmem:[%s1 + $0x1948] sm:$0xff]
  %v870 = vld [vmem:[%s1 + $0x1950] sm:$0xff]
  %v871 = vld [vmem:[%s1 + $0x1958] sm:$0xff]
  %v872 = vld [vmem:[%s1 + $0x1960] sm:$0xff]
  %v873 = vld [vmem:[%s1 + $0x1968] sm:$0xff]
  %v874 = vld [vmem:[%s1 + $0x1970] sm:$0xff]
  %v875 = vld [vmem:[%s1 + $0x1978] sm:$0xff]
  %v876 = vld [vmem:[%s1 + $0x1980] sm:$0xff]
  %v877 = vld [vmem:[%s1 + $0x1988] sm:$0xff]
  %v878 = vld [vmem:[%s1 + $0x1990] sm:$0xff]
  %v879 = vld [vmem:[%s1 + $0x1998] sm:$0xff]
  %v880 = vld [vmem:[%s1 + $0x19a0] sm:$0xff]
  %v881 = vld [vmem:[%s1 + $0x19a8] sm:$0xff]
  %v882 = vld [vmem:[%s1 + $0x19b0] sm:$0xff]
  %v883 = vld [vmem:[%s1 + $0x19b8] sm:$0xff]
  %v884 = vld [vmem:[%s1 + $0x19c0] sm:$0xff]
  %v885 = vld [vmem:[%s1 + $0x19c8] sm:$0xff]
  %v886 = vld [vmem:[%s1 + $0x19d0] sm:$0xff]
  %v887 = vld [vmem:[%s1 + $0x19d8] sm:$0xff]
  %v888 = vld [vmem:[%s1 + $0x19e0] sm:$0xff]
  %v889 = vld [vmem:[%s1 + $0x19e8] sm:$0xff]
  %v890 = vld [vmem:[%s1 + $0x19f0] sm:$0xff]
  %v891 = vld [vmem:[%s1 + $0x19f8] sm:$0xff]
  %v892 = vld [vmem:[%s1 + $0x1a00] sm:$0xff]
  %v893 = vld [vmem:[%s1 + $0x1a08] sm:$0xff]
  %v894 = vld [vmem:[%s1 + $0x1a10] sm:$0xff]
  %v895 = vld [vmem:[%s1 + $0x1a18] sm:$0xff]
  %v896 = vld [vmem:[%s1 + $0x1a20] sm:$0xff]
  %v897 = vld [vmem:[%s1 + $0x1a28] sm:$0xff]
  %v898 = vld [vmem:[%s1 + $0x1a30] sm:$0xff]
  %v899 = vld [vmem:[%s1 + $0x1a38] sm:$0xff]
  %v900 = vld [vmem:[%s1 + $0x1a40] sm:$0xff]
  %v901 = vld [vmem:[%s1 + $0x1a48] sm:$0xff]
  %v902 = vld [vmem:[%s1 + $0x1a50] sm:$0xff]
  %v903 = vld [vmem:[%s1 + $0x1a58] sm:$0xff]
  %v904 = vld [vmem:[%s1 + $0x1a60] sm:$0xff]
  %v905 = vld [vmem:[%s1 + $0x1a68] sm:$0xff]
  %v906 = vld [vmem:[%s1 + $0x1a70] sm:$0xff]
  %v907 = vld [vmem:[%s1 + $0x1a78] sm:$0xff]
  %v908 = vld [vmem:[%s1 + $0x1a80] sm:$0xff]
  %v909 = vld [vmem:[%s1 + $0x1a88] sm:$0xff]
  %v910 = vld [vmem:[%s1 + $0x1a90] sm:$0xff]
  %v911 = vld [vmem:[%s1 + $0x1a98] sm:$0xff]
  %v912 = vld [vmem:[%s1 + $0x1aa0] sm:$0xff]
  %v913 = vld [vmem:[%s1 + $0x1aa8] sm:$0xff]
  %v914 = vld [vmem:[%s1 + $0x1ab0] sm:$0xff]
  %v915 = vld [vmem:[%s1 + $0x1ab8] sm:$0xff]
  %v916 = vld [vmem:[%s1 + $0x1ac0] sm:$0xff]
  %v917 = vld [vmem:[%s1 + $0x1ac8] sm:$0xff]
  %v918 = vld [vmem:[%s1 + $0x1ad0] sm:$0xff]
  %v919 = vld [vmem:[%s1 + $0x1ad8] sm:$0xff]
  %v920 = vld [vmem:[%s1 + $0x1ae0] sm:$0xff]
  %v921 = vld [vmem:[%s1 + $0x1ae8] sm:$0xff]
  %v922 = vld [vmem:[%s1 + $0x1af0] sm:$0xff]
  %v923 = vld [vmem:[%s1 + $0x1af8] sm:$0xff]
  %v924 = vld [vmem:[%s1 + $0x1b00] sm:$0xff]
  %v925 = vld [vmem:[%s1 + $0x1b08] sm:$0xff]
  %v926 = vld [vmem:[%s1 + $0x1b10] sm:$0xff]
  %v927 = vld [vmem:[%s1 + $0x1b18] sm:$0xff]
  %v928 = vld [vmem:[%s1 + $0x1b20] sm:$0xff]
  %v929 = vld [vmem:[%s1 + $0x1b28] sm:$0xff]
  %v930 = vld [vmem:[%s1 + $0x1b30] sm:$0xff]
  %v931 = vld [vmem:[%s1 + $0x1b38] sm:$0xff]
  %v932 = vld [vmem:[%s1 + $0x1b40] sm:$0xff]
  %v933 = vld [vmem:[%s1 + $0x1b48] sm:$0xff]
  %v934 = vld [vmem:[%s1 + $0x1b50] sm:$0xff]
  %v935 = vld [vmem:[%s1 + $0x1b58] sm:$0xff]
  %v936 = vld [vmem:[%s1 + $0x1b60] sm:$0xff]
  %v937 = vld [vmem:[%s1 + $0x1b68] sm:$0xff]
  %v938 = vld [vmem:[%s1 + $0x1b70] sm:$0xff]
  %v939 = vld [vmem:[%s1 + $0x1b78] sm:$0xff]
  %v940 = vld [vmem:[%s1 + $0x1b80] sm:$0xff]
  %v941 = vld [vmem:[%s1 + $0x1b88] sm:$0xff]
  %v942 = vld [vmem:[%s1 + $0x1b90] sm:$0xff]
  %v943 = vld [vmem:[%s1 + $0x1b98] sm:$0xff]
  %v944 = vld [vmem:[%s1 + $0x1ba0] sm:$0xff]
  %v945 = vld [vmem:[%s1 + $0x1ba8] sm:$0xff]
  %v946 = vld [vmem:[%s1 + $0x1bb0] sm:$0xff]
  %v947 = vld [vmem:[%s1 + $0x1bb8] sm:$0xff]
  %v948 = vld [vmem:[%s1 + $0x1bc0] sm:$0xff]
  %v949 = vld [vmem:[%s1 + $0x1bc8] sm:$0xff]
  %v950 = vld [vmem:[%s1 + $0x1bd0] sm:$0xff]
  %v951 = vld [vmem:[%s1 + $0x1bd8] sm:$0xff]
  %v952 = vld [vmem:[%s1 + $0x1be0] sm:$0xff]
  %v953 = vld [vmem:[%s1 + $0x1be8] sm:$0xff]
  %v954 = vld [vmem:[%s1 + $0x1bf0] sm:$0xff]
  %v955 = vld [vmem:[%s1 + $0x1bf8] sm:$0xff]
  %v956 = vld [vmem:[%s1 + $0x1c00] sm:$0xff]
  %v957 = vld [vmem:[%s1 + $0x1c08] sm:$0xff]
  %v958 = vld [vmem:[%s1 + $0x1c10] sm:$0xff]
  %v959 = vld [vmem:[%s1 + $0x1c18] sm:$0xff]
  %v960 = vld [vmem:[%s1 + $0x1c20] sm:$0xff]
  %v961 = vld [vmem:[%s1 + $0x1c28] sm:$0xff]
  %v962 = vld [vmem:[%s1 + $0x1c30] sm:$0xff]
  %v963 = vld [vmem:[%s1 + $0x1c38] sm:$0xff]
  %v964 = vld [vmem:[%s1 + $0x1c40] sm:$0xff]
  %v965 = vld [vmem:[%s1 + $0x1c48] sm:$0xff]
  %v966 = vld [vmem:[%s1 + $0x1c50] sm:$0xff]
  %v967 = vld [vmem:[%s1 + $0x1c58] sm:$0xff]
  %v968 = vld [vmem:[%s1 + $0x1c60] sm:$0xff]
  %v969 = vld [vmem:[%s1 + $0x1c68] sm:$0xff]
  %v970 = vld [vmem:[%s1 + $0x1c70] sm:$0xff]
  %v971 = vld [vmem:[%s1 + $0x1c78] sm:$0xff]
  %v972 = vld [vmem:[%s1 + $0x1c80] sm:$0xff]
  %v973 = vld [vmem:[%s1 + $0x1c88] sm:$0xff]
  %v974 = vld [vmem:[%s1 + $0x1c90] sm:$0xff]
  %v975 = vld [vmem:[%s1 + $0x1c98] sm:$0xff]
  %v976 = vld [vmem:[%s1 + $0x1ca0] sm:$0xff]
  %v977 = vld [vmem:[%s1 + $0x1ca8] sm:$0xff]
  %v978 = vld [vmem:[%s1 + $0x1cb0] sm:$0xff]
  %v979 = vld [vmem:[%s1 + $0x1cb8] sm:$0xff]
  %v980 = vld [vmem:[%s1 + $0x1cc0] sm:$0xff]
  %v981 = vld [vmem:[%s1 + $0x1cc8] sm:$0xff]
  %v982 = vld [vmem:[%s1 + $0x1cd0] sm:$0xff]
  %v983 = vld [vmem:[%s1 + $0x1cd8] sm:$0xff]
  %v984 = vld [vmem:[%s1 + $0x1ce0] sm:$0xff]
  %v985 = vld [vmem:[%s1 + $0x1ce8] sm:$0xff]
  %v986 = vld [vmem:[%s1 + $0x1cf0] sm:$0xff]
  %v987 = vld [vmem:[%s1 + $0x1cf8] sm:$0xff]
  %v988 = vld [vmem:[%s1 + $0x1d00] sm:$0xff]
  %v989 = vld [vmem:[%s1 + $0x1d08] sm:$0xff]
  %v990 = vld [vmem:[%s1 + $0x1d10] sm:$0xff]
  %v991 = vld [vmem:[%s1 + $0x1d18] sm:$0xff]
  %v992 = vld [vmem:[%s1 + $0x1d20] sm:$0xff]
  %v993 = vld [vmem:[%s1 + $0x1d28] sm:$0xff]
  %v994 = vld [vmem:[%s1 + $0x1d30] sm:$0xff]
  %v995 = vld [vmem:[%s1 + $0x1d38] sm:$0xff]
  %v996 = vld [vmem:[%s1 + $0x1d40] sm:$0xff]
  %v997 = vld [vmem:[%s1 + $0x1d48] sm:$0xff]
  %v998 = vld [vmem:[%s1 + $0x1d50] sm:$0xff]
  %v999 = vld [vmem:[%s1 + $0x1d58] sm:$0xff]
  %v1000 = vld [vmem:[%s1 + $0x1d60] sm:$0xff]
  %v1001 = vld [vmem:[%s1 + $0x1d68] sm:$0xff]
  %v1002 = vld [vmem:[%s1 + $0x1d70] sm:$0xff]
  %v1003 = vld [vmem:[%s1 + $0x1d78] sm:$0xff]
  %v1004 = vld [vmem:[%s1 + $0x1d80] sm:$0xff]
  %v1005 = vld [vmem:[%s1 + $0x1d88] sm:$0xff]
  %v1006 = vld [vmem:[%s1 + $0x1d90] sm:$0xff]
  %v1007 = vld [vmem:[%s1 + $0x1d98] sm:$0xff]
  %v1008 = vld [vmem:[%s1 + $0x1da0] sm:$0xff]
  %v1009 = vld [vmem:[%s1 + $0x1da8] sm:$0xff]
  %v1010 = vld [vmem:[%s1 + $0x1db0] sm:$0xff]
  %v1011 = vld [vmem:[%s1 + $0x1db8] sm:$0xff]
  %v1012 = vld [vmem:[%s1 + $0x1dc0] sm:$0xff]
  %v1013 = vld [vmem:[%s1 + $0x1dc8] sm:$0xff]
  %v1014 = vld [vmem:[%s1 + $0x1dd0] sm:$0xff]
  %v1015 = vld [vmem:[%s1 + $0x1dd8] sm:$0xff]
  %v1016 = vld [vmem:[%s1 + $0x1de0] sm:$0xff]
  %v1017 = vld [vmem:[%s1 + $0x1de8] sm:$0xff]
  %v1018 = vld [vmem:[%s1 + $0x1df0] sm:$0xff]
  %v1019 = vld [vmem:[%s1 + $0x1df8] sm:$0xff]
  %v1020 = vld [vmem:[%s1 + $0x1e00] sm:$0xff]
  %v1021 = vld [vmem:[%s1 + $0x1e08] sm:$0xff]
  %v1022 = vld [vmem:[%s1 + $0x1e10] sm:$0xff]
  %v1023 = vld [vmem:[%s1 + $0x1e18] sm:$0xff]
  %v1024 = vld [vmem:[%s1 + $0x1e20] sm:$0xff]
  %v1025 = vld [vmem:[%s1 + $0x1e28] sm:$0xff]
  %v1026 = vld [vmem:[%s1 + $0x1e30] sm:$0xff]
  %v1027 = vld [vmem:[%s1 + $0x1e38] sm:$0xff]
  %v1028 = vld [vmem:[%s1 + $0x1e40] sm:$0xff]
  %v1029 = vld [vmem:[%s1 + $0x1e48] sm:$0xff]
  %v1030 = vld [vmem:[%s1 + $0x1e50] sm:$0xff]
  %v1031 = vld [vmem:[%s1 + $0x1e58] sm:$0xff]
  %v1032 = vld [vmem:[%s1 + $0x1e60] sm:$0xff]
  %v1033 = vld [vmem:[%s1 + $0x1e68] sm:$0xff]
  %v1034 = vld [vmem:[%s1 + $0x1e70] sm:$0xff]
  %v1035 = vld [vmem:[%s1 + $0x1e78] sm:$0xff]
  %v1036 = vld [vmem:[%s1 + $0x1e80] sm:$0xff]
  %v1037 = vld [vmem:[%s1 + $0x1e88] sm:$0xff]
  %v1038 = vld [vmem:[%s1 + $0x1e90] sm:$0xff]
  %v1039 = vld [vmem:[%s1 + $0x1e98] sm:$0xff]
  %v1040 = vld [vmem:[%s1 + $0x1ea0] sm:$0xff]
  %v1041 = vld [vmem:[%s1 + $0x1ea8] sm:$0xff]
  %v1042 = vld [vmem:[%s1 + $0x1eb0] sm:$0xff]
  %v1043 = vld [vmem:[%s1 + $0x1eb8] sm:$0xff]
  %v1044 = vld [vmem:[%s1 + $0x1ec0] sm:$0xff]
  %v1045 = vld [vmem:[%s1 + $0x1ec8] sm:$0xff]
  %v1046 = vld [vmem:[%s1 + $0x1ed0] sm:$0xff]
  %v1047 = vld [vmem:[%s1 + $0x1ed8] sm:$0xff]
  %v1048 = vld [vmem:[%s1 + $0x1ee0] sm:$0xff]
  %v1049 = vld [vmem:[%s1 + $0x1ee8] sm:$0xff]
  %v1050 = vld [vmem:[%s1 + $0x1ef0] sm:$0xff]
  %v1051 = vld [vmem:[%s1 + $0x1ef8] sm:$0xff]
  %v1052 = vld [vmem:[%s1 + $0x1f00] sm:$0xff]
  %v1053 = vld [vmem:[%s1 + $0x1f08] sm:$0xff]
  %v1054 = vld [vmem:[%s1 + $0x1f10] sm:$0xff]
  %v1055 = vld [vmem:[%s1 + $0x1f18] sm:$0xff]
  %v1056 = vld [vmem:[%s1 + $0x1f20] sm:$0xff]
  %v1057 = vld [vmem:[%s1 + $0x1f28] sm:$0xff]
  %v1058 = vld [vmem:[%s1 + $0x1f30] sm:$0xff]
  %v1059 = vld [vmem:[%s1 + $0x1f38] sm:$0xff]
  %v1060 = vld [vmem:[%s1 + $0x1f40] sm:$0xff]
  %v1061 = vld [vmem:[%s1 + $0x1f48] sm:$0xff]
  %v1062 = vld [vmem:[%s1 + $0x1f50] sm:$0xff]
  %v1063 = vld [vmem:[%s1 + $0x1f58] sm:$0xff]
  %v1064 = vld [vmem:[%s1 + $0x1f60] sm:$0xff]
  %v1065 = vld [vmem:[%s1 + $0x1f68] sm:$0xff]
  %v1066 = vld [vmem:[%s1 + $0x1f70] sm:$0xff]
  %v1067 = vld [vmem:[%s1 + $0x1f78] sm:$0xff]
  %v1068 = vld [vmem:[%s1 + $0x1f80] sm:$0xff]
  %v1069 = vld [vmem:[%s1 + $0x1f88] sm:$0xff]
  %v1070 = vld [vmem:[%s1 + $0x1f90] sm:$0xff]
  %v1071 = vld [vmem:[%s1 + $0x1f98] sm:$0xff]
  %v1072 = vld [vmem:[%s1 + $0x1fa0] sm:$0xff]
  %v1073 = vld [vmem:[%s1 + $0x1fa8] sm:$0xff]
  %v1074 = vld [vmem:[%s1 + $0x1fb0] sm:$0xff]
  %v1075 = vld [vmem:[%s1 + $0x1fb8] sm:$0xff]
  %v1076 = vld [vmem:[%s1 + $0x1fc0] sm:$0xff]
  %v1077 = vld [vmem:[%s1 + $0x1fc8] sm:$0xff]
  %v1078 = vld [vmem:[%s1 + $0x1fd0] sm:$0xff]
  %v1079 = vld [vmem:[%s1 + $0x1fd8] sm:$0xff]
  %v1080 = vld [vmem:[%s1 + $0x1fe0] sm:$0xff]
  %v1081 = vld [vmem:[%s1 + $0x1fe8] sm:$0xff]
  %v1082 = vld [vmem:[%s1 + $0x1ff0] sm:$0xff]
  %v1083 = vld [vmem:[%s1 + $0x1ff8] sm:$0xff]
  %v1084 = vld [vmem:[%s1 + $0x2000] sm:$0xff]
  %v1085 = vld [vmem:[%s1 + $0x2008] sm:$0xff]
  %v1086 = vld [vmem:[%s1 + $0x2010] sm:$0xff]
  %v1087 = vld [vmem:[%s1 + $0x2018] sm:$0xff]
  %v1088 = vld [vmem:[%s1 + $0x2020] sm:$0xff]
  %v1089 = vld [vmem:[%s1 + $0x2028] sm:$0xff]
  %v1090 = vld [vmem:[%s1 + $0x2030] sm:$0xff]
  %v1091 = vld [vmem:[%s1 + $0x2038] sm:$0xff]
  %v1092 = vld [vmem:[%s1 + $0x2040] sm:$0xff]
  %v1093 = vld [vmem:[%s1 + $0x2048] sm:$0xff]
  %v1094 = vld [vmem:[%s1 + $0x2050] sm:$0xff]
  %v1095 = vld [vmem:[%s1 + $0x2058] sm:$0xff]
  %v1096 = vld [vmem:[%s1 + $0x2060] sm:$0xff]
  %v1097 = vld [vmem:[%s1 + $0x2068] sm:$0xff]
  %v1098 = vld [vmem:[%s1 + $0x2070] sm:$0xff]
  %v1099 = vld [vmem:[%s1 + $0x2078] sm:$0xff]
  %v1100 = vld [vmem:[%s1 + $0x2080] sm:$0xff]
  %v1101 = vld [vmem:[%s1 + $0x2088] sm:$0xff]
  %v1102 = vld [vmem:[%s1 + $0x2090] sm:$0xff]
  %v1103 = vld [vmem:[%s1 + $0x2098] sm:$0xff]
  %v1104 = vld [vmem:[%s1 + $0x20a0] sm:$0xff]
  %v1105 = vld [vmem:[%s1 + $0x20a8] sm:$0xff]
  %v1106 = vld [vmem:[%s1 + $0x20b0] sm:$0xff]
  %v1107 = vld [vmem:[%s1 + $0x20b8] sm:$0xff]
  %v1108 = vld [vmem:[%s1 + $0x20c0] sm:$0xff]
  %v1109 = vld [vmem:[%s1 + $0x20c8] sm:$0xff]
  %v1110 = vld [vmem:[%s1 + $0x20d0] sm:$0xff]
  %v1111 = vld [vmem:[%s1 + $0x20d8] sm:$0xff]
  %v1112 = vld [vmem:[%s1 + $0x20e0] sm:$0xff]
  %v1113 = vld [vmem:[%s1 + $0x20e8] sm:$0xff]
  %v1114 = vld [vmem:[%s1 + $0x20f0] sm:$0xff]
  %v1115 = vld [vmem:[%s1 + $0x20f8] sm:$0xff]
  %v1116 = vld [vmem:[%s1 + $0x2100] sm:$0xff]
  %v1117 = vld [vmem:[%s1 + $0x2108] sm:$0xff]
  %v1118 = vld [vmem:[%s1 + $0x2110] sm:$0xff]
  %v1119 = vld [vmem:[%s1 + $0x2118] sm:$0xff]
  %v1120 = vld [vmem:[%s1 + $0x2120] sm:$0xff]
  %v1121 = vld [vmem:[%s1 + $0x2128] sm:$0xff]
  %v1122 = vld [vmem:[%s1 + $0x2130] sm:$0xff]
  %v1123 = vld [vmem:[%s1 + $0x2138] sm:$0xff]
  %v1124 = vld [vmem:[%s1 + $0x2140] sm:$0xff]
  %v1125 = vld [vmem:[%s1 + $0x2148] sm:$0xff]
  %v1126 = vld [vmem:[%s1 + $0x2150] sm:$0xff]
  %v1127 = vld [vmem:[%s1 + $0x2158] sm:$0xff]
  %v1128 = vld [vmem:[%s1 + $0x2160] sm:$0xff]
  %v1129 = vld [vmem:[%s1 + $0x2168] sm:$0xff]
  %v1130 = vld [vmem:[%s1 + $0x2170] sm:$0xff]
  %v1131 = vld [vmem:[%s1 + $0x2178] sm:$0xff]
  %v1132 = vld [vmem:[%s1 + $0x2180] sm:$0xff]
  %v1133 = vld [vmem:[%s1 + $0x2188] sm:$0xff]
  %v1134 = vld [vmem:[%s1 + $0x2190] sm:$0xff]
  %v1135 = vld [vmem:[%s1 + $0x2198] sm:$0xff]
  %v1136 = vld [vmem:[%s1 + $0x21a0] sm:$0xff]
  %v1137 = vld [vmem:[%s1 + $0x21a8] sm:$0xff]
  %v1138 = vld [vmem:[%s1 + $0x21b0] sm:$0xff]
  %v1139 = vld [vmem:[%s1 + $0x21b8] sm:$0xff]
  %v1140 = vld [vmem:[%s1 + $0x21c0] sm:$0xff]
  %v1141 = vld [vmem:[%s1 + $0x21c8] sm:$0xff]
  %v1142 = vld [vmem:[%s1 + $0x21d0] sm:$0xff]
  %v1143 = vld [vmem:[%s1 + $0x21d8] sm:$0xff]
  %v1144 = vld [vmem:[%s1 + $0x21e0] sm:$0xff]
  %v1145 = vld [vmem:[%s1 + $0x21e8] sm:$0xff]
  %v1146 = vld [vmem:[%s1 + $0x21f0] sm:$0xff]
  %v1147 = vld [vmem:[%s1 + $0x21f8] sm:$0xff]
  %v1148 = vld [vmem:[%s1 + $0x2200] sm:$0xff]
  %v1149 = vld [vmem:[%s1 + $0x2208] sm:$0xff]
  %v1150 = vld [vmem:[%s1 + $0x2210] sm:$0xff]
  %v1151 = vld [vmem:[%s1 + $0x2218] sm:$0xff]
  %v1152 = vld [vmem:[%s1 + $0x2220] sm:$0xff]
  %v1153 = vld [vmem:[%s1 + $0x2228] sm:$0xff]
  %v1154 = vld [vmem:[%s1 + $0x2230] sm:$0xff]
  %v1155 = vld [vmem:[%s1 + $0x2238] sm:$0xff]
  %v1156 = vld [vmem:[%s1 + $0x2240] sm:$0xff]
  %v1157 = vld [vmem:[%s1 + $0x2248] sm:$0xff]
  %v1158 = vld [vmem:[%s1 + $0x2250] sm:$0xff]
  %v1159 = vld [vmem:[%s1 + $0x2258] sm:$0xff]
  %v1160 = vld [vmem:[%s1 + $0x2260] sm:$0xff]
  %v1161 = vld [vmem:[%s1 + $0x2268] sm:$0xff]
  %v1162 = vld [vmem:[%s1 + $0x2270] sm:$0xff]
  %v1163 = vld [vmem:[%s1 + $0x2278] sm:$0xff]
  %v1164 = vld [vmem:[%s1 + $0x2280] sm:$0xff]
  %v1165 = vld [vmem:[%s1 + $0x2288] sm:$0xff]
  %v1166 = vld [vmem:[%s1 + $0x2290] sm:$0xff]
  %v1167 = vld [vmem:[%s1 + $0x2298] sm:$0xff]
  %v1168 = vld [vmem:[%s1 + $0x22a0] sm:$0xff]
  %v1169 = vld [vmem:[%s1 + $0x22a8] sm:$0xff]
  %v1170 = vld [vmem:[%s1 + $0x22b0] sm:$0xff]
  %v1171 = vld [vmem:[%s1 + $0x22b8] sm:$0xff]
  %v1172 = vld [vmem:[%s1 + $0x22c0] sm:$0xff]
  %v1173 = vld [vmem:[%s1 + $0x22c8] sm:$0xff]
  %v1174 = vld [vmem:[%s1 + $0x22d0] sm:$0xff]
  %v1175 = vld [vmem:[%s1 + $0x22d8] sm:$0xff]
  %v1176 = vld [vmem:[%s1 + $0x22e0] sm:$0xff]
  %v1177 = vld [vmem:[%s1 + $0x22e8] sm:$0xff]
  %v1178 = vld [vmem:[%s1 + $0x22f0] sm:$0xff]
  %v1179 = vld [vmem:[%s1 + $0x22f8] sm:$0xff]
  %v1180 = vld [vmem:[%s1 + $0x2300] sm:$0xff]
  %v1181 = vld [vmem:[%s1 + $0x2308] sm:$0xff]
  %v1182 = vld [vmem:[%s1 + $0x2310] sm:$0xff]
  %v1183 = vld [vmem:[%s1 + $0x2318] sm:$0xff]
  %v1184 = vld [vmem:[%s1 + $0x2320] sm:$0xff]
  %v1185 = vld [vmem:[%s1 + $0x2328] sm:$0xff]
  %v1186 = vld [vmem:[%s1 + $0x2330] sm:$0xff]
  %v1187 = vld [vmem:[%s1 + $0x2338] sm:$0xff]
  %v1188 = vld [vmem:[%s1 + $0x2340] sm:$0xff]
  %v1189 = vld [vmem:[%s1 + $0x2348] sm:$0xff]
  %v1190 = vld [vmem:[%s1 + $0x2350] sm:$0xff]
  %v1191 = vld [vmem:[%s1 + $0x2358] sm:$0xff]
  %v1192 = vld [vmem:[%s1 + $0x2360] sm:$0xff]
  %v1193 = vld [vmem:[%s1 + $0x2368] sm:$0xff]
  %v1194 = vld [vmem:[%s1 + $0x2370] sm:$0xff]
  %v1195 = vld [vmem:[%s1 + $0x2378] sm:$0xff]
  %v1196 = vld [vmem:[%s1 + $0x2380] sm:$0xff]
  %v1197 = vld [vmem:[%s1 + $0x2388] sm:$0xff]
  %v1198 = vld [vmem:[%s1 + $0x2390] sm:$0xff]
  %v1199 = vld [vmem:[%s1 + $0x2398] sm:$0xff]
  %v1200 = vld [vmem:[%s1 + $0x23a0] sm:$0xff]
  %v1201 = vld [vmem:[%s1 + $0x23a8] sm:$0xff]
  %v1202 = vld [vmem:[%s1 + $0x23b0] sm:$0xff]
  %v1203 = vld [vmem:[%s1 + $0x23b8] sm:$0xff]
  %v1204 = vld [vmem:[%s1 + $0x23c0] sm:$0xff]
  %v1205 = vld [vmem:[%s1 + $0x23c8] sm:$0xff]
  %v1206 = vld [vmem:[%s1 + $0x23d0] sm:$0xff]
  %v1207 = vld [vmem:[%s1 + $0x23d8] sm:$0xff]
  %v1208 = vld [vmem:[%s1 + $0x23e0] sm:$0xff]
  %v1209 = vld [vmem:[%s1 + $0x23e8] sm:$0xff]
  %v1210 = vld [vmem:[%s1 + $0x23f0] sm:$0xff]
  %v1211 = vld [vmem:[%s1 + $0x23f8] sm:$0xff]
  %v1212 = vld [vmem:[%s1 + $0x2400] sm:$0xff]
  %v1213 = vld [vmem:[%s1 + $0x2408] sm:$0xff]
  %v1214 = vld [vmem:[%s1 + $0x2410] sm:$0xff]
  %v1215 = vld [vmem:[%s1 + $0x2418] sm:$0xff]
  %v1216 = vld [vmem:[%s1 + $0x2420] sm:$0xff]
  %v1217 = vld [vmem:[%s1 + $0x2428] sm:$0xff]
  %v1218 = vld [vmem:[%s1 + $0x2430] sm:$0xff]
  %v1219 = vld [vmem:[%s1 + $0x2438] sm:$0xff]
  %v1220 = vld [vmem:[%s1 + $0x2440] sm:$0xff]
  %v1221 = vld [vmem:[%s1 + $0x2448] sm:$0xff]
  %v1222 = vld [vmem:[%s1 + $0x2450] sm:$0xff]
  %v1223 = vld [vmem:[%s1 + $0x2458] sm:$0xff]
  %v1224 = vld [vmem:[%s1 + $0x2460] sm:$0xff]
  %v1225 = vld [vmem:[%s1 + $0x2468] sm:$0xff]
  %v1226 = vld [vmem:[%s1 + $0x2470] sm:$0xff]
  %v1227 = vld [vmem:[%s1 + $0x2478] sm:$0xff]
  %v1228 = vld [vmem:[%s1 + $0x2480] sm:$0xff]
  %v1229 = vld [vmem:[%s1 + $0x2488] sm:$0xff]
  %v1230 = vld [vmem:[%s1 + $0x2490] sm:$0xff]
  %v1231 = vld [vmem:[%s1 + $0x2498] sm:$0xff]
  %v1232 = vld [vmem:[%s1 + $0x24a0] sm:$0xff]
  %v1233 = vld [vmem:[%s1 + $0x24a8] sm:$0xff]
  %v1234 = vld [vmem:[%s1 + $0x24b0] sm:$0xff]
  %v1235 = vld [vmem:[%s1 + $0x24b8] sm:$0xff]
  %v1236 = vld [vmem:[%s1 + $0x24c0] sm:$0xff]
  %v1237 = vld [vmem:[%s1 + $0x24c8] sm:$0xff]
  %v1238 = vld [vmem:[%s1 + $0x24d0] sm:$0xff]
  %v1239 = vld [vmem:[%s1 + $0x24d8] sm:$0xff]
  %v1240 = vld [vmem:[%s1 + $0x24e0] sm:$0xff]
  %v1241 = vld [vmem:[%s1 + $0x24e8] sm:$0xff]
  %v1242 = vld [vmem:[%s1 + $0x24f0] sm:$0xff]
  %v1243 = vld [vmem:[%s1 + $0x24f8] sm:$0xff]
  %v1244 = vld [vmem:[%s1 + $0x2500] sm:$0xff]
  %v1245 = vld [vmem:[%s1 + $0x2508] sm:$0xff]
  %v1246 = vld [vmem:[%s1 + $0x2510] sm:$0xff]
  %v1247 = vld [vmem:[%s1 + $0x2518] sm:$0xff]
  %v1248 = vld [vmem:[%s1 + $0x2520] sm:$0xff]
  %v1249 = vld [vmem:[%s1 + $0x2528] sm:$0xff]
  %v1250 = vld [vmem:[%s1 + $0x2530] sm:$0xff]
  %v1251 = vld [vmem:[%s1 + $0x2538] sm:$0xff]
  %v1252 = vld [vmem:[%s1 + $0x2540] sm:$0xff]
  %v1253 = vld [vmem:[%s1 + $0x2548] sm:$0xff]
  %v1254 = vld [vmem:[%s1 + $0x2550] sm:$0xff]
  %v1255 = vld [vmem:[%s1 + $0x2558] sm:$0xff]
  %v1256 = vld [vmem:[%s1 + $0x2560] sm:$0xff]
  %v1257 = vld [vmem:[%s1 + $0x2568] sm:$0xff]
  %v1258 = vld [vmem:[%s1 + $0x2570] sm:$0xff]
  %v1259 = vld [vmem:[%s1 + $0x2578] sm:$0xff]
  %v1260 = vld [vmem:[%s1 + $0x2580] sm:$0xff]
  %v1261 = vld [vmem:[%s1 + $0x2588] sm:$0xff]
  %v1262 = vld [vmem:[%s1 + $0x2590] sm:$0xff]
  %v1263 = vld [vmem:[%s1 + $0x2598] sm:$0xff]
  %v1264 = vld [vmem:[%s1 + $0x25a0] sm:$0xff]
  %v1265 = vld [vmem:[%s1 + $0x25a8] sm:$0xff]
  %v1266 = vld [vmem:[%s1 + $0x25b0] sm:$0xff]
  %v1267 = vld [vmem:[%s1 + $0x25b8] sm:$0xff]
  %v1268 = vld [vmem:[%s1 + $0x25c0] sm:$0xff]
  %v1269 = vld [vmem:[%s1 + $0x25c8] sm:$0xff]
  %v1270 = vld [vmem:[%s1 + $0x25d0] sm:$0xff]
  %v1271 = vld [vmem:[%s1 + $0x25d8] sm:$0xff]
  %v1272 = vld [vmem:[%s1 + $0x25e0] sm:$0xff]
  %v1273 = vld [vmem:[%s1 + $0x25e8] sm:$0xff]
  %v1274 = vld [vmem:[%s1 + $0x25f0] sm:$0xff]
  %v1275 = vld [vmem:[%s1 + $0x25f8] sm:$0xff]
  %v1276 = vld [vmem:[%s1 + $0x2600] sm:$0xff]
  %v1277 = vld [vmem:[%s1 + $0x2608] sm:$0xff]
  %v1278 = vld [vmem:[%s1 + $0x2610] sm:$0xff]
  %v1279 = vld [vmem:[%s1 + $0x2618] sm:$0xff]
  %v1280 = vld [vmem:[%s1 + $0x2620] sm:$0xff]
  %v1281 = vld [vmem:[%s1 + $0x2628] sm:$0xff]
  %v1282 = vld [vmem:[%s1 + $0x2630] sm:$0xff]
  %v1283 = vld [vmem:[%s1 + $0x2638] sm:$0xff]
  %v1284 = vld [vmem:[%s1 + $0x2640] sm:$0xff]
  %v1285 = vld [vmem:[%s1 + $0x2648] sm:$0xff]
  %v1286 = vld [vmem:[%s1 + $0x2650] sm:$0xff]
  %v1287 = vld [vmem:[%s1 + $0x2658] sm:$0xff]
  %v1288 = vld [vmem:[%s1 + $0x2660] sm:$0xff]
  %v1289 = vld [vmem:[%s1 + $0x2668] sm:$0xff]
  %v1290 = vld [vmem:[%s1 + $0x2670] sm:$0xff]
  %v1291 = vld [vmem:[%s1 + $0x2678] sm:$0xff]
  %v1292 = vld [vmem:[%s1 + $0x2680] sm:$0xff]
  %v1293 = vld [vmem:[%s1 + $0x2688] sm:$0xff]
  %v1294 = vld [vmem:[%s1 + $0x2690] sm:$0xff]
  %v1295 = vld [vmem:[%s1 + $0x2698] sm:$0xff]
  %v1296 = vld [vmem:[%s1 + $0x26a0] sm:$0xff]
  %v1297 = vld [vmem:[%s1 + $0x26a8] sm:$0xff]
  %v1298 = vld [vmem:[%s1 + $0x26b0] sm:$0xff]
  %v1299 = vld [vmem:[%s1 + $0x26b8] sm:$0xff]
  %v1300 = vld [vmem:[%s1 + $0x26c0] sm:$0xff]
  %v1301 = vld [vmem:[%s1 + $0x26c8] sm:$0xff]
  %v1302 = vld [vmem:[%s1 + $0x26d0] sm:$0xff]
  %v1303 = vld [vmem:[%s1 + $0x26d8] sm:$0xff]
  %v1304 = vld [vmem:[%s1 + $0x26e0] sm:$0xff]
  %v1305 = vld [vmem:[%s1 + $0x26e8] sm:$0xff]
  %v1306 = vld [vmem:[%s1 + $0x26f0] sm:$0xff]
  %v1307 = vld [vmem:[%s1 + $0x26f8] sm:$0xff]
  %v1308 = vld [vmem:[%s1 + $0x2700] sm:$0xff]
  %v1309 = vld [vmem:[%s1 + $0x2708] sm:$0xff]
  %v1310 = vld [vmem:[%s1 + $0x2710] sm:$0xff]
  %v1311 = vld [vmem:[%s1 + $0x2718] sm:$0xff]
  %v1312 = vld [vmem:[%s1 + $0x2720] sm:$0xff]
  %v1313 = vld [vmem:[%s1 + $0x2728] sm:$0xff]
  %v1314 = vld [vmem:[%s1 + $0x2730] sm:$0xff]
  %v1315 = vld [vmem:[%s1 + $0x2738] sm:$0xff]
  %v1316 = vld [vmem:[%s1 + $0x2740] sm:$0xff]
  %v1317 = vld [vmem:[%s1 + $0x2748] sm:$0xff]
  %v1318 = vld [vmem:[%s1 + $0x2750] sm:$0xff]
  %v1319 = vld [vmem:[%s1 + $0x2758] sm:$0xff]
  %v1320 = vld [vmem:[%s1 + $0x2760] sm:$0xff]
  %v1321 = vld [vmem:[%s1 + $0x2768] sm:$0xff]
  %v1322 = vld [vmem:[%s1 + $0x2770] sm:$0xff]
  %v1323 = vld [vmem:[%s1 + $0x2778] sm:$0xff]
  %v1324 = vld [vmem:[%s1 + $0x2780] sm:$0xff]
  %v1325 = vld [vmem:[%s1 + $0x2788] sm:$0xff]
  %v1326 = vld [vmem:[%s1 + $0x2790] sm:$0xff]
  %v1327 = vld [vmem:[%s1 + $0x2798] sm:$0xff]
  %v1328 = vld [vmem:[%s1 + $0x27a0] sm:$0xff]
  %v1329 = vld [vmem:[%s1 + $0x27a8] sm:$0xff]
  %v1330 = vld [vmem:[%s1 + $0x27b0] sm:$0xff]
  %v1331 = vld [vmem:[%s1 + $0x27b8] sm:$0xff]
  %v1332 = vld [vmem:[%s1 + $0x27c0] sm:$0xff]
  %v1333 = vld [vmem:[%s1 + $0x27c8] sm:$0xff]
  %v1334 = vld [vmem:[%s1 + $0x27d0] sm:$0xff]
  %v1335 = vld [vmem:[%s1 + $0x27d8] sm:$0xff]
  %v1336 = vld [vmem:[%s1 + $0x27e0] sm:$0xff]
  %v1337 = vld [vmem:[%s1 + $0x27e8] sm:$0xff]
  %v1338 = vld [vmem:[%s1 + $0x27f0] sm:$0xff]
  %v1339 = vld [vmem:[%s1 + $0x27f8] sm:$0xff]
  %v1340 = vld [vmem:[%s1 + $0x2800] sm:$0xff]
  %v1341 = vld [vmem:[%s1 + $0x2808] sm:$0xff]
  %v1342 = vld [vmem:[%s1 + $0x2810] sm:$0xff]
  %v1343 = vld [vmem:[%s1 + $0x2818] sm:$0xff]
  %v1344 = vld [vmem:[%s1 + $0x2820] sm:$0xff]
  %v1345 = vld [vmem:[%s1 + $0x2828] sm:$0xff]
  %v1346 = vld [vmem:[%s1 + $0x2830] sm:$0xff]
  %v1347 = vld [vmem:[%s1 + $0x2838] sm:$0xff]
  %v1348 = vld [vmem:[%s1 + $0x2840] sm:$0xff]
  %v1349 = vld [vmem:[%s1 + $0x2848] sm:$0xff]
  %v1350 = vld [vmem:[%s1 + $0x2850] sm:$0xff]
  %v1351 = vld [vmem:[%s1 + $0x2858] sm:$0xff]
  %v1352 = vld [vmem:[%s1 + $0x2860] sm:$0xff]
  %v1353 = vld [vmem:[%s1 + $0x2868] sm:$0xff]
  %v1354 = vld [vmem:[%s1 + $0x2870] sm:$0xff]
  %v1355 = vld [vmem:[%s1 + $0x2878] sm:$0xff]
  %v1356 = vld [vmem:[%s1 + $0x2880] sm:$0xff]
  %v1357 = vld [vmem:[%s1 + $0x2888] sm:$0xff]
  %v1358 = vld [vmem:[%s1 + $0x2890] sm:$0xff]
  %v1359 = vld [vmem:[%s1 + $0x2898] sm:$0xff]
  %v1360 = vld [vmem:[%s1 + $0x28a0] sm:$0xff]
  %v1361 = vld [vmem:[%s1 + $0x28a8] sm:$0xff]
  %v1362 = vld [vmem:[%s1 + $0x28b0] sm:$0xff]
  %v1363 = vld [vmem:[%s1 + $0x28b8] sm:$0xff]
  %v1364 = vld [vmem:[%s1 + $0x28c0] sm:$0xff]
  %v1365 = vld [vmem:[%s1 + $0x28c8] sm:$0xff]
  %v1366 = vld [vmem:[%s1 + $0x28d0] sm:$0xff]
  %v1367 = vld [vmem:[%s1 + $0x28d8] sm:$0xff]
  %v1368 = vld [vmem:[%s1 + $0x28e0] sm:$0xff]
  %v1369 = vld [vmem:[%s1 + $0x28e8] sm:$0xff]
  %v1370 = vld [vmem:[%s1 + $0x28f0] sm:$0xff]
  %v1371 = vld [vmem:[%s1 + $0x28f8] sm:$0xff]
  %v1372 = vld [vmem:[%s1 + $0x2900] sm:$0xff]
  %v1373 = vld [vmem:[%s1 + $0x2908] sm:$0xff]
  %v1374 = vld [vmem:[%s1 + $0x2910] sm:$0xff]
  %v1375 = vld [vmem:[%s1 + $0x2918] sm:$0xff]
  %v1376 = vld [vmem:[%s1 + $0x2920] sm:$0xff]
  %v1377 = vld [vmem:[%s1 + $0x2928] sm:$0xff]
  %v1378 = vld [vmem:[%s1 + $0x2930] sm:$0xff]
  %v1379 = vld [vmem:[%s1 + $0x2938] sm:$0xff]
  %v1380 = vld [vmem:[%s1 + $0x2940] sm:$0xff]
  %v1381 = vld [vmem:[%s1 + $0x2948] sm:$0xff]
  %v1382 = vld [vmem:[%s1 + $0x2950] sm:$0xff]
  %v1383 = vld [vmem:[%s1 + $0x2958] sm:$0xff]
  %v1384 = vld [vmem:[%s1 + $0x2960] sm:$0xff]
  %v1385 = vld [vmem:[%s1 + $0x2968] sm:$0xff]
  %v1386 = vld [vmem:[%s1 + $0x2970] sm:$0xff]
  %v1387 = vld [vmem:[%s1 + $0x2978] sm:$0xff]
  %v1388 = vld [vmem:[%s1 + $0x2980] sm:$0xff]
  %v1389 = vld [vmem:[%s1 + $0x2988] sm:$0xff]
  %v1390 = vld [vmem:[%s1 + $0x2990] sm:$0xff]
  %v1391 = vld [vmem:[%s1 + $0x2998] sm:$0xff]
  %v1392 = vld [vmem:[%s1 + $0x29a0] sm:$0xff]
  %v1393 = vld [vmem:[%s1 + $0x29a8] sm:$0xff]
  %v1394 = vld [vmem:[%s1 + $0x29b0] sm:$0xff]
  %v1395 = vld [vmem:[%s1 + $0x29b8] sm:$0xff]
  %v1396 = vld [vmem:[%s1 + $0x29c0] sm:$0xff]
  %v1397 = vld [vmem:[%s1 + $0x29c8] sm:$0xff]
  %v1398 = vld [vmem:[%s1 + $0x29d0] sm:$0xff]
  %v1399 = vld [vmem:[%s1 + $0x29d8] sm:$0xff]
  %v1400 = vld [vmem:[%s1 + $0x29e0] sm:$0xff]
  %v1401 = vld [vmem:[%s1 + $0x29e8] sm:$0xff]
  %v1402 = vld [vmem:[%s1 + $0x29f0] sm:$0xff]
  %v1403 = vld [vmem:[%s1 + $0x29f8] sm:$0xff]
  %v1404 = vld [vmem:[%s1 + $0x2a00] sm:$0xff]
  %v1405 = vld [vmem:[%s1 + $0x2a08] sm:$0xff]
  %v1406 = vld [vmem:[%s1 + $0x2a10] sm:$0xff]
  %v1407 = vld [vmem:[%s1 + $0x2a18] sm:$0xff]
  %v1408 = vld [vmem:[%s1 + $0x2a20] sm:$0xff]
  %v1409 = vld [vmem:[%s1 + $0x2a28] sm:$0xff]
  %v1410 = vld [vmem:[%s1 + $0x2a30] sm:$0xff]
  %v1411 = vld [vmem:[%s1 + $0x2a38] sm:$0xff]
  %v1412 = vld [vmem:[%s1 + $0x2a40] sm:$0xff]
  %v1413 = vld [vmem:[%s1 + $0x2a48] sm:$0xff]
  %v1414 = vld [vmem:[%s1 + $0x2a50] sm:$0xff]
  %v1415 = vld [vmem:[%s1 + $0x2a58] sm:$0xff]
  %v1416 = vld [vmem:[%s1 + $0x2a60] sm:$0xff]
  %v1417 = vld [vmem:[%s1 + $0x2a68] sm:$0xff]
  %v1418 = vld [vmem:[%s1 + $0x2a70] sm:$0xff]
  %v1419 = vld [vmem:[%s1 + $0x2a78] sm:$0xff]
  %v1420 = vld [vmem:[%s1 + $0x2a80] sm:$0xff]
  %v1421 = vld [vmem:[%s1 + $0x2a88] sm:$0xff]
  %v1422 = vld [vmem:[%s1 + $0x2a90] sm:$0xff]
  %v1423 = vld [vmem:[%s1 + $0x2a98] sm:$0xff]
  %v1424 = vld [vmem:[%s1 + $0x2aa0] sm:$0xff]
  %v1425 = vld [vmem:[%s1 + $0x2aa8] sm:$0xff]
  %v1426 = vld [vmem:[%s1 + $0x2ab0] sm:$0xff]
  %v1427 = vld [vmem:[%s1 + $0x2ab8] sm:$0xff]
  %v1428 = vld [vmem:[%s1 + $0x2ac0] sm:$0xff]
  %v1429 = vld [vmem:[%s1 + $0x2ac8] sm:$0xff]
  %v1430 = vld [vmem:[%s1 + $0x2ad0] sm:$0xff]
  %v1431 = vld [vmem:[%s1 + $0x2ad8] sm:$0xff]
  %v1432 = vld [vmem:[%s1 + $0x2ae0] sm:$0xff]
  %v1433 = vld [vmem:[%s1 + $0x2ae8] sm:$0xff]
  %v1434 = vld [vmem:[%s1 + $0x2af0] sm:$0xff]
  %v1435 = vld [vmem:[%s1 + $0x2af8] sm:$0xff]
  %v1436 = vld [vmem:[%s1 + $0x2b00] sm:$0xff]
  %v1437 = vld [vmem:[%s1 + $0x2b08] sm:$0xff]
  %v1438 = vld [vmem:[%s1 + $0x2b10] sm:$0xff]
  %v1439 = vld [vmem:[%s1 + $0x2b18] sm:$0xff]
  %v1440 = vld [vmem:[%s1 + $0x2b20] sm:$0xff]
  %v1441 = vld [vmem:[%s1 + $0x2b28] sm:$0xff]
  %v1442 = vld [vmem:[%s1 + $0x2b30] sm:$0xff]
  %v1443 = vld [vmem:[%s1 + $0x2b38] sm:$0xff]
  %v1444 = vld [vmem:[%s1 + $0x2b40] sm:$0xff]
  %v1445 = vld [vmem:[%s1 + $0x2b48] sm:$0xff]
  %v1446 = vld [vmem:[%s1 + $0x2b50] sm:$0xff]
  %v1447 = vld [vmem:[%s1 + $0x2b58] sm:$0xff]
  %v1448 = vld [vmem:[%s1 + $0x2b60] sm:$0xff]
  %v1449 = vld [vmem:[%s1 + $0x2b68] sm:$0xff]
  %v1450 = vld [vmem:[%s1 + $0x2b70] sm:$0xff]
  %v1451 = vld [vmem:[%s1 + $0x2b78] sm:$0xff]
  %v1452 = vld [vmem:[%s1 + $0x2b80] sm:$0xff]
  %v1453 = vld [vmem:[%s1 + $0x2b88] sm:$0xff]
  %v1454 = vld [vmem:[%s1 + $0x2b90] sm:$0xff]
  %v1455 = vld [vmem:[%s1 + $0x2b98] sm:$0xff]
  %v1456 = vld [vmem:[%s1 + $0x2ba0] sm:$0xff]
  %v1457 = vld [vmem:[%s1 + $0x2ba8] sm:$0xff]
  %v1458 = vld [vmem:[%s1 + $0x2bb0] sm:$0xff]
  %v1459 = vld [vmem:[%s1 + $0x2bb8] sm:$0xff]
  %v1460 = vld [vmem:[%s1 + $0x2bc0] sm:$0xff]
  %v1461 = vld [vmem:[%s1 + $0x2bc8] sm:$0xff]
  %v1462 = vld [vmem:[%s1 + $0x2bd0] sm:$0xff]
  %v1463 = vld [vmem:[%s1 + $0x2bd8] sm:$0xff]
  %v1464 = vld [vmem:[%s1 + $0x2be0] sm:$0xff]
  %v1465 = vld [vmem:[%s1 + $0x2be8] sm:$0xff]
  %v1466 = vld [vmem:[%s1 + $0x2bf0] sm:$0xff]
  %v1467 = vld [vmem:[%s1 + $0x2bf8] sm:$0xff]
  %v1468 = vld [vmem:[%s1 + $0x2c00] sm:$0xff]
  %v1469 = vld [vmem:[%s1 + $0x2c08] sm:$0xff]
  %v1470 = vld [vmem:[%s1 + $0x2c10] sm:$0xff]
  %v1471 = vld [vmem:[%s1 + $0x2c18] sm:$0xff]
  %v1472 = vld [vmem:[%s1 + $0x2c20] sm:$0xff]
  %v1473 = vld [vmem:[%s1 + $0x2c28] sm:$0xff]
  %v1474 = vld [vmem:[%s1 + $0x2c30] sm:$0xff]
  %v1475 = vld [vmem:[%s1 + $0x2c38] sm:$0xff]
  %v1476 = vld [vmem:[%s1 + $0x2c40] sm:$0xff]
  %v1477 = vld [vmem:[%s1 + $0x2c48] sm:$0xff]
  %v1478 = vld [vmem:[%s1 + $0x2c50] sm:$0xff]
  %v1479 = vld [vmem:[%s1 + $0x2c58] sm:$0xff]
  %v1480 = vld [vmem:[%s1 + $0x2c60] sm:$0xff]
  %v1481 = vld [vmem:[%s1 + $0x2c68] sm:$0xff]
  %v1482 = vld [vmem:[%s1 + $0x2c70] sm:$0xff]
  %v1483 = vld [vmem:[%s1 + $0x2c78] sm:$0xff]
  %v1484 = vld [vmem:[%s1 + $0x2c80] sm:$0xff]
  %v1485 = vld [vmem:[%s1 + $0x2c88] sm:$0xff]
  %v1486 = vld [vmem:[%s1 + $0x2c90] sm:$0xff]
  %v1487 = vld [vmem:[%s1 + $0x2c98] sm:$0xff]
  %v1488 = vld [vmem:[%s1 + $0x2ca0] sm:$0xff]
  %v1489 = vld [vmem:[%s1 + $0x2ca8] sm:$0xff]
  %v1490 = vld [vmem:[%s1 + $0x2cb0] sm:$0xff]
  %v1491 = vld [vmem:[%s1 + $0x2cb8] sm:$0xff]
  %v1492 = vld [vmem:[%s1 + $0x2cc0] sm:$0xff]
  %v1493 = vld [vmem:[%s1 + $0x2cc8] sm:$0xff]
  %v1494 = vld [vmem:[%s1 + $0x2cd0] sm:$0xff]
  %v1495 = vld [vmem:[%s1 + $0x2cd8] sm:$0xff]
  %v1496 = vld [vmem:[%s1 + $0x2ce0] sm:$0xff]
  %v1497 = vld [vmem:[%s1 + $0x2ce8] sm:$0xff]
  %v1498 = vld [vmem:[%s1 + $0x2cf0] sm:$0xff]
  %v1499 = vld [vmem:[%s1 + $0x2cf8] sm:$0xff]
  %v1500 = vld [vmem:[%s1 + $0x2d00] sm:$0xff]
  %v1501 = vld [vmem:[%s1 + $0x2d08] sm:$0xff]
  %v1502 = vld [vmem:[%s1 + $0x2d10] sm:$0xff]
  %v1503 = vld [vmem:[%s1 + $0x2d18] sm:$0xff]
  %v1504 = vld [vmem:[%s1 + $0x2d20] sm:$0xff]
  %v1505 = vld [vmem:[%s1 + $0x2d28] sm:$0xff]
  %v1506 = vld [vmem:[%s1 + $0x2d30] sm:$0xff]
  %v1507 = vld [vmem:[%s1 + $0x2d38] sm:$0xff]
  %v1508 = vld [vmem:[%s1 + $0x2d40] sm:$0xff]
  %v1509 = vld [vmem:[%s1 + $0x2d48] sm:$0xff]
  %v1510 = vld [vmem:[%s1 + $0x2d50] sm:$0xff]
  %v1511 = vld [vmem:[%s1 + $0x2d58] sm:$0xff]
  %v1512 = vld [vmem:[%s1 + $0x2d60] sm:$0xff]
  %v1513 = vld [vmem:[%s1 + $0x2d68] sm:$0xff]
  %v1514 = vld [vmem:[%s1 + $0x2d70] sm:$0xff]
  %v1515 = vld [vmem:[%s1 + $0x2d78] sm:$0xff]
  %v1516 = vld [vmem:[%s1 + $0x2d80] sm:$0xff]
  %v1517 = vld [vmem:[%s1 + $0x2d88] sm:$0xff]
  %v1518 = vld [vmem:[%s1 + $0x2d90] sm:$0xff]
  %v1519 = vld [vmem:[%s1 + $0x2d98] sm:$0xff]
  %v1520 = vld [vmem:[%s1 + $0x2da0] sm:$0xff]
  %v1521 = vld [vmem:[%s1 + $0x2da8] sm:$0xff]
  %v1522 = vld [vmem:[%s1 + $0x2db0] sm:$0xff]
  %v1523 = vld [vmem:[%s1 + $0x2db8] sm:$0xff]
  %v1524 = vld [vmem:[%s1 + $0x2dc0] sm:$0xff]
  %v1525 = vld [vmem:[%s1 + $0x2dc8] sm:$0xff]
  %v1526 = vld [vmem:[%s1 + $0x2dd0] sm:$0xff]
  %v1527 = vld [vmem:[%s1 + $0x2dd8] sm:$0xff]
  %v1528 = vld [vmem:[%s1 + $0x2de0] sm:$0xff]
  %v1529 = vld [vmem:[%s1 + $0x2de8] sm:$0xff]
  %v1530 = vld [vmem:[%s1 + $0x2df0] sm:$0xff]
  %v1531 = vld [vmem:[%s1 + $0x2df8] sm:$0xff]
  %v1532 = vld [vmem:[%s1 + $0x2e00] sm:$0xff]
  %v1533 = vld [vmem:[%s1 + $0x2e08] sm:$0xff]
  %v1534 = vld [vmem:[%s1 + $0x2e10] sm:$0xff]
  %v1535 = vld [vmem:[%s1 + $0x2e18] sm:$0xff]
  %v1536 = vld [vmem:[%s1 + $0x2e20] sm:$0xff]
  %v1537 = vld [vmem:[%s1 + $0x2e28] sm:$0xff]
  %v1538 = vld [vmem:[%s1 + $0x2e30] sm:$0xff]
  %v1539 = vld [vmem:[%s1 + $0x2e38] sm:$0xff]
  %v1540 = vld [vmem:[%s1 + $0x2e40] sm:$0xff]
  %v1541 = vld [vmem:[%s1 + $0x2e48] sm:$0xff]
  %v1542 = vld [vmem:[%s1 + $0x2e50] sm:$0xff]
  %v1543 = vld [vmem:[%s1 + $0x2e58] sm:$0xff]
  %v1544 = vld [vmem:[%s1 + $0x2e60] sm:$0xff]
  %v1545 = vld [vmem:[%s1 + $0x2e68] sm:$0xff]
  %v1546 = vld [vmem:[%s1 + $0x2e70] sm:$0xff]
  %v1547 = vld [vmem:[%s1 + $0x2e78] sm:$0xff]
  %v1548 = vld [vmem:[%s1 + $0x2e80] sm:$0xff]
  %v1549 = vld [vmem:[%s1 + $0x2e88] sm:$0xff]
  %v1550 = vld [vmem:[%s1 + $0x2e90] sm:$0xff]
  %v1551 = vld [vmem:[%s1 + $0x2e98] sm:$0xff]
  %v1552 = vld [vmem:[%s1 + $0x2ea0] sm:$0xff]
  %v1553 = vld [vmem:[%s1 + $0x2ea8] sm:$0xff]
  %v1554 = vld [vmem:[%s1 + $0x2eb0] sm:$0xff]
  %v1555 = vld [vmem:[%s1 + $0x2eb8] sm:$0xff]
  %v1556 = vld [vmem:[%s1 + $0x2ec0] sm:$0xff]
  %v1557 = vld [vmem:[%s1 + $0x2ec8] sm:$0xff]
  %v1558 = vld [vmem:[%s1 + $0x2ed0] sm:$0xff]
  %v1559 = vld [vmem:[%s1 + $0x2ed8] sm:$0xff]
  %v1560 = vld [vmem:[%s1 + $0x2ee0] sm:$0xff]
  %v1561 = vld [vmem:[%s1 + $0x2ee8] sm:$0xff]
  %v1562 = vld [vmem:[%s1 + $0x2ef0] sm:$0xff]
  %v1563 = vld [vmem:[%s1 + $0x2ef8] sm:$0xff]
  %v1564 = vld [vmem:[%s1 + $0x2f00] sm:$0xff]
  %v1565 = vld [vmem:[%s1 + $0x2f08] sm:$0xff]
  %v1566 = vld [vmem:[%s1 + $0x2f10] sm:$0xff]
  %v1567 = vld [vmem:[%s1 + $0x2f18] sm:$0xff]
  %v1568 = vld [vmem:[%s1 + $0x2f20] sm:$0xff]
  %v1569 = vld [vmem:[%s1 + $0x2f28] sm:$0xff]
  %v1570 = vld [vmem:[%s1 + $0x2f30] sm:$0xff]
  %v1571 = vld [vmem:[%s1 + $0x2f38] sm:$0xff]
  %v1572 = vld [vmem:[%s1 + $0x2f40] sm:$0xff]
  %v1573 = vld [vmem:[%s1 + $0x2f48] sm:$0xff]
  %v1574 = vld [vmem:[%s1 + $0x2f50] sm:$0xff]
  %v1575 = vld [vmem:[%s1 + $0x2f58] sm:$0xff]
  %v1576 = vld [vmem:[%s1 + $0x2f60] sm:$0xff]
  %v1577 = vld [vmem:[%s1 + $0x2f68] sm:$0xff]
  %v1578 = vld [vmem:[%s1 + $0x2f70] sm:$0xff]
  %v1579 = vld [vmem:[%s1 + $0x2f78] sm:$0xff]
  %v1580 = vld [vmem:[%s1 + $0x2f80] sm:$0xff]
  %v1581 = vld [vmem:[%s1 + $0x2f88] sm:$0xff]
  %v1582 = vld [vmem:[%s1 + $0x2f90] sm:$0xff]
  %v1583 = vld [vmem:[%s1 + $0x2f98] sm:$0xff]
  %v1584 = vld [vmem:[%s1 + $0x2fa0] sm:$0xff]
  %v1585 = vld [vmem:[%s1 + $0x2fa8] sm:$0xff]
  %v1586 = vld [vmem:[%s1 + $0x2fb0] sm:$0xff]
  %v1587 = vld [vmem:[%s1 + $0x2fb8] sm:$0xff]
  %v1588 = vld [vmem:[%s1 + $0x2fc0] sm:$0xff]
  %v1589 = vld [vmem:[%s1 + $0x2fc8] sm:$0xff]
  %v1590 = vld [vmem:[%s1 + $0x2fd0] sm:$0xff]
  %v1591 = vld [vmem:[%s1 + $0x2fd8] sm:$0xff]
  %v1592 = vld [vmem:[%s1 + $0x2fe0] sm:$0xff]
  %v1593 = vld [vmem:[%s1 + $0x2fe8] sm:$0xff]
  %v1594 = vld [vmem:[%s1 + $0x2ff0] sm:$0xff]
  %v1595 = vld [vmem:[%s1 + $0x2ff8] sm:$0xff]
  %v1596 = vld [vmem:[%s1 + $0x3000] sm:$0xff]
  %v1597 = vld [vmem:[%s1 + $0x3008] sm:$0xff]
  %v1598 = vld [vmem:[%s1 + $0x3010] sm:$0xff]
  %v1599 = vld [vmem:[%s1 + $0x3018] sm:$0xff]
  %v1600 = vld [vmem:[%s1 + $0x3020] sm:$0xff]
  %v1601 = vld [vmem:[%s1 + $0x3028] sm:$0xff]
  %v1602 = vld [vmem:[%s1 + $0x3030] sm:$0xff]
  %v1603 = vld [vmem:[%s1 + $0x3038] sm:$0xff]
  %v1604 = vld [vmem:[%s1 + $0x3040] sm:$0xff]
  %v1605 = vld [vmem:[%s1 + $0x3048] sm:$0xff]
  %v1606 = vld [vmem:[%s1 + $0x3050] sm:$0xff]
  %v1607 = vld [vmem:[%s1 + $0x3058] sm:$0xff]
  %v1608 = vld [vmem:[%s1 + $0x3060] sm:$0xff]
  %v1609 = vld [vmem:[%s1 + $0x3068] sm:$0xff]
  %v1610 = vld [vmem:[%s1 + $0x3070] sm:$0xff]
  %v1611 = vld [vmem:[%s1 + $0x3078] sm:$0xff]
  %v1612 = vld [vmem:[%s1 + $0x3080] sm:$0xff]
  %v1613 = vld [vmem:[%s1 + $0x3088] sm:$0xff]
  %v1614 = vld [vmem:[%s1 + $0x3090] sm:$0xff]
  %v1615 = vld [vmem:[%s1 + $0x3098] sm:$0xff]
  %v1616 = vld [vmem:[%s1 + $0x30a0] sm:$0xff]
  %v1617 = vld [vmem:[%s1 + $0x30a8] sm:$0xff]
  %v1618 = vld [vmem:[%s1 + $0x30b0] sm:$0xff]
  %v1619 = vld [vmem:[%s1 + $0x30b8] sm:$0xff]
  %v1620 = vld [vmem:[%s1 + $0x30c0] sm:$0xff]
  %v1621 = vld [vmem:[%s1 + $0x30c8] sm:$0xff]
  %v1622 = vld [vmem:[%s1 + $0x30d0] sm:$0xff]
  %v1623 = vld [vmem:[%s1 + $0x30d8] sm:$0xff]
  %v1624 = vld [vmem:[%s1 + $0x30e0] sm:$0xff]
  %v1625 = vld [vmem:[%s1 + $0x30e8] sm:$0xff]
  %v1626 = vld [vmem:[%s1 + $0x30f0] sm:$0xff]
  %v1627 = vld [vmem:[%s1 + $0x30f8] sm:$0xff]
  %v1628 = vld [vmem:[%s2] sm:$0xf]
  %v1630 = vperm.slane %v1628, 0
  %v1631 = vperm.slane %v1628, 1
  %v1632 = vperm.slane %v1628, 2
  %v1633 = vperm.slane %v1628, 3
  %vm1638 = vcmask 523264
  %v1640 = vsel %vm1638, %v59, 0
  %1642 = vmatpush.msra.mxu0 %v120
  %1643 = vmatpush.msra.mxu0 %v116
  %1644 = vmatpush.msra.mxu0 %v112
  %1645 = vmatpush.msra.mxu0 %v108
  %1646 = vmatpush.msra.mxu0 %v104
  %1647 = vmatpush.msra.mxu0 %v100
  %1648 = vmatpush.msra.mxu0 %v96
  %1649 = vmatpush.msra.mxu0 %v92
  %1650 = vmatpush.msra.mxu0 %v88
  %1651 = vmatpush.msra.mxu0 %v84
  %1652 = vmatpush.msra.mxu0 %v80
  %1653 = vmatpush.msra.mxu0 %v76
  %1654 = vmatpush.msra.mxu0 %v72
  %1655 = vmatpush.msra.mxu0 %v68
  %1656 = vmatpush.msra.mxu0 %v64
  %1657 = vmatpush.msra.mxu0 %v60
  %1658 = vmatmul.f32.gmra.mxu0 %v35
  %v1659 = vpop.f32.mrf.mxu0
  %v1660 = vadd.f32 %v1630, %v1659
  %1661 = vdwg.mxu0
  %1662 = vmatpush.msra.mxu0 %v184
  %1663 = vmatpush.msra.mxu0 %v180
  %1664 = vmatpush.msra.mxu0 %v176
  %1665 = vmatpush.msra.mxu0 %v172
  %1666 = vmatpush.msra.mxu0 %v168
  %1667 = vmatpush.msra.mxu0 %v164
  %1668 = vmatpush.msra.mxu0 %v160
  %1669 = vmatpush.msra.mxu0 %v156
  %1670 = vmatpush.msra.mxu0 %v152
  %1671 = vmatpush.msra.mxu0 %v148
  %1672 = vmatpush.msra.mxu0 %v144
  %1673 = vmatpush.msra.mxu0 %v140
  %1674 = vmatpush.msra.mxu0 %v136
  %1675 = vmatpush.msra.mxu0 %v132
  %1676 = vmatpush.msra.mxu0 %v128
  %1677 = vmatpush.msra.mxu0 %v124
  %1678 = vmatmul.f32.gmra.mxu0 %v36
  %v1679 = vpop.f32.mrf.mxu0
  %v1680 = vadd.f32 %v1660, %v1679
  %1681 = vdwg.mxu0
  %1682 = vmatpush.msra.mxu0 %v248
  %1683 = vmatpush.msra.mxu0 %v244
  %1684 = vmatpush.msra.mxu0 %v240
  %1685 = vmatpush.msra.mxu0 %v236
  %1686 = vmatpush.msra.mxu0 %v232
  %1687 = vmatpush.msra.mxu0 %v228
  %1688 = vmatpush.msra.mxu0 %v224
  %1689 = vmatpush.msra.mxu0 %v220
  %1690 = vmatpush.msra.mxu0 %v216
  %1691 = vmatpush.msra.mxu0 %v212
  %1692 = vmatpush.msra.mxu0 %v208
  %1693 = vmatpush.msra.mxu0 %v204
  %1694 = vmatpush.msra.mxu0 %v200
  %1695 = vmatpush.msra.mxu0 %v196
  %1696 = vmatpush.msra.mxu0 %v192
  %1697 = vmatpush.msra.mxu0 %v188
  %1698 = vmatmul.f32.gmra.mxu0 %v37
  %v1699 = vpop.f32.mrf.mxu0
  %v1700 = vadd.f32 %v1680, %v1699
  %1701 = vdwg.mxu0
  %1702 = vmatpush.msra.mxu0 %v312
  %1703 = vmatpush.msra.mxu0 %v308
  %1704 = vmatpush.msra.mxu0 %v304
  %1705 = vmatpush.msra.mxu0 %v300
  %1706 = vmatpush.msra.mxu0 %v296
  %1707 = vmatpush.msra.mxu0 %v292
  %1708 = vmatpush.msra.mxu0 %v288
  %1709 = vmatpush.msra.mxu0 %v284
  %1710 = vmatpush.msra.mxu0 %v280
  %1711 = vmatpush.msra.mxu0 %v276
  %1712 = vmatpush.msra.mxu0 %v272
  %1713 = vmatpush.msra.mxu0 %v268
  %1714 = vmatpush.msra.mxu0 %v264
  %1715 = vmatpush.msra.mxu0 %v260
  %1716 = vmatpush.msra.mxu0 %v256
  %1717 = vmatpush.msra.mxu0 %v252
  %1718 = vmatmul.f32.gmra.mxu0 %v38
  %v1719 = vpop.f32.mrf.mxu0
  %v1720 = vadd.f32 %v1700, %v1719
  %1721 = vdwg.mxu0
  %1722 = vmatpush.msra.mxu0 %v376
  %1723 = vmatpush.msra.mxu0 %v372
  %1724 = vmatpush.msra.mxu0 %v368
  %1725 = vmatpush.msra.mxu0 %v364
  %1726 = vmatpush.msra.mxu0 %v360
  %1727 = vmatpush.msra.mxu0 %v356
  %1728 = vmatpush.msra.mxu0 %v352
  %1729 = vmatpush.msra.mxu0 %v348
  %1730 = vmatpush.msra.mxu0 %v344
  %1731 = vmatpush.msra.mxu0 %v340
  %1732 = vmatpush.msra.mxu0 %v336
  %1733 = vmatpush.msra.mxu0 %v332
  %1734 = vmatpush.msra.mxu0 %v328
  %1735 = vmatpush.msra.mxu0 %v324
  %1736 = vmatpush.msra.mxu0 %v320
  %1737 = vmatpush.msra.mxu0 %v316
  %1738 = vmatmul.f32.gmra.mxu0 %v39
  %v1739 = vpop.f32.mrf.mxu0
  %v1740 = vadd.f32 %v1720, %v1739
  %1741 = vdwg.mxu0
  %1742 = vmatpush.msra.mxu0 %v440
  %1743 = vmatpush.msra.mxu0 %v436
  %1744 = vmatpush.msra.mxu0 %v432
  %1745 = vmatpush.msra.mxu0 %v428
  %1746 = vmatpush.msra.mxu0 %v424
  %1747 = vmatpush.msra.mxu0 %v420
  %1748 = vmatpush.msra.mxu0 %v416
  %1749 = vmatpush.msra.mxu0 %v412
  %1750 = vmatpush.msra.mxu0 %v408
  %1751 = vmatpush.msra.mxu0 %v404
  %1752 = vmatpush.msra.mxu0 %v400
  %1753 = vmatpush.msra.mxu0 %v396
  %1754 = vmatpush.msra.mxu0 %v392
  %1755 = vmatpush.msra.mxu0 %v388
  %1756 = vmatpush.msra.mxu0 %v384
  %1757 = vmatpush.msra.mxu0 %v380
  %1758 = vmatmul.f32.gmra.mxu0 %v40
  %v1759 = vpop.f32.mrf.mxu0
  %v1760 = vadd.f32 %v1740, %v1759
  %1761 = vdwg.mxu0
  %1762 = vmatpush.msra.mxu0 %v504
  %1763 = vmatpush.msra.mxu0 %v500
  %1764 = vmatpush.msra.mxu0 %v496
  %1765 = vmatpush.msra.mxu0 %v492
  %1766 = vmatpush.msra.mxu0 %v488
  %1767 = vmatpush.msra.mxu0 %v484
  %1768 = vmatpush.msra.mxu0 %v480
  %1769 = vmatpush.msra.mxu0 %v476
  %1770 = vmatpush.msra.mxu0 %v472
  %1771 = vmatpush.msra.mxu0 %v468
  %1772 = vmatpush.msra.mxu0 %v464
  %1773 = vmatpush.msra.mxu0 %v460
  %1774 = vmatpush.msra.mxu0 %v456
  %1775 = vmatpush.msra.mxu0 %v452
  %1776 = vmatpush.msra.mxu0 %v448
  %1777 = vmatpush.msra.mxu0 %v444
  %1778 = vmatmul.f32.gmra.mxu0 %v41
  %v1779 = vpop.f32.mrf.mxu0
  %v1780 = vadd.f32 %v1760, %v1779
  %1781 = vdwg.mxu0
  %1782 = vmatpush.msra.mxu0 %v568
  %1783 = vmatpush.msra.mxu0 %v564
  %1784 = vmatpush.msra.mxu0 %v560
  %1785 = vmatpush.msra.mxu0 %v556
  %1786 = vmatpush.msra.mxu0 %v552
  %1787 = vmatpush.msra.mxu0 %v548
  %1788 = vmatpush.msra.mxu0 %v544
  %1789 = vmatpush.msra.mxu0 %v540
  %1790 = vmatpush.msra.mxu0 %v536
  %1791 = vmatpush.msra.mxu0 %v532
  %1792 = vmatpush.msra.mxu0 %v528
  %1793 = vmatpush.msra.mxu0 %v524
  %1794 = vmatpush.msra.mxu0 %v520
  %1795 = vmatpush.msra.mxu0 %v516
  %1796 = vmatpush.msra.mxu0 %v512
  %1797 = vmatpush.msra.mxu0 %v508
  %1798 = vmatmul.f32.gmra.mxu0 %v42
  %v1799 = vpop.f32.mrf.mxu0
  %v1800 = vadd.f32 %v1780, %v1799
  %1801 = vdwg.mxu0
  %1802 = vmatpush.msra.mxu0 %v632
  %1803 = vmatpush.msra.mxu0 %v628
  %1804 = vmatpush.msra.mxu0 %v624
  %1805 = vmatpush.msra.mxu0 %v620
  %1806 = vmatpush.msra.mxu0 %v616
  %1807 = vmatpush.msra.mxu0 %v612
  %1808 = vmatpush.msra.mxu0 %v608
  %1809 = vmatpush.msra.mxu0 %v604
  %1810 = vmatpush.msra.mxu0 %v600
  %1811 = vmatpush.msra.mxu0 %v596
  %1812 = vmatpush.msra.mxu0 %v592
  %1813 = vmatpush.msra.mxu0 %v588
  %1814 = vmatpush.msra.mxu0 %v584
  %1815 = vmatpush.msra.mxu0 %v580
  %1816 = vmatpush.msra.mxu0 %v576
  %1817 = vmatpush.msra.mxu0 %v572
  %1818 = vmatmul.f32.gmra.mxu0 %v43
  %v1819 = vpop.f32.mrf.mxu0
  %v1820 = vadd.f32 %v1800, %v1819
  %1821 = vdwg.mxu0
  %1822 = vmatpush.msra.mxu0 %v696
  %1823 = vmatpush.msra.mxu0 %v692
  %1824 = vmatpush.msra.mxu0 %v688
  %1825 = vmatpush.msra.mxu0 %v684
  %1826 = vmatpush.msra.mxu0 %v680
  %1827 = vmatpush.msra.mxu0 %v676
  %1828 = vmatpush.msra.mxu0 %v672
  %1829 = vmatpush.msra.mxu0 %v668
  %1830 = vmatpush.msra.mxu0 %v664
  %1831 = vmatpush.msra.mxu0 %v660
  %1832 = vmatpush.msra.mxu0 %v656
  %1833 = vmatpush.msra.mxu0 %v652
  %1834 = vmatpush.msra.mxu0 %v648
  %1835 = vmatpush.msra.mxu0 %v644
  %1836 = vmatpush.msra.mxu0 %v640
  %1837 = vmatpush.msra.mxu0 %v636
  %1838 = vmatmul.f32.gmra.mxu0 %v44
  %v1839 = vpop.f32.mrf.mxu0
  %v1840 = vadd.f32 %v1820, %v1839
  %1841 = vdwg.mxu0
  %1842 = vmatpush.msra.mxu0 %v760
  %1843 = vmatpush.msra.mxu0 %v756
  %1844 = vmatpush.msra.mxu0 %v752
  %1845 = vmatpush.msra.mxu0 %v748
  %1846 = vmatpush.msra.mxu0 %v744
  %1847 = vmatpush.msra.mxu0 %v740
  %1848 = vmatpush.msra.mxu0 %v736
  %1849 = vmatpush.msra.mxu0 %v732
  %1850 = vmatpush.msra.mxu0 %v728
  %1851 = vmatpush.msra.mxu0 %v724
  %1852 = vmatpush.msra.mxu0 %v720
  %1853 = vmatpush.msra.mxu0 %v716
  %1854 = vmatpush.msra.mxu0 %v712
  %1855 = vmatpush.msra.mxu0 %v708
  %1856 = vmatpush.msra.mxu0 %v704
  %1857 = vmatpush.msra.mxu0 %v700
  %1858 = vmatmul.f32.gmra.mxu0 %v45
  %v1859 = vpop.f32.mrf.mxu0
  %v1860 = vadd.f32 %v1840, %v1859
  %1861 = vdwg.mxu0
  %1862 = vmatpush.msra.mxu0 %v824
  %1863 = vmatpush.msra.mxu0 %v820
  %1864 = vmatpush.msra.mxu0 %v816
  %1865 = vmatpush.msra.mxu0 %v812
  %1866 = vmatpush.msra.mxu0 %v808
  %1867 = vmatpush.msra.mxu0 %v804
  %1868 = vmatpush.msra.mxu0 %v800
  %1869 = vmatpush.msra.mxu0 %v796
  %1870 = vmatpush.msra.mxu0 %v792
  %1871 = vmatpush.msra.mxu0 %v788
  %1872 = vmatpush.msra.mxu0 %v784
  %1873 = vmatpush.msra.mxu0 %v780
  %1874 = vmatpush.msra.mxu0 %v776
  %1875 = vmatpush.msra.mxu0 %v772
  %1876 = vmatpush.msra.mxu0 %v768
  %1877 = vmatpush.msra.mxu0 %v764
  %1878 = vmatmul.f32.gmra.mxu0 %v46
  %v1879 = vpop.f32.mrf.mxu0
  %v1880 = vadd.f32 %v1860, %v1879
  %1881 = vdwg.mxu0
  %1882 = vmatpush.msra.mxu0 %v888
  %1883 = vmatpush.msra.mxu0 %v884
  %1884 = vmatpush.msra.mxu0 %v880
  %1885 = vmatpush.msra.mxu0 %v876
  %1886 = vmatpush.msra.mxu0 %v872
  %1887 = vmatpush.msra.mxu0 %v868
  %1888 = vmatpush.msra.mxu0 %v864
  %1889 = vmatpush.msra.mxu0 %v860
  %1890 = vmatpush.msra.mxu0 %v856
  %1891 = vmatpush.msra.mxu0 %v852
  %1892 = vmatpush.msra.mxu0 %v848
  %1893 = vmatpush.msra.mxu0 %v844
  %1894 = vmatpush.msra.mxu0 %v840
  %1895 = vmatpush.msra.mxu0 %v836
  %1896 = vmatpush.msra.mxu0 %v832
  %1897 = vmatpush.msra.mxu0 %v828
  %1898 = vmatmul.f32.gmra.mxu0 %v47
  %v1899 = vpop.f32.mrf.mxu0
  %v1900 = vadd.f32 %v1880, %v1899
  %1901 = vdwg.mxu0
  %1902 = vmatpush.msra.mxu0 %v952
  %1903 = vmatpush.msra.mxu0 %v948
  %1904 = vmatpush.msra.mxu0 %v944
  %1905 = vmatpush.msra.mxu0 %v940
  %1906 = vmatpush.msra.mxu0 %v936
  %1907 = vmatpush.msra.mxu0 %v932
  %1908 = vmatpush.msra.mxu0 %v928
  %1909 = vmatpush.msra.mxu0 %v924
  %1910 = vmatpush.msra.mxu0 %v920
  %1911 = vmatpush.msra.mxu0 %v916
  %1912 = vmatpush.msra.mxu0 %v912
  %1913 = vmatpush.msra.mxu0 %v908
  %1914 = vmatpush.msra.mxu0 %v904
  %1915 = vmatpush.msra.mxu0 %v900
  %1916 = vmatpush.msra.mxu0 %v896
  %1917 = vmatpush.msra.mxu0 %v892
  %1918 = vmatmul.f32.gmra.mxu0 %v48
  %v1919 = vpop.f32.mrf.mxu0
  %v1920 = vadd.f32 %v1900, %v1919
  %1921 = vdwg.mxu0
  %1922 = vmatpush.msra.mxu0 %v1016
  %1923 = vmatpush.msra.mxu0 %v1012
  %1924 = vmatpush.msra.mxu0 %v1008
  %1925 = vmatpush.msra.mxu0 %v1004
  %1926 = vmatpush.msra.mxu0 %v1000
  %1927 = vmatpush.msra.mxu0 %v996
  %1928 = vmatpush.msra.mxu0 %v992
  %1929 = vmatpush.msra.mxu0 %v988
  %1930 = vmatpush.msra.mxu0 %v984
  %1931 = vmatpush.msra.mxu0 %v980
  %1932 = vmatpush.msra.mxu0 %v976
  %1933 = vmatpush.msra.mxu0 %v972
  %1934 = vmatpush.msra.mxu0 %v968
  %1935 = vmatpush.msra.mxu0 %v964
  %1936 = vmatpush.msra.mxu0 %v960
  %1937 = vmatpush.msra.mxu0 %v956
  %1938 = vmatmul.f32.gmra.mxu0 %v49
  %v1939 = vpop.f32.mrf.mxu0
  %v1940 = vadd.f32 %v1920, %v1939
  %1941 = vdwg.mxu0
  %1942 = vmatpush.msra.mxu0 %v1080
  %1943 = vmatpush.msra.mxu0 %v1076
  %1944 = vmatpush.msra.mxu0 %v1072
  %1945 = vmatpush.msra.mxu0 %v1068
  %1946 = vmatpush.msra.mxu0 %v1064
  %1947 = vmatpush.msra.mxu0 %v1060
  %1948 = vmatpush.msra.mxu0 %v1056
  %1949 = vmatpush.msra.mxu0 %v1052
  %1950 = vmatpush.msra.mxu0 %v1048
  %1951 = vmatpush.msra.mxu0 %v1044
  %1952 = vmatpush.msra.mxu0 %v1040
  %1953 = vmatpush.msra.mxu0 %v1036
  %1954 = vmatpush.msra.mxu0 %v1032
  %1955 = vmatpush.msra.mxu0 %v1028
  %1956 = vmatpush.msra.mxu0 %v1024
  %1957 = vmatpush.msra.mxu0 %v1020
  %1958 = vmatmul.f32.gmra.mxu0 %v50
  %v1959 = vpop.f32.mrf.mxu0
  %v1960 = vadd.f32 %v1940, %v1959
  %1961 = vdwg.mxu0
  %1962 = vmatpush.msra.mxu0 %v1144
  %1963 = vmatpush.msra.mxu0 %v1140
  %1964 = vmatpush.msra.mxu0 %v1136
  %1965 = vmatpush.msra.mxu0 %v1132
  %1966 = vmatpush.msra.mxu0 %v1128
  %1967 = vmatpush.msra.mxu0 %v1124
  %1968 = vmatpush.msra.mxu0 %v1120
  %1969 = vmatpush.msra.mxu0 %v1116
  %1970 = vmatpush.msra.mxu0 %v1112
  %1971 = vmatpush.msra.mxu0 %v1108
  %1972 = vmatpush.msra.mxu0 %v1104
  %1973 = vmatpush.msra.mxu0 %v1100
  %1974 = vmatpush.msra.mxu0 %v1096
  %1975 = vmatpush.msra.mxu0 %v1092
  %1976 = vmatpush.msra.mxu0 %v1088
  %1977 = vmatpush.msra.mxu0 %v1084
  %1978 = vmatmul.f32.gmra.mxu0 %v51
  %v1979 = vpop.f32.mrf.mxu0
  %v1980 = vadd.f32 %v1960, %v1979
  %1981 = vdwg.mxu0
  %1982 = vmatpush.msra.mxu0 %v1208
  %1983 = vmatpush.msra.mxu0 %v1204
  %1984 = vmatpush.msra.mxu0 %v1200
  %1985 = vmatpush.msra.mxu0 %v1196
  %1986 = vmatpush.msra.mxu0 %v1192
  %1987 = vmatpush.msra.mxu0 %v1188
  %1988 = vmatpush.msra.mxu0 %v1184
  %1989 = vmatpush.msra.mxu0 %v1180
  %1990 = vmatpush.msra.mxu0 %v1176
  %1991 = vmatpush.msra.mxu0 %v1172
  %1992 = vmatpush.msra.mxu0 %v1168
  %1993 = vmatpush.msra.mxu0 %v1164
  %1994 = vmatpush.msra.mxu0 %v1160
  %1995 = vmatpush.msra.mxu0 %v1156
  %1996 = vmatpush.msra.mxu0 %v1152
  %1997 = vmatpush.msra.mxu0 %v1148
  %1998 = vmatmul.f32.gmra.mxu0 %v52
  %v1999 = vpop.f32.mrf.mxu0
  %v2000 = vadd.f32 %v1980, %v1999
  %2001 = vdwg.mxu0
  %2002 = vmatpush.msra.mxu0 %v1272
  %2003 = vmatpush.msra.mxu0 %v1268
  %2004 = vmatpush.msra.mxu0 %v1264
  %2005 = vmatpush.msra.mxu0 %v1260
  %2006 = vmatpush.msra.mxu0 %v1256
  %2007 = vmatpush.msra.mxu0 %v1252
  %2008 = vmatpush.msra.mxu0 %v1248
  %2009 = vmatpush.msra.mxu0 %v1244
  %2010 = vmatpush.msra.mxu0 %v1240
  %2011 = vmatpush.msra.mxu0 %v1236
  %2012 = vmatpush.msra.mxu0 %v1232
  %2013 = vmatpush.msra.mxu0 %v1228
  %2014 = vmatpush.msra.mxu0 %v1224
  %2015 = vmatpush.msra.mxu0 %v1220
  %2016 = vmatpush.msra.mxu0 %v1216
  %2017 = vmatpush.msra.mxu0 %v1212
  %2018 = vmatmul.f32.gmra.mxu0 %v53
  %v2019 = vpop.f32.mrf.mxu0
  %v2020 = vadd.f32 %v2000, %v2019
  %2021 = vdwg.mxu0
  %2022 = vmatpush.msra.mxu0 %v1336
  %2023 = vmatpush.msra.mxu0 %v1332
  %2024 = vmatpush.msra.mxu0 %v1328
  %2025 = vmatpush.msra.mxu0 %v1324
  %2026 = vmatpush.msra.mxu0 %v1320
  %2027 = vmatpush.msra.mxu0 %v1316
  %2028 = vmatpush.msra.mxu0 %v1312
  %2029 = vmatpush.msra.mxu0 %v1308
  %2030 = vmatpush.msra.mxu0 %v1304
  %2031 = vmatpush.msra.mxu0 %v1300
  %2032 = vmatpush.msra.mxu0 %v1296
  %2033 = vmatpush.msra.mxu0 %v1292
  %2034 = vmatpush.msra.mxu0 %v1288
  %2035 = vmatpush.msra.mxu0 %v1284
  %2036 = vmatpush.msra.mxu0 %v1280
  %2037 = vmatpush.msra.mxu0 %v1276
  %2038 = vmatmul.f32.gmra.mxu0 %v54
  %v2039 = vpop.f32.mrf.mxu0
  %v2040 = vadd.f32 %v2020, %v2039
  %2041 = vdwg.mxu0
  %2042 = vmatpush.msra.mxu0 %v1400
  %2043 = vmatpush.msra.mxu0 %v1396
  %2044 = vmatpush.msra.mxu0 %v1392
  %2045 = vmatpush.msra.mxu0 %v1388
  %2046 = vmatpush.msra.mxu0 %v1384
  %2047 = vmatpush.msra.mxu0 %v1380
  %2048 = vmatpush.msra.mxu0 %v1376
  %2049 = vmatpush.msra.mxu0 %v1372
  %2050 = vmatpush.msra.mxu0 %v1368
  %2051 = vmatpush.msra.mxu0 %v1364
  %2052 = vmatpush.msra.mxu0 %v1360
  %2053 = vmatpush.msra.mxu0 %v1356
  %2054 = vmatpush.msra.mxu0 %v1352
  %2055 = vmatpush.msra.mxu0 %v1348
  %2056 = vmatpush.msra.mxu0 %v1344
  %2057 = vmatpush.msra.mxu0 %v1340
  %2058 = vmatmul.f32.gmra.mxu0 %v55
  %v2059 = vpop.f32.mrf.mxu0
  %v2060 = vadd.f32 %v2040, %v2059
  %2061 = vdwg.mxu0
  %2062 = vmatpush.msra.mxu0 %v1464
  %2063 = vmatpush.msra.mxu0 %v1460
  %2064 = vmatpush.msra.mxu0 %v1456
  %2065 = vmatpush.msra.mxu0 %v1452
  %2066 = vmatpush.msra.mxu0 %v1448
  %2067 = vmatpush.msra.mxu0 %v1444
  %2068 = vmatpush.msra.mxu0 %v1440
  %2069 = vmatpush.msra.mxu0 %v1436
  %2070 = vmatpush.msra.mxu0 %v1432
  %2071 = vmatpush.msra.mxu0 %v1428
  %2072 = vmatpush.msra.mxu0 %v1424
  %2073 = vmatpush.msra.mxu0 %v1420
  %2074 = vmatpush.msra.mxu0 %v1416
  %2075 = vmatpush.msra.mxu0 %v1412
  %2076 = vmatpush.msra.mxu0 %v1408
  %2077 = vmatpush.msra.mxu0 %v1404
  %2078 = vmatmul.f32.gmra.mxu0 %v56
  %v2079 = vpop.f32.mrf.mxu0
  %v2080 = vadd.f32 %v2060, %v2079
  %2081 = vdwg.mxu0
  %2082 = vmatpush.msra.mxu0 %v1528
  %2083 = vmatpush.msra.mxu0 %v1524
  %2084 = vmatpush.msra.mxu0 %v1520
  %2085 = vmatpush.msra.mxu0 %v1516
  %2086 = vmatpush.msra.mxu0 %v1512
  %2087 = vmatpush.msra.mxu0 %v1508
  %2088 = vmatpush.msra.mxu0 %v1504
  %2089 = vmatpush.msra.mxu0 %v1500
  %2090 = vmatpush.msra.mxu0 %v1496
  %2091 = vmatpush.msra.mxu0 %v1492
  %2092 = vmatpush.msra.mxu0 %v1488
  %2093 = vmatpush.msra.mxu0 %v1484
  %2094 = vmatpush.msra.mxu0 %v1480
  %2095 = vmatpush.msra.mxu0 %v1476
  %2096 = vmatpush.msra.mxu0 %v1472
  %2097 = vmatpush.msra.mxu0 %v1468
  %2098 = vmatmul.f32.gmra.mxu0 %v57
  %v2099 = vpop.f32.mrf.mxu0
  %v2100 = vadd.f32 %v2080, %v2099
  %2101 = vdwg.mxu0
  %2102 = vmatpush.msra.mxu0 %v1592
  %2103 = vmatpush.msra.mxu0 %v1588
  %2104 = vmatpush.msra.mxu0 %v1584
  %2105 = vmatpush.msra.mxu0 %v1580
  %2106 = vmatpush.msra.mxu0 %v1576
  %2107 = vmatpush.msra.mxu0 %v1572
  %2108 = vmatpush.msra.mxu0 %v1568
  %2109 = vmatpush.msra.mxu0 %v1564
  %2110 = vmatpush.msra.mxu0 %v1560
  %2111 = vmatpush.msra.mxu0 %v1556
  %2112 = vmatpush.msra.mxu0 %v1552
  %2113 = vmatpush.msra.mxu0 %v1548
  %2114 = vmatpush.msra.mxu0 %v1544
  %2115 = vmatpush.msra.mxu0 %v1540
  %2116 = vmatpush.msra.mxu0 %v1536
  %2117 = vmatpush.msra.mxu0 %v1532
  %2118 = vmatmul.f32.gmra.mxu0 %v58
  %v2119 = vpop.f32.mrf.mxu0
  %v2120 = vadd.f32 %v2100, %v2119
  %2121 = vdwg.mxu0
  %2122 = vmatpush.msra.mxu0 0.0
  %2123 = vmatpush.msra.mxu0 0.0
  %2124 = vmatpush.msra.mxu0 0.0
  %2125 = vmatpush.msra.mxu0 0.0
  %2126 = vmatpush.msra.mxu0 0.0
  %2127 = vmatpush.msra.mxu0 0.0
  %2128 = vmatpush.msra.mxu0 0.0
  %2129 = vmatpush.msra.mxu0 0.0
  %2130 = vmatpush.msra.mxu0 %v1624
  %2131 = vmatpush.msra.mxu0 %v1620
  %2132 = vmatpush.msra.mxu0 %v1616
  %2133 = vmatpush.msra.mxu0 %v1612
  %2134 = vmatpush.msra.mxu0 %v1608
  %2135 = vmatpush.msra.mxu0 %v1604
  %2136 = vmatpush.msra.mxu0 %v1600
  %2137 = vmatpush.msra.mxu0 %v1596
  %2138 = vmatmul.f32.gmra.mxu0 %v1640
  %v2139 = vpop.f32.mrf.mxu0
  %v2140 = vadd.f32 %v2120, %v2139
  %2141 = vdwg.mxu0
  %2142 = vmatpush.msra.mxu0 %v121
  %2143 = vmatpush.msra.mxu0 %v117
  %2144 = vmatpush.msra.mxu0 %v113
  %2145 = vmatpush.msra.mxu0 %v109
  %2146 = vmatpush.msra.mxu0 %v105
  %2147 = vmatpush.msra.mxu0 %v101
  %2148 = vmatpush.msra.mxu0 %v97
  %2149 = vmatpush.msra.mxu0 %v93
  %2150 = vmatpush.msra.mxu0 %v89
  %2151 = vmatpush.msra.mxu0 %v85
  %2152 = vmatpush.msra.mxu0 %v81
  %2153 = vmatpush.msra.mxu0 %v77
  %2154 = vmatpush.msra.mxu0 %v73
  %2155 = vmatpush.msra.mxu0 %v69
  %2156 = vmatpush.msra.mxu0 %v65
  %2157 = vmatpush.msra.mxu0 %v61
  %2158 = vmatmul.f32.gmra.mxu0 %v35
  %v2159 = vpop.f32.mrf.mxu0
  %v2160 = vadd.f32 %v1631, %v2159
  %2161 = vdwg.mxu0
  %2162 = vmatpush.msra.mxu0 %v185
  %2163 = vmatpush.msra.mxu0 %v181
  %2164 = vmatpush.msra.mxu0 %v177
  %2165 = vmatpush.msra.mxu0 %v173
  %2166 = vmatpush.msra.mxu0 %v169
  %2167 = vmatpush.msra.mxu0 %v165
  %2168 = vmatpush.msra.mxu0 %v161
  %2169 = vmatpush.msra.mxu0 %v157
  %2170 = vmatpush.msra.mxu0 %v153
  %2171 = vmatpush.msra.mxu0 %v149
  %2172 = vmatpush.msra.mxu0 %v145
  %2173 = vmatpush.msra.mxu0 %v141
  %2174 = vmatpush.msra.mxu0 %v137
  %2175 = vmatpush.msra.mxu0 %v133
  %2176 = vmatpush.msra.mxu0 %v129
  %2177 = vmatpush.msra.mxu0 %v125
  %2178 = vmatmul.f32.gmra.mxu0 %v36
  %v2179 = vpop.f32.mrf.mxu0
  %v2180 = vadd.f32 %v2160, %v2179
  %2181 = vdwg.mxu0
  %2182 = vmatpush.msra.mxu0 %v249
  %2183 = vmatpush.msra.mxu0 %v245
  %2184 = vmatpush.msra.mxu0 %v241
  %2185 = vmatpush.msra.mxu0 %v237
  %2186 = vmatpush.msra.mxu0 %v233
  %2187 = vmatpush.msra.mxu0 %v229
  %2188 = vmatpush.msra.mxu0 %v225
  %2189 = vmatpush.msra.mxu0 %v221
  %2190 = vmatpush.msra.mxu0 %v217
  %2191 = vmatpush.msra.mxu0 %v213
  %2192 = vmatpush.msra.mxu0 %v209
  %2193 = vmatpush.msra.mxu0 %v205
  %2194 = vmatpush.msra.mxu0 %v201
  %2195 = vmatpush.msra.mxu0 %v197
  %2196 = vmatpush.msra.mxu0 %v193
  %2197 = vmatpush.msra.mxu0 %v189
  %2198 = vmatmul.f32.gmra.mxu0 %v37
  %v2199 = vpop.f32.mrf.mxu0
  %v2200 = vadd.f32 %v2180, %v2199
  %2201 = vdwg.mxu0
  %2202 = vmatpush.msra.mxu0 %v313
  %2203 = vmatpush.msra.mxu0 %v309
  %2204 = vmatpush.msra.mxu0 %v305
  %2205 = vmatpush.msra.mxu0 %v301
  %2206 = vmatpush.msra.mxu0 %v297
  %2207 = vmatpush.msra.mxu0 %v293
  %2208 = vmatpush.msra.mxu0 %v289
  %2209 = vmatpush.msra.mxu0 %v285
  %2210 = vmatpush.msra.mxu0 %v281
  %2211 = vmatpush.msra.mxu0 %v277
  %2212 = vmatpush.msra.mxu0 %v273
  %2213 = vmatpush.msra.mxu0 %v269
  %2214 = vmatpush.msra.mxu0 %v265
  %2215 = vmatpush.msra.mxu0 %v261
  %2216 = vmatpush.msra.mxu0 %v257
  %2217 = vmatpush.msra.mxu0 %v253
  %2218 = vmatmul.f32.gmra.mxu0 %v38
  %v2219 = vpop.f32.mrf.mxu0
  %v2220 = vadd.f32 %v2200, %v2219
  %2221 = vdwg.mxu0
  %2222 = vmatpush.msra.mxu0 %v377
  %2223 = vmatpush.msra.mxu0 %v373
  %2224 = vmatpush.msra.mxu0 %v369
  %2225 = vmatpush.msra.mxu0 %v365
  %2226 = vmatpush.msra.mxu0 %v361
  %2227 = vmatpush.msra.mxu0 %v357
  %2228 = vmatpush.msra.mxu0 %v353
  %2229 = vmatpush.msra.mxu0 %v349
  %2230 = vmatpush.msra.mxu0 %v345
  %2231 = vmatpush.msra.mxu0 %v341
  %2232 = vmatpush.msra.mxu0 %v337
  %2233 = vmatpush.msra.mxu0 %v333
  %2234 = vmatpush.msra.mxu0 %v329
  %2235 = vmatpush.msra.mxu0 %v325
  %2236 = vmatpush.msra.mxu0 %v321
  %2237 = vmatpush.msra.mxu0 %v317
  %2238 = vmatmul.f32.gmra.mxu0 %v39
  %v2239 = vpop.f32.mrf.mxu0
  %v2240 = vadd.f32 %v2220, %v2239
  %2241 = vdwg.mxu0
  %2242 = vmatpush.msra.mxu0 %v441
  %2243 = vmatpush.msra.mxu0 %v437
  %2244 = vmatpush.msra.mxu0 %v433
  %2245 = vmatpush.msra.mxu0 %v429
  %2246 = vmatpush.msra.mxu0 %v425
  %2247 = vmatpush.msra.mxu0 %v421
  %2248 = vmatpush.msra.mxu0 %v417
  %2249 = vmatpush.msra.mxu0 %v413
  %2250 = vmatpush.msra.mxu0 %v409
  %2251 = vmatpush.msra.mxu0 %v405
  %2252 = vmatpush.msra.mxu0 %v401
  %2253 = vmatpush.msra.mxu0 %v397
  %2254 = vmatpush.msra.mxu0 %v393
  %2255 = vmatpush.msra.mxu0 %v389
  %2256 = vmatpush.msra.mxu0 %v385
  %2257 = vmatpush.msra.mxu0 %v381
  %2258 = vmatmul.f32.gmra.mxu0 %v40
  %v2259 = vpop.f32.mrf.mxu0
  %v2260 = vadd.f32 %v2240, %v2259
  %2261 = vdwg.mxu0
  %2262 = vmatpush.msra.mxu0 %v505
  %2263 = vmatpush.msra.mxu0 %v501
  %2264 = vmatpush.msra.mxu0 %v497
  %2265 = vmatpush.msra.mxu0 %v493
  %2266 = vmatpush.msra.mxu0 %v489
  %2267 = vmatpush.msra.mxu0 %v485
  %2268 = vmatpush.msra.mxu0 %v481
  %2269 = vmatpush.msra.mxu0 %v477
  %2270 = vmatpush.msra.mxu0 %v473
  %2271 = vmatpush.msra.mxu0 %v469
  %2272 = vmatpush.msra.mxu0 %v465
  %2273 = vmatpush.msra.mxu0 %v461
  %2274 = vmatpush.msra.mxu0 %v457
  %2275 = vmatpush.msra.mxu0 %v453
  %2276 = vmatpush.msra.mxu0 %v449
  %2277 = vmatpush.msra.mxu0 %v445
  %2278 = vmatmul.f32.gmra.mxu0 %v41
  %v2279 = vpop.f32.mrf.mxu0
  %v2280 = vadd.f32 %v2260, %v2279
  %2281 = vdwg.mxu0
  %2282 = vmatpush.msra.mxu0 %v569
  %2283 = vmatpush.msra.mxu0 %v565
  %2284 = vmatpush.msra.mxu0 %v561
  %2285 = vmatpush.msra.mxu0 %v557
  %2286 = vmatpush.msra.mxu0 %v553
  %2287 = vmatpush.msra.mxu0 %v549
  %2288 = vmatpush.msra.mxu0 %v545
  %2289 = vmatpush.msra.mxu0 %v541
  %2290 = vmatpush.msra.mxu0 %v537
  %2291 = vmatpush.msra.mxu0 %v533
  %2292 = vmatpush.msra.mxu0 %v529
  %2293 = vmatpush.msra.mxu0 %v525
  %2294 = vmatpush.msra.mxu0 %v521
  %2295 = vmatpush.msra.mxu0 %v517
  %2296 = vmatpush.msra.mxu0 %v513
  %2297 = vmatpush.msra.mxu0 %v509
  %2298 = vmatmul.f32.gmra.mxu0 %v42
  %v2299 = vpop.f32.mrf.mxu0
  %v2300 = vadd.f32 %v2280, %v2299
  %2301 = vdwg.mxu0
  %2302 = vmatpush.msra.mxu0 %v633
  %2303 = vmatpush.msra.mxu0 %v629
  %2304 = vmatpush.msra.mxu0 %v625
  %2305 = vmatpush.msra.mxu0 %v621
  %2306 = vmatpush.msra.mxu0 %v617
  %2307 = vmatpush.msra.mxu0 %v613
  %2308 = vmatpush.msra.mxu0 %v609
  %2309 = vmatpush.msra.mxu0 %v605
  %2310 = vmatpush.msra.mxu0 %v601
  %2311 = vmatpush.msra.mxu0 %v597
  %2312 = vmatpush.msra.mxu0 %v593
  %2313 = vmatpush.msra.mxu0 %v589
  %2314 = vmatpush.msra.mxu0 %v585
  %2315 = vmatpush.msra.mxu0 %v581
  %2316 = vmatpush.msra.mxu0 %v577
  %2317 = vmatpush.msra.mxu0 %v573
  %2318 = vmatmul.f32.gmra.mxu0 %v43
  %v2319 = vpop.f32.mrf.mxu0
  %v2320 = vadd.f32 %v2300, %v2319
  %2321 = vdwg.mxu0
  %2322 = vmatpush.msra.mxu0 %v697
  %2323 = vmatpush.msra.mxu0 %v693
  %2324 = vmatpush.msra.mxu0 %v689
  %2325 = vmatpush.msra.mxu0 %v685
  %2326 = vmatpush.msra.mxu0 %v681
  %2327 = vmatpush.msra.mxu0 %v677
  %2328 = vmatpush.msra.mxu0 %v673
  %2329 = vmatpush.msra.mxu0 %v669
  %2330 = vmatpush.msra.mxu0 %v665
  %2331 = vmatpush.msra.mxu0 %v661
  %2332 = vmatpush.msra.mxu0 %v657
  %2333 = vmatpush.msra.mxu0 %v653
  %2334 = vmatpush.msra.mxu0 %v649
  %2335 = vmatpush.msra.mxu0 %v645
  %2336 = vmatpush.msra.mxu0 %v641
  %2337 = vmatpush.msra.mxu0 %v637
  %2338 = vmatmul.f32.gmra.mxu0 %v44
  %v2339 = vpop.f32.mrf.mxu0
  %v2340 = vadd.f32 %v2320, %v2339
  %2341 = vdwg.mxu0
  %2342 = vmatpush.msra.mxu0 %v761
  %2343 = vmatpush.msra.mxu0 %v757
  %2344 = vmatpush.msra.mxu0 %v753
  %2345 = vmatpush.msra.mxu0 %v749
  %2346 = vmatpush.msra.mxu0 %v745
  %2347 = vmatpush.msra.mxu0 %v741
  %2348 = vmatpush.msra.mxu0 %v737
  %2349 = vmatpush.msra.mxu0 %v733
  %2350 = vmatpush.msra.mxu0 %v729
  %2351 = vmatpush.msra.mxu0 %v725
  %2352 = vmatpush.msra.mxu0 %v721
  %2353 = vmatpush.msra.mxu0 %v717
  %2354 = vmatpush.msra.mxu0 %v713
  %2355 = vmatpush.msra.mxu0 %v709
  %2356 = vmatpush.msra.mxu0 %v705
  %2357 = vmatpush.msra.mxu0 %v701
  %2358 = vmatmul.f32.gmra.mxu0 %v45
  %v2359 = vpop.f32.mrf.mxu0
  %v2360 = vadd.f32 %v2340, %v2359
  %2361 = vdwg.mxu0
  %2362 = vmatpush.msra.mxu0 %v825
  %2363 = vmatpush.msra.mxu0 %v821
  %2364 = vmatpush.msra.mxu0 %v817
  %2365 = vmatpush.msra.mxu0 %v813
  %2366 = vmatpush.msra.mxu0 %v809
  %2367 = vmatpush.msra.mxu0 %v805
  %2368 = vmatpush.msra.mxu0 %v801
  %2369 = vmatpush.msra.mxu0 %v797
  %2370 = vmatpush.msra.mxu0 %v793
  %2371 = vmatpush.msra.mxu0 %v789
  %2372 = vmatpush.msra.mxu0 %v785
  %2373 = vmatpush.msra.mxu0 %v781
  %2374 = vmatpush.msra.mxu0 %v777
  %2375 = vmatpush.msra.mxu0 %v773
  %2376 = vmatpush.msra.mxu0 %v769
  %2377 = vmatpush.msra.mxu0 %v765
  %2378 = vmatmul.f32.gmra.mxu0 %v46
  %v2379 = vpop.f32.mrf.mxu0
  %v2380 = vadd.f32 %v2360, %v2379
  %2381 = vdwg.mxu0
  %2382 = vmatpush.msra.mxu0 %v889
  %2383 = vmatpush.msra.mxu0 %v885
  %2384 = vmatpush.msra.mxu0 %v881
  %2385 = vmatpush.msra.mxu0 %v877
  %2386 = vmatpush.msra.mxu0 %v873
  %2387 = vmatpush.msra.mxu0 %v869
  %2388 = vmatpush.msra.mxu0 %v865
  %2389 = vmatpush.msra.mxu0 %v861
  %2390 = vmatpush.msra.mxu0 %v857
  %2391 = vmatpush.msra.mxu0 %v853
  %2392 = vmatpush.msra.mxu0 %v849
  %2393 = vmatpush.msra.mxu0 %v845
  %2394 = vmatpush.msra.mxu0 %v841
  %2395 = vmatpush.msra.mxu0 %v837
  %2396 = vmatpush.msra.mxu0 %v833
  %2397 = vmatpush.msra.mxu0 %v829
  %2398 = vmatmul.f32.gmra.mxu0 %v47
  %v2399 = vpop.f32.mrf.mxu0
  %v2400 = vadd.f32 %v2380, %v2399
  %2401 = vdwg.mxu0
  %2402 = vmatpush.msra.mxu0 %v953
  %2403 = vmatpush.msra.mxu0 %v949
  %2404 = vmatpush.msra.mxu0 %v945
  %2405 = vmatpush.msra.mxu0 %v941
  %2406 = vmatpush.msra.mxu0 %v937
  %2407 = vmatpush.msra.mxu0 %v933
  %2408 = vmatpush.msra.mxu0 %v929
  %2409 = vmatpush.msra.mxu0 %v925
  %2410 = vmatpush.msra.mxu0 %v921
  %2411 = vmatpush.msra.mxu0 %v917
  %2412 = vmatpush.msra.mxu0 %v913
  %2413 = vmatpush.msra.mxu0 %v909
  %2414 = vmatpush.msra.mxu0 %v905
  %2415 = vmatpush.msra.mxu0 %v901
  %2416 = vmatpush.msra.mxu0 %v897
  %2417 = vmatpush.msra.mxu0 %v893
  %2418 = vmatmul.f32.gmra.mxu0 %v48
  %v2419 = vpop.f32.mrf.mxu0
  %v2420 = vadd.f32 %v2400, %v2419
  %2421 = vdwg.mxu0
  %2422 = vmatpush.msra.mxu0 %v1017
  %2423 = vmatpush.msra.mxu0 %v1013
  %2424 = vmatpush.msra.mxu0 %v1009
  %2425 = vmatpush.msra.mxu0 %v1005
  %2426 = vmatpush.msra.mxu0 %v1001
  %2427 = vmatpush.msra.mxu0 %v997
  %2428 = vmatpush.msra.mxu0 %v993
  %2429 = vmatpush.msra.mxu0 %v989
  %2430 = vmatpush.msra.mxu0 %v985
  %2431 = vmatpush.msra.mxu0 %v981
  %2432 = vmatpush.msra.mxu0 %v977
  %2433 = vmatpush.msra.mxu0 %v973
  %2434 = vmatpush.msra.mxu0 %v969
  %2435 = vmatpush.msra.mxu0 %v965
  %2436 = vmatpush.msra.mxu0 %v961
  %2437 = vmatpush.msra.mxu0 %v957
  %2438 = vmatmul.f32.gmra.mxu0 %v49
  %v2439 = vpop.f32.mrf.mxu0
  %v2440 = vadd.f32 %v2420, %v2439
  %2441 = vdwg.mxu0
  %2442 = vmatpush.msra.mxu0 %v1081
  %2443 = vmatpush.msra.mxu0 %v1077
  %2444 = vmatpush.msra.mxu0 %v1073
  %2445 = vmatpush.msra.mxu0 %v1069
  %2446 = vmatpush.msra.mxu0 %v1065
  %2447 = vmatpush.msra.mxu0 %v1061
  %2448 = vmatpush.msra.mxu0 %v1057
  %2449 = vmatpush.msra.mxu0 %v1053
  %2450 = vmatpush.msra.mxu0 %v1049
  %2451 = vmatpush.msra.mxu0 %v1045
  %2452 = vmatpush.msra.mxu0 %v1041
  %2453 = vmatpush.msra.mxu0 %v1037
  %2454 = vmatpush.msra.mxu0 %v1033
  %2455 = vmatpush.msra.mxu0 %v1029
  %2456 = vmatpush.msra.mxu0 %v1025
  %2457 = vmatpush.msra.mxu0 %v1021
  %2458 = vmatmul.f32.gmra.mxu0 %v50
  %v2459 = vpop.f32.mrf.mxu0
  %v2460 = vadd.f32 %v2440, %v2459
  %2461 = vdwg.mxu0
  %2462 = vmatpush.msra.mxu0 %v1145
  %2463 = vmatpush.msra.mxu0 %v1141
  %2464 = vmatpush.msra.mxu0 %v1137
  %2465 = vmatpush.msra.mxu0 %v1133
  %2466 = vmatpush.msra.mxu0 %v1129
  %2467 = vmatpush.msra.mxu0 %v1125
  %2468 = vmatpush.msra.mxu0 %v1121
  %2469 = vmatpush.msra.mxu0 %v1117
  %2470 = vmatpush.msra.mxu0 %v1113
  %2471 = vmatpush.msra.mxu0 %v1109
  %2472 = vmatpush.msra.mxu0 %v1105
  %2473 = vmatpush.msra.mxu0 %v1101
  %2474 = vmatpush.msra.mxu0 %v1097
  %2475 = vmatpush.msra.mxu0 %v1093
  %2476 = vmatpush.msra.mxu0 %v1089
  %2477 = vmatpush.msra.mxu0 %v1085
  %2478 = vmatmul.f32.gmra.mxu0 %v51
  %v2479 = vpop.f32.mrf.mxu0
  %v2480 = vadd.f32 %v2460, %v2479
  %2481 = vdwg.mxu0
  %2482 = vmatpush.msra.mxu0 %v1209
  %2483 = vmatpush.msra.mxu0 %v1205
  %2484 = vmatpush.msra.mxu0 %v1201
  %2485 = vmatpush.msra.mxu0 %v1197
  %2486 = vmatpush.msra.mxu0 %v1193
  %2487 = vmatpush.msra.mxu0 %v1189
  %2488 = vmatpush.msra.mxu0 %v1185
  %2489 = vmatpush.msra.mxu0 %v1181
  %2490 = vmatpush.msra.mxu0 %v1177
  %2491 = vmatpush.msra.mxu0 %v1173
  %2492 = vmatpush.msra.mxu0 %v1169
  %2493 = vmatpush.msra.mxu0 %v1165
  %2494 = vmatpush.msra.mxu0 %v1161
  %2495 = vmatpush.msra.mxu0 %v1157
  %2496 = vmatpush.msra.mxu0 %v1153
  %2497 = vmatpush.msra.mxu0 %v1149
  %2498 = vmatmul.f32.gmra.mxu0 %v52
  %v2499 = vpop.f32.mrf.mxu0
  %v2500 = vadd.f32 %v2480, %v2499
  %2501 = vdwg.mxu0
  %2502 = vmatpush.msra.mxu0 %v1273
  %2503 = vmatpush.msra.mxu0 %v1269
  %2504 = vmatpush.msra.mxu0 %v1265
  %2505 = vmatpush.msra.mxu0 %v1261
  %2506 = vmatpush.msra.mxu0 %v1257
  %2507 = vmatpush.msra.mxu0 %v1253
  %2508 = vmatpush.msra.mxu0 %v1249
  %2509 = vmatpush.msra.mxu0 %v1245
  %2510 = vmatpush.msra.mxu0 %v1241
  %2511 = vmatpush.msra.mxu0 %v1237
  %2512 = vmatpush.msra.mxu0 %v1233
  %2513 = vmatpush.msra.mxu0 %v1229
  %2514 = vmatpush.msra.mxu0 %v1225
  %2515 = vmatpush.msra.mxu0 %v1221
  %2516 = vmatpush.msra.mxu0 %v1217
  %2517 = vmatpush.msra.mxu0 %v1213
  %2518 = vmatmul.f32.gmra.mxu0 %v53
  %v2519 = vpop.f32.mrf.mxu0
  %v2520 = vadd.f32 %v2500, %v2519
  %2521 = vdwg.mxu0
  %2522 = vmatpush.msra.mxu0 %v1337
  %2523 = vmatpush.msra.mxu0 %v1333
  %2524 = vmatpush.msra.mxu0 %v1329
  %2525 = vmatpush.msra.mxu0 %v1325
  %2526 = vmatpush.msra.mxu0 %v1321
  %2527 = vmatpush.msra.mxu0 %v1317
  %2528 = vmatpush.msra.mxu0 %v1313
  %2529 = vmatpush.msra.mxu0 %v1309
  %2530 = vmatpush.msra.mxu0 %v1305
  %2531 = vmatpush.msra.mxu0 %v1301
  %2532 = vmatpush.msra.mxu0 %v1297
  %2533 = vmatpush.msra.mxu0 %v1293
  %2534 = vmatpush.msra.mxu0 %v1289
  %2535 = vmatpush.msra.mxu0 %v1285
  %2536 = vmatpush.msra.mxu0 %v1281
  %2537 = vmatpush.msra.mxu0 %v1277
  %2538 = vmatmul.f32.gmra.mxu0 %v54
  %v2539 = vpop.f32.mrf.mxu0
  %v2540 = vadd.f32 %v2520, %v2539
  %2541 = vdwg.mxu0
  %2542 = vmatpush.msra.mxu0 %v1401
  %2543 = vmatpush.msra.mxu0 %v1397
  %2544 = vmatpush.msra.mxu0 %v1393
  %2545 = vmatpush.msra.mxu0 %v1389
  %2546 = vmatpush.msra.mxu0 %v1385
  %2547 = vmatpush.msra.mxu0 %v1381
  %2548 = vmatpush.msra.mxu0 %v1377
  %2549 = vmatpush.msra.mxu0 %v1373
  %2550 = vmatpush.msra.mxu0 %v1369
  %2551 = vmatpush.msra.mxu0 %v1365
  %2552 = vmatpush.msra.mxu0 %v1361
  %2553 = vmatpush.msra.mxu0 %v1357
  %2554 = vmatpush.msra.mxu0 %v1353
  %2555 = vmatpush.msra.mxu0 %v1349
  %2556 = vmatpush.msra.mxu0 %v1345
  %2557 = vmatpush.msra.mxu0 %v1341
  %2558 = vmatmul.f32.gmra.mxu0 %v55
  %v2559 = vpop.f32.mrf.mxu0
  %v2560 = vadd.f32 %v2540, %v2559
  %2561 = vdwg.mxu0
  %2562 = vmatpush.msra.mxu0 %v1465
  %2563 = vmatpush.msra.mxu0 %v1461
  %2564 = vmatpush.msra.mxu0 %v1457
  %2565 = vmatpush.msra.mxu0 %v1453
  %2566 = vmatpush.msra.mxu0 %v1449
  %2567 = vmatpush.msra.mxu0 %v1445
  %2568 = vmatpush.msra.mxu0 %v1441
  %2569 = vmatpush.msra.mxu0 %v1437
  %2570 = vmatpush.msra.mxu0 %v1433
  %2571 = vmatpush.msra.mxu0 %v1429
  %2572 = vmatpush.msra.mxu0 %v1425
  %2573 = vmatpush.msra.mxu0 %v1421
  %2574 = vmatpush.msra.mxu0 %v1417
  %2575 = vmatpush.msra.mxu0 %v1413
  %2576 = vmatpush.msra.mxu0 %v1409
  %2577 = vmatpush.msra.mxu0 %v1405
  %2578 = vmatmul.f32.gmra.mxu0 %v56
  %v2579 = vpop.f32.mrf.mxu0
  %v2580 = vadd.f32 %v2560, %v2579
  %2581 = vdwg.mxu0
  %2582 = vmatpush.msra.mxu0 %v1529
  %2583 = vmatpush.msra.mxu0 %v1525
  %2584 = vmatpush.msra.mxu0 %v1521
  %2585 = vmatpush.msra.mxu0 %v1517
  %2586 = vmatpush.msra.mxu0 %v1513
  %2587 = vmatpush.msra.mxu0 %v1509
  %2588 = vmatpush.msra.mxu0 %v1505
  %2589 = vmatpush.msra.mxu0 %v1501
  %2590 = vmatpush.msra.mxu0 %v1497
  %2591 = vmatpush.msra.mxu0 %v1493
  %2592 = vmatpush.msra.mxu0 %v1489
  %2593 = vmatpush.msra.mxu0 %v1485
  %2594 = vmatpush.msra.mxu0 %v1481
  %2595 = vmatpush.msra.mxu0 %v1477
  %2596 = vmatpush.msra.mxu0 %v1473
  %2597 = vmatpush.msra.mxu0 %v1469
  %2598 = vmatmul.f32.gmra.mxu0 %v57
  %v2599 = vpop.f32.mrf.mxu0
  %v2600 = vadd.f32 %v2580, %v2599
  %2601 = vdwg.mxu0
  %2602 = vmatpush.msra.mxu0 %v1593
  %2603 = vmatpush.msra.mxu0 %v1589
  %2604 = vmatpush.msra.mxu0 %v1585
  %2605 = vmatpush.msra.mxu0 %v1581
  %2606 = vmatpush.msra.mxu0 %v1577
  %2607 = vmatpush.msra.mxu0 %v1573
  %2608 = vmatpush.msra.mxu0 %v1569
  %2609 = vmatpush.msra.mxu0 %v1565
  %2610 = vmatpush.msra.mxu0 %v1561
  %2611 = vmatpush.msra.mxu0 %v1557
  %2612 = vmatpush.msra.mxu0 %v1553
  %2613 = vmatpush.msra.mxu0 %v1549
  %2614 = vmatpush.msra.mxu0 %v1545
  %2615 = vmatpush.msra.mxu0 %v1541
  %2616 = vmatpush.msra.mxu0 %v1537
  %2617 = vmatpush.msra.mxu0 %v1533
  %2618 = vmatmul.f32.gmra.mxu0 %v58
  %v2619 = vpop.f32.mrf.mxu0
  %v2620 = vadd.f32 %v2600, %v2619
  %2621 = vdwg.mxu0
  %2622 = vmatpush.msra.mxu0 0.0
  %2623 = vmatpush.msra.mxu0 0.0
  %2624 = vmatpush.msra.mxu0 0.0
  %2625 = vmatpush.msra.mxu0 0.0
  %2626 = vmatpush.msra.mxu0 0.0
  %2627 = vmatpush.msra.mxu0 0.0
  %2628 = vmatpush.msra.mxu0 0.0
  %2629 = vmatpush.msra.mxu0 0.0
  %2630 = vmatpush.msra.mxu0 %v1625
  %2631 = vmatpush.msra.mxu0 %v1621
  %2632 = vmatpush.msra.mxu0 %v1617
  %2633 = vmatpush.msra.mxu0 %v1613
  %2634 = vmatpush.msra.mxu0 %v1609
  %2635 = vmatpush.msra.mxu0 %v1605
  %2636 = vmatpush.msra.mxu0 %v1601
  %2637 = vmatpush.msra.mxu0 %v1597
  %2638 = vmatmul.f32.gmra.mxu0 %v1640
  %v2639 = vpop.f32.mrf.mxu0
  %v2640 = vadd.f32 %v2620, %v2639
  %2641 = vdwg.mxu0
  %2642 = vmatpush.msra.mxu0 %v122
  %2643 = vmatpush.msra.mxu0 %v118
  %2644 = vmatpush.msra.mxu0 %v114
  %2645 = vmatpush.msra.mxu0 %v110
  %2646 = vmatpush.msra.mxu0 %v106
  %2647 = vmatpush.msra.mxu0 %v102
  %2648 = vmatpush.msra.mxu0 %v98
  %2649 = vmatpush.msra.mxu0 %v94
  %2650 = vmatpush.msra.mxu0 %v90
  %2651 = vmatpush.msra.mxu0 %v86
  %2652 = vmatpush.msra.mxu0 %v82
  %2653 = vmatpush.msra.mxu0 %v78
  %2654 = vmatpush.msra.mxu0 %v74
  %2655 = vmatpush.msra.mxu0 %v70
  %2656 = vmatpush.msra.mxu0 %v66
  %2657 = vmatpush.msra.mxu0 %v62
  %2658 = vmatmul.f32.gmra.mxu0 %v35
  %v2659 = vpop.f32.mrf.mxu0
  %v2660 = vadd.f32 %v1632, %v2659
  %2661 = vdwg.mxu0
  %2662 = vmatpush.msra.mxu0 %v186
  %2663 = vmatpush.msra.mxu0 %v182
  %2664 = vmatpush.msra.mxu0 %v178
  %2665 = vmatpush.msra.mxu0 %v174
  %2666 = vmatpush.msra.mxu0 %v170
  %2667 = vmatpush.msra.mxu0 %v166
  %2668 = vmatpush.msra.mxu0 %v162
  %2669 = vmatpush.msra.mxu0 %v158
  %2670 = vmatpush.msra.mxu0 %v154
  %2671 = vmatpush.msra.mxu0 %v150
  %2672 = vmatpush.msra.mxu0 %v146
  %2673 = vmatpush.msra.mxu0 %v142
  %2674 = vmatpush.msra.mxu0 %v138
  %2675 = vmatpush.msra.mxu0 %v134
  %2676 = vmatpush.msra.mxu0 %v130
  %2677 = vmatpush.msra.mxu0 %v126
  %2678 = vmatmul.f32.gmra.mxu0 %v36
  %v2679 = vpop.f32.mrf.mxu0
  %v2680 = vadd.f32 %v2660, %v2679
  %2681 = vdwg.mxu0
  %2682 = vmatpush.msra.mxu0 %v250
  %2683 = vmatpush.msra.mxu0 %v246
  %2684 = vmatpush.msra.mxu0 %v242
  %2685 = vmatpush.msra.mxu0 %v238
  %2686 = vmatpush.msra.mxu0 %v234
  %2687 = vmatpush.msra.mxu0 %v230
  %2688 = vmatpush.msra.mxu0 %v226
  %2689 = vmatpush.msra.mxu0 %v222
  %2690 = vmatpush.msra.mxu0 %v218
  %2691 = vmatpush.msra.mxu0 %v214
  %2692 = vmatpush.msra.mxu0 %v210
  %2693 = vmatpush.msra.mxu0 %v206
  %2694 = vmatpush.msra.mxu0 %v202
  %2695 = vmatpush.msra.mxu0 %v198
  %2696 = vmatpush.msra.mxu0 %v194
  %2697 = vmatpush.msra.mxu0 %v190
  %2698 = vmatmul.f32.gmra.mxu0 %v37
  %v2699 = vpop.f32.mrf.mxu0
  %v2700 = vadd.f32 %v2680, %v2699
  %2701 = vdwg.mxu0
  %2702 = vmatpush.msra.mxu0 %v314
  %2703 = vmatpush.msra.mxu0 %v310
  %2704 = vmatpush.msra.mxu0 %v306
  %2705 = vmatpush.msra.mxu0 %v302
  %2706 = vmatpush.msra.mxu0 %v298
  %2707 = vmatpush.msra.mxu0 %v294
  %2708 = vmatpush.msra.mxu0 %v290
  %2709 = vmatpush.msra.mxu0 %v286
  %2710 = vmatpush.msra.mxu0 %v282
  %2711 = vmatpush.msra.mxu0 %v278
  %2712 = vmatpush.msra.mxu0 %v274
  %2713 = vmatpush.msra.mxu0 %v270
  %2714 = vmatpush.msra.mxu0 %v266
  %2715 = vmatpush.msra.mxu0 %v262
  %2716 = vmatpush.msra.mxu0 %v258
  %2717 = vmatpush.msra.mxu0 %v254
  %2718 = vmatmul.f32.gmra.mxu0 %v38
  %v2719 = vpop.f32.mrf.mxu0
  %v2720 = vadd.f32 %v2700, %v2719
  %2721 = vdwg.mxu0
  %2722 = vmatpush.msra.mxu0 %v378
  %2723 = vmatpush.msra.mxu0 %v374
  %2724 = vmatpush.msra.mxu0 %v370
  %2725 = vmatpush.msra.mxu0 %v366
  %2726 = vmatpush.msra.mxu0 %v362
  %2727 = vmatpush.msra.mxu0 %v358
  %2728 = vmatpush.msra.mxu0 %v354
  %2729 = vmatpush.msra.mxu0 %v350
  %2730 = vmatpush.msra.mxu0 %v346
  %2731 = vmatpush.msra.mxu0 %v342
  %2732 = vmatpush.msra.mxu0 %v338
  %2733 = vmatpush.msra.mxu0 %v334
  %2734 = vmatpush.msra.mxu0 %v330
  %2735 = vmatpush.msra.mxu0 %v326
  %2736 = vmatpush.msra.mxu0 %v322
  %2737 = vmatpush.msra.mxu0 %v318
  %2738 = vmatmul.f32.gmra.mxu0 %v39
  %v2739 = vpop.f32.mrf.mxu0
  %v2740 = vadd.f32 %v2720, %v2739
  %2741 = vdwg.mxu0
  %2742 = vmatpush.msra.mxu0 %v442
  %2743 = vmatpush.msra.mxu0 %v438
  %2744 = vmatpush.msra.mxu0 %v434
  %2745 = vmatpush.msra.mxu0 %v430
  %2746 = vmatpush.msra.mxu0 %v426
  %2747 = vmatpush.msra.mxu0 %v422
  %2748 = vmatpush.msra.mxu0 %v418
  %2749 = vmatpush.msra.mxu0 %v414
  %2750 = vmatpush.msra.mxu0 %v410
  %2751 = vmatpush.msra.mxu0 %v406
  %2752 = vmatpush.msra.mxu0 %v402
  %2753 = vmatpush.msra.mxu0 %v398
  %2754 = vmatpush.msra.mxu0 %v394
  %2755 = vmatpush.msra.mxu0 %v390
  %2756 = vmatpush.msra.mxu0 %v386
  %2757 = vmatpush.msra.mxu0 %v382
  %2758 = vmatmul.f32.gmra.mxu0 %v40
  %v2759 = vpop.f32.mrf.mxu0
  %v2760 = vadd.f32 %v2740, %v2759
  %2761 = vdwg.mxu0
  %2762 = vmatpush.msra.mxu0 %v506
  %2763 = vmatpush.msra.mxu0 %v502
  %2764 = vmatpush.msra.mxu0 %v498
  %2765 = vmatpush.msra.mxu0 %v494
  %2766 = vmatpush.msra.mxu0 %v490
  %2767 = vmatpush.msra.mxu0 %v486
  %2768 = vmatpush.msra.mxu0 %v482
  %2769 = vmatpush.msra.mxu0 %v478
  %2770 = vmatpush.msra.mxu0 %v474
  %2771 = vmatpush.msra.mxu0 %v470
  %2772 = vmatpush.msra.mxu0 %v466
  %2773 = vmatpush.msra.mxu0 %v462
  %2774 = vmatpush.msra.mxu0 %v458
  %2775 = vmatpush.msra.mxu0 %v454
  %2776 = vmatpush.msra.mxu0 %v450
  %2777 = vmatpush.msra.mxu0 %v446
  %2778 = vmatmul.f32.gmra.mxu0 %v41
  %v2779 = vpop.f32.mrf.mxu0
  %v2780 = vadd.f32 %v2760, %v2779
  %2781 = vdwg.mxu0
  %2782 = vmatpush.msra.mxu0 %v570
  %2783 = vmatpush.msra.mxu0 %v566
  %2784 = vmatpush.msra.mxu0 %v562
  %2785 = vmatpush.msra.mxu0 %v558
  %2786 = vmatpush.msra.mxu0 %v554
  %2787 = vmatpush.msra.mxu0 %v550
  %2788 = vmatpush.msra.mxu0 %v546
  %2789 = vmatpush.msra.mxu0 %v542
  %2790 = vmatpush.msra.mxu0 %v538
  %2791 = vmatpush.msra.mxu0 %v534
  %2792 = vmatpush.msra.mxu0 %v530
  %2793 = vmatpush.msra.mxu0 %v526
  %2794 = vmatpush.msra.mxu0 %v522
  %2795 = vmatpush.msra.mxu0 %v518
  %2796 = vmatpush.msra.mxu0 %v514
  %2797 = vmatpush.msra.mxu0 %v510
  %2798 = vmatmul.f32.gmra.mxu0 %v42
  %v2799 = vpop.f32.mrf.mxu0
  %v2800 = vadd.f32 %v2780, %v2799
  %2801 = vdwg.mxu0
  %2802 = vmatpush.msra.mxu0 %v634
  %2803 = vmatpush.msra.mxu0 %v630
  %2804 = vmatpush.msra.mxu0 %v626
  %2805 = vmatpush.msra.mxu0 %v622
  %2806 = vmatpush.msra.mxu0 %v618
  %2807 = vmatpush.msra.mxu0 %v614
  %2808 = vmatpush.msra.mxu0 %v610
  %2809 = vmatpush.msra.mxu0 %v606
  %2810 = vmatpush.msra.mxu0 %v602
  %2811 = vmatpush.msra.mxu0 %v598
  %2812 = vmatpush.msra.mxu0 %v594
  %2813 = vmatpush.msra.mxu0 %v590
  %2814 = vmatpush.msra.mxu0 %v586
  %2815 = vmatpush.msra.mxu0 %v582
  %2816 = vmatpush.msra.mxu0 %v578
  %2817 = vmatpush.msra.mxu0 %v574
  %2818 = vmatmul.f32.gmra.mxu0 %v43
  %v2819 = vpop.f32.mrf.mxu0
  %v2820 = vadd.f32 %v2800, %v2819
  %2821 = vdwg.mxu0
  %2822 = vmatpush.msra.mxu0 %v698
  %2823 = vmatpush.msra.mxu0 %v694
  %2824 = vmatpush.msra.mxu0 %v690
  %2825 = vmatpush.msra.mxu0 %v686
  %2826 = vmatpush.msra.mxu0 %v682
  %2827 = vmatpush.msra.mxu0 %v678
  %2828 = vmatpush.msra.mxu0 %v674
  %2829 = vmatpush.msra.mxu0 %v670
  %2830 = vmatpush.msra.mxu0 %v666
  %2831 = vmatpush.msra.mxu0 %v662
  %2832 = vmatpush.msra.mxu0 %v658
  %2833 = vmatpush.msra.mxu0 %v654
  %2834 = vmatpush.msra.mxu0 %v650
  %2835 = vmatpush.msra.mxu0 %v646
  %2836 = vmatpush.msra.mxu0 %v642
  %2837 = vmatpush.msra.mxu0 %v638
  %2838 = vmatmul.f32.gmra.mxu0 %v44
  %v2839 = vpop.f32.mrf.mxu0
  %v2840 = vadd.f32 %v2820, %v2839
  %2841 = vdwg.mxu0
  %2842 = vmatpush.msra.mxu0 %v762
  %2843 = vmatpush.msra.mxu0 %v758
  %2844 = vmatpush.msra.mxu0 %v754
  %2845 = vmatpush.msra.mxu0 %v750
  %2846 = vmatpush.msra.mxu0 %v746
  %2847 = vmatpush.msra.mxu0 %v742
  %2848 = vmatpush.msra.mxu0 %v738
  %2849 = vmatpush.msra.mxu0 %v734
  %2850 = vmatpush.msra.mxu0 %v730
  %2851 = vmatpush.msra.mxu0 %v726
  %2852 = vmatpush.msra.mxu0 %v722
  %2853 = vmatpush.msra.mxu0 %v718
  %2854 = vmatpush.msra.mxu0 %v714
  %2855 = vmatpush.msra.mxu0 %v710
  %2856 = vmatpush.msra.mxu0 %v706
  %2857 = vmatpush.msra.mxu0 %v702
  %2858 = vmatmul.f32.gmra.mxu0 %v45
  %v2859 = vpop.f32.mrf.mxu0
  %v2860 = vadd.f32 %v2840, %v2859
  %2861 = vdwg.mxu0
  %2862 = vmatpush.msra.mxu0 %v826
  %2863 = vmatpush.msra.mxu0 %v822
  %2864 = vmatpush.msra.mxu0 %v818
  %2865 = vmatpush.msra.mxu0 %v814
  %2866 = vmatpush.msra.mxu0 %v810
  %2867 = vmatpush.msra.mxu0 %v806
  %2868 = vmatpush.msra.mxu0 %v802
  %2869 = vmatpush.msra.mxu0 %v798
  %2870 = vmatpush.msra.mxu0 %v794
  %2871 = vmatpush.msra.mxu0 %v790
  %2872 = vmatpush.msra.mxu0 %v786
  %2873 = vmatpush.msra.mxu0 %v782
  %2874 = vmatpush.msra.mxu0 %v778
  %2875 = vmatpush.msra.mxu0 %v774
  %2876 = vmatpush.msra.mxu0 %v770
  %2877 = vmatpush.msra.mxu0 %v766
  %2878 = vmatmul.f32.gmra.mxu0 %v46
  %v2879 = vpop.f32.mrf.mxu0
  %v2880 = vadd.f32 %v2860, %v2879
  %2881 = vdwg.mxu0
  %2882 = vmatpush.msra.mxu0 %v890
  %2883 = vmatpush.msra.mxu0 %v886
  %2884 = vmatpush.msra.mxu0 %v882
  %2885 = vmatpush.msra.mxu0 %v878
  %2886 = vmatpush.msra.mxu0 %v874
  %2887 = vmatpush.msra.mxu0 %v870
  %2888 = vmatpush.msra.mxu0 %v866
  %2889 = vmatpush.msra.mxu0 %v862
  %2890 = vmatpush.msra.mxu0 %v858
  %2891 = vmatpush.msra.mxu0 %v854
  %2892 = vmatpush.msra.mxu0 %v850
  %2893 = vmatpush.msra.mxu0 %v846
  %2894 = vmatpush.msra.mxu0 %v842
  %2895 = vmatpush.msra.mxu0 %v838
  %2896 = vmatpush.msra.mxu0 %v834
  %2897 = vmatpush.msra.mxu0 %v830
  %2898 = vmatmul.f32.gmra.mxu0 %v47
  %v2899 = vpop.f32.mrf.mxu0
  %v2900 = vadd.f32 %v2880, %v2899
  %2901 = vdwg.mxu0
  %2902 = vmatpush.msra.mxu0 %v954
  %2903 = vmatpush.msra.mxu0 %v950
  %2904 = vmatpush.msra.mxu0 %v946
  %2905 = vmatpush.msra.mxu0 %v942
  %2906 = vmatpush.msra.mxu0 %v938
  %2907 = vmatpush.msra.mxu0 %v934
  %2908 = vmatpush.msra.mxu0 %v930
  %2909 = vmatpush.msra.mxu0 %v926
  %2910 = vmatpush.msra.mxu0 %v922
  %2911 = vmatpush.msra.mxu0 %v918
  %2912 = vmatpush.msra.mxu0 %v914
  %2913 = vmatpush.msra.mxu0 %v910
  %2914 = vmatpush.msra.mxu0 %v906
  %2915 = vmatpush.msra.mxu0 %v902
  %2916 = vmatpush.msra.mxu0 %v898
  %2917 = vmatpush.msra.mxu0 %v894
  %2918 = vmatmul.f32.gmra.mxu0 %v48
  %v2919 = vpop.f32.mrf.mxu0
  %v2920 = vadd.f32 %v2900, %v2919
  %2921 = vdwg.mxu0
  %2922 = vmatpush.msra.mxu0 %v1018
  %2923 = vmatpush.msra.mxu0 %v1014
  %2924 = vmatpush.msra.mxu0 %v1010
  %2925 = vmatpush.msra.mxu0 %v1006
  %2926 = vmatpush.msra.mxu0 %v1002
  %2927 = vmatpush.msra.mxu0 %v998
  %2928 = vmatpush.msra.mxu0 %v994
  %2929 = vmatpush.msra.mxu0 %v990
  %2930 = vmatpush.msra.mxu0 %v986
  %2931 = vmatpush.msra.mxu0 %v982
  %2932 = vmatpush.msra.mxu0 %v978
  %2933 = vmatpush.msra.mxu0 %v974
  %2934 = vmatpush.msra.mxu0 %v970
  %2935 = vmatpush.msra.mxu0 %v966
  %2936 = vmatpush.msra.mxu0 %v962
  %2937 = vmatpush.msra.mxu0 %v958
  %2938 = vmatmul.f32.gmra.mxu0 %v49
  %v2939 = vpop.f32.mrf.mxu0
  %v2940 = vadd.f32 %v2920, %v2939
  %2941 = vdwg.mxu0
  %2942 = vmatpush.msra.mxu0 %v1082
  %2943 = vmatpush.msra.mxu0 %v1078
  %2944 = vmatpush.msra.mxu0 %v1074
  %2945 = vmatpush.msra.mxu0 %v1070
  %2946 = vmatpush.msra.mxu0 %v1066
  %2947 = vmatpush.msra.mxu0 %v1062
  %2948 = vmatpush.msra.mxu0 %v1058
  %2949 = vmatpush.msra.mxu0 %v1054
  %2950 = vmatpush.msra.mxu0 %v1050
  %2951 = vmatpush.msra.mxu0 %v1046
  %2952 = vmatpush.msra.mxu0 %v1042
  %2953 = vmatpush.msra.mxu0 %v1038
  %2954 = vmatpush.msra.mxu0 %v1034
  %2955 = vmatpush.msra.mxu0 %v1030
  %2956 = vmatpush.msra.mxu0 %v1026
  %2957 = vmatpush.msra.mxu0 %v1022
  %2958 = vmatmul.f32.gmra.mxu0 %v50
  %v2959 = vpop.f32.mrf.mxu0
  %v2960 = vadd.f32 %v2940, %v2959
  %2961 = vdwg.mxu0
  %2962 = vmatpush.msra.mxu0 %v1146
  %2963 = vmatpush.msra.mxu0 %v1142
  %2964 = vmatpush.msra.mxu0 %v1138
  %2965 = vmatpush.msra.mxu0 %v1134
  %2966 = vmatpush.msra.mxu0 %v1130
  %2967 = vmatpush.msra.mxu0 %v1126
  %2968 = vmatpush.msra.mxu0 %v1122
  %2969 = vmatpush.msra.mxu0 %v1118
  %2970 = vmatpush.msra.mxu0 %v1114
  %2971 = vmatpush.msra.mxu0 %v1110
  %2972 = vmatpush.msra.mxu0 %v1106
  %2973 = vmatpush.msra.mxu0 %v1102
  %2974 = vmatpush.msra.mxu0 %v1098
  %2975 = vmatpush.msra.mxu0 %v1094
  %2976 = vmatpush.msra.mxu0 %v1090
  %2977 = vmatpush.msra.mxu0 %v1086
  %2978 = vmatmul.f32.gmra.mxu0 %v51
  %v2979 = vpop.f32.mrf.mxu0
  %v2980 = vadd.f32 %v2960, %v2979
  %2981 = vdwg.mxu0
  %2982 = vmatpush.msra.mxu0 %v1210
  %2983 = vmatpush.msra.mxu0 %v1206
  %2984 = vmatpush.msra.mxu0 %v1202
  %2985 = vmatpush.msra.mxu0 %v1198
  %2986 = vmatpush.msra.mxu0 %v1194
  %2987 = vmatpush.msra.mxu0 %v1190
  %2988 = vmatpush.msra.mxu0 %v1186
  %2989 = vmatpush.msra.mxu0 %v1182
  %2990 = vmatpush.msra.mxu0 %v1178
  %2991 = vmatpush.msra.mxu0 %v1174
  %2992 = vmatpush.msra.mxu0 %v1170
  %2993 = vmatpush.msra.mxu0 %v1166
  %2994 = vmatpush.msra.mxu0 %v1162
  %2995 = vmatpush.msra.mxu0 %v1158
  %2996 = vmatpush.msra.mxu0 %v1154
  %2997 = vmatpush.msra.mxu0 %v1150
  %2998 = vmatmul.f32.gmra.mxu0 %v52
  %v2999 = vpop.f32.mrf.mxu0
  %v3000 = vadd.f32 %v2980, %v2999
  %3001 = vdwg.mxu0
  %3002 = vmatpush.msra.mxu0 %v1274
  %3003 = vmatpush.msra.mxu0 %v1270
  %3004 = vmatpush.msra.mxu0 %v1266
  %3005 = vmatpush.msra.mxu0 %v1262
  %3006 = vmatpush.msra.mxu0 %v1258
  %3007 = vmatpush.msra.mxu0 %v1254
  %3008 = vmatpush.msra.mxu0 %v1250
  %3009 = vmatpush.msra.mxu0 %v1246
  %3010 = vmatpush.msra.mxu0 %v1242
  %3011 = vmatpush.msra.mxu0 %v1238
  %3012 = vmatpush.msra.mxu0 %v1234
  %3013 = vmatpush.msra.mxu0 %v1230
  %3014 = vmatpush.msra.mxu0 %v1226
  %3015 = vmatpush.msra.mxu0 %v1222
  %3016 = vmatpush.msra.mxu0 %v1218
  %3017 = vmatpush.msra.mxu0 %v1214
  %3018 = vmatmul.f32.gmra.mxu0 %v53
  %v3019 = vpop.f32.mrf.mxu0
  %v3020 = vadd.f32 %v3000, %v3019
  %3021 = vdwg.mxu0
  %3022 = vmatpush.msra.mxu0 %v1338
  %3023 = vmatpush.msra.mxu0 %v1334
  %3024 = vmatpush.msra.mxu0 %v1330
  %3025 = vmatpush.msra.mxu0 %v1326
  %3026 = vmatpush.msra.mxu0 %v1322
  %3027 = vmatpush.msra.mxu0 %v1318
  %3028 = vmatpush.msra.mxu0 %v1314
  %3029 = vmatpush.msra.mxu0 %v1310
  %3030 = vmatpush.msra.mxu0 %v1306
  %3031 = vmatpush.msra.mxu0 %v1302
  %3032 = vmatpush.msra.mxu0 %v1298
  %3033 = vmatpush.msra.mxu0 %v1294
  %3034 = vmatpush.msra.mxu0 %v1290
  %3035 = vmatpush.msra.mxu0 %v1286
  %3036 = vmatpush.msra.mxu0 %v1282
  %3037 = vmatpush.msra.mxu0 %v1278
  %3038 = vmatmul.f32.gmra.mxu0 %v54
  %v3039 = vpop.f32.mrf.mxu0
  %v3040 = vadd.f32 %v3020, %v3039
  %3041 = vdwg.mxu0
  %3042 = vmatpush.msra.mxu0 %v1402
  %3043 = vmatpush.msra.mxu0 %v1398
  %3044 = vmatpush.msra.mxu0 %v1394
  %3045 = vmatpush.msra.mxu0 %v1390
  %3046 = vmatpush.msra.mxu0 %v1386
  %3047 = vmatpush.msra.mxu0 %v1382
  %3048 = vmatpush.msra.mxu0 %v1378
  %3049 = vmatpush.msra.mxu0 %v1374
  %3050 = vmatpush.msra.mxu0 %v1370
  %3051 = vmatpush.msra.mxu0 %v1366
  %3052 = vmatpush.msra.mxu0 %v1362
  %3053 = vmatpush.msra.mxu0 %v1358
  %3054 = vmatpush.msra.mxu0 %v1354
  %3055 = vmatpush.msra.mxu0 %v1350
  %3056 = vmatpush.msra.mxu0 %v1346
  %3057 = vmatpush.msra.mxu0 %v1342
  %3058 = vmatmul.f32.gmra.mxu0 %v55
  %v3059 = vpop.f32.mrf.mxu0
  %v3060 = vadd.f32 %v3040, %v3059
  %3061 = vdwg.mxu0
  %3062 = vmatpush.msra.mxu0 %v1466
  %3063 = vmatpush.msra.mxu0 %v1462
  %3064 = vmatpush.msra.mxu0 %v1458
  %3065 = vmatpush.msra.mxu0 %v1454
  %3066 = vmatpush.msra.mxu0 %v1450
  %3067 = vmatpush.msra.mxu0 %v1446
  %3068 = vmatpush.msra.mxu0 %v1442
  %3069 = vmatpush.msra.mxu0 %v1438
  %3070 = vmatpush.msra.mxu0 %v1434
  %3071 = vmatpush.msra.mxu0 %v1430
  %3072 = vmatpush.msra.mxu0 %v1426
  %3073 = vmatpush.msra.mxu0 %v1422
  %3074 = vmatpush.msra.mxu0 %v1418
  %3075 = vmatpush.msra.mxu0 %v1414
  %3076 = vmatpush.msra.mxu0 %v1410
  %3077 = vmatpush.msra.mxu0 %v1406
  %3078 = vmatmul.f32.gmra.mxu0 %v56
  %v3079 = vpop.f32.mrf.mxu0
  %v3080 = vadd.f32 %v3060, %v3079
  %3081 = vdwg.mxu0
  %3082 = vmatpush.msra.mxu0 %v1530
  %3083 = vmatpush.msra.mxu0 %v1526
  %3084 = vmatpush.msra.mxu0 %v1522
  %3085 = vmatpush.msra.mxu0 %v1518
  %3086 = vmatpush.msra.mxu0 %v1514
  %3087 = vmatpush.msra.mxu0 %v1510
  %3088 = vmatpush.msra.mxu0 %v1506
  %3089 = vmatpush.msra.mxu0 %v1502
  %3090 = vmatpush.msra.mxu0 %v1498
  %3091 = vmatpush.msra.mxu0 %v1494
  %3092 = vmatpush.msra.mxu0 %v1490
  %3093 = vmatpush.msra.mxu0 %v1486
  %3094 = vmatpush.msra.mxu0 %v1482
  %3095 = vmatpush.msra.mxu0 %v1478
  %3096 = vmatpush.msra.mxu0 %v1474
  %3097 = vmatpush.msra.mxu0 %v1470
  %3098 = vmatmul.f32.gmra.mxu0 %v57
  %v3099 = vpop.f32.mrf.mxu0
  %v3100 = vadd.f32 %v3080, %v3099
  %3101 = vdwg.mxu0
  %3102 = vmatpush.msra.mxu0 %v1594
  %3103 = vmatpush.msra.mxu0 %v1590
  %3104 = vmatpush.msra.mxu0 %v1586
  %3105 = vmatpush.msra.mxu0 %v1582
  %3106 = vmatpush.msra.mxu0 %v1578
  %3107 = vmatpush.msra.mxu0 %v1574
  %3108 = vmatpush.msra.mxu0 %v1570
  %3109 = vmatpush.msra.mxu0 %v1566
  %3110 = vmatpush.msra.mxu0 %v1562
  %3111 = vmatpush.msra.mxu0 %v1558
  %3112 = vmatpush.msra.mxu0 %v1554
  %3113 = vmatpush.msra.mxu0 %v1550
  %3114 = vmatpush.msra.mxu0 %v1546
  %3115 = vmatpush.msra.mxu0 %v1542
  %3116 = vmatpush.msra.mxu0 %v1538
  %3117 = vmatpush.msra.mxu0 %v1534
  %3118 = vmatmul.f32.gmra.mxu0 %v58
  %v3119 = vpop.f32.mrf.mxu0
  %v3120 = vadd.f32 %v3100, %v3119
  %3121 = vdwg.mxu0
  %3122 = vmatpush.msra.mxu0 0.0
  %3123 = vmatpush.msra.mxu0 0.0
  %3124 = vmatpush.msra.mxu0 0.0
  %3125 = vmatpush.msra.mxu0 0.0
  %3126 = vmatpush.msra.mxu0 0.0
  %3127 = vmatpush.msra.mxu0 0.0
  %3128 = vmatpush.msra.mxu0 0.0
  %3129 = vmatpush.msra.mxu0 0.0
  %3130 = vmatpush.msra.mxu0 %v1626
  %3131 = vmatpush.msra.mxu0 %v1622
  %3132 = vmatpush.msra.mxu0 %v1618
  %3133 = vmatpush.msra.mxu0 %v1614
  %3134 = vmatpush.msra.mxu0 %v1610
  %3135 = vmatpush.msra.mxu0 %v1606
  %3136 = vmatpush.msra.mxu0 %v1602
  %3137 = vmatpush.msra.mxu0 %v1598
  %3138 = vmatmul.f32.gmra.mxu0 %v1640
  %v3139 = vpop.f32.mrf.mxu0
  %v3140 = vadd.f32 %v3120, %v3139
  %3141 = vdwg.mxu0
  %3142 = vmatpush.msra.mxu0 %v123
  %3143 = vmatpush.msra.mxu0 %v119
  %3144 = vmatpush.msra.mxu0 %v115
  %3145 = vmatpush.msra.mxu0 %v111
  %3146 = vmatpush.msra.mxu0 %v107
  %3147 = vmatpush.msra.mxu0 %v103
  %3148 = vmatpush.msra.mxu0 %v99
  %3149 = vmatpush.msra.mxu0 %v95
  %3150 = vmatpush.msra.mxu0 %v91
  %3151 = vmatpush.msra.mxu0 %v87
  %3152 = vmatpush.msra.mxu0 %v83
  %3153 = vmatpush.msra.mxu0 %v79
  %3154 = vmatpush.msra.mxu0 %v75
  %3155 = vmatpush.msra.mxu0 %v71
  %3156 = vmatpush.msra.mxu0 %v67
  %3157 = vmatpush.msra.mxu0 %v63
  %3158 = vmatmul.f32.gmra.mxu0 %v35
  %v3159 = vpop.f32.mrf.mxu0
  %v3160 = vadd.f32 %v1633, %v3159
  %3161 = vdwg.mxu0
  %3162 = vmatpush.msra.mxu0 %v187
  %3163 = vmatpush.msra.mxu0 %v183
  %3164 = vmatpush.msra.mxu0 %v179
  %3165 = vmatpush.msra.mxu0 %v175
  %3166 = vmatpush.msra.mxu0 %v171
  %3167 = vmatpush.msra.mxu0 %v167
  %3168 = vmatpush.msra.mxu0 %v163
  %3169 = vmatpush.msra.mxu0 %v159
  %3170 = vmatpush.msra.mxu0 %v155
  %3171 = vmatpush.msra.mxu0 %v151
  %3172 = vmatpush.msra.mxu0 %v147
  %3173 = vmatpush.msra.mxu0 %v143
  %3174 = vmatpush.msra.mxu0 %v139
  %3175 = vmatpush.msra.mxu0 %v135
  %3176 = vmatpush.msra.mxu0 %v131
  %3177 = vmatpush.msra.mxu0 %v127
  %3178 = vmatmul.f32.gmra.mxu0 %v36
  %v3179 = vpop.f32.mrf.mxu0
  %v3180 = vadd.f32 %v3160, %v3179
  %3181 = vdwg.mxu0
  %3182 = vmatpush.msra.mxu0 %v251
  %3183 = vmatpush.msra.mxu0 %v247
  %3184 = vmatpush.msra.mxu0 %v243
  %3185 = vmatpush.msra.mxu0 %v239
  %3186 = vmatpush.msra.mxu0 %v235
  %3187 = vmatpush.msra.mxu0 %v231
  %3188 = vmatpush.msra.mxu0 %v227
  %3189 = vmatpush.msra.mxu0 %v223
  %3190 = vmatpush.msra.mxu0 %v219
  %3191 = vmatpush.msra.mxu0 %v215
  %3192 = vmatpush.msra.mxu0 %v211
  %3193 = vmatpush.msra.mxu0 %v207
  %3194 = vmatpush.msra.mxu0 %v203
  %3195 = vmatpush.msra.mxu0 %v199
  %3196 = vmatpush.msra.mxu0 %v195
  %3197 = vmatpush.msra.mxu0 %v191
  %3198 = vmatmul.f32.gmra.mxu0 %v37
  %v3199 = vpop.f32.mrf.mxu0
  %v3200 = vadd.f32 %v3180, %v3199
  %3201 = vdwg.mxu0
  %3202 = vmatpush.msra.mxu0 %v315
  %3203 = vmatpush.msra.mxu0 %v311
  %3204 = vmatpush.msra.mxu0 %v307
  %3205 = vmatpush.msra.mxu0 %v303
  %3206 = vmatpush.msra.mxu0 %v299
  %3207 = vmatpush.msra.mxu0 %v295
  %3208 = vmatpush.msra.mxu0 %v291
  %3209 = vmatpush.msra.mxu0 %v287
  %3210 = vmatpush.msra.mxu0 %v283
  %3211 = vmatpush.msra.mxu0 %v279
  %3212 = vmatpush.msra.mxu0 %v275
  %3213 = vmatpush.msra.mxu0 %v271
  %3214 = vmatpush.msra.mxu0 %v267
  %3215 = vmatpush.msra.mxu0 %v263
  %3216 = vmatpush.msra.mxu0 %v259
  %3217 = vmatpush.msra.mxu0 %v255
  %3218 = vmatmul.f32.gmra.mxu0 %v38
  %v3219 = vpop.f32.mrf.mxu0
  %v3220 = vadd.f32 %v3200, %v3219
  %3221 = vdwg.mxu0
  %3222 = vmatpush.msra.mxu0 %v379
  %3223 = vmatpush.msra.mxu0 %v375
  %3224 = vmatpush.msra.mxu0 %v371
  %3225 = vmatpush.msra.mxu0 %v367
  %3226 = vmatpush.msra.mxu0 %v363
  %3227 = vmatpush.msra.mxu0 %v359
  %3228 = vmatpush.msra.mxu0 %v355
  %3229 = vmatpush.msra.mxu0 %v351
  %3230 = vmatpush.msra.mxu0 %v347
  %3231 = vmatpush.msra.mxu0 %v343
  %3232 = vmatpush.msra.mxu0 %v339
  %3233 = vmatpush.msra.mxu0 %v335
  %3234 = vmatpush.msra.mxu0 %v331
  %3235 = vmatpush.msra.mxu0 %v327
  %3236 = vmatpush.msra.mxu0 %v323
  %3237 = vmatpush.msra.mxu0 %v319
  %3238 = vmatmul.f32.gmra.mxu0 %v39
  %v3239 = vpop.f32.mrf.mxu0
  %v3240 = vadd.f32 %v3220, %v3239
  %3241 = vdwg.mxu0
  %3242 = vmatpush.msra.mxu0 %v443
  %3243 = vmatpush.msra.mxu0 %v439
  %3244 = vmatpush.msra.mxu0 %v435
  %3245 = vmatpush.msra.mxu0 %v431
  %3246 = vmatpush.msra.mxu0 %v427
  %3247 = vmatpush.msra.mxu0 %v423
  %3248 = vmatpush.msra.mxu0 %v419
  %3249 = vmatpush.msra.mxu0 %v415
  %3250 = vmatpush.msra.mxu0 %v411
  %3251 = vmatpush.msra.mxu0 %v407
  %3252 = vmatpush.msra.mxu0 %v403
  %3253 = vmatpush.msra.mxu0 %v399
  %3254 = vmatpush.msra.mxu0 %v395
  %3255 = vmatpush.msra.mxu0 %v391
  %3256 = vmatpush.msra.mxu0 %v387
  %3257 = vmatpush.msra.mxu0 %v383
  %3258 = vmatmul.f32.gmra.mxu0 %v40
  %v3259 = vpop.f32.mrf.mxu0
  %v3260 = vadd.f32 %v3240, %v3259
  %3261 = vdwg.mxu0
  %3262 = vmatpush.msra.mxu0 %v507
  %3263 = vmatpush.msra.mxu0 %v503
  %3264 = vmatpush.msra.mxu0 %v499
  %3265 = vmatpush.msra.mxu0 %v495
  %3266 = vmatpush.msra.mxu0 %v491
  %3267 = vmatpush.msra.mxu0 %v487
  %3268 = vmatpush.msra.mxu0 %v483
  %3269 = vmatpush.msra.mxu0 %v479
  %3270 = vmatpush.msra.mxu0 %v475
  %3271 = vmatpush.msra.mxu0 %v471
  %3272 = vmatpush.msra.mxu0 %v467
  %3273 = vmatpush.msra.mxu0 %v463
  %3274 = vmatpush.msra.mxu0 %v459
  %3275 = vmatpush.msra.mxu0 %v455
  %3276 = vmatpush.msra.mxu0 %v451
  %3277 = vmatpush.msra.mxu0 %v447
  %3278 = vmatmul.f32.gmra.mxu0 %v41
  %v3279 = vpop.f32.mrf.mxu0
  %v3280 = vadd.f32 %v3260, %v3279
  %3281 = vdwg.mxu0
  %3282 = vmatpush.msra.mxu0 %v571
  %3283 = vmatpush.msra.mxu0 %v567
  %3284 = vmatpush.msra.mxu0 %v563
  %3285 = vmatpush.msra.mxu0 %v559
  %3286 = vmatpush.msra.mxu0 %v555
  %3287 = vmatpush.msra.mxu0 %v551
  %3288 = vmatpush.msra.mxu0 %v547
  %3289 = vmatpush.msra.mxu0 %v543
  %3290 = vmatpush.msra.mxu0 %v539
  %3291 = vmatpush.msra.mxu0 %v535
  %3292 = vmatpush.msra.mxu0 %v531
  %3293 = vmatpush.msra.mxu0 %v527
  %3294 = vmatpush.msra.mxu0 %v523
  %3295 = vmatpush.msra.mxu0 %v519
  %3296 = vmatpush.msra.mxu0 %v515
  %3297 = vmatpush.msra.mxu0 %v511
  %3298 = vmatmul.f32.gmra.mxu0 %v42
  %v3299 = vpop.f32.mrf.mxu0
  %v3300 = vadd.f32 %v3280, %v3299
  %3301 = vdwg.mxu0
  %3302 = vmatpush.msra.mxu0 %v635
  %3303 = vmatpush.msra.mxu0 %v631
  %3304 = vmatpush.msra.mxu0 %v627
  %3305 = vmatpush.msra.mxu0 %v623
  %3306 = vmatpush.msra.mxu0 %v619
  %3307 = vmatpush.msra.mxu0 %v615
  %3308 = vmatpush.msra.mxu0 %v611
  %3309 = vmatpush.msra.mxu0 %v607
  %3310 = vmatpush.msra.mxu0 %v603
  %3311 = vmatpush.msra.mxu0 %v599
  %3312 = vmatpush.msra.mxu0 %v595
  %3313 = vmatpush.msra.mxu0 %v591
  %3314 = vmatpush.msra.mxu0 %v587
  %3315 = vmatpush.msra.mxu0 %v583
  %3316 = vmatpush.msra.mxu0 %v579
  %3317 = vmatpush.msra.mxu0 %v575
  %3318 = vmatmul.f32.gmra.mxu0 %v43
  %v3319 = vpop.f32.mrf.mxu0
  %v3320 = vadd.f32 %v3300, %v3319
  %3321 = vdwg.mxu0
  %3322 = vmatpush.msra.mxu0 %v699
  %3323 = vmatpush.msra.mxu0 %v695
  %3324 = vmatpush.msra.mxu0 %v691
  %3325 = vmatpush.msra.mxu0 %v687
  %3326 = vmatpush.msra.mxu0 %v683
  %3327 = vmatpush.msra.mxu0 %v679
  %3328 = vmatpush.msra.mxu0 %v675
  %3329 = vmatpush.msra.mxu0 %v671
  %3330 = vmatpush.msra.mxu0 %v667
  %3331 = vmatpush.msra.mxu0 %v663
  %3332 = vmatpush.msra.mxu0 %v659
  %3333 = vmatpush.msra.mxu0 %v655
  %3334 = vmatpush.msra.mxu0 %v651
  %3335 = vmatpush.msra.mxu0 %v647
  %3336 = vmatpush.msra.mxu0 %v643
  %3337 = vmatpush.msra.mxu0 %v639
  %3338 = vmatmul.f32.gmra.mxu0 %v44
  %v3339 = vpop.f32.mrf.mxu0
  %v3340 = vadd.f32 %v3320, %v3339
  %3341 = vdwg.mxu0
  %3342 = vmatpush.msra.mxu0 %v763
  %3343 = vmatpush.msra.mxu0 %v759
  %3344 = vmatpush.msra.mxu0 %v755
  %3345 = vmatpush.msra.mxu0 %v751
  %3346 = vmatpush.msra.mxu0 %v747
  %3347 = vmatpush.msra.mxu0 %v743
  %3348 = vmatpush.msra.mxu0 %v739
  %3349 = vmatpush.msra.mxu0 %v735
  %3350 = vmatpush.msra.mxu0 %v731
  %3351 = vmatpush.msra.mxu0 %v727
  %3352 = vmatpush.msra.mxu0 %v723
  %3353 = vmatpush.msra.mxu0 %v719
  %3354 = vmatpush.msra.mxu0 %v715
  %3355 = vmatpush.msra.mxu0 %v711
  %3356 = vmatpush.msra.mxu0 %v707
  %3357 = vmatpush.msra.mxu0 %v703
  %3358 = vmatmul.f32.gmra.mxu0 %v45
  %v3359 = vpop.f32.mrf.mxu0
  %v3360 = vadd.f32 %v3340, %v3359
  %3361 = vdwg.mxu0
  %3362 = vmatpush.msra.mxu0 %v827
  %3363 = vmatpush.msra.mxu0 %v823
  %3364 = vmatpush.msra.mxu0 %v819
  %3365 = vmatpush.msra.mxu0 %v815
  %3366 = vmatpush.msra.mxu0 %v811
  %3367 = vmatpush.msra.mxu0 %v807
  %3368 = vmatpush.msra.mxu0 %v803
  %3369 = vmatpush.msra.mxu0 %v799
  %3370 = vmatpush.msra.mxu0 %v795
  %3371 = vmatpush.msra.mxu0 %v791
  %3372 = vmatpush.msra.mxu0 %v787
  %3373 = vmatpush.msra.mxu0 %v783
  %3374 = vmatpush.msra.mxu0 %v779
  %3375 = vmatpush.msra.mxu0 %v775
  %3376 = vmatpush.msra.mxu0 %v771
  %3377 = vmatpush.msra.mxu0 %v767
  %3378 = vmatmul.f32.gmra.mxu0 %v46
  %v3379 = vpop.f32.mrf.mxu0
  %v3380 = vadd.f32 %v3360, %v3379
  %3381 = vdwg.mxu0
  %3382 = vmatpush.msra.mxu0 %v891
  %3383 = vmatpush.msra.mxu0 %v887
  %3384 = vmatpush.msra.mxu0 %v883
  %3385 = vmatpush.msra.mxu0 %v879
  %3386 = vmatpush.msra.mxu0 %v875
  %3387 = vmatpush.msra.mxu0 %v871
  %3388 = vmatpush.msra.mxu0 %v867
  %3389 = vmatpush.msra.mxu0 %v863
  %3390 = vmatpush.msra.mxu0 %v859
  %3391 = vmatpush.msra.mxu0 %v855
  %3392 = vmatpush.msra.mxu0 %v851
  %3393 = vmatpush.msra.mxu0 %v847
  %3394 = vmatpush.msra.mxu0 %v843
  %3395 = vmatpush.msra.mxu0 %v839
  %3396 = vmatpush.msra.mxu0 %v835
  %3397 = vmatpush.msra.mxu0 %v831
  %3398 = vmatmul.f32.gmra.mxu0 %v47
  %v3399 = vpop.f32.mrf.mxu0
  %v3400 = vadd.f32 %v3380, %v3399
  %3401 = vdwg.mxu0
  %3402 = vmatpush.msra.mxu0 %v955
  %3403 = vmatpush.msra.mxu0 %v951
  %3404 = vmatpush.msra.mxu0 %v947
  %3405 = vmatpush.msra.mxu0 %v943
  %3406 = vmatpush.msra.mxu0 %v939
  %3407 = vmatpush.msra.mxu0 %v935
  %3408 = vmatpush.msra.mxu0 %v931
  %3409 = vmatpush.msra.mxu0 %v927
  %3410 = vmatpush.msra.mxu0 %v923
  %3411 = vmatpush.msra.mxu0 %v919
  %3412 = vmatpush.msra.mxu0 %v915
  %3413 = vmatpush.msra.mxu0 %v911
  %3414 = vmatpush.msra.mxu0 %v907
  %3415 = vmatpush.msra.mxu0 %v903
  %3416 = vmatpush.msra.mxu0 %v899
  %3417 = vmatpush.msra.mxu0 %v895
  %3418 = vmatmul.f32.gmra.mxu0 %v48
  %v3419 = vpop.f32.mrf.mxu0
  %v3420 = vadd.f32 %v3400, %v3419
  %3421 = vdwg.mxu0
  %3422 = vmatpush.msra.mxu0 %v1019
  %3423 = vmatpush.msra.mxu0 %v1015
  %3424 = vmatpush.msra.mxu0 %v1011
  %3425 = vmatpush.msra.mxu0 %v1007
  %3426 = vmatpush.msra.mxu0 %v1003
  %3427 = vmatpush.msra.mxu0 %v999
  %3428 = vmatpush.msra.mxu0 %v995
  %3429 = vmatpush.msra.mxu0 %v991
  %3430 = vmatpush.msra.mxu0 %v987
  %3431 = vmatpush.msra.mxu0 %v983
  %3432 = vmatpush.msra.mxu0 %v979
  %3433 = vmatpush.msra.mxu0 %v975
  %3434 = vmatpush.msra.mxu0 %v971
  %3435 = vmatpush.msra.mxu0 %v967
  %3436 = vmatpush.msra.mxu0 %v963
  %3437 = vmatpush.msra.mxu0 %v959
  %3438 = vmatmul.f32.gmra.mxu0 %v49
  %v3439 = vpop.f32.mrf.mxu0
  %v3440 = vadd.f32 %v3420, %v3439
  %3441 = vdwg.mxu0
  %3442 = vmatpush.msra.mxu0 %v1083
  %3443 = vmatpush.msra.mxu0 %v1079
  %3444 = vmatpush.msra.mxu0 %v1075
  %3445 = vmatpush.msra.mxu0 %v1071
  %3446 = vmatpush.msra.mxu0 %v1067
  %3447 = vmatpush.msra.mxu0 %v1063
  %3448 = vmatpush.msra.mxu0 %v1059
  %3449 = vmatpush.msra.mxu0 %v1055
  %3450 = vmatpush.msra.mxu0 %v1051
  %3451 = vmatpush.msra.mxu0 %v1047
  %3452 = vmatpush.msra.mxu0 %v1043
  %3453 = vmatpush.msra.mxu0 %v1039
  %3454 = vmatpush.msra.mxu0 %v1035
  %3455 = vmatpush.msra.mxu0 %v1031
  %3456 = vmatpush.msra.mxu0 %v1027
  %3457 = vmatpush.msra.mxu0 %v1023
  %3458 = vmatmul.f32.gmra.mxu0 %v50
  %v3459 = vpop.f32.mrf.mxu0
  %v3460 = vadd.f32 %v3440, %v3459
  %3461 = vdwg.mxu0
  %3462 = vmatpush.msra.mxu0 %v1147
  %3463 = vmatpush.msra.mxu0 %v1143
  %3464 = vmatpush.msra.mxu0 %v1139
  %3465 = vmatpush.msra.mxu0 %v1135
  %3466 = vmatpush.msra.mxu0 %v1131
  %3467 = vmatpush.msra.mxu0 %v1127
  %3468 = vmatpush.msra.mxu0 %v1123
  %3469 = vmatpush.msra.mxu0 %v1119
  %3470 = vmatpush.msra.mxu0 %v1115
  %3471 = vmatpush.msra.mxu0 %v1111
  %3472 = vmatpush.msra.mxu0 %v1107
  %3473 = vmatpush.msra.mxu0 %v1103
  %3474 = vmatpush.msra.mxu0 %v1099
  %3475 = vmatpush.msra.mxu0 %v1095
  %3476 = vmatpush.msra.mxu0 %v1091
  %3477 = vmatpush.msra.mxu0 %v1087
  %3478 = vmatmul.f32.gmra.mxu0 %v51
  %v3479 = vpop.f32.mrf.mxu0
  %v3480 = vadd.f32 %v3460, %v3479
  %3481 = vdwg.mxu0
  %3482 = vmatpush.msra.mxu0 %v1211
  %3483 = vmatpush.msra.mxu0 %v1207
  %3484 = vmatpush.msra.mxu0 %v1203
  %3485 = vmatpush.msra.mxu0 %v1199
  %3486 = vmatpush.msra.mxu0 %v1195
  %3487 = vmatpush.msra.mxu0 %v1191
  %3488 = vmatpush.msra.mxu0 %v1187
  %3489 = vmatpush.msra.mxu0 %v1183
  %3490 = vmatpush.msra.mxu0 %v1179
  %3491 = vmatpush.msra.mxu0 %v1175
  %3492 = vmatpush.msra.mxu0 %v1171
  %3493 = vmatpush.msra.mxu0 %v1167
  %3494 = vmatpush.msra.mxu0 %v1163
  %3495 = vmatpush.msra.mxu0 %v1159
  %3496 = vmatpush.msra.mxu0 %v1155
  %3497 = vmatpush.msra.mxu0 %v1151
  %3498 = vmatmul.f32.gmra.mxu0 %v52
  %v3499 = vpop.f32.mrf.mxu0
  %v3500 = vadd.f32 %v3480, %v3499
  %3501 = vdwg.mxu0
  %3502 = vmatpush.msra.mxu0 %v1275
  %3503 = vmatpush.msra.mxu0 %v1271
  %3504 = vmatpush.msra.mxu0 %v1267
  %3505 = vmatpush.msra.mxu0 %v1263
  %3506 = vmatpush.msra.mxu0 %v1259
  %3507 = vmatpush.msra.mxu0 %v1255
  %3508 = vmatpush.msra.mxu0 %v1251
  %3509 = vmatpush.msra.mxu0 %v1247
  %3510 = vmatpush.msra.mxu0 %v1243
  %3511 = vmatpush.msra.mxu0 %v1239
  %3512 = vmatpush.msra.mxu0 %v1235
  %3513 = vmatpush.msra.mxu0 %v1231
  %3514 = vmatpush.msra.mxu0 %v1227
  %3515 = vmatpush.msra.mxu0 %v1223
  %3516 = vmatpush.msra.mxu0 %v1219
  %3517 = vmatpush.msra.mxu0 %v1215
  %3518 = vmatmul.f32.gmra.mxu0 %v53
  %v3519 = vpop.f32.mrf.mxu0
  %v3520 = vadd.f32 %v3500, %v3519
  %3521 = vdwg.mxu0
  %3522 = vmatpush.msra.mxu0 %v1339
  %3523 = vmatpush.msra.mxu0 %v1335
  %3524 = vmatpush.msra.mxu0 %v1331
  %3525 = vmatpush.msra.mxu0 %v1327
  %3526 = vmatpush.msra.mxu0 %v1323
  %3527 = vmatpush.msra.mxu0 %v1319
  %3528 = vmatpush.msra.mxu0 %v1315
  %3529 = vmatpush.msra.mxu0 %v1311
  %3530 = vmatpush.msra.mxu0 %v1307
  %3531 = vmatpush.msra.mxu0 %v1303
  %3532 = vmatpush.msra.mxu0 %v1299
  %3533 = vmatpush.msra.mxu0 %v1295
  %3534 = vmatpush.msra.mxu0 %v1291
  %3535 = vmatpush.msra.mxu0 %v1287
  %3536 = vmatpush.msra.mxu0 %v1283
  %3537 = vmatpush.msra.mxu0 %v1279
  %3538 = vmatmul.f32.gmra.mxu0 %v54
  %v3539 = vpop.f32.mrf.mxu0
  %v3540 = vadd.f32 %v3520, %v3539
  %3541 = vdwg.mxu0
  %3542 = vmatpush.msra.mxu0 %v1403
  %3543 = vmatpush.msra.mxu0 %v1399
  %3544 = vmatpush.msra.mxu0 %v1395
  %3545 = vmatpush.msra.mxu0 %v1391
  %3546 = vmatpush.msra.mxu0 %v1387
  %3547 = vmatpush.msra.mxu0 %v1383
  %3548 = vmatpush.msra.mxu0 %v1379
  %3549 = vmatpush.msra.mxu0 %v1375
  %3550 = vmatpush.msra.mxu0 %v1371
  %3551 = vmatpush.msra.mxu0 %v1367
  %3552 = vmatpush.msra.mxu0 %v1363
  %3553 = vmatpush.msra.mxu0 %v1359
  %3554 = vmatpush.msra.mxu0 %v1355
  %3555 = vmatpush.msra.mxu0 %v1351
  %3556 = vmatpush.msra.mxu0 %v1347
  %3557 = vmatpush.msra.mxu0 %v1343
  %3558 = vmatmul.f32.gmra.mxu0 %v55
  %v3559 = vpop.f32.mrf.mxu0
  %v3560 = vadd.f32 %v3540, %v3559
  %3561 = vdwg.mxu0
  %3562 = vmatpush.msra.mxu0 %v1467
  %3563 = vmatpush.msra.mxu0 %v1463
  %3564 = vmatpush.msra.mxu0 %v1459
  %3565 = vmatpush.msra.mxu0 %v1455
  %3566 = vmatpush.msra.mxu0 %v1451
  %3567 = vmatpush.msra.mxu0 %v1447
  %3568 = vmatpush.msra.mxu0 %v1443
  %3569 = vmatpush.msra.mxu0 %v1439
  %3570 = vmatpush.msra.mxu0 %v1435
  %3571 = vmatpush.msra.mxu0 %v1431
  %3572 = vmatpush.msra.mxu0 %v1427
  %3573 = vmatpush.msra.mxu0 %v1423
  %3574 = vmatpush.msra.mxu0 %v1419
  %3575 = vmatpush.msra.mxu0 %v1415
  %3576 = vmatpush.msra.mxu0 %v1411
  %3577 = vmatpush.msra.mxu0 %v1407
  %3578 = vmatmul.f32.gmra.mxu0 %v56
  %v3579 = vpop.f32.mrf.mxu0
  %v3580 = vadd.f32 %v3560, %v3579
  %3581 = vdwg.mxu0
  %3582 = vmatpush.msra.mxu0 %v1531
  %3583 = vmatpush.msra.mxu0 %v1527
  %3584 = vmatpush.msra.mxu0 %v1523
  %3585 = vmatpush.msra.mxu0 %v1519
  %3586 = vmatpush.msra.mxu0 %v1515
  %3587 = vmatpush.msra.mxu0 %v1511
  %3588 = vmatpush.msra.mxu0 %v1507
  %3589 = vmatpush.msra.mxu0 %v1503
  %3590 = vmatpush.msra.mxu0 %v1499
  %3591 = vmatpush.msra.mxu0 %v1495
  %3592 = vmatpush.msra.mxu0 %v1491
  %3593 = vmatpush.msra.mxu0 %v1487
  %3594 = vmatpush.msra.mxu0 %v1483
  %3595 = vmatpush.msra.mxu0 %v1479
  %3596 = vmatpush.msra.mxu0 %v1475
  %3597 = vmatpush.msra.mxu0 %v1471
  %3598 = vmatmul.f32.gmra.mxu0 %v57
  %v3599 = vpop.f32.mrf.mxu0
  %v3600 = vadd.f32 %v3580, %v3599
  %3601 = vdwg.mxu0
  %3602 = vmatpush.msra.mxu0 %v1595
  %3603 = vmatpush.msra.mxu0 %v1591
  %3604 = vmatpush.msra.mxu0 %v1587
  %3605 = vmatpush.msra.mxu0 %v1583
  %3606 = vmatpush.msra.mxu0 %v1579
  %3607 = vmatpush.msra.mxu0 %v1575
  %3608 = vmatpush.msra.mxu0 %v1571
  %3609 = vmatpush.msra.mxu0 %v1567
  %3610 = vmatpush.msra.mxu0 %v1563
  %3611 = vmatpush.msra.mxu0 %v1559
  %3612 = vmatpush.msra.mxu0 %v1555
  %3613 = vmatpush.msra.mxu0 %v1551
  %3614 = vmatpush.msra.mxu0 %v1547
  %3615 = vmatpush.msra.mxu0 %v1543
  %3616 = vmatpush.msra.mxu0 %v1539
  %3617 = vmatpush.msra.mxu0 %v1535
  %3618 = vmatmul.f32.gmra.mxu0 %v58
  %v3619 = vpop.f32.mrf.mxu0
  %v3620 = vadd.f32 %v3600, %v3619
  %3621 = vdwg.mxu0
  %3622 = vmatpush.msra.mxu0 0.0
  %3623 = vmatpush.msra.mxu0 0.0
  %3624 = vmatpush.msra.mxu0 0.0
  %3625 = vmatpush.msra.mxu0 0.0
  %3626 = vmatpush.msra.mxu0 0.0
  %3627 = vmatpush.msra.mxu0 0.0
  %3628 = vmatpush.msra.mxu0 0.0
  %3629 = vmatpush.msra.mxu0 0.0
  %3630 = vmatpush.msra.mxu0 %v1627
  %3631 = vmatpush.msra.mxu0 %v1623
  %3632 = vmatpush.msra.mxu0 %v1619
  %3633 = vmatpush.msra.mxu0 %v1615
  %3634 = vmatpush.msra.mxu0 %v1611
  %3635 = vmatpush.msra.mxu0 %v1607
  %3636 = vmatpush.msra.mxu0 %v1603
  %3637 = vmatpush.msra.mxu0 %v1599
  %3638 = vmatmul.f32.gmra.mxu0 %v1640
  %v3639 = vpop.f32.mrf.mxu0
  %v3640 = vadd.f32 %v3620, %v3639
  %3641 = vdwg.mxu0
  %v3642 = vmax.f32 %v2140, 0.0
  %v3643 = vmax.f32 %v2640, 0.0
  %v3644 = vmax.f32 %v3140, 0.0
  %v3645 = vmax.f32 %v3640, 0.0
  %v3646 = vld [vmem:[%s3] sm:$0xff]
  %v3647 = vld [vmem:[%s3 + $0x8] sm:$0xff]
  %v3648 = vld [vmem:[%s3 + $0x10] sm:$0xff]
  %v3649 = vld [vmem:[%s3 + $0x18] sm:$0xff]
  %v3650 = vld [vmem:[%s3 + $0x20] sm:$0xff]
  %v3651 = vld [vmem:[%s3 + $0x28] sm:$0xff]
  %v3652 = vld [vmem:[%s3 + $0x30] sm:$0xff]
  %v3653 = vld [vmem:[%s3 + $0x38] sm:$0xff]
  %v3654 = vld [vmem:[%s3 + $0x40] sm:$0xff]
  %v3655 = vld [vmem:[%s3 + $0x48] sm:$0xff]
  %v3656 = vld [vmem:[%s3 + $0x50] sm:$0xff]
  %v3657 = vld [vmem:[%s3 + $0x58] sm:$0xff]
  %v3658 = vld [vmem:[%s3 + $0x60] sm:$0xff]
  %v3659 = vld [vmem:[%s3 + $0x68] sm:$0xff]
  %v3660 = vld [vmem:[%s3 + $0x70] sm:$0xff]
  %v3661 = vld [vmem:[%s3 + $0x78] sm:$0xff]
  %v3662 = vld [vmem:[%s3 + $0x80] sm:$0xff]
  %v3663 = vld [vmem:[%s3 + $0x88] sm:$0xff]
  %v3664 = vld [vmem:[%s3 + $0x90] sm:$0xff]
  %v3665 = vld [vmem:[%s3 + $0x98] sm:$0xff]
  %v3666 = vld [vmem:[%s3 + $0xa0] sm:$0xff]
  %v3667 = vld [vmem:[%s3 + $0xa8] sm:$0xff]
  %v3668 = vld [vmem:[%s3 + $0xb0] sm:$0xff]
  %v3669 = vld [vmem:[%s3 + $0xb8] sm:$0xff]
  %v3670 = vld [vmem:[%s3 + $0xc0] sm:$0xff]
  %v3671 = vld [vmem:[%s3 + $0xc8] sm:$0xff]
  %v3672 = vld [vmem:[%s3 + $0xd0] sm:$0xff]
  %v3673 = vld [vmem:[%s3 + $0xd8] sm:$0xff]
  %v3674 = vld [vmem:[%s3 + $0xe0] sm:$0xff]
  %v3675 = vld [vmem:[%s3 + $0xe8] sm:$0xff]
  %v3676 = vld [vmem:[%s3 + $0xf0] sm:$0xff]
  %v3677 = vld [vmem:[%s3 + $0xf8] sm:$0xff]
  %v3678 = vld [vmem:[%s3 + $0x100] sm:$0xff]
  %v3679 = vld [vmem:[%s3 + $0x108] sm:$0xff]
  %v3680 = vld [vmem:[%s3 + $0x110] sm:$0xff]
  %v3681 = vld [vmem:[%s3 + $0x118] sm:$0xff]
  %v3682 = vld [vmem:[%s3 + $0x120] sm:$0xff]
  %v3683 = vld [vmem:[%s3 + $0x128] sm:$0xff]
  %v3684 = vld [vmem:[%s3 + $0x130] sm:$0xff]
  %v3685 = vld [vmem:[%s3 + $0x138] sm:$0xff]
  %v3686 = vld [vmem:[%s3 + $0x140] sm:$0xff]
  %v3687 = vld [vmem:[%s3 + $0x148] sm:$0xff]
  %v3688 = vld [vmem:[%s3 + $0x150] sm:$0xff]
  %v3689 = vld [vmem:[%s3 + $0x158] sm:$0xff]
  %v3690 = vld [vmem:[%s3 + $0x160] sm:$0xff]
  %v3691 = vld [vmem:[%s3 + $0x168] sm:$0xff]
  %v3692 = vld [vmem:[%s3 + $0x170] sm:$0xff]
  %v3693 = vld [vmem:[%s3 + $0x178] sm:$0xff]
  %v3694 = vld [vmem:[%s3 + $0x180] sm:$0xff]
  %v3695 = vld [vmem:[%s3 + $0x188] sm:$0xff]
  %v3696 = vld [vmem:[%s3 + $0x190] sm:$0xff]
  %v3697 = vld [vmem:[%s3 + $0x198] sm:$0xff]
  %v3698 = vld [vmem:[%s3 + $0x1a0] sm:$0xff]
  %v3699 = vld [vmem:[%s3 + $0x1a8] sm:$0xff]
  %v3700 = vld [vmem:[%s3 + $0x1b0] sm:$0xff]
  %v3701 = vld [vmem:[%s3 + $0x1b8] sm:$0xff]
  %v3702 = vld [vmem:[%s3 + $0x1c0] sm:$0xff]
  %v3703 = vld [vmem:[%s3 + $0x1c8] sm:$0xff]
  %v3704 = vld [vmem:[%s3 + $0x1d0] sm:$0xff]
  %v3705 = vld [vmem:[%s3 + $0x1d8] sm:$0xff]
  %v3706 = vld [vmem:[%s3 + $0x1e0] sm:$0xff]
  %v3707 = vld [vmem:[%s3 + $0x1e8] sm:$0xff]
  %v3708 = vld [vmem:[%s3 + $0x1f0] sm:$0xff]
  %v3709 = vld [vmem:[%s3 + $0x1f8] sm:$0xff]
  %v3710 = vld [vmem:[%s4] sm:$0x1]
  %v3712 = vperm.slane %v3710, 0
  %3714 = vmatpush.msra.mxu0 %v3661
  %3715 = vmatpush.msra.mxu0 %v3660
  %3716 = vmatpush.msra.mxu0 %v3659
  %3717 = vmatpush.msra.mxu0 %v3658
  %3718 = vmatpush.msra.mxu0 %v3657
  %3719 = vmatpush.msra.mxu0 %v3656
  %3720 = vmatpush.msra.mxu0 %v3655
  %3721 = vmatpush.msra.mxu0 %v3654
  %3722 = vmatpush.msra.mxu0 %v3653
  %3723 = vmatpush.msra.mxu0 %v3652
  %3724 = vmatpush.msra.mxu0 %v3651
  %3725 = vmatpush.msra.mxu0 %v3650
  %3726 = vmatpush.msra.mxu0 %v3649
  %3727 = vmatpush.msra.mxu0 %v3648
  %3728 = vmatpush.msra.mxu0 %v3647
  %3729 = vmatpush.msra.mxu0 %v3646
  %3730 = vmatmul.f32.gmra.mxu0 %v3642
  %v3731 = vpop.f32.mrf.mxu0
  %v3732 = vadd.f32 %v3712, %v3731
  %3733 = vdwg.mxu0
  %3734 = vmatpush.msra.mxu0 %v3677
  %3735 = vmatpush.msra.mxu0 %v3676
  %3736 = vmatpush.msra.mxu0 %v3675
  %3737 = vmatpush.msra.mxu0 %v3674
  %3738 = vmatpush.msra.mxu0 %v3673
  %3739 = vmatpush.msra.mxu0 %v3672
  %3740 = vmatpush.msra.mxu0 %v3671
  %3741 = vmatpush.msra.mxu0 %v3670
  %3742 = vmatpush.msra.mxu0 %v3669
  %3743 = vmatpush.msra.mxu0 %v3668
  %3744 = vmatpush.msra.mxu0 %v3667
  %3745 = vmatpush.msra.mxu0 %v3666
  %3746 = vmatpush.msra.mxu0 %v3665
  %3747 = vmatpush.msra.mxu0 %v3664
  %3748 = vmatpush.msra.mxu0 %v3663
  %3749 = vmatpush.msra.mxu0 %v3662
  %3750 = vmatmul.f32.gmra.mxu0 %v3643
  %v3751 = vpop.f32.mrf.mxu0
  %v3752 = vadd.f32 %v3732, %v3751
  %3753 = vdwg.mxu0
  %3754 = vmatpush.msra.mxu0 %v3693
  %3755 = vmatpush.msra.mxu0 %v3692
  %3756 = vmatpush.msra.mxu0 %v3691
  %3757 = vmatpush.msra.mxu0 %v3690
  %3758 = vmatpush.msra.mxu0 %v3689
  %3759 = vmatpush.msra.mxu0 %v3688
  %3760 = vmatpush.msra.mxu0 %v3687
  %3761 = vmatpush.msra.mxu0 %v3686
  %3762 = vmatpush.msra.mxu0 %v3685
  %3763 = vmatpush.msra.mxu0 %v3684
  %3764 = vmatpush.msra.mxu0 %v3683
  %3765 = vmatpush.msra.mxu0 %v3682
  %3766 = vmatpush.msra.mxu0 %v3681
  %3767 = vmatpush.msra.mxu0 %v3680
  %3768 = vmatpush.msra.mxu0 %v3679
  %3769 = vmatpush.msra.mxu0 %v3678
  %3770 = vmatmul.f32.gmra.mxu0 %v3644
  %v3771 = vpop.f32.mrf.mxu0
  %v3772 = vadd.f32 %v3752, %v3771
  %3773 = vdwg.mxu0
  %3774 = vmatpush.msra.mxu0 %v3709
  %3775 = vmatpush.msra.mxu0 %v3708
  %3776 = vmatpush.msra.mxu0 %v3707
  %3777 = vmatpush.msra.mxu0 %v3706
  %3778 = vmatpush.msra.mxu0 %v3705
  %3779 = vmatpush.msra.mxu0 %v3704
  %3780 = vmatpush.msra.mxu0 %v3703
  %3781 = vmatpush.msra.mxu0 %v3702
  %3782 = vmatpush.msra.mxu0 %v3701
  %3783 = vmatpush.msra.mxu0 %v3700
  %3784 = vmatpush.msra.mxu0 %v3699
  %3785 = vmatpush.msra.mxu0 %v3698
  %3786 = vmatpush.msra.mxu0 %v3697
  %3787 = vmatpush.msra.mxu0 %v3696
  %3788 = vmatpush.msra.mxu0 %v3695
  %3789 = vmatpush.msra.mxu0 %v3694
  %3790 = vmatmul.f32.gmra.mxu0 %v3645
  %v3791 = vpop.f32.mrf.mxu0
  %v3792 = vadd.f32 %v3772, %v3791
  %3793 = vdwg.mxu0
  %vm3794 = vcmask 48128
  %3795 = vst.msk [vmem:[%s9] sm:$0xff] %vm3794, %v3792
  %v3796 = vld [vmem:[%s5] sm:$0xff]
  %v3797 = vld [vmem:[%s5 + $0x8] sm:$0xff]
  %v3798 = vld [vmem:[%s5 + $0x10] sm:$0xff]
  %v3799 = vld [vmem:[%s5 + $0x18] sm:$0xff]
  %v3800 = vld [vmem:[%s5 + $0x20] sm:$0xff]
  %v3801 = vld [vmem:[%s5 + $0x28] sm:$0xff]
  %v3802 = vld [vmem:[%s5 + $0x30] sm:$0xff]
  %v3803 = vld [vmem:[%s5 + $0x38] sm:$0xff]
  %v3804 = vld [vmem:[%s5 + $0x40] sm:$0xff]
  %v3805 = vld [vmem:[%s5 + $0x48] sm:$0xff]
  %v3806 = vld [vmem:[%s5 + $0x50] sm:$0xff]
  %v3807 = vld [vmem:[%s5 + $0x58] sm:$0xff]
  %v3808 = vld [vmem:[%s5 + $0x60] sm:$0xff]
  %v3809 = vld [vmem:[%s5 + $0x68] sm:$0xff]
  %v3810 = vld [vmem:[%s5 + $0x70] sm:$0xff]
  %v3811 = vld [vmem:[%s5 + $0x78] sm:$0xff]
  %v3812 = vld [vmem:[%s5 + $0x80] sm:$0xff]
  %v3813 = vld [vmem:[%s5 + $0x88] sm:$0xff]
  %v3814 = vld [vmem:[%s5 + $0x90] sm:$0xff]
  %v3815 = vld [vmem:[%s5 + $0x98] sm:$0xff]
  %v3816 = vld [vmem:[%s5 + $0xa0] sm:$0xff]
  %v3817 = vld [vmem:[%s5 + $0xa8] sm:$0xff]
  %v3818 = vld [vmem:[%s5 + $0xb0] sm:$0xff]
  %v3819 = vld [vmem:[%s5 + $0xb8] sm:$0xff]
  %v3820 = vld [vmem:[%s5 + $0xc0] sm:$0xff]
  %v3821 = vld [vmem:[%s5 + $0xc8] sm:$0xff]
  %v3822 = vld [vmem:[%s5 + $0xd0] sm:$0xff]
  %v3823 = vld [vmem:[%s5 + $0xd8] sm:$0xff]
  %v3824 = vld [vmem:[%s5 + $0xe0] sm:$0xff]
  %v3825 = vld [vmem:[%s5 + $0xe8] sm:$0xff]
  %v3826 = vld [vmem:[%s5 + $0xf0] sm:$0xff]
  %v3827 = vld [vmem:[%s5 + $0xf8] sm:$0xff]
  %v3828 = vld [vmem:[%s5 + $0x100] sm:$0xff]
  %v3829 = vld [vmem:[%s5 + $0x108] sm:$0xff]
  %v3830 = vld [vmem:[%s5 + $0x110] sm:$0xff]
  %v3831 = vld [vmem:[%s5 + $0x118] sm:$0xff]
  %v3832 = vld [vmem:[%s5 + $0x120] sm:$0xff]
  %v3833 = vld [vmem:[%s5 + $0x128] sm:$0xff]
  %v3834 = vld [vmem:[%s5 + $0x130] sm:$0xff]
  %v3835 = vld [vmem:[%s5 + $0x138] sm:$0xff]
  %v3836 = vld [vmem:[%s5 + $0x140] sm:$0xff]
  %v3837 = vld [vmem:[%s5 + $0x148] sm:$0xff]
  %v3838 = vld [vmem:[%s5 + $0x150] sm:$0xff]
  %v3839 = vld [vmem:[%s5 + $0x158] sm:$0xff]
  %v3840 = vld [vmem:[%s5 + $0x160] sm:$0xff]
  %v3841 = vld [vmem:[%s5 + $0x168] sm:$0xff]
  %v3842 = vld [vmem:[%s5 + $0x170] sm:$0xff]
  %v3843 = vld [vmem:[%s5 + $0x178] sm:$0xff]
  %v3844 = vld [vmem:[%s5 + $0x180] sm:$0xff]
  %v3845 = vld [vmem:[%s5 + $0x188] sm:$0xff]
  %v3846 = vld [vmem:[%s5 + $0x190] sm:$0xff]
  %v3847 = vld [vmem:[%s5 + $0x198] sm:$0xff]
  %v3848 = vld [vmem:[%s5 + $0x1a0] sm:$0xff]
  %v3849 = vld [vmem:[%s5 + $0x1a8] sm:$0xff]
  %v3850 = vld [vmem:[%s5 + $0x1b0] sm:$0xff]
  %v3851 = vld [vmem:[%s5 + $0x1b8] sm:$0xff]
  %v3852 = vld [vmem:[%s5 + $0x1c0] sm:$0xff]
  %v3853 = vld [vmem:[%s5 + $0x1c8] sm:$0xff]
  %v3854 = vld [vmem:[%s5 + $0x1d0] sm:$0xff]
  %v3855 = vld [vmem:[%s5 + $0x1d8] sm:$0xff]
  %v3856 = vld [vmem:[%s5 + $0x1e0] sm:$0xff]
  %v3857 = vld [vmem:[%s5 + $0x1e8] sm:$0xff]
  %v3858 = vld [vmem:[%s5 + $0x1f0] sm:$0xff]
  %v3859 = vld [vmem:[%s5 + $0x1f8] sm:$0xff]
  %v3860 = vld [vmem:[%s5 + $0x200] sm:$0xff]
  %v3861 = vld [vmem:[%s5 + $0x208] sm:$0xff]
  %v3862 = vld [vmem:[%s5 + $0x210] sm:$0xff]
  %v3863 = vld [vmem:[%s5 + $0x218] sm:$0xff]
  %v3864 = vld [vmem:[%s5 + $0x220] sm:$0xff]
  %v3865 = vld [vmem:[%s5 + $0x228] sm:$0xff]
  %v3866 = vld [vmem:[%s5 + $0x230] sm:$0xff]
  %v3867 = vld [vmem:[%s5 + $0x238] sm:$0xff]
  %v3868 = vld [vmem:[%s5 + $0x240] sm:$0xff]
  %v3869 = vld [vmem:[%s5 + $0x248] sm:$0xff]
  %v3870 = vld [vmem:[%s5 + $0x250] sm:$0xff]
  %v3871 = vld [vmem:[%s5 + $0x258] sm:$0xff]
  %v3872 = vld [vmem:[%s5 + $0x260] sm:$0xff]
  %v3873 = vld [vmem:[%s5 + $0x268] sm:$0xff]
  %v3874 = vld [vmem:[%s5 + $0x270] sm:$0xff]
  %v3875 = vld [vmem:[%s5 + $0x278] sm:$0xff]
  %v3876 = vld [vmem:[%s5 + $0x280] sm:$0xff]
  %v3877 = vld [vmem:[%s5 + $0x288] sm:$0xff]
  %v3878 = vld [vmem:[%s5 + $0x290] sm:$0xff]
  %v3879 = vld [vmem:[%s5 + $0x298] sm:$0xff]
  %v3880 = vld [vmem:[%s5 + $0x2a0] sm:$0xff]
  %v3881 = vld [vmem:[%s5 + $0x2a8] sm:$0xff]
  %v3882 = vld [vmem:[%s5 + $0x2b0] sm:$0xff]
  %v3883 = vld [vmem:[%s5 + $0x2b8] sm:$0xff]
  %v3884 = vld [vmem:[%s5 + $0x2c0] sm:$0xff]
  %v3885 = vld [vmem:[%s5 + $0x2c8] sm:$0xff]
  %v3886 = vld [vmem:[%s5 + $0x2d0] sm:$0xff]
  %v3887 = vld [vmem:[%s5 + $0x2d8] sm:$0xff]
  %v3888 = vld [vmem:[%s5 + $0x2e0] sm:$0xff]
  %v3889 = vld [vmem:[%s5 + $0x2e8] sm:$0xff]
  %v3890 = vld [vmem:[%s5 + $0x2f0] sm:$0xff]
  %v3891 = vld [vmem:[%s5 + $0x2f8] sm:$0xff]
  %v3892 = vld [vmem:[%s5 + $0x300] sm:$0xff]
  %v3893 = vld [vmem:[%s5 + $0x308] sm:$0xff]
  %v3894 = vld [vmem:[%s5 + $0x310] sm:$0xff]
  %v3895 = vld [vmem:[%s5 + $0x318] sm:$0xff]
  %v3896 = vld [vmem:[%s5 + $0x320] sm:$0xff]
  %v3897 = vld [vmem:[%s5 + $0x328] sm:$0xff]
  %v3898 = vld [vmem:[%s5 + $0x330] sm:$0xff]
  %v3899 = vld [vmem:[%s5 + $0x338] sm:$0xff]
  %v3900 = vld [vmem:[%s5 + $0x340] sm:$0xff]
  %v3901 = vld [vmem:[%s5 + $0x348] sm:$0xff]
  %v3902 = vld [vmem:[%s5 + $0x350] sm:$0xff]
  %v3903 = vld [vmem:[%s5 + $0x358] sm:$0xff]
  %v3904 = vld [vmem:[%s5 + $0x360] sm:$0xff]
  %v3905 = vld [vmem:[%s5 + $0x368] sm:$0xff]
  %v3906 = vld [vmem:[%s5 + $0x370] sm:$0xff]
  %v3907 = vld [vmem:[%s5 + $0x378] sm:$0xff]
  %v3908 = vld [vmem:[%s5 + $0x380] sm:$0xff]
  %v3909 = vld [vmem:[%s5 + $0x388] sm:$0xff]
  %v3910 = vld [vmem:[%s5 + $0x390] sm:$0xff]
  %v3911 = vld [vmem:[%s5 + $0x398] sm:$0xff]
  %v3912 = vld [vmem:[%s5 + $0x3a0] sm:$0xff]
  %v3913 = vld [vmem:[%s5 + $0x3a8] sm:$0xff]
  %v3914 = vld [vmem:[%s5 + $0x3b0] sm:$0xff]
  %v3915 = vld [vmem:[%s5 + $0x3b8] sm:$0xff]
  %v3916 = vld [vmem:[%s5 + $0x3c0] sm:$0xff]
  %v3917 = vld [vmem:[%s5 + $0x3c8] sm:$0xff]
  %v3918 = vld [vmem:[%s5 + $0x3d0] sm:$0xff]
  %v3919 = vld [vmem:[%s5 + $0x3d8] sm:$0xff]
  %v3920 = vld [vmem:[%s5 + $0x3e0] sm:$0xff]
  %v3921 = vld [vmem:[%s5 + $0x3e8] sm:$0xff]
  %v3922 = vld [vmem:[%s5 + $0x3f0] sm:$0xff]
  %v3923 = vld [vmem:[%s5 + $0x3f8] sm:$0xff]
  %v3924 = vld [vmem:[%s5 + $0x400] sm:$0xff]
  %v3925 = vld [vmem:[%s5 + $0x408] sm:$0xff]
  %v3926 = vld [vmem:[%s5 + $0x410] sm:$0xff]
  %v3927 = vld [vmem:[%s5 + $0x418] sm:$0xff]
  %v3928 = vld [vmem:[%s5 + $0x420] sm:$0xff]
  %v3929 = vld [vmem:[%s5 + $0x428] sm:$0xff]
  %v3930 = vld [vmem:[%s5 + $0x430] sm:$0xff]
  %v3931 = vld [vmem:[%s5 + $0x438] sm:$0xff]
  %v3932 = vld [vmem:[%s5 + $0x440] sm:$0xff]
  %v3933 = vld [vmem:[%s5 + $0x448] sm:$0xff]
  %v3934 = vld [vmem:[%s5 + $0x450] sm:$0xff]
  %v3935 = vld [vmem:[%s5 + $0x458] sm:$0xff]
  %v3936 = vld [vmem:[%s5 + $0x460] sm:$0xff]
  %v3937 = vld [vmem:[%s5 + $0x468] sm:$0xff]
  %v3938 = vld [vmem:[%s5 + $0x470] sm:$0xff]
  %v3939 = vld [vmem:[%s5 + $0x478] sm:$0xff]
  %v3940 = vld [vmem:[%s5 + $0x480] sm:$0xff]
  %v3941 = vld [vmem:[%s5 + $0x488] sm:$0xff]
  %v3942 = vld [vmem:[%s5 + $0x490] sm:$0xff]
  %v3943 = vld [vmem:[%s5 + $0x498] sm:$0xff]
  %v3944 = vld [vmem:[%s5 + $0x4a0] sm:$0xff]
  %v3945 = vld [vmem:[%s5 + $0x4a8] sm:$0xff]
  %v3946 = vld [vmem:[%s5 + $0x4b0] sm:$0xff]
  %v3947 = vld [vmem:[%s5 + $0x4b8] sm:$0xff]
  %v3948 = vld [vmem:[%s5 + $0x4c0] sm:$0xff]
  %v3949 = vld [vmem:[%s5 + $0x4c8] sm:$0xff]
  %v3950 = vld [vmem:[%s5 + $0x4d0] sm:$0xff]
  %v3951 = vld [vmem:[%s5 + $0x4d8] sm:$0xff]
  %v3952 = vld [vmem:[%s5 + $0x4e0] sm:$0xff]
  %v3953 = vld [vmem:[%s5 + $0x4e8] sm:$0xff]
  %v3954 = vld [vmem:[%s5 + $0x4f0] sm:$0xff]
  %v3955 = vld [vmem:[%s5 + $0x4f8] sm:$0xff]
  %v3956 = vld [vmem:[%s5 + $0x500] sm:$0xff]
  %v3957 = vld [vmem:[%s5 + $0x508] sm:$0xff]
  %v3958 = vld [vmem:[%s5 + $0x510] sm:$0xff]
  %v3959 = vld [vmem:[%s5 + $0x518] sm:$0xff]
  %v3960 = vld [vmem:[%s5 + $0x520] sm:$0xff]
  %v3961 = vld [vmem:[%s5 + $0x528] sm:$0xff]
  %v3962 = vld [vmem:[%s5 + $0x530] sm:$0xff]
  %v3963 = vld [vmem:[%s5 + $0x538] sm:$0xff]
  %v3964 = vld [vmem:[%s5 + $0x540] sm:$0xff]
  %v3965 = vld [vmem:[%s5 + $0x548] sm:$0xff]
  %v3966 = vld [vmem:[%s5 + $0x550] sm:$0xff]
  %v3967 = vld [vmem:[%s5 + $0x558] sm:$0xff]
  %v3968 = vld [vmem:[%s5 + $0x560] sm:$0xff]
  %v3969 = vld [vmem:[%s5 + $0x568] sm:$0xff]
  %v3970 = vld [vmem:[%s5 + $0x570] sm:$0xff]
  %v3971 = vld [vmem:[%s5 + $0x578] sm:$0xff]
  %v3972 = vld [vmem:[%s5 + $0x580] sm:$0xff]
  %v3973 = vld [vmem:[%s5 + $0x588] sm:$0xff]
  %v3974 = vld [vmem:[%s5 + $0x590] sm:$0xff]
  %v3975 = vld [vmem:[%s5 + $0x598] sm:$0xff]
  %v3976 = vld [vmem:[%s5 + $0x5a0] sm:$0xff]
  %v3977 = vld [vmem:[%s5 + $0x5a8] sm:$0xff]
  %v3978 = vld [vmem:[%s5 + $0x5b0] sm:$0xff]
  %v3979 = vld [vmem:[%s5 + $0x5b8] sm:$0xff]
  %v3980 = vld [vmem:[%s5 + $0x5c0] sm:$0xff]
  %v3981 = vld [vmem:[%s5 + $0x5c8] sm:$0xff]
  %v3982 = vld [vmem:[%s5 + $0x5d0] sm:$0xff]
  %v3983 = vld [vmem:[%s5 + $0x5d8] sm:$0xff]
  %v3984 = vld [vmem:[%s5 + $0x5e0] sm:$0xff]
  %v3985 = vld [vmem:[%s5 + $0x5e8] sm:$0xff]
  %v3986 = vld [vmem:[%s5 + $0x5f0] sm:$0xff]
  %v3987 = vld [vmem:[%s5 + $0x5f8] sm:$0xff]
  %v3988 = vld [vmem:[%s5 + $0x600] sm:$0xff]
  %v3989 = vld [vmem:[%s5 + $0x608] sm:$0xff]
  %v3990 = vld [vmem:[%s5 + $0x610] sm:$0xff]
  %v3991 = vld [vmem:[%s5 + $0x618] sm:$0xff]
  %v3992 = vld [vmem:[%s5 + $0x620] sm:$0xff]
  %v3993 = vld [vmem:[%s5 + $0x628] sm:$0xff]
  %v3994 = vld [vmem:[%s5 + $0x630] sm:$0xff]
  %v3995 = vld [vmem:[%s5 + $0x638] sm:$0xff]
  %v3996 = vld [vmem:[%s5 + $0x640] sm:$0xff]
  %v3997 = vld [vmem:[%s5 + $0x648] sm:$0xff]
  %v3998 = vld [vmem:[%s5 + $0x650] sm:$0xff]
  %v3999 = vld [vmem:[%s5 + $0x658] sm:$0xff]
  %v4000 = vld [vmem:[%s5 + $0x660] sm:$0xff]
  %v4001 = vld [vmem:[%s5 + $0x668] sm:$0xff]
  %v4002 = vld [vmem:[%s5 + $0x670] sm:$0xff]
  %v4003 = vld [vmem:[%s5 + $0x678] sm:$0xff]
  %v4004 = vld [vmem:[%s5 + $0x680] sm:$0xff]
  %v4005 = vld [vmem:[%s5 + $0x688] sm:$0xff]
  %v4006 = vld [vmem:[%s5 + $0x690] sm:$0xff]
  %v4007 = vld [vmem:[%s5 + $0x698] sm:$0xff]
  %v4008 = vld [vmem:[%s5 + $0x6a0] sm:$0xff]
  %v4009 = vld [vmem:[%s5 + $0x6a8] sm:$0xff]
  %v4010 = vld [vmem:[%s5 + $0x6b0] sm:$0xff]
  %v4011 = vld [vmem:[%s5 + $0x6b8] sm:$0xff]
  %v4012 = vld [vmem:[%s5 + $0x6c0] sm:$0xff]
  %v4013 = vld [vmem:[%s5 + $0x6c8] sm:$0xff]
  %v4014 = vld [vmem:[%s5 + $0x6d0] sm:$0xff]
  %v4015 = vld [vmem:[%s5 + $0x6d8] sm:$0xff]
  %v4016 = vld [vmem:[%s5 + $0x6e0] sm:$0xff]
  %v4017 = vld [vmem:[%s5 + $0x6e8] sm:$0xff]
  %v4018 = vld [vmem:[%s5 + $0x6f0] sm:$0xff]
  %v4019 = vld [vmem:[%s5 + $0x6f8] sm:$0xff]
  %v4020 = vld [vmem:[%s5 + $0x700] sm:$0xff]
  %v4021 = vld [vmem:[%s5 + $0x708] sm:$0xff]
  %v4022 = vld [vmem:[%s5 + $0x710] sm:$0xff]
  %v4023 = vld [vmem:[%s5 + $0x718] sm:$0xff]
  %v4024 = vld [vmem:[%s5 + $0x720] sm:$0xff]
  %v4025 = vld [vmem:[%s5 + $0x728] sm:$0xff]
  %v4026 = vld [vmem:[%s5 + $0x730] sm:$0xff]
  %v4027 = vld [vmem:[%s5 + $0x738] sm:$0xff]
  %v4028 = vld [vmem:[%s5 + $0x740] sm:$0xff]
  %v4029 = vld [vmem:[%s5 + $0x748] sm:$0xff]
  %v4030 = vld [vmem:[%s5 + $0x750] sm:$0xff]
  %v4031 = vld [vmem:[%s5 + $0x758] sm:$0xff]
  %v4032 = vld [vmem:[%s5 + $0x760] sm:$0xff]
  %v4033 = vld [vmem:[%s5 + $0x768] sm:$0xff]
  %v4034 = vld [vmem:[%s5 + $0x770] sm:$0xff]
  %v4035 = vld [vmem:[%s5 + $0x778] sm:$0xff]
  %v4036 = vld [vmem:[%s5 + $0x780] sm:$0xff]
  %v4037 = vld [vmem:[%s5 + $0x788] sm:$0xff]
  %v4038 = vld [vmem:[%s5 + $0x790] sm:$0xff]
  %v4039 = vld [vmem:[%s5 + $0x798] sm:$0xff]
  %v4040 = vld [vmem:[%s5 + $0x7a0] sm:$0xff]
  %v4041 = vld [vmem:[%s5 + $0x7a8] sm:$0xff]
  %v4042 = vld [vmem:[%s5 + $0x7b0] sm:$0xff]
  %v4043 = vld [vmem:[%s5 + $0x7b8] sm:$0xff]
  %v4044 = vld [vmem:[%s5 + $0x7c0] sm:$0xff]
  %v4045 = vld [vmem:[%s5 + $0x7c8] sm:$0xff]
  %v4046 = vld [vmem:[%s5 + $0x7d0] sm:$0xff]
  %v4047 = vld [vmem:[%s5 + $0x7d8] sm:$0xff]
  %v4048 = vld [vmem:[%s5 + $0x7e0] sm:$0xff]
  %v4049 = vld [vmem:[%s5 + $0x7e8] sm:$0xff]
  %v4050 = vld [vmem:[%s5 + $0x7f0] sm:$0xff]
  %v4051 = vld [vmem:[%s5 + $0x7f8] sm:$0xff]
  %v4052 = vld [vmem:[%s5 + $0x800] sm:$0xff]
  %v4053 = vld [vmem:[%s5 + $0x808] sm:$0xff]
  %v4054 = vld [vmem:[%s5 + $0x810] sm:$0xff]
  %v4055 = vld [vmem:[%s5 + $0x818] sm:$0xff]
  %v4056 = vld [vmem:[%s5 + $0x820] sm:$0xff]
  %v4057 = vld [vmem:[%s5 + $0x828] sm:$0xff]
  %v4058 = vld [vmem:[%s5 + $0x830] sm:$0xff]
  %v4059 = vld [vmem:[%s5 + $0x838] sm:$0xff]
  %v4060 = vld [vmem:[%s5 + $0x840] sm:$0xff]
  %v4061 = vld [vmem:[%s5 + $0x848] sm:$0xff]
  %v4062 = vld [vmem:[%s5 + $0x850] sm:$0xff]
  %v4063 = vld [vmem:[%s5 + $0x858] sm:$0xff]
  %v4064 = vld [vmem:[%s5 + $0x860] sm:$0xff]
  %v4065 = vld [vmem:[%s5 + $0x868] sm:$0xff]
  %v4066 = vld [vmem:[%s5 + $0x870] sm:$0xff]
  %v4067 = vld [vmem:[%s5 + $0x878] sm:$0xff]
  %v4068 = vld [vmem:[%s5 + $0x880] sm:$0xff]
  %v4069 = vld [vmem:[%s5 + $0x888] sm:$0xff]
  %v4070 = vld [vmem:[%s5 + $0x890] sm:$0xff]
  %v4071 = vld [vmem:[%s5 + $0x898] sm:$0xff]
  %v4072 = vld [vmem:[%s5 + $0x8a0] sm:$0xff]
  %v4073 = vld [vmem:[%s5 + $0x8a8] sm:$0xff]
  %v4074 = vld [vmem:[%s5 + $0x8b0] sm:$0xff]
  %v4075 = vld [vmem:[%s5 + $0x8b8] sm:$0xff]
  %v4076 = vld [vmem:[%s5 + $0x8c0] sm:$0xff]
  %v4077 = vld [vmem:[%s5 + $0x8c8] sm:$0xff]
  %v4078 = vld [vmem:[%s5 + $0x8d0] sm:$0xff]
  %v4079 = vld [vmem:[%s5 + $0x8d8] sm:$0xff]
  %v4080 = vld [vmem:[%s5 + $0x8e0] sm:$0xff]
  %v4081 = vld [vmem:[%s5 + $0x8e8] sm:$0xff]
  %v4082 = vld [vmem:[%s5 + $0x8f0] sm:$0xff]
  %v4083 = vld [vmem:[%s5 + $0x8f8] sm:$0xff]
  %v4084 = vld [vmem:[%s5 + $0x900] sm:$0xff]
  %v4085 = vld [vmem:[%s5 + $0x908] sm:$0xff]
  %v4086 = vld [vmem:[%s5 + $0x910] sm:$0xff]
  %v4087 = vld [vmem:[%s5 + $0x918] sm:$0xff]
  %v4088 = vld [vmem:[%s5 + $0x920] sm:$0xff]
  %v4089 = vld [vmem:[%s5 + $0x928] sm:$0xff]
  %v4090 = vld [vmem:[%s5 + $0x930] sm:$0xff]
  %v4091 = vld [vmem:[%s5 + $0x938] sm:$0xff]
  %v4092 = vld [vmem:[%s5 + $0x940] sm:$0xff]
  %v4093 = vld [vmem:[%s5 + $0x948] sm:$0xff]
  %v4094 = vld [vmem:[%s5 + $0x950] sm:$0xff]
  %v4095 = vld [vmem:[%s5 + $0x958] sm:$0xff]
  %v4096 = vld [vmem:[%s5 + $0x960] sm:$0xff]
  %v4097 = vld [vmem:[%s5 + $0x968] sm:$0xff]
  %v4098 = vld [vmem:[%s5 + $0x970] sm:$0xff]
  %v4099 = vld [vmem:[%s5 + $0x978] sm:$0xff]
  %v4100 = vld [vmem:[%s5 + $0x980] sm:$0xff]
  %v4101 = vld [vmem:[%s5 + $0x988] sm:$0xff]
  %v4102 = vld [vmem:[%s5 + $0x990] sm:$0xff]
  %v4103 = vld [vmem:[%s5 + $0x998] sm:$0xff]
  %v4104 = vld [vmem:[%s5 + $0x9a0] sm:$0xff]
  %v4105 = vld [vmem:[%s5 + $0x9a8] sm:$0xff]
  %v4106 = vld [vmem:[%s5 + $0x9b0] sm:$0xff]
  %v4107 = vld [vmem:[%s5 + $0x9b8] sm:$0xff]
  %v4108 = vld [vmem:[%s5 + $0x9c0] sm:$0xff]
  %v4109 = vld [vmem:[%s5 + $0x9c8] sm:$0xff]
  %v4110 = vld [vmem:[%s5 + $0x9d0] sm:$0xff]
  %v4111 = vld [vmem:[%s5 + $0x9d8] sm:$0xff]
  %v4112 = vld [vmem:[%s5 + $0x9e0] sm:$0xff]
  %v4113 = vld [vmem:[%s5 + $0x9e8] sm:$0xff]
  %v4114 = vld [vmem:[%s5 + $0x9f0] sm:$0xff]
  %v4115 = vld [vmem:[%s5 + $0x9f8] sm:$0xff]
  %v4116 = vld [vmem:[%s5 + $0xa00] sm:$0xff]
  %v4117 = vld [vmem:[%s5 + $0xa08] sm:$0xff]
  %v4118 = vld [vmem:[%s5 + $0xa10] sm:$0xff]
  %v4119 = vld [vmem:[%s5 + $0xa18] sm:$0xff]
  %v4120 = vld [vmem:[%s5 + $0xa20] sm:$0xff]
  %v4121 = vld [vmem:[%s5 + $0xa28] sm:$0xff]
  %v4122 = vld [vmem:[%s5 + $0xa30] sm:$0xff]
  %v4123 = vld [vmem:[%s5 + $0xa38] sm:$0xff]
  %v4124 = vld [vmem:[%s5 + $0xa40] sm:$0xff]
  %v4125 = vld [vmem:[%s5 + $0xa48] sm:$0xff]
  %v4126 = vld [vmem:[%s5 + $0xa50] sm:$0xff]
  %v4127 = vld [vmem:[%s5 + $0xa58] sm:$0xff]
  %v4128 = vld [vmem:[%s5 + $0xa60] sm:$0xff]
  %v4129 = vld [vmem:[%s5 + $0xa68] sm:$0xff]
  %v4130 = vld [vmem:[%s5 + $0xa70] sm:$0xff]
  %v4131 = vld [vmem:[%s5 + $0xa78] sm:$0xff]
  %v4132 = vld [vmem:[%s5 + $0xa80] sm:$0xff]
  %v4133 = vld [vmem:[%s5 + $0xa88] sm:$0xff]
  %v4134 = vld [vmem:[%s5 + $0xa90] sm:$0xff]
  %v4135 = vld [vmem:[%s5 + $0xa98] sm:$0xff]
  %v4136 = vld [vmem:[%s5 + $0xaa0] sm:$0xff]
  %v4137 = vld [vmem:[%s5 + $0xaa8] sm:$0xff]
  %v4138 = vld [vmem:[%s5 + $0xab0] sm:$0xff]
  %v4139 = vld [vmem:[%s5 + $0xab8] sm:$0xff]
  %v4140 = vld [vmem:[%s5 + $0xac0] sm:$0xff]
  %v4141 = vld [vmem:[%s5 + $0xac8] sm:$0xff]
  %v4142 = vld [vmem:[%s5 + $0xad0] sm:$0xff]
  %v4143 = vld [vmem:[%s5 + $0xad8] sm:$0xff]
  %v4144 = vld [vmem:[%s5 + $0xae0] sm:$0xff]
  %v4145 = vld [vmem:[%s5 + $0xae8] sm:$0xff]
  %v4146 = vld [vmem:[%s5 + $0xaf0] sm:$0xff]
  %v4147 = vld [vmem:[%s5 + $0xaf8] sm:$0xff]
  %v4148 = vld [vmem:[%s5 + $0xb00] sm:$0xff]
  %v4149 = vld [vmem:[%s5 + $0xb08] sm:$0xff]
  %v4150 = vld [vmem:[%s5 + $0xb10] sm:$0xff]
  %v4151 = vld [vmem:[%s5 + $0xb18] sm:$0xff]
  %v4152 = vld [vmem:[%s5 + $0xb20] sm:$0xff]
  %v4153 = vld [vmem:[%s5 + $0xb28] sm:$0xff]
  %v4154 = vld [vmem:[%s5 + $0xb30] sm:$0xff]
  %v4155 = vld [vmem:[%s5 + $0xb38] sm:$0xff]
  %v4156 = vld [vmem:[%s5 + $0xb40] sm:$0xff]
  %v4157 = vld [vmem:[%s5 + $0xb48] sm:$0xff]
  %v4158 = vld [vmem:[%s5 + $0xb50] sm:$0xff]
  %v4159 = vld [vmem:[%s5 + $0xb58] sm:$0xff]
  %v4160 = vld [vmem:[%s5 + $0xb60] sm:$0xff]
  %v4161 = vld [vmem:[%s5 + $0xb68] sm:$0xff]
  %v4162 = vld [vmem:[%s5 + $0xb70] sm:$0xff]
  %v4163 = vld [vmem:[%s5 + $0xb78] sm:$0xff]
  %v4164 = vld [vmem:[%s5 + $0xb80] sm:$0xff]
  %v4165 = vld [vmem:[%s5 + $0xb88] sm:$0xff]
  %v4166 = vld [vmem:[%s5 + $0xb90] sm:$0xff]
  %v4167 = vld [vmem:[%s5 + $0xb98] sm:$0xff]
  %v4168 = vld [vmem:[%s5 + $0xba0] sm:$0xff]
  %v4169 = vld [vmem:[%s5 + $0xba8] sm:$0xff]
  %v4170 = vld [vmem:[%s5 + $0xbb0] sm:$0xff]
  %v4171 = vld [vmem:[%s5 + $0xbb8] sm:$0xff]
  %v4172 = vld [vmem:[%s5 + $0xbc0] sm:$0xff]
  %v4173 = vld [vmem:[%s5 + $0xbc8] sm:$0xff]
  %v4174 = vld [vmem:[%s5 + $0xbd0] sm:$0xff]
  %v4175 = vld [vmem:[%s5 + $0xbd8] sm:$0xff]
  %v4176 = vld [vmem:[%s5 + $0xbe0] sm:$0xff]
  %v4177 = vld [vmem:[%s5 + $0xbe8] sm:$0xff]
  %v4178 = vld [vmem:[%s5 + $0xbf0] sm:$0xff]
  %v4179 = vld [vmem:[%s5 + $0xbf8] sm:$0xff]
  %v4180 = vld [vmem:[%s5 + $0xc00] sm:$0xff]
  %v4181 = vld [vmem:[%s5 + $0xc08] sm:$0xff]
  %v4182 = vld [vmem:[%s5 + $0xc10] sm:$0xff]
  %v4183 = vld [vmem:[%s5 + $0xc18] sm:$0xff]
  %v4184 = vld [vmem:[%s5 + $0xc20] sm:$0xff]
  %v4185 = vld [vmem:[%s5 + $0xc28] sm:$0xff]
  %v4186 = vld [vmem:[%s5 + $0xc30] sm:$0xff]
  %v4187 = vld [vmem:[%s5 + $0xc38] sm:$0xff]
  %v4188 = vld [vmem:[%s5 + $0xc40] sm:$0xff]
  %v4189 = vld [vmem:[%s5 + $0xc48] sm:$0xff]
  %v4190 = vld [vmem:[%s5 + $0xc50] sm:$0xff]
  %v4191 = vld [vmem:[%s5 + $0xc58] sm:$0xff]
  %v4192 = vld [vmem:[%s5 + $0xc60] sm:$0xff]
  %v4193 = vld [vmem:[%s5 + $0xc68] sm:$0xff]
  %v4194 = vld [vmem:[%s5 + $0xc70] sm:$0xff]
  %v4195 = vld [vmem:[%s5 + $0xc78] sm:$0xff]
  %v4196 = vld [vmem:[%s5 + $0xc80] sm:$0xff]
  %v4197 = vld [vmem:[%s5 + $0xc88] sm:$0xff]
  %v4198 = vld [vmem:[%s5 + $0xc90] sm:$0xff]
  %v4199 = vld [vmem:[%s5 + $0xc98] sm:$0xff]
  %v4200 = vld [vmem:[%s5 + $0xca0] sm:$0xff]
  %v4201 = vld [vmem:[%s5 + $0xca8] sm:$0xff]
  %v4202 = vld [vmem:[%s5 + $0xcb0] sm:$0xff]
  %v4203 = vld [vmem:[%s5 + $0xcb8] sm:$0xff]
  %v4204 = vld [vmem:[%s5 + $0xcc0] sm:$0xff]
  %v4205 = vld [vmem:[%s5 + $0xcc8] sm:$0xff]
  %v4206 = vld [vmem:[%s5 + $0xcd0] sm:$0xff]
  %v4207 = vld [vmem:[%s5 + $0xcd8] sm:$0xff]
  %v4208 = vld [vmem:[%s5 + $0xce0] sm:$0xff]
  %v4209 = vld [vmem:[%s5 + $0xce8] sm:$0xff]
  %v4210 = vld [vmem:[%s5 + $0xcf0] sm:$0xff]
  %v4211 = vld [vmem:[%s5 + $0xcf8] sm:$0xff]
  %v4212 = vld [vmem:[%s5 + $0xd00] sm:$0xff]
  %v4213 = vld [vmem:[%s5 + $0xd08] sm:$0xff]
  %v4214 = vld [vmem:[%s5 + $0xd10] sm:$0xff]
  %v4215 = vld [vmem:[%s5 + $0xd18] sm:$0xff]
  %v4216 = vld [vmem:[%s5 + $0xd20] sm:$0xff]
  %v4217 = vld [vmem:[%s5 + $0xd28] sm:$0xff]
  %v4218 = vld [vmem:[%s5 + $0xd30] sm:$0xff]
  %v4219 = vld [vmem:[%s5 + $0xd38] sm:$0xff]
  %v4220 = vld [vmem:[%s5 + $0xd40] sm:$0xff]
  %v4221 = vld [vmem:[%s5 + $0xd48] sm:$0xff]
  %v4222 = vld [vmem:[%s5 + $0xd50] sm:$0xff]
  %v4223 = vld [vmem:[%s5 + $0xd58] sm:$0xff]
  %v4224 = vld [vmem:[%s5 + $0xd60] sm:$0xff]
  %v4225 = vld [vmem:[%s5 + $0xd68] sm:$0xff]
  %v4226 = vld [vmem:[%s5 + $0xd70] sm:$0xff]
  %v4227 = vld [vmem:[%s5 + $0xd78] sm:$0xff]
  %v4228 = vld [vmem:[%s5 + $0xd80] sm:$0xff]
  %v4229 = vld [vmem:[%s5 + $0xd88] sm:$0xff]
  %v4230 = vld [vmem:[%s5 + $0xd90] sm:$0xff]
  %v4231 = vld [vmem:[%s5 + $0xd98] sm:$0xff]
  %v4232 = vld [vmem:[%s5 + $0xda0] sm:$0xff]
  %v4233 = vld [vmem:[%s5 + $0xda8] sm:$0xff]
  %v4234 = vld [vmem:[%s5 + $0xdb0] sm:$0xff]
  %v4235 = vld [vmem:[%s5 + $0xdb8] sm:$0xff]
  %v4236 = vld [vmem:[%s5 + $0xdc0] sm:$0xff]
  %v4237 = vld [vmem:[%s5 + $0xdc8] sm:$0xff]
  %v4238 = vld [vmem:[%s5 + $0xdd0] sm:$0xff]
  %v4239 = vld [vmem:[%s5 + $0xdd8] sm:$0xff]
  %v4240 = vld [vmem:[%s5 + $0xde0] sm:$0xff]
  %v4241 = vld [vmem:[%s5 + $0xde8] sm:$0xff]
  %v4242 = vld [vmem:[%s5 + $0xdf0] sm:$0xff]
  %v4243 = vld [vmem:[%s5 + $0xdf8] sm:$0xff]
  %v4244 = vld [vmem:[%s5 + $0xe00] sm:$0xff]
  %v4245 = vld [vmem:[%s5 + $0xe08] sm:$0xff]
  %v4246 = vld [vmem:[%s5 + $0xe10] sm:$0xff]
  %v4247 = vld [vmem:[%s5 + $0xe18] sm:$0xff]
  %v4248 = vld [vmem:[%s5 + $0xe20] sm:$0xff]
  %v4249 = vld [vmem:[%s5 + $0xe28] sm:$0xff]
  %v4250 = vld [vmem:[%s5 + $0xe30] sm:$0xff]
  %v4251 = vld [vmem:[%s5 + $0xe38] sm:$0xff]
  %v4252 = vld [vmem:[%s5 + $0xe40] sm:$0xff]
  %v4253 = vld [vmem:[%s5 + $0xe48] sm:$0xff]
  %v4254 = vld [vmem:[%s5 + $0xe50] sm:$0xff]
  %v4255 = vld [vmem:[%s5 + $0xe58] sm:$0xff]
  %v4256 = vld [vmem:[%s5 + $0xe60] sm:$0xff]
  %v4257 = vld [vmem:[%s5 + $0xe68] sm:$0xff]
  %v4258 = vld [vmem:[%s5 + $0xe70] sm:$0xff]
  %v4259 = vld [vmem:[%s5 + $0xe78] sm:$0xff]
  %v4260 = vld [vmem:[%s5 + $0xe80] sm:$0xff]
  %v4261 = vld [vmem:[%s5 + $0xe88] sm:$0xff]
  %v4262 = vld [vmem:[%s5 + $0xe90] sm:$0xff]
  %v4263 = vld [vmem:[%s5 + $0xe98] sm:$0xff]
  %v4264 = vld [vmem:[%s5 + $0xea0] sm:$0xff]
  %v4265 = vld [vmem:[%s5 + $0xea8] sm:$0xff]
  %v4266 = vld [vmem:[%s5 + $0xeb0] sm:$0xff]
  %v4267 = vld [vmem:[%s5 + $0xeb8] sm:$0xff]
  %v4268 = vld [vmem:[%s5 + $0xec0] sm:$0xff]
  %v4269 = vld [vmem:[%s5 + $0xec8] sm:$0xff]
  %v4270 = vld [vmem:[%s5 + $0xed0] sm:$0xff]
  %v4271 = vld [vmem:[%s5 + $0xed8] sm:$0xff]
  %v4272 = vld [vmem:[%s5 + $0xee0] sm:$0xff]
  %v4273 = vld [vmem:[%s5 + $0xee8] sm:$0xff]
  %v4274 = vld [vmem:[%s5 + $0xef0] sm:$0xff]
  %v4275 = vld [vmem:[%s5 + $0xef8] sm:$0xff]
  %v4276 = vld [vmem:[%s5 + $0xf00] sm:$0xff]
  %v4277 = vld [vmem:[%s5 + $0xf08] sm:$0xff]
  %v4278 = vld [vmem:[%s5 + $0xf10] sm:$0xff]
  %v4279 = vld [vmem:[%s5 + $0xf18] sm:$0xff]
  %v4280 = vld [vmem:[%s5 + $0xf20] sm:$0xff]
  %v4281 = vld [vmem:[%s5 + $0xf28] sm:$0xff]
  %v4282 = vld [vmem:[%s5 + $0xf30] sm:$0xff]
  %v4283 = vld [vmem:[%s5 + $0xf38] sm:$0xff]
  %v4284 = vld [vmem:[%s5 + $0xf40] sm:$0xff]
  %v4285 = vld [vmem:[%s5 + $0xf48] sm:$0xff]
  %v4286 = vld [vmem:[%s5 + $0xf50] sm:$0xff]
  %v4287 = vld [vmem:[%s5 + $0xf58] sm:$0xff]
  %v4288 = vld [vmem:[%s5 + $0xf60] sm:$0xff]
  %v4289 = vld [vmem:[%s5 + $0xf68] sm:$0xff]
  %v4290 = vld [vmem:[%s5 + $0xf70] sm:$0xff]
  %v4291 = vld [vmem:[%s5 + $0xf78] sm:$0xff]
  %v4292 = vld [vmem:[%s5 + $0xf80] sm:$0xff]
  %v4293 = vld [vmem:[%s5 + $0xf88] sm:$0xff]
  %v4294 = vld [vmem:[%s5 + $0xf90] sm:$0xff]
  %v4295 = vld [vmem:[%s5 + $0xf98] sm:$0xff]
  %v4296 = vld [vmem:[%s5 + $0xfa0] sm:$0xff]
  %v4297 = vld [vmem:[%s5 + $0xfa8] sm:$0xff]
  %v4298 = vld [vmem:[%s5 + $0xfb0] sm:$0xff]
  %v4299 = vld [vmem:[%s5 + $0xfb8] sm:$0xff]
  %v4300 = vld [vmem:[%s5 + $0xfc0] sm:$0xff]
  %v4301 = vld [vmem:[%s5 + $0xfc8] sm:$0xff]
  %v4302 = vld [vmem:[%s5 + $0xfd0] sm:$0xff]
  %v4303 = vld [vmem:[%s5 + $0xfd8] sm:$0xff]
  %v4304 = vld [vmem:[%s5 + $0xfe0] sm:$0xff]
  %v4305 = vld [vmem:[%s5 + $0xfe8] sm:$0xff]
  %v4306 = vld [vmem:[%s5 + $0xff0] sm:$0xff]
  %v4307 = vld [vmem:[%s5 + $0xff8] sm:$0xff]
  %v4308 = vld [vmem:[%s5 + $0x1000] sm:$0xff]
  %v4309 = vld [vmem:[%s5 + $0x1008] sm:$0xff]
  %v4310 = vld [vmem:[%s5 + $0x1010] sm:$0xff]
  %v4311 = vld [vmem:[%s5 + $0x1018] sm:$0xff]
  %v4312 = vld [vmem:[%s5 + $0x1020] sm:$0xff]
  %v4313 = vld [vmem:[%s5 + $0x1028] sm:$0xff]
  %v4314 = vld [vmem:[%s5 + $0x1030] sm:$0xff]
  %v4315 = vld [vmem:[%s5 + $0x1038] sm:$0xff]
  %v4316 = vld [vmem:[%s5 + $0x1040] sm:$0xff]
  %v4317 = vld [vmem:[%s5 + $0x1048] sm:$0xff]
  %v4318 = vld [vmem:[%s5 + $0x1050] sm:$0xff]
  %v4319 = vld [vmem:[%s5 + $0x1058] sm:$0xff]
  %v4320 = vld [vmem:[%s5 + $0x1060] sm:$0xff]
  %v4321 = vld [vmem:[%s5 + $0x1068] sm:$0xff]
  %v4322 = vld [vmem:[%s5 + $0x1070] sm:$0xff]
  %v4323 = vld [vmem:[%s5 + $0x1078] sm:$0xff]
  %v4324 = vld [vmem:[%s5 + $0x1080] sm:$0xff]
  %v4325 = vld [vmem:[%s5 + $0x1088] sm:$0xff]
  %v4326 = vld [vmem:[%s5 + $0x1090] sm:$0xff]
  %v4327 = vld [vmem:[%s5 + $0x1098] sm:$0xff]
  %v4328 = vld [vmem:[%s5 + $0x10a0] sm:$0xff]
  %v4329 = vld [vmem:[%s5 + $0x10a8] sm:$0xff]
  %v4330 = vld [vmem:[%s5 + $0x10b0] sm:$0xff]
  %v4331 = vld [vmem:[%s5 + $0x10b8] sm:$0xff]
  %v4332 = vld [vmem:[%s5 + $0x10c0] sm:$0xff]
  %v4333 = vld [vmem:[%s5 + $0x10c8] sm:$0xff]
  %v4334 = vld [vmem:[%s5 + $0x10d0] sm:$0xff]
  %v4335 = vld [vmem:[%s5 + $0x10d8] sm:$0xff]
  %v4336 = vld [vmem:[%s5 + $0x10e0] sm:$0xff]
  %v4337 = vld [vmem:[%s5 + $0x10e8] sm:$0xff]
  %v4338 = vld [vmem:[%s5 + $0x10f0] sm:$0xff]
  %v4339 = vld [vmem:[%s5 + $0x10f8] sm:$0xff]
  %v4340 = vld [vmem:[%s5 + $0x1100] sm:$0xff]
  %v4341 = vld [vmem:[%s5 + $0x1108] sm:$0xff]
  %v4342 = vld [vmem:[%s5 + $0x1110] sm:$0xff]
  %v4343 = vld [vmem:[%s5 + $0x1118] sm:$0xff]
  %v4344 = vld [vmem:[%s5 + $0x1120] sm:$0xff]
  %v4345 = vld [vmem:[%s5 + $0x1128] sm:$0xff]
  %v4346 = vld [vmem:[%s5 + $0x1130] sm:$0xff]
  %v4347 = vld [vmem:[%s5 + $0x1138] sm:$0xff]
  %v4348 = vld [vmem:[%s5 + $0x1140] sm:$0xff]
  %v4349 = vld [vmem:[%s5 + $0x1148] sm:$0xff]
  %v4350 = vld [vmem:[%s5 + $0x1150] sm:$0xff]
  %v4351 = vld [vmem:[%s5 + $0x1158] sm:$0xff]
  %v4352 = vld [vmem:[%s5 + $0x1160] sm:$0xff]
  %v4353 = vld [vmem:[%s5 + $0x1168] sm:$0xff]
  %v4354 = vld [vmem:[%s5 + $0x1170] sm:$0xff]
  %v4355 = vld [vmem:[%s5 + $0x1178] sm:$0xff]
  %v4356 = vld [vmem:[%s5 + $0x1180] sm:$0xff]
  %v4357 = vld [vmem:[%s5 + $0x1188] sm:$0xff]
  %v4358 = vld [vmem:[%s5 + $0x1190] sm:$0xff]
  %v4359 = vld [vmem:[%s5 + $0x1198] sm:$0xff]
  %v4360 = vld [vmem:[%s5 + $0x11a0] sm:$0xff]
  %v4361 = vld [vmem:[%s5 + $0x11a8] sm:$0xff]
  %v4362 = vld [vmem:[%s5 + $0x11b0] sm:$0xff]
  %v4363 = vld [vmem:[%s5 + $0x11b8] sm:$0xff]
  %v4364 = vld [vmem:[%s5 + $0x11c0] sm:$0xff]
  %v4365 = vld [vmem:[%s5 + $0x11c8] sm:$0xff]
  %v4366 = vld [vmem:[%s5 + $0x11d0] sm:$0xff]
  %v4367 = vld [vmem:[%s5 + $0x11d8] sm:$0xff]
  %v4368 = vld [vmem:[%s5 + $0x11e0] sm:$0xff]
  %v4369 = vld [vmem:[%s5 + $0x11e8] sm:$0xff]
  %v4370 = vld [vmem:[%s5 + $0x11f0] sm:$0xff]
  %v4371 = vld [vmem:[%s5 + $0x11f8] sm:$0xff]
  %v4372 = vld [vmem:[%s5 + $0x1200] sm:$0xff]
  %v4373 = vld [vmem:[%s5 + $0x1208] sm:$0xff]
  %v4374 = vld [vmem:[%s5 + $0x1210] sm:$0xff]
  %v4375 = vld [vmem:[%s5 + $0x1218] sm:$0xff]
  %v4376 = vld [vmem:[%s5 + $0x1220] sm:$0xff]
  %v4377 = vld [vmem:[%s5 + $0x1228] sm:$0xff]
  %v4378 = vld [vmem:[%s5 + $0x1230] sm:$0xff]
  %v4379 = vld [vmem:[%s5 + $0x1238] sm:$0xff]
  %v4380 = vld [vmem:[%s5 + $0x1240] sm:$0xff]
  %v4381 = vld [vmem:[%s5 + $0x1248] sm:$0xff]
  %v4382 = vld [vmem:[%s5 + $0x1250] sm:$0xff]
  %v4383 = vld [vmem:[%s5 + $0x1258] sm:$0xff]
  %v4384 = vld [vmem:[%s5 + $0x1260] sm:$0xff]
  %v4385 = vld [vmem:[%s5 + $0x1268] sm:$0xff]
  %v4386 = vld [vmem:[%s5 + $0x1270] sm:$0xff]
  %v4387 = vld [vmem:[%s5 + $0x1278] sm:$0xff]
  %v4388 = vld [vmem:[%s5 + $0x1280] sm:$0xff]
  %v4389 = vld [vmem:[%s5 + $0x1288] sm:$0xff]
  %v4390 = vld [vmem:[%s5 + $0x1290] sm:$0xff]
  %v4391 = vld [vmem:[%s5 + $0x1298] sm:$0xff]
  %v4392 = vld [vmem:[%s5 + $0x12a0] sm:$0xff]
  %v4393 = vld [vmem:[%s5 + $0x12a8] sm:$0xff]
  %v4394 = vld [vmem:[%s5 + $0x12b0] sm:$0xff]
  %v4395 = vld [vmem:[%s5 + $0x12b8] sm:$0xff]
  %v4396 = vld [vmem:[%s5 + $0x12c0] sm:$0xff]
  %v4397 = vld [vmem:[%s5 + $0x12c8] sm:$0xff]
  %v4398 = vld [vmem:[%s5 + $0x12d0] sm:$0xff]
  %v4399 = vld [vmem:[%s5 + $0x12d8] sm:$0xff]
  %v4400 = vld [vmem:[%s5 + $0x12e0] sm:$0xff]
  %v4401 = vld [vmem:[%s5 + $0x12e8] sm:$0xff]
  %v4402 = vld [vmem:[%s5 + $0x12f0] sm:$0xff]
  %v4403 = vld [vmem:[%s5 + $0x12f8] sm:$0xff]
  %v4404 = vld [vmem:[%s5 + $0x1300] sm:$0xff]
  %v4405 = vld [vmem:[%s5 + $0x1308] sm:$0xff]
  %v4406 = vld [vmem:[%s5 + $0x1310] sm:$0xff]
  %v4407 = vld [vmem:[%s5 + $0x1318] sm:$0xff]
  %v4408 = vld [vmem:[%s5 + $0x1320] sm:$0xff]
  %v4409 = vld [vmem:[%s5 + $0x1328] sm:$0xff]
  %v4410 = vld [vmem:[%s5 + $0x1330] sm:$0xff]
  %v4411 = vld [vmem:[%s5 + $0x1338] sm:$0xff]
  %v4412 = vld [vmem:[%s5 + $0x1340] sm:$0xff]
  %v4413 = vld [vmem:[%s5 + $0x1348] sm:$0xff]
  %v4414 = vld [vmem:[%s5 + $0x1350] sm:$0xff]
  %v4415 = vld [vmem:[%s5 + $0x1358] sm:$0xff]
  %v4416 = vld [vmem:[%s5 + $0x1360] sm:$0xff]
  %v4417 = vld [vmem:[%s5 + $0x1368] sm:$0xff]
  %v4418 = vld [vmem:[%s5 + $0x1370] sm:$0xff]
  %v4419 = vld [vmem:[%s5 + $0x1378] sm:$0xff]
  %v4420 = vld [vmem:[%s5 + $0x1380] sm:$0xff]
  %v4421 = vld [vmem:[%s5 + $0x1388] sm:$0xff]
  %v4422 = vld [vmem:[%s5 + $0x1390] sm:$0xff]
  %v4423 = vld [vmem:[%s5 + $0x1398] sm:$0xff]
  %v4424 = vld [vmem:[%s5 + $0x13a0] sm:$0xff]
  %v4425 = vld [vmem:[%s5 + $0x13a8] sm:$0xff]
  %v4426 = vld [vmem:[%s5 + $0x13b0] sm:$0xff]
  %v4427 = vld [vmem:[%s5 + $0x13b8] sm:$0xff]
  %v4428 = vld [vmem:[%s5 + $0x13c0] sm:$0xff]
  %v4429 = vld [vmem:[%s5 + $0x13c8] sm:$0xff]
  %v4430 = vld [vmem:[%s5 + $0x13d0] sm:$0xff]
  %v4431 = vld [vmem:[%s5 + $0x13d8] sm:$0xff]
  %v4432 = vld [vmem:[%s5 + $0x13e0] sm:$0xff]
  %v4433 = vld [vmem:[%s5 + $0x13e8] sm:$0xff]
  %v4434 = vld [vmem:[%s5 + $0x13f0] sm:$0xff]
  %v4435 = vld [vmem:[%s5 + $0x13f8] sm:$0xff]
  %v4436 = vld [vmem:[%s5 + $0x1400] sm:$0xff]
  %v4437 = vld [vmem:[%s5 + $0x1408] sm:$0xff]
  %v4438 = vld [vmem:[%s5 + $0x1410] sm:$0xff]
  %v4439 = vld [vmem:[%s5 + $0x1418] sm:$0xff]
  %v4440 = vld [vmem:[%s5 + $0x1420] sm:$0xff]
  %v4441 = vld [vmem:[%s5 + $0x1428] sm:$0xff]
  %v4442 = vld [vmem:[%s5 + $0x1430] sm:$0xff]
  %v4443 = vld [vmem:[%s5 + $0x1438] sm:$0xff]
  %v4444 = vld [vmem:[%s5 + $0x1440] sm:$0xff]
  %v4445 = vld [vmem:[%s5 + $0x1448] sm:$0xff]
  %v4446 = vld [vmem:[%s5 + $0x1450] sm:$0xff]
  %v4447 = vld [vmem:[%s5 + $0x1458] sm:$0xff]
  %v4448 = vld [vmem:[%s5 + $0x1460] sm:$0xff]
  %v4449 = vld [vmem:[%s5 + $0x1468] sm:$0xff]
  %v4450 = vld [vmem:[%s5 + $0x1470] sm:$0xff]
  %v4451 = vld [vmem:[%s5 + $0x1478] sm:$0xff]
  %v4452 = vld [vmem:[%s5 + $0x1480] sm:$0xff]
  %v4453 = vld [vmem:[%s5 + $0x1488] sm:$0xff]
  %v4454 = vld [vmem:[%s5 + $0x1490] sm:$0xff]
  %v4455 = vld [vmem:[%s5 + $0x1498] sm:$0xff]
  %v4456 = vld [vmem:[%s5 + $0x14a0] sm:$0xff]
  %v4457 = vld [vmem:[%s5 + $0x14a8] sm:$0xff]
  %v4458 = vld [vmem:[%s5 + $0x14b0] sm:$0xff]
  %v4459 = vld [vmem:[%s5 + $0x14b8] sm:$0xff]
  %v4460 = vld [vmem:[%s5 + $0x14c0] sm:$0xff]
  %v4461 = vld [vmem:[%s5 + $0x14c8] sm:$0xff]
  %v4462 = vld [vmem:[%s5 + $0x14d0] sm:$0xff]
  %v4463 = vld [vmem:[%s5 + $0x14d8] sm:$0xff]
  %v4464 = vld [vmem:[%s5 + $0x14e0] sm:$0xff]
  %v4465 = vld [vmem:[%s5 + $0x14e8] sm:$0xff]
  %v4466 = vld [vmem:[%s5 + $0x14f0] sm:$0xff]
  %v4467 = vld [vmem:[%s5 + $0x14f8] sm:$0xff]
  %v4468 = vld [vmem:[%s5 + $0x1500] sm:$0xff]
  %v4469 = vld [vmem:[%s5 + $0x1508] sm:$0xff]
  %v4470 = vld [vmem:[%s5 + $0x1510] sm:$0xff]
  %v4471 = vld [vmem:[%s5 + $0x1518] sm:$0xff]
  %v4472 = vld [vmem:[%s5 + $0x1520] sm:$0xff]
  %v4473 = vld [vmem:[%s5 + $0x1528] sm:$0xff]
  %v4474 = vld [vmem:[%s5 + $0x1530] sm:$0xff]
  %v4475 = vld [vmem:[%s5 + $0x1538] sm:$0xff]
  %v4476 = vld [vmem:[%s5 + $0x1540] sm:$0xff]
  %v4477 = vld [vmem:[%s5 + $0x1548] sm:$0xff]
  %v4478 = vld [vmem:[%s5 + $0x1550] sm:$0xff]
  %v4479 = vld [vmem:[%s5 + $0x1558] sm:$0xff]
  %v4480 = vld [vmem:[%s5 + $0x1560] sm:$0xff]
  %v4481 = vld [vmem:[%s5 + $0x1568] sm:$0xff]
  %v4482 = vld [vmem:[%s5 + $0x1570] sm:$0xff]
  %v4483 = vld [vmem:[%s5 + $0x1578] sm:$0xff]
  %v4484 = vld [vmem:[%s5 + $0x1580] sm:$0xff]
  %v4485 = vld [vmem:[%s5 + $0x1588] sm:$0xff]
  %v4486 = vld [vmem:[%s5 + $0x1590] sm:$0xff]
  %v4487 = vld [vmem:[%s5 + $0x1598] sm:$0xff]
  %v4488 = vld [vmem:[%s5 + $0x15a0] sm:$0xff]
  %v4489 = vld [vmem:[%s5 + $0x15a8] sm:$0xff]
  %v4490 = vld [vmem:[%s5 + $0x15b0] sm:$0xff]
  %v4491 = vld [vmem:[%s5 + $0x15b8] sm:$0xff]
  %v4492 = vld [vmem:[%s5 + $0x15c0] sm:$0xff]
  %v4493 = vld [vmem:[%s5 + $0x15c8] sm:$0xff]
  %v4494 = vld [vmem:[%s5 + $0x15d0] sm:$0xff]
  %v4495 = vld [vmem:[%s5 + $0x15d8] sm:$0xff]
  %v4496 = vld [vmem:[%s5 + $0x15e0] sm:$0xff]
  %v4497 = vld [vmem:[%s5 + $0x15e8] sm:$0xff]
  %v4498 = vld [vmem:[%s5 + $0x15f0] sm:$0xff]
  %v4499 = vld [vmem:[%s5 + $0x15f8] sm:$0xff]
  %v4500 = vld [vmem:[%s5 + $0x1600] sm:$0xff]
  %v4501 = vld [vmem:[%s5 + $0x1608] sm:$0xff]
  %v4502 = vld [vmem:[%s5 + $0x1610] sm:$0xff]
  %v4503 = vld [vmem:[%s5 + $0x1618] sm:$0xff]
  %v4504 = vld [vmem:[%s5 + $0x1620] sm:$0xff]
  %v4505 = vld [vmem:[%s5 + $0x1628] sm:$0xff]
  %v4506 = vld [vmem:[%s5 + $0x1630] sm:$0xff]
  %v4507 = vld [vmem:[%s5 + $0x1638] sm:$0xff]
  %v4508 = vld [vmem:[%s5 + $0x1640] sm:$0xff]
  %v4509 = vld [vmem:[%s5 + $0x1648] sm:$0xff]
  %v4510 = vld [vmem:[%s5 + $0x1650] sm:$0xff]
  %v4511 = vld [vmem:[%s5 + $0x1658] sm:$0xff]
  %v4512 = vld [vmem:[%s5 + $0x1660] sm:$0xff]
  %v4513 = vld [vmem:[%s5 + $0x1668] sm:$0xff]
  %v4514 = vld [vmem:[%s5 + $0x1670] sm:$0xff]
  %v4515 = vld [vmem:[%s5 + $0x1678] sm:$0xff]
  %v4516 = vld [vmem:[%s5 + $0x1680] sm:$0xff]
  %v4517 = vld [vmem:[%s5 + $0x1688] sm:$0xff]
  %v4518 = vld [vmem:[%s5 + $0x1690] sm:$0xff]
  %v4519 = vld [vmem:[%s5 + $0x1698] sm:$0xff]
  %v4520 = vld [vmem:[%s5 + $0x16a0] sm:$0xff]
  %v4521 = vld [vmem:[%s5 + $0x16a8] sm:$0xff]
  %v4522 = vld [vmem:[%s5 + $0x16b0] sm:$0xff]
  %v4523 = vld [vmem:[%s5 + $0x16b8] sm:$0xff]
  %v4524 = vld [vmem:[%s5 + $0x16c0] sm:$0xff]
  %v4525 = vld [vmem:[%s5 + $0x16c8] sm:$0xff]
  %v4526 = vld [vmem:[%s5 + $0x16d0] sm:$0xff]
  %v4527 = vld [vmem:[%s5 + $0x16d8] sm:$0xff]
  %v4528 = vld [vmem:[%s5 + $0x16e0] sm:$0xff]
  %v4529 = vld [vmem:[%s5 + $0x16e8] sm:$0xff]
  %v4530 = vld [vmem:[%s5 + $0x16f0] sm:$0xff]
  %v4531 = vld [vmem:[%s5 + $0x16f8] sm:$0xff]
  %v4532 = vld [vmem:[%s5 + $0x1700] sm:$0xff]
  %v4533 = vld [vmem:[%s5 + $0x1708] sm:$0xff]
  %v4534 = vld [vmem:[%s5 + $0x1710] sm:$0xff]
  %v4535 = vld [vmem:[%s5 + $0x1718] sm:$0xff]
  %v4536 = vld [vmem:[%s5 + $0x1720] sm:$0xff]
  %v4537 = vld [vmem:[%s5 + $0x1728] sm:$0xff]
  %v4538 = vld [vmem:[%s5 + $0x1730] sm:$0xff]
  %v4539 = vld [vmem:[%s5 + $0x1738] sm:$0xff]
  %v4540 = vld [vmem:[%s5 + $0x1740] sm:$0xff]
  %v4541 = vld [vmem:[%s5 + $0x1748] sm:$0xff]
  %v4542 = vld [vmem:[%s5 + $0x1750] sm:$0xff]
  %v4543 = vld [vmem:[%s5 + $0x1758] sm:$0xff]
  %v4544 = vld [vmem:[%s5 + $0x1760] sm:$0xff]
  %v4545 = vld [vmem:[%s5 + $0x1768] sm:$0xff]
  %v4546 = vld [vmem:[%s5 + $0x1770] sm:$0xff]
  %v4547 = vld [vmem:[%s5 + $0x1778] sm:$0xff]
  %v4548 = vld [vmem:[%s5 + $0x1780] sm:$0xff]
  %v4549 = vld [vmem:[%s5 + $0x1788] sm:$0xff]
  %v4550 = vld [vmem:[%s5 + $0x1790] sm:$0xff]
  %v4551 = vld [vmem:[%s5 + $0x1798] sm:$0xff]
  %v4552 = vld [vmem:[%s5 + $0x17a0] sm:$0xff]
  %v4553 = vld [vmem:[%s5 + $0x17a8] sm:$0xff]
  %v4554 = vld [vmem:[%s5 + $0x17b0] sm:$0xff]
  %v4555 = vld [vmem:[%s5 + $0x17b8] sm:$0xff]
  %v4556 = vld [vmem:[%s5 + $0x17c0] sm:$0xff]
  %v4557 = vld [vmem:[%s5 + $0x17c8] sm:$0xff]
  %v4558 = vld [vmem:[%s5 + $0x17d0] sm:$0xff]
  %v4559 = vld [vmem:[%s5 + $0x17d8] sm:$0xff]
  %v4560 = vld [vmem:[%s5 + $0x17e0] sm:$0xff]
  %v4561 = vld [vmem:[%s5 + $0x17e8] sm:$0xff]
  %v4562 = vld [vmem:[%s5 + $0x17f0] sm:$0xff]
  %v4563 = vld [vmem:[%s5 + $0x17f8] sm:$0xff]
  %v4564 = vld [vmem:[%s5 + $0x1800] sm:$0xff]
  %v4565 = vld [vmem:[%s5 + $0x1808] sm:$0xff]
  %v4566 = vld [vmem:[%s5 + $0x1810] sm:$0xff]
  %v4567 = vld [vmem:[%s5 + $0x1818] sm:$0xff]
  %v4568 = vld [vmem:[%s5 + $0x1820] sm:$0xff]
  %v4569 = vld [vmem:[%s5 + $0x1828] sm:$0xff]
  %v4570 = vld [vmem:[%s5 + $0x1830] sm:$0xff]
  %v4571 = vld [vmem:[%s5 + $0x1838] sm:$0xff]
  %v4572 = vld [vmem:[%s5 + $0x1840] sm:$0xff]
  %v4573 = vld [vmem:[%s5 + $0x1848] sm:$0xff]
  %v4574 = vld [vmem:[%s5 + $0x1850] sm:$0xff]
  %v4575 = vld [vmem:[%s5 + $0x1858] sm:$0xff]
  %v4576 = vld [vmem:[%s5 + $0x1860] sm:$0xff]
  %v4577 = vld [vmem:[%s5 + $0x1868] sm:$0xff]
  %v4578 = vld [vmem:[%s5 + $0x1870] sm:$0xff]
  %v4579 = vld [vmem:[%s5 + $0x1878] sm:$0xff]
  %v4580 = vld [vmem:[%s5 + $0x1880] sm:$0xff]
  %v4581 = vld [vmem:[%s5 + $0x1888] sm:$0xff]
  %v4582 = vld [vmem:[%s5 + $0x1890] sm:$0xff]
  %v4583 = vld [vmem:[%s5 + $0x1898] sm:$0xff]
  %v4584 = vld [vmem:[%s5 + $0x18a0] sm:$0xff]
  %v4585 = vld [vmem:[%s5 + $0x18a8] sm:$0xff]
  %v4586 = vld [vmem:[%s5 + $0x18b0] sm:$0xff]
  %v4587 = vld [vmem:[%s5 + $0x18b8] sm:$0xff]
  %v4588 = vld [vmem:[%s5 + $0x18c0] sm:$0xff]
  %v4589 = vld [vmem:[%s5 + $0x18c8] sm:$0xff]
  %v4590 = vld [vmem:[%s5 + $0x18d0] sm:$0xff]
  %v4591 = vld [vmem:[%s5 + $0x18d8] sm:$0xff]
  %v4592 = vld [vmem:[%s5 + $0x18e0] sm:$0xff]
  %v4593 = vld [vmem:[%s5 + $0x18e8] sm:$0xff]
  %v4594 = vld [vmem:[%s5 + $0x18f0] sm:$0xff]
  %v4595 = vld [vmem:[%s5 + $0x18f8] sm:$0xff]
  %v4596 = vld [vmem:[%s5 + $0x1900] sm:$0xff]
  %v4597 = vld [vmem:[%s5 + $0x1908] sm:$0xff]
  %v4598 = vld [vmem:[%s5 + $0x1910] sm:$0xff]
  %v4599 = vld [vmem:[%s5 + $0x1918] sm:$0xff]
  %v4600 = vld [vmem:[%s5 + $0x1920] sm:$0xff]
  %v4601 = vld [vmem:[%s5 + $0x1928] sm:$0xff]
  %v4602 = vld [vmem:[%s5 + $0x1930] sm:$0xff]
  %v4603 = vld [vmem:[%s5 + $0x1938] sm:$0xff]
  %v4604 = vld [vmem:[%s5 + $0x1940] sm:$0xff]
  %v4605 = vld [vmem:[%s5 + $0x1948] sm:$0xff]
  %v4606 = vld [vmem:[%s5 + $0x1950] sm:$0xff]
  %v4607 = vld [vmem:[%s5 + $0x1958] sm:$0xff]
  %v4608 = vld [vmem:[%s5 + $0x1960] sm:$0xff]
  %v4609 = vld [vmem:[%s5 + $0x1968] sm:$0xff]
  %v4610 = vld [vmem:[%s5 + $0x1970] sm:$0xff]
  %v4611 = vld [vmem:[%s5 + $0x1978] sm:$0xff]
  %v4612 = vld [vmem:[%s5 + $0x1980] sm:$0xff]
  %v4613 = vld [vmem:[%s5 + $0x1988] sm:$0xff]
  %v4614 = vld [vmem:[%s5 + $0x1990] sm:$0xff]
  %v4615 = vld [vmem:[%s5 + $0x1998] sm:$0xff]
  %v4616 = vld [vmem:[%s5 + $0x19a0] sm:$0xff]
  %v4617 = vld [vmem:[%s5 + $0x19a8] sm:$0xff]
  %v4618 = vld [vmem:[%s5 + $0x19b0] sm:$0xff]
  %v4619 = vld [vmem:[%s5 + $0x19b8] sm:$0xff]
  %v4620 = vld [vmem:[%s5 + $0x19c0] sm:$0xff]
  %v4621 = vld [vmem:[%s5 + $0x19c8] sm:$0xff]
  %v4622 = vld [vmem:[%s5 + $0x19d0] sm:$0xff]
  %v4623 = vld [vmem:[%s5 + $0x19d8] sm:$0xff]
  %v4624 = vld [vmem:[%s5 + $0x19e0] sm:$0xff]
  %v4625 = vld [vmem:[%s5 + $0x19e8] sm:$0xff]
  %v4626 = vld [vmem:[%s5 + $0x19f0] sm:$0xff]
  %v4627 = vld [vmem:[%s5 + $0x19f8] sm:$0xff]
  %v4628 = vld [vmem:[%s5 + $0x1a00] sm:$0xff]
  %v4629 = vld [vmem:[%s5 + $0x1a08] sm:$0xff]
  %v4630 = vld [vmem:[%s5 + $0x1a10] sm:$0xff]
  %v4631 = vld [vmem:[%s5 + $0x1a18] sm:$0xff]
  %v4632 = vld [vmem:[%s5 + $0x1a20] sm:$0xff]
  %v4633 = vld [vmem:[%s5 + $0x1a28] sm:$0xff]
  %v4634 = vld [vmem:[%s5 + $0x1a30] sm:$0xff]
  %v4635 = vld [vmem:[%s5 + $0x1a38] sm:$0xff]
  %v4636 = vld [vmem:[%s5 + $0x1a40] sm:$0xff]
  %v4637 = vld [vmem:[%s5 + $0x1a48] sm:$0xff]
  %v4638 = vld [vmem:[%s5 + $0x1a50] sm:$0xff]
  %v4639 = vld [vmem:[%s5 + $0x1a58] sm:$0xff]
  %v4640 = vld [vmem:[%s5 + $0x1a60] sm:$0xff]
  %v4641 = vld [vmem:[%s5 + $0x1a68] sm:$0xff]
  %v4642 = vld [vmem:[%s5 + $0x1a70] sm:$0xff]
  %v4643 = vld [vmem:[%s5 + $0x1a78] sm:$0xff]
  %v4644 = vld [vmem:[%s5 + $0x1a80] sm:$0xff]
  %v4645 = vld [vmem:[%s5 + $0x1a88] sm:$0xff]
  %v4646 = vld [vmem:[%s5 + $0x1a90] sm:$0xff]
  %v4647 = vld [vmem:[%s5 + $0x1a98] sm:$0xff]
  %v4648 = vld [vmem:[%s5 + $0x1aa0] sm:$0xff]
  %v4649 = vld [vmem:[%s5 + $0x1aa8] sm:$0xff]
  %v4650 = vld [vmem:[%s5 + $0x1ab0] sm:$0xff]
  %v4651 = vld [vmem:[%s5 + $0x1ab8] sm:$0xff]
  %v4652 = vld [vmem:[%s5 + $0x1ac0] sm:$0xff]
  %v4653 = vld [vmem:[%s5 + $0x1ac8] sm:$0xff]
  %v4654 = vld [vmem:[%s5 + $0x1ad0] sm:$0xff]
  %v4655 = vld [vmem:[%s5 + $0x1ad8] sm:$0xff]
  %v4656 = vld [vmem:[%s5 + $0x1ae0] sm:$0xff]
  %v4657 = vld [vmem:[%s5 + $0x1ae8] sm:$0xff]
  %v4658 = vld [vmem:[%s5 + $0x1af0] sm:$0xff]
  %v4659 = vld [vmem:[%s5 + $0x1af8] sm:$0xff]
  %v4660 = vld [vmem:[%s5 + $0x1b00] sm:$0xff]
  %v4661 = vld [vmem:[%s5 + $0x1b08] sm:$0xff]
  %v4662 = vld [vmem:[%s5 + $0x1b10] sm:$0xff]
  %v4663 = vld [vmem:[%s5 + $0x1b18] sm:$0xff]
  %v4664 = vld [vmem:[%s5 + $0x1b20] sm:$0xff]
  %v4665 = vld [vmem:[%s5 + $0x1b28] sm:$0xff]
  %v4666 = vld [vmem:[%s5 + $0x1b30] sm:$0xff]
  %v4667 = vld [vmem:[%s5 + $0x1b38] sm:$0xff]
  %v4668 = vld [vmem:[%s5 + $0x1b40] sm:$0xff]
  %v4669 = vld [vmem:[%s5 + $0x1b48] sm:$0xff]
  %v4670 = vld [vmem:[%s5 + $0x1b50] sm:$0xff]
  %v4671 = vld [vmem:[%s5 + $0x1b58] sm:$0xff]
  %v4672 = vld [vmem:[%s5 + $0x1b60] sm:$0xff]
  %v4673 = vld [vmem:[%s5 + $0x1b68] sm:$0xff]
  %v4674 = vld [vmem:[%s5 + $0x1b70] sm:$0xff]
  %v4675 = vld [vmem:[%s5 + $0x1b78] sm:$0xff]
  %v4676 = vld [vmem:[%s5 + $0x1b80] sm:$0xff]
  %v4677 = vld [vmem:[%s5 + $0x1b88] sm:$0xff]
  %v4678 = vld [vmem:[%s5 + $0x1b90] sm:$0xff]
  %v4679 = vld [vmem:[%s5 + $0x1b98] sm:$0xff]
  %v4680 = vld [vmem:[%s5 + $0x1ba0] sm:$0xff]
  %v4681 = vld [vmem:[%s5 + $0x1ba8] sm:$0xff]
  %v4682 = vld [vmem:[%s5 + $0x1bb0] sm:$0xff]
  %v4683 = vld [vmem:[%s5 + $0x1bb8] sm:$0xff]
  %v4684 = vld [vmem:[%s5 + $0x1bc0] sm:$0xff]
  %v4685 = vld [vmem:[%s5 + $0x1bc8] sm:$0xff]
  %v4686 = vld [vmem:[%s5 + $0x1bd0] sm:$0xff]
  %v4687 = vld [vmem:[%s5 + $0x1bd8] sm:$0xff]
  %v4688 = vld [vmem:[%s5 + $0x1be0] sm:$0xff]
  %v4689 = vld [vmem:[%s5 + $0x1be8] sm:$0xff]
  %v4690 = vld [vmem:[%s5 + $0x1bf0] sm:$0xff]
  %v4691 = vld [vmem:[%s5 + $0x1bf8] sm:$0xff]
  %v4692 = vld [vmem:[%s5 + $0x1c00] sm:$0xff]
  %v4693 = vld [vmem:[%s5 + $0x1c08] sm:$0xff]
  %v4694 = vld [vmem:[%s5 + $0x1c10] sm:$0xff]
  %v4695 = vld [vmem:[%s5 + $0x1c18] sm:$0xff]
  %v4696 = vld [vmem:[%s5 + $0x1c20] sm:$0xff]
  %v4697 = vld [vmem:[%s5 + $0x1c28] sm:$0xff]
  %v4698 = vld [vmem:[%s5 + $0x1c30] sm:$0xff]
  %v4699 = vld [vmem:[%s5 + $0x1c38] sm:$0xff]
  %v4700 = vld [vmem:[%s5 + $0x1c40] sm:$0xff]
  %v4701 = vld [vmem:[%s5 + $0x1c48] sm:$0xff]
  %v4702 = vld [vmem:[%s5 + $0x1c50] sm:$0xff]
  %v4703 = vld [vmem:[%s5 + $0x1c58] sm:$0xff]
  %v4704 = vld [vmem:[%s5 + $0x1c60] sm:$0xff]
  %v4705 = vld [vmem:[%s5 + $0x1c68] sm:$0xff]
  %v4706 = vld [vmem:[%s5 + $0x1c70] sm:$0xff]
  %v4707 = vld [vmem:[%s5 + $0x1c78] sm:$0xff]
  %v4708 = vld [vmem:[%s5 + $0x1c80] sm:$0xff]
  %v4709 = vld [vmem:[%s5 + $0x1c88] sm:$0xff]
  %v4710 = vld [vmem:[%s5 + $0x1c90] sm:$0xff]
  %v4711 = vld [vmem:[%s5 + $0x1c98] sm:$0xff]
  %v4712 = vld [vmem:[%s5 + $0x1ca0] sm:$0xff]
  %v4713 = vld [vmem:[%s5 + $0x1ca8] sm:$0xff]
  %v4714 = vld [vmem:[%s5 + $0x1cb0] sm:$0xff]
  %v4715 = vld [vmem:[%s5 + $0x1cb8] sm:$0xff]
  %v4716 = vld [vmem:[%s5 + $0x1cc0] sm:$0xff]
  %v4717 = vld [vmem:[%s5 + $0x1cc8] sm:$0xff]
  %v4718 = vld [vmem:[%s5 + $0x1cd0] sm:$0xff]
  %v4719 = vld [vmem:[%s5 + $0x1cd8] sm:$0xff]
  %v4720 = vld [vmem:[%s5 + $0x1ce0] sm:$0xff]
  %v4721 = vld [vmem:[%s5 + $0x1ce8] sm:$0xff]
  %v4722 = vld [vmem:[%s5 + $0x1cf0] sm:$0xff]
  %v4723 = vld [vmem:[%s5 + $0x1cf8] sm:$0xff]
  %v4724 = vld [vmem:[%s5 + $0x1d00] sm:$0xff]
  %v4725 = vld [vmem:[%s5 + $0x1d08] sm:$0xff]
  %v4726 = vld [vmem:[%s5 + $0x1d10] sm:$0xff]
  %v4727 = vld [vmem:[%s5 + $0x1d18] sm:$0xff]
  %v4728 = vld [vmem:[%s5 + $0x1d20] sm:$0xff]
  %v4729 = vld [vmem:[%s5 + $0x1d28] sm:$0xff]
  %v4730 = vld [vmem:[%s5 + $0x1d30] sm:$0xff]
  %v4731 = vld [vmem:[%s5 + $0x1d38] sm:$0xff]
  %v4732 = vld [vmem:[%s5 + $0x1d40] sm:$0xff]
  %v4733 = vld [vmem:[%s5 + $0x1d48] sm:$0xff]
  %v4734 = vld [vmem:[%s5 + $0x1d50] sm:$0xff]
  %v4735 = vld [vmem:[%s5 + $0x1d58] sm:$0xff]
  %v4736 = vld [vmem:[%s5 + $0x1d60] sm:$0xff]
  %v4737 = vld [vmem:[%s5 + $0x1d68] sm:$0xff]
  %v4738 = vld [vmem:[%s5 + $0x1d70] sm:$0xff]
  %v4739 = vld [vmem:[%s5 + $0x1d78] sm:$0xff]
  %v4740 = vld [vmem:[%s5 + $0x1d80] sm:$0xff]
  %v4741 = vld [vmem:[%s5 + $0x1d88] sm:$0xff]
  %v4742 = vld [vmem:[%s5 + $0x1d90] sm:$0xff]
  %v4743 = vld [vmem:[%s5 + $0x1d98] sm:$0xff]
  %v4744 = vld [vmem:[%s5 + $0x1da0] sm:$0xff]
  %v4745 = vld [vmem:[%s5 + $0x1da8] sm:$0xff]
  %v4746 = vld [vmem:[%s5 + $0x1db0] sm:$0xff]
  %v4747 = vld [vmem:[%s5 + $0x1db8] sm:$0xff]
  %v4748 = vld [vmem:[%s5 + $0x1dc0] sm:$0xff]
  %v4749 = vld [vmem:[%s5 + $0x1dc8] sm:$0xff]
  %v4750 = vld [vmem:[%s5 + $0x1dd0] sm:$0xff]
  %v4751 = vld [vmem:[%s5 + $0x1dd8] sm:$0xff]
  %v4752 = vld [vmem:[%s5 + $0x1de0] sm:$0xff]
  %v4753 = vld [vmem:[%s5 + $0x1de8] sm:$0xff]
  %v4754 = vld [vmem:[%s5 + $0x1df0] sm:$0xff]
  %v4755 = vld [vmem:[%s5 + $0x1df8] sm:$0xff]
  %v4756 = vld [vmem:[%s5 + $0x1e00] sm:$0xff]
  %v4757 = vld [vmem:[%s5 + $0x1e08] sm:$0xff]
  %v4758 = vld [vmem:[%s5 + $0x1e10] sm:$0xff]
  %v4759 = vld [vmem:[%s5 + $0x1e18] sm:$0xff]
  %v4760 = vld [vmem:[%s5 + $0x1e20] sm:$0xff]
  %v4761 = vld [vmem:[%s5 + $0x1e28] sm:$0xff]
  %v4762 = vld [vmem:[%s5 + $0x1e30] sm:$0xff]
  %v4763 = vld [vmem:[%s5 + $0x1e38] sm:$0xff]
  %v4764 = vld [vmem:[%s5 + $0x1e40] sm:$0xff]
  %v4765 = vld [vmem:[%s5 + $0x1e48] sm:$0xff]
  %v4766 = vld [vmem:[%s5 + $0x1e50] sm:$0xff]
  %v4767 = vld [vmem:[%s5 + $0x1e58] sm:$0xff]
  %v4768 = vld [vmem:[%s5 + $0x1e60] sm:$0xff]
  %v4769 = vld [vmem:[%s5 + $0x1e68] sm:$0xff]
  %v4770 = vld [vmem:[%s5 + $0x1e70] sm:$0xff]
  %v4771 = vld [vmem:[%s5 + $0x1e78] sm:$0xff]
  %v4772 = vld [vmem:[%s5 + $0x1e80] sm:$0xff]
  %v4773 = vld [vmem:[%s5 + $0x1e88] sm:$0xff]
  %v4774 = vld [vmem:[%s5 + $0x1e90] sm:$0xff]
  %v4775 = vld [vmem:[%s5 + $0x1e98] sm:$0xff]
  %v4776 = vld [vmem:[%s5 + $0x1ea0] sm:$0xff]
  %v4777 = vld [vmem:[%s5 + $0x1ea8] sm:$0xff]
  %v4778 = vld [vmem:[%s5 + $0x1eb0] sm:$0xff]
  %v4779 = vld [vmem:[%s5 + $0x1eb8] sm:$0xff]
  %v4780 = vld [vmem:[%s5 + $0x1ec0] sm:$0xff]
  %v4781 = vld [vmem:[%s5 + $0x1ec8] sm:$0xff]
  %v4782 = vld [vmem:[%s5 + $0x1ed0] sm:$0xff]
  %v4783 = vld [vmem:[%s5 + $0x1ed8] sm:$0xff]
  %v4784 = vld [vmem:[%s5 + $0x1ee0] sm:$0xff]
  %v4785 = vld [vmem:[%s5 + $0x1ee8] sm:$0xff]
  %v4786 = vld [vmem:[%s5 + $0x1ef0] sm:$0xff]
  %v4787 = vld [vmem:[%s5 + $0x1ef8] sm:$0xff]
  %v4788 = vld [vmem:[%s5 + $0x1f00] sm:$0xff]
  %v4789 = vld [vmem:[%s5 + $0x1f08] sm:$0xff]
  %v4790 = vld [vmem:[%s5 + $0x1f10] sm:$0xff]
  %v4791 = vld [vmem:[%s5 + $0x1f18] sm:$0xff]
  %v4792 = vld [vmem:[%s5 + $0x1f20] sm:$0xff]
  %v4793 = vld [vmem:[%s5 + $0x1f28] sm:$0xff]
  %v4794 = vld [vmem:[%s5 + $0x1f30] sm:$0xff]
  %v4795 = vld [vmem:[%s5 + $0x1f38] sm:$0xff]
  %v4796 = vld [vmem:[%s5 + $0x1f40] sm:$0xff]
  %v4797 = vld [vmem:[%s5 + $0x1f48] sm:$0xff]
  %v4798 = vld [vmem:[%s5 + $0x1f50] sm:$0xff]
  %v4799 = vld [vmem:[%s5 + $0x1f58] sm:$0xff]
  %v4800 = vld [vmem:[%s5 + $0x1f60] sm:$0xff]
  %v4801 = vld [vmem:[%s5 + $0x1f68] sm:$0xff]
  %v4802 = vld [vmem:[%s5 + $0x1f70] sm:$0xff]
  %v4803 = vld [vmem:[%s5 + $0x1f78] sm:$0xff]
  %v4804 = vld [vmem:[%s5 + $0x1f80] sm:$0xff]
  %v4805 = vld [vmem:[%s5 + $0x1f88] sm:$0xff]
  %v4806 = vld [vmem:[%s5 + $0x1f90] sm:$0xff]
  %v4807 = vld [vmem:[%s5 + $0x1f98] sm:$0xff]
  %v4808 = vld [vmem:[%s5 + $0x1fa0] sm:$0xff]
  %v4809 = vld [vmem:[%s5 + $0x1fa8] sm:$0xff]
  %v4810 = vld [vmem:[%s5 + $0x1fb0] sm:$0xff]
  %v4811 = vld [vmem:[%s5 + $0x1fb8] sm:$0xff]
  %v4812 = vld [vmem:[%s5 + $0x1fc0] sm:$0xff]
  %v4813 = vld [vmem:[%s5 + $0x1fc8] sm:$0xff]
  %v4814 = vld [vmem:[%s5 + $0x1fd0] sm:$0xff]
  %v4815 = vld [vmem:[%s5 + $0x1fd8] sm:$0xff]
  %v4816 = vld [vmem:[%s5 + $0x1fe0] sm:$0xff]
  %v4817 = vld [vmem:[%s5 + $0x1fe8] sm:$0xff]
  %v4818 = vld [vmem:[%s5 + $0x1ff0] sm:$0xff]
  %v4819 = vld [vmem:[%s5 + $0x1ff8] sm:$0xff]
  %v4820 = vld [vmem:[%s5 + $0x2000] sm:$0xff]
  %v4821 = vld [vmem:[%s5 + $0x2008] sm:$0xff]
  %v4822 = vld [vmem:[%s5 + $0x2010] sm:$0xff]
  %v4823 = vld [vmem:[%s5 + $0x2018] sm:$0xff]
  %v4824 = vld [vmem:[%s5 + $0x2020] sm:$0xff]
  %v4825 = vld [vmem:[%s5 + $0x2028] sm:$0xff]
  %v4826 = vld [vmem:[%s5 + $0x2030] sm:$0xff]
  %v4827 = vld [vmem:[%s5 + $0x2038] sm:$0xff]
  %v4828 = vld [vmem:[%s5 + $0x2040] sm:$0xff]
  %v4829 = vld [vmem:[%s5 + $0x2048] sm:$0xff]
  %v4830 = vld [vmem:[%s5 + $0x2050] sm:$0xff]
  %v4831 = vld [vmem:[%s5 + $0x2058] sm:$0xff]
  %v4832 = vld [vmem:[%s5 + $0x2060] sm:$0xff]
  %v4833 = vld [vmem:[%s5 + $0x2068] sm:$0xff]
  %v4834 = vld [vmem:[%s5 + $0x2070] sm:$0xff]
  %v4835 = vld [vmem:[%s5 + $0x2078] sm:$0xff]
  %v4836 = vld [vmem:[%s5 + $0x2080] sm:$0xff]
  %v4837 = vld [vmem:[%s5 + $0x2088] sm:$0xff]
  %v4838 = vld [vmem:[%s5 + $0x2090] sm:$0xff]
  %v4839 = vld [vmem:[%s5 + $0x2098] sm:$0xff]
  %v4840 = vld [vmem:[%s5 + $0x20a0] sm:$0xff]
  %v4841 = vld [vmem:[%s5 + $0x20a8] sm:$0xff]
  %v4842 = vld [vmem:[%s5 + $0x20b0] sm:$0xff]
  %v4843 = vld [vmem:[%s5 + $0x20b8] sm:$0xff]
  %v4844 = vld [vmem:[%s5 + $0x20c0] sm:$0xff]
  %v4845 = vld [vmem:[%s5 + $0x20c8] sm:$0xff]
  %v4846 = vld [vmem:[%s5 + $0x20d0] sm:$0xff]
  %v4847 = vld [vmem:[%s5 + $0x20d8] sm:$0xff]
  %v4848 = vld [vmem:[%s5 + $0x20e0] sm:$0xff]
  %v4849 = vld [vmem:[%s5 + $0x20e8] sm:$0xff]
  %v4850 = vld [vmem:[%s5 + $0x20f0] sm:$0xff]
  %v4851 = vld [vmem:[%s5 + $0x20f8] sm:$0xff]
  %v4852 = vld [vmem:[%s5 + $0x2100] sm:$0xff]
  %v4853 = vld [vmem:[%s5 + $0x2108] sm:$0xff]
  %v4854 = vld [vmem:[%s5 + $0x2110] sm:$0xff]
  %v4855 = vld [vmem:[%s5 + $0x2118] sm:$0xff]
  %v4856 = vld [vmem:[%s5 + $0x2120] sm:$0xff]
  %v4857 = vld [vmem:[%s5 + $0x2128] sm:$0xff]
  %v4858 = vld [vmem:[%s5 + $0x2130] sm:$0xff]
  %v4859 = vld [vmem:[%s5 + $0x2138] sm:$0xff]
  %v4860 = vld [vmem:[%s5 + $0x2140] sm:$0xff]
  %v4861 = vld [vmem:[%s5 + $0x2148] sm:$0xff]
  %v4862 = vld [vmem:[%s5 + $0x2150] sm:$0xff]
  %v4863 = vld [vmem:[%s5 + $0x2158] sm:$0xff]
  %v4864 = vld [vmem:[%s5 + $0x2160] sm:$0xff]
  %v4865 = vld [vmem:[%s5 + $0x2168] sm:$0xff]
  %v4866 = vld [vmem:[%s5 + $0x2170] sm:$0xff]
  %v4867 = vld [vmem:[%s5 + $0x2178] sm:$0xff]
  %v4868 = vld [vmem:[%s5 + $0x2180] sm:$0xff]
  %v4869 = vld [vmem:[%s5 + $0x2188] sm:$0xff]
  %v4870 = vld [vmem:[%s5 + $0x2190] sm:$0xff]
  %v4871 = vld [vmem:[%s5 + $0x2198] sm:$0xff]
  %v4872 = vld [vmem:[%s5 + $0x21a0] sm:$0xff]
  %v4873 = vld [vmem:[%s5 + $0x21a8] sm:$0xff]
  %v4874 = vld [vmem:[%s5 + $0x21b0] sm:$0xff]
  %v4875 = vld [vmem:[%s5 + $0x21b8] sm:$0xff]
  %v4876 = vld [vmem:[%s5 + $0x21c0] sm:$0xff]
  %v4877 = vld [vmem:[%s5 + $0x21c8] sm:$0xff]
  %v4878 = vld [vmem:[%s5 + $0x21d0] sm:$0xff]
  %v4879 = vld [vmem:[%s5 + $0x21d8] sm:$0xff]
  %v4880 = vld [vmem:[%s5 + $0x21e0] sm:$0xff]
  %v4881 = vld [vmem:[%s5 + $0x21e8] sm:$0xff]
  %v4882 = vld [vmem:[%s5 + $0x21f0] sm:$0xff]
  %v4883 = vld [vmem:[%s5 + $0x21f8] sm:$0xff]
  %v4884 = vld [vmem:[%s5 + $0x2200] sm:$0xff]
  %v4885 = vld [vmem:[%s5 + $0x2208] sm:$0xff]
  %v4886 = vld [vmem:[%s5 + $0x2210] sm:$0xff]
  %v4887 = vld [vmem:[%s5 + $0x2218] sm:$0xff]
  %v4888 = vld [vmem:[%s5 + $0x2220] sm:$0xff]
  %v4889 = vld [vmem:[%s5 + $0x2228] sm:$0xff]
  %v4890 = vld [vmem:[%s5 + $0x2230] sm:$0xff]
  %v4891 = vld [vmem:[%s5 + $0x2238] sm:$0xff]
  %v4892 = vld [vmem:[%s5 + $0x2240] sm:$0xff]
  %v4893 = vld [vmem:[%s5 + $0x2248] sm:$0xff]
  %v4894 = vld [vmem:[%s5 + $0x2250] sm:$0xff]
  %v4895 = vld [vmem:[%s5 + $0x2258] sm:$0xff]
  %v4896 = vld [vmem:[%s5 + $0x2260] sm:$0xff]
  %v4897 = vld [vmem:[%s5 + $0x2268] sm:$0xff]
  %v4898 = vld [vmem:[%s5 + $0x2270] sm:$0xff]
  %v4899 = vld [vmem:[%s5 + $0x2278] sm:$0xff]
  %v4900 = vld [vmem:[%s5 + $0x2280] sm:$0xff]
  %v4901 = vld [vmem:[%s5 + $0x2288] sm:$0xff]
  %v4902 = vld [vmem:[%s5 + $0x2290] sm:$0xff]
  %v4903 = vld [vmem:[%s5 + $0x2298] sm:$0xff]
  %v4904 = vld [vmem:[%s5 + $0x22a0] sm:$0xff]
  %v4905 = vld [vmem:[%s5 + $0x22a8] sm:$0xff]
  %v4906 = vld [vmem:[%s5 + $0x22b0] sm:$0xff]
  %v4907 = vld [vmem:[%s5 + $0x22b8] sm:$0xff]
  %v4908 = vld [vmem:[%s5 + $0x22c0] sm:$0xff]
  %v4909 = vld [vmem:[%s5 + $0x22c8] sm:$0xff]
  %v4910 = vld [vmem:[%s5 + $0x22d0] sm:$0xff]
  %v4911 = vld [vmem:[%s5 + $0x22d8] sm:$0xff]
  %v4912 = vld [vmem:[%s5 + $0x22e0] sm:$0xff]
  %v4913 = vld [vmem:[%s5 + $0x22e8] sm:$0xff]
  %v4914 = vld [vmem:[%s5 + $0x22f0] sm:$0xff]
  %v4915 = vld [vmem:[%s5 + $0x22f8] sm:$0xff]
  %v4916 = vld [vmem:[%s5 + $0x2300] sm:$0xff]
  %v4917 = vld [vmem:[%s5 + $0x2308] sm:$0xff]
  %v4918 = vld [vmem:[%s5 + $0x2310] sm:$0xff]
  %v4919 = vld [vmem:[%s5 + $0x2318] sm:$0xff]
  %v4920 = vld [vmem:[%s5 + $0x2320] sm:$0xff]
  %v4921 = vld [vmem:[%s5 + $0x2328] sm:$0xff]
  %v4922 = vld [vmem:[%s5 + $0x2330] sm:$0xff]
  %v4923 = vld [vmem:[%s5 + $0x2338] sm:$0xff]
  %v4924 = vld [vmem:[%s5 + $0x2340] sm:$0xff]
  %v4925 = vld [vmem:[%s5 + $0x2348] sm:$0xff]
  %v4926 = vld [vmem:[%s5 + $0x2350] sm:$0xff]
  %v4927 = vld [vmem:[%s5 + $0x2358] sm:$0xff]
  %v4928 = vld [vmem:[%s5 + $0x2360] sm:$0xff]
  %v4929 = vld [vmem:[%s5 + $0x2368] sm:$0xff]
  %v4930 = vld [vmem:[%s5 + $0x2370] sm:$0xff]
  %v4931 = vld [vmem:[%s5 + $0x2378] sm:$0xff]
  %v4932 = vld [vmem:[%s5 + $0x2380] sm:$0xff]
  %v4933 = vld [vmem:[%s5 + $0x2388] sm:$0xff]
  %v4934 = vld [vmem:[%s5 + $0x2390] sm:$0xff]
  %v4935 = vld [vmem:[%s5 + $0x2398] sm:$0xff]
  %v4936 = vld [vmem:[%s5 + $0x23a0] sm:$0xff]
  %v4937 = vld [vmem:[%s5 + $0x23a8] sm:$0xff]
  %v4938 = vld [vmem:[%s5 + $0x23b0] sm:$0xff]
  %v4939 = vld [vmem:[%s5 + $0x23b8] sm:$0xff]
  %v4940 = vld [vmem:[%s5 + $0x23c0] sm:$0xff]
  %v4941 = vld [vmem:[%s5 + $0x23c8] sm:$0xff]
  %v4942 = vld [vmem:[%s5 + $0x23d0] sm:$0xff]
  %v4943 = vld [vmem:[%s5 + $0x23d8] sm:$0xff]
  %v4944 = vld [vmem:[%s5 + $0x23e0] sm:$0xff]
  %v4945 = vld [vmem:[%s5 + $0x23e8] sm:$0xff]
  %v4946 = vld [vmem:[%s5 + $0x23f0] sm:$0xff]
  %v4947 = vld [vmem:[%s5 + $0x23f8] sm:$0xff]
  %v4948 = vld [vmem:[%s5 + $0x2400] sm:$0xff]
  %v4949 = vld [vmem:[%s5 + $0x2408] sm:$0xff]
  %v4950 = vld [vmem:[%s5 + $0x2410] sm:$0xff]
  %v4951 = vld [vmem:[%s5 + $0x2418] sm:$0xff]
  %v4952 = vld [vmem:[%s5 + $0x2420] sm:$0xff]
  %v4953 = vld [vmem:[%s5 + $0x2428] sm:$0xff]
  %v4954 = vld [vmem:[%s5 + $0x2430] sm:$0xff]
  %v4955 = vld [vmem:[%s5 + $0x2438] sm:$0xff]
  %v4956 = vld [vmem:[%s5 + $0x2440] sm:$0xff]
  %v4957 = vld [vmem:[%s5 + $0x2448] sm:$0xff]
  %v4958 = vld [vmem:[%s5 + $0x2450] sm:$0xff]
  %v4959 = vld [vmem:[%s5 + $0x2458] sm:$0xff]
  %v4960 = vld [vmem:[%s5 + $0x2460] sm:$0xff]
  %v4961 = vld [vmem:[%s5 + $0x2468] sm:$0xff]
  %v4962 = vld [vmem:[%s5 + $0x2470] sm:$0xff]
  %v4963 = vld [vmem:[%s5 + $0x2478] sm:$0xff]
  %v4964 = vld [vmem:[%s5 + $0x2480] sm:$0xff]
  %v4965 = vld [vmem:[%s5 + $0x2488] sm:$0xff]
  %v4966 = vld [vmem:[%s5 + $0x2490] sm:$0xff]
  %v4967 = vld [vmem:[%s5 + $0x2498] sm:$0xff]
  %v4968 = vld [vmem:[%s5 + $0x24a0] sm:$0xff]
  %v4969 = vld [vmem:[%s5 + $0x24a8] sm:$0xff]
  %v4970 = vld [vmem:[%s5 + $0x24b0] sm:$0xff]
  %v4971 = vld [vmem:[%s5 + $0x24b8] sm:$0xff]
  %v4972 = vld [vmem:[%s5 + $0x24c0] sm:$0xff]
  %v4973 = vld [vmem:[%s5 + $0x24c8] sm:$0xff]
  %v4974 = vld [vmem:[%s5 + $0x24d0] sm:$0xff]
  %v4975 = vld [vmem:[%s5 + $0x24d8] sm:$0xff]
  %v4976 = vld [vmem:[%s5 + $0x24e0] sm:$0xff]
  %v4977 = vld [vmem:[%s5 + $0x24e8] sm:$0xff]
  %v4978 = vld [vmem:[%s5 + $0x24f0] sm:$0xff]
  %v4979 = vld [vmem:[%s5 + $0x24f8] sm:$0xff]
  %v4980 = vld [vmem:[%s5 + $0x2500] sm:$0xff]
  %v4981 = vld [vmem:[%s5 + $0x2508] sm:$0xff]
  %v4982 = vld [vmem:[%s5 + $0x2510] sm:$0xff]
  %v4983 = vld [vmem:[%s5 + $0x2518] sm:$0xff]
  %v4984 = vld [vmem:[%s5 + $0x2520] sm:$0xff]
  %v4985 = vld [vmem:[%s5 + $0x2528] sm:$0xff]
  %v4986 = vld [vmem:[%s5 + $0x2530] sm:$0xff]
  %v4987 = vld [vmem:[%s5 + $0x2538] sm:$0xff]
  %v4988 = vld [vmem:[%s5 + $0x2540] sm:$0xff]
  %v4989 = vld [vmem:[%s5 + $0x2548] sm:$0xff]
  %v4990 = vld [vmem:[%s5 + $0x2550] sm:$0xff]
  %v4991 = vld [vmem:[%s5 + $0x2558] sm:$0xff]
  %v4992 = vld [vmem:[%s5 + $0x2560] sm:$0xff]
  %v4993 = vld [vmem:[%s5 + $0x2568] sm:$0xff]
  %v4994 = vld [vmem:[%s5 + $0x2570] sm:$0xff]
  %v4995 = vld [vmem:[%s5 + $0x2578] sm:$0xff]
  %v4996 = vld [vmem:[%s5 + $0x2580] sm:$0xff]
  %v4997 = vld [vmem:[%s5 + $0x2588] sm:$0xff]
  %v4998 = vld [vmem:[%s5 + $0x2590] sm:$0xff]
  %v4999 = vld [vmem:[%s5 + $0x2598] sm:$0xff]
  %v5000 = vld [vmem:[%s5 + $0x25a0] sm:$0xff]
  %v5001 = vld [vmem:[%s5 + $0x25a8] sm:$0xff]
  %v5002 = vld [vmem:[%s5 + $0x25b0] sm:$0xff]
  %v5003 = vld [vmem:[%s5 + $0x25b8] sm:$0xff]
  %v5004 = vld [vmem:[%s5 + $0x25c0] sm:$0xff]
  %v5005 = vld [vmem:[%s5 + $0x25c8] sm:$0xff]
  %v5006 = vld [vmem:[%s5 + $0x25d0] sm:$0xff]
  %v5007 = vld [vmem:[%s5 + $0x25d8] sm:$0xff]
  %v5008 = vld [vmem:[%s5 + $0x25e0] sm:$0xff]
  %v5009 = vld [vmem:[%s5 + $0x25e8] sm:$0xff]
  %v5010 = vld [vmem:[%s5 + $0x25f0] sm:$0xff]
  %v5011 = vld [vmem:[%s5 + $0x25f8] sm:$0xff]
  %v5012 = vld [vmem:[%s5 + $0x2600] sm:$0xff]
  %v5013 = vld [vmem:[%s5 + $0x2608] sm:$0xff]
  %v5014 = vld [vmem:[%s5 + $0x2610] sm:$0xff]
  %v5015 = vld [vmem:[%s5 + $0x2618] sm:$0xff]
  %v5016 = vld [vmem:[%s5 + $0x2620] sm:$0xff]
  %v5017 = vld [vmem:[%s5 + $0x2628] sm:$0xff]
  %v5018 = vld [vmem:[%s5 + $0x2630] sm:$0xff]
  %v5019 = vld [vmem:[%s5 + $0x2638] sm:$0xff]
  %v5020 = vld [vmem:[%s5 + $0x2640] sm:$0xff]
  %v5021 = vld [vmem:[%s5 + $0x2648] sm:$0xff]
  %v5022 = vld [vmem:[%s5 + $0x2650] sm:$0xff]
  %v5023 = vld [vmem:[%s5 + $0x2658] sm:$0xff]
  %v5024 = vld [vmem:[%s5 + $0x2660] sm:$0xff]
  %v5025 = vld [vmem:[%s5 + $0x2668] sm:$0xff]
  %v5026 = vld [vmem:[%s5 + $0x2670] sm:$0xff]
  %v5027 = vld [vmem:[%s5 + $0x2678] sm:$0xff]
  %v5028 = vld [vmem:[%s5 + $0x2680] sm:$0xff]
  %v5029 = vld [vmem:[%s5 + $0x2688] sm:$0xff]
  %v5030 = vld [vmem:[%s5 + $0x2690] sm:$0xff]
  %v5031 = vld [vmem:[%s5 + $0x2698] sm:$0xff]
  %v5032 = vld [vmem:[%s5 + $0x26a0] sm:$0xff]
  %v5033 = vld [vmem:[%s5 + $0x26a8] sm:$0xff]
  %v5034 = vld [vmem:[%s5 + $0x26b0] sm:$0xff]
  %v5035 = vld [vmem:[%s5 + $0x26b8] sm:$0xff]
  %v5036 = vld [vmem:[%s5 + $0x26c0] sm:$0xff]
  %v5037 = vld [vmem:[%s5 + $0x26c8] sm:$0xff]
  %v5038 = vld [vmem:[%s5 + $0x26d0] sm:$0xff]
  %v5039 = vld [vmem:[%s5 + $0x26d8] sm:$0xff]
  %v5040 = vld [vmem:[%s5 + $0x26e0] sm:$0xff]
  %v5041 = vld [vmem:[%s5 + $0x26e8] sm:$0xff]
  %v5042 = vld [vmem:[%s5 + $0x26f0] sm:$0xff]
  %v5043 = vld [vmem:[%s5 + $0x26f8] sm:$0xff]
  %v5044 = vld [vmem:[%s5 + $0x2700] sm:$0xff]
  %v5045 = vld [vmem:[%s5 + $0x2708] sm:$0xff]
  %v5046 = vld [vmem:[%s5 + $0x2710] sm:$0xff]
  %v5047 = vld [vmem:[%s5 + $0x2718] sm:$0xff]
  %v5048 = vld [vmem:[%s5 + $0x2720] sm:$0xff]
  %v5049 = vld [vmem:[%s5 + $0x2728] sm:$0xff]
  %v5050 = vld [vmem:[%s5 + $0x2730] sm:$0xff]
  %v5051 = vld [vmem:[%s5 + $0x2738] sm:$0xff]
  %v5052 = vld [vmem:[%s5 + $0x2740] sm:$0xff]
  %v5053 = vld [vmem:[%s5 + $0x2748] sm:$0xff]
  %v5054 = vld [vmem:[%s5 + $0x2750] sm:$0xff]
  %v5055 = vld [vmem:[%s5 + $0x2758] sm:$0xff]
  %v5056 = vld [vmem:[%s5 + $0x2760] sm:$0xff]
  %v5057 = vld [vmem:[%s5 + $0x2768] sm:$0xff]
  %v5058 = vld [vmem:[%s5 + $0x2770] sm:$0xff]
  %v5059 = vld [vmem:[%s5 + $0x2778] sm:$0xff]
  %v5060 = vld [vmem:[%s5 + $0x2780] sm:$0xff]
  %v5061 = vld [vmem:[%s5 + $0x2788] sm:$0xff]
  %v5062 = vld [vmem:[%s5 + $0x2790] sm:$0xff]
  %v5063 = vld [vmem:[%s5 + $0x2798] sm:$0xff]
  %v5064 = vld [vmem:[%s5 + $0x27a0] sm:$0xff]
  %v5065 = vld [vmem:[%s5 + $0x27a8] sm:$0xff]
  %v5066 = vld [vmem:[%s5 + $0x27b0] sm:$0xff]
  %v5067 = vld [vmem:[%s5 + $0x27b8] sm:$0xff]
  %v5068 = vld [vmem:[%s5 + $0x27c0] sm:$0xff]
  %v5069 = vld [vmem:[%s5 + $0x27c8] sm:$0xff]
  %v5070 = vld [vmem:[%s5 + $0x27d0] sm:$0xff]
  %v5071 = vld [vmem:[%s5 + $0x27d8] sm:$0xff]
  %v5072 = vld [vmem:[%s5 + $0x27e0] sm:$0xff]
  %v5073 = vld [vmem:[%s5 + $0x27e8] sm:$0xff]
  %v5074 = vld [vmem:[%s5 + $0x27f0] sm:$0xff]
  %v5075 = vld [vmem:[%s5 + $0x27f8] sm:$0xff]
  %v5076 = vld [vmem:[%s5 + $0x2800] sm:$0xff]
  %v5077 = vld [vmem:[%s5 + $0x2808] sm:$0xff]
  %v5078 = vld [vmem:[%s5 + $0x2810] sm:$0xff]
  %v5079 = vld [vmem:[%s5 + $0x2818] sm:$0xff]
  %v5080 = vld [vmem:[%s5 + $0x2820] sm:$0xff]
  %v5081 = vld [vmem:[%s5 + $0x2828] sm:$0xff]
  %v5082 = vld [vmem:[%s5 + $0x2830] sm:$0xff]
  %v5083 = vld [vmem:[%s5 + $0x2838] sm:$0xff]
  %v5084 = vld [vmem:[%s5 + $0x2840] sm:$0xff]
  %v5085 = vld [vmem:[%s5 + $0x2848] sm:$0xff]
  %v5086 = vld [vmem:[%s5 + $0x2850] sm:$0xff]
  %v5087 = vld [vmem:[%s5 + $0x2858] sm:$0xff]
  %v5088 = vld [vmem:[%s5 + $0x2860] sm:$0xff]
  %v5089 = vld [vmem:[%s5 + $0x2868] sm:$0xff]
  %v5090 = vld [vmem:[%s5 + $0x2870] sm:$0xff]
  %v5091 = vld [vmem:[%s5 + $0x2878] sm:$0xff]
  %v5092 = vld [vmem:[%s5 + $0x2880] sm:$0xff]
  %v5093 = vld [vmem:[%s5 + $0x2888] sm:$0xff]
  %v5094 = vld [vmem:[%s5 + $0x2890] sm:$0xff]
  %v5095 = vld [vmem:[%s5 + $0x2898] sm:$0xff]
  %v5096 = vld [vmem:[%s5 + $0x28a0] sm:$0xff]
  %v5097 = vld [vmem:[%s5 + $0x28a8] sm:$0xff]
  %v5098 = vld [vmem:[%s5 + $0x28b0] sm:$0xff]
  %v5099 = vld [vmem:[%s5 + $0x28b8] sm:$0xff]
  %v5100 = vld [vmem:[%s5 + $0x28c0] sm:$0xff]
  %v5101 = vld [vmem:[%s5 + $0x28c8] sm:$0xff]
  %v5102 = vld [vmem:[%s5 + $0x28d0] sm:$0xff]
  %v5103 = vld [vmem:[%s5 + $0x28d8] sm:$0xff]
  %v5104 = vld [vmem:[%s5 + $0x28e0] sm:$0xff]
  %v5105 = vld [vmem:[%s5 + $0x28e8] sm:$0xff]
  %v5106 = vld [vmem:[%s5 + $0x28f0] sm:$0xff]
  %v5107 = vld [vmem:[%s5 + $0x28f8] sm:$0xff]
  %v5108 = vld [vmem:[%s5 + $0x2900] sm:$0xff]
  %v5109 = vld [vmem:[%s5 + $0x2908] sm:$0xff]
  %v5110 = vld [vmem:[%s5 + $0x2910] sm:$0xff]
  %v5111 = vld [vmem:[%s5 + $0x2918] sm:$0xff]
  %v5112 = vld [vmem:[%s5 + $0x2920] sm:$0xff]
  %v5113 = vld [vmem:[%s5 + $0x2928] sm:$0xff]
  %v5114 = vld [vmem:[%s5 + $0x2930] sm:$0xff]
  %v5115 = vld [vmem:[%s5 + $0x2938] sm:$0xff]
  %v5116 = vld [vmem:[%s5 + $0x2940] sm:$0xff]
  %v5117 = vld [vmem:[%s5 + $0x2948] sm:$0xff]
  %v5118 = vld [vmem:[%s5 + $0x2950] sm:$0xff]
  %v5119 = vld [vmem:[%s5 + $0x2958] sm:$0xff]
  %v5120 = vld [vmem:[%s5 + $0x2960] sm:$0xff]
  %v5121 = vld [vmem:[%s5 + $0x2968] sm:$0xff]
  %v5122 = vld [vmem:[%s5 + $0x2970] sm:$0xff]
  %v5123 = vld [vmem:[%s5 + $0x2978] sm:$0xff]
  %v5124 = vld [vmem:[%s5 + $0x2980] sm:$0xff]
  %v5125 = vld [vmem:[%s5 + $0x2988] sm:$0xff]
  %v5126 = vld [vmem:[%s5 + $0x2990] sm:$0xff]
  %v5127 = vld [vmem:[%s5 + $0x2998] sm:$0xff]
  %v5128 = vld [vmem:[%s5 + $0x29a0] sm:$0xff]
  %v5129 = vld [vmem:[%s5 + $0x29a8] sm:$0xff]
  %v5130 = vld [vmem:[%s5 + $0x29b0] sm:$0xff]
  %v5131 = vld [vmem:[%s5 + $0x29b8] sm:$0xff]
  %v5132 = vld [vmem:[%s5 + $0x29c0] sm:$0xff]
  %v5133 = vld [vmem:[%s5 + $0x29c8] sm:$0xff]
  %v5134 = vld [vmem:[%s5 + $0x29d0] sm:$0xff]
  %v5135 = vld [vmem:[%s5 + $0x29d8] sm:$0xff]
  %v5136 = vld [vmem:[%s5 + $0x29e0] sm:$0xff]
  %v5137 = vld [vmem:[%s5 + $0x29e8] sm:$0xff]
  %v5138 = vld [vmem:[%s5 + $0x29f0] sm:$0xff]
  %v5139 = vld [vmem:[%s5 + $0x29f8] sm:$0xff]
  %v5140 = vld [vmem:[%s5 + $0x2a00] sm:$0xff]
  %v5141 = vld [vmem:[%s5 + $0x2a08] sm:$0xff]
  %v5142 = vld [vmem:[%s5 + $0x2a10] sm:$0xff]
  %v5143 = vld [vmem:[%s5 + $0x2a18] sm:$0xff]
  %v5144 = vld [vmem:[%s5 + $0x2a20] sm:$0xff]
  %v5145 = vld [vmem:[%s5 + $0x2a28] sm:$0xff]
  %v5146 = vld [vmem:[%s5 + $0x2a30] sm:$0xff]
  %v5147 = vld [vmem:[%s5 + $0x2a38] sm:$0xff]
  %v5148 = vld [vmem:[%s5 + $0x2a40] sm:$0xff]
  %v5149 = vld [vmem:[%s5 + $0x2a48] sm:$0xff]
  %v5150 = vld [vmem:[%s5 + $0x2a50] sm:$0xff]
  %v5151 = vld [vmem:[%s5 + $0x2a58] sm:$0xff]
  %v5152 = vld [vmem:[%s5 + $0x2a60] sm:$0xff]
  %v5153 = vld [vmem:[%s5 + $0x2a68] sm:$0xff]
  %v5154 = vld [vmem:[%s5 + $0x2a70] sm:$0xff]
  %v5155 = vld [vmem:[%s5 + $0x2a78] sm:$0xff]
  %v5156 = vld [vmem:[%s5 + $0x2a80] sm:$0xff]
  %v5157 = vld [vmem:[%s5 + $0x2a88] sm:$0xff]
  %v5158 = vld [vmem:[%s5 + $0x2a90] sm:$0xff]
  %v5159 = vld [vmem:[%s5 + $0x2a98] sm:$0xff]
  %v5160 = vld [vmem:[%s5 + $0x2aa0] sm:$0xff]
  %v5161 = vld [vmem:[%s5 + $0x2aa8] sm:$0xff]
  %v5162 = vld [vmem:[%s5 + $0x2ab0] sm:$0xff]
  %v5163 = vld [vmem:[%s5 + $0x2ab8] sm:$0xff]
  %v5164 = vld [vmem:[%s5 + $0x2ac0] sm:$0xff]
  %v5165 = vld [vmem:[%s5 + $0x2ac8] sm:$0xff]
  %v5166 = vld [vmem:[%s5 + $0x2ad0] sm:$0xff]
  %v5167 = vld [vmem:[%s5 + $0x2ad8] sm:$0xff]
  %v5168 = vld [vmem:[%s5 + $0x2ae0] sm:$0xff]
  %v5169 = vld [vmem:[%s5 + $0x2ae8] sm:$0xff]
  %v5170 = vld [vmem:[%s5 + $0x2af0] sm:$0xff]
  %v5171 = vld [vmem:[%s5 + $0x2af8] sm:$0xff]
  %v5172 = vld [vmem:[%s5 + $0x2b00] sm:$0xff]
  %v5173 = vld [vmem:[%s5 + $0x2b08] sm:$0xff]
  %v5174 = vld [vmem:[%s5 + $0x2b10] sm:$0xff]
  %v5175 = vld [vmem:[%s5 + $0x2b18] sm:$0xff]
  %v5176 = vld [vmem:[%s5 + $0x2b20] sm:$0xff]
  %v5177 = vld [vmem:[%s5 + $0x2b28] sm:$0xff]
  %v5178 = vld [vmem:[%s5 + $0x2b30] sm:$0xff]
  %v5179 = vld [vmem:[%s5 + $0x2b38] sm:$0xff]
  %v5180 = vld [vmem:[%s5 + $0x2b40] sm:$0xff]
  %v5181 = vld [vmem:[%s5 + $0x2b48] sm:$0xff]
  %v5182 = vld [vmem:[%s5 + $0x2b50] sm:$0xff]
  %v5183 = vld [vmem:[%s5 + $0x2b58] sm:$0xff]
  %v5184 = vld [vmem:[%s5 + $0x2b60] sm:$0xff]
  %v5185 = vld [vmem:[%s5 + $0x2b68] sm:$0xff]
  %v5186 = vld [vmem:[%s5 + $0x2b70] sm:$0xff]
  %v5187 = vld [vmem:[%s5 + $0x2b78] sm:$0xff]
  %v5188 = vld [vmem:[%s5 + $0x2b80] sm:$0xff]
  %v5189 = vld [vmem:[%s5 + $0x2b88] sm:$0xff]
  %v5190 = vld [vmem:[%s5 + $0x2b90] sm:$0xff]
  %v5191 = vld [vmem:[%s5 + $0x2b98] sm:$0xff]
  %v5192 = vld [vmem:[%s5 + $0x2ba0] sm:$0xff]
  %v5193 = vld [vmem:[%s5 + $0x2ba8] sm:$0xff]
  %v5194 = vld [vmem:[%s5 + $0x2bb0] sm:$0xff]
  %v5195 = vld [vmem:[%s5 + $0x2bb8] sm:$0xff]
  %v5196 = vld [vmem:[%s5 + $0x2bc0] sm:$0xff]
  %v5197 = vld [vmem:[%s5 + $0x2bc8] sm:$0xff]
  %v5198 = vld [vmem:[%s5 + $0x2bd0] sm:$0xff]
  %v5199 = vld [vmem:[%s5 + $0x2bd8] sm:$0xff]
  %v5200 = vld [vmem:[%s5 + $0x2be0] sm:$0xff]
  %v5201 = vld [vmem:[%s5 + $0x2be8] sm:$0xff]
  %v5202 = vld [vmem:[%s5 + $0x2bf0] sm:$0xff]
  %v5203 = vld [vmem:[%s5 + $0x2bf8] sm:$0xff]
  %v5204 = vld [vmem:[%s5 + $0x2c00] sm:$0xff]
  %v5205 = vld [vmem:[%s5 + $0x2c08] sm:$0xff]
  %v5206 = vld [vmem:[%s5 + $0x2c10] sm:$0xff]
  %v5207 = vld [vmem:[%s5 + $0x2c18] sm:$0xff]
  %v5208 = vld [vmem:[%s5 + $0x2c20] sm:$0xff]
  %v5209 = vld [vmem:[%s5 + $0x2c28] sm:$0xff]
  %v5210 = vld [vmem:[%s5 + $0x2c30] sm:$0xff]
  %v5211 = vld [vmem:[%s5 + $0x2c38] sm:$0xff]
  %v5212 = vld [vmem:[%s5 + $0x2c40] sm:$0xff]
  %v5213 = vld [vmem:[%s5 + $0x2c48] sm:$0xff]
  %v5214 = vld [vmem:[%s5 + $0x2c50] sm:$0xff]
  %v5215 = vld [vmem:[%s5 + $0x2c58] sm:$0xff]
  %v5216 = vld [vmem:[%s5 + $0x2c60] sm:$0xff]
  %v5217 = vld [vmem:[%s5 + $0x2c68] sm:$0xff]
  %v5218 = vld [vmem:[%s5 + $0x2c70] sm:$0xff]
  %v5219 = vld [vmem:[%s5 + $0x2c78] sm:$0xff]
  %v5220 = vld [vmem:[%s5 + $0x2c80] sm:$0xff]
  %v5221 = vld [vmem:[%s5 + $0x2c88] sm:$0xff]
  %v5222 = vld [vmem:[%s5 + $0x2c90] sm:$0xff]
  %v5223 = vld [vmem:[%s5 + $0x2c98] sm:$0xff]
  %v5224 = vld [vmem:[%s5 + $0x2ca0] sm:$0xff]
  %v5225 = vld [vmem:[%s5 + $0x2ca8] sm:$0xff]
  %v5226 = vld [vmem:[%s5 + $0x2cb0] sm:$0xff]
  %v5227 = vld [vmem:[%s5 + $0x2cb8] sm:$0xff]
  %v5228 = vld [vmem:[%s5 + $0x2cc0] sm:$0xff]
  %v5229 = vld [vmem:[%s5 + $0x2cc8] sm:$0xff]
  %v5230 = vld [vmem:[%s5 + $0x2cd0] sm:$0xff]
  %v5231 = vld [vmem:[%s5 + $0x2cd8] sm:$0xff]
  %v5232 = vld [vmem:[%s5 + $0x2ce0] sm:$0xff]
  %v5233 = vld [vmem:[%s5 + $0x2ce8] sm:$0xff]
  %v5234 = vld [vmem:[%s5 + $0x2cf0] sm:$0xff]
  %v5235 = vld [vmem:[%s5 + $0x2cf8] sm:$0xff]
  %v5236 = vld [vmem:[%s5 + $0x2d00] sm:$0xff]
  %v5237 = vld [vmem:[%s5 + $0x2d08] sm:$0xff]
  %v5238 = vld [vmem:[%s5 + $0x2d10] sm:$0xff]
  %v5239 = vld [vmem:[%s5 + $0x2d18] sm:$0xff]
  %v5240 = vld [vmem:[%s5 + $0x2d20] sm:$0xff]
  %v5241 = vld [vmem:[%s5 + $0x2d28] sm:$0xff]
  %v5242 = vld [vmem:[%s5 + $0x2d30] sm:$0xff]
  %v5243 = vld [vmem:[%s5 + $0x2d38] sm:$0xff]
  %v5244 = vld [vmem:[%s5 + $0x2d40] sm:$0xff]
  %v5245 = vld [vmem:[%s5 + $0x2d48] sm:$0xff]
  %v5246 = vld [vmem:[%s5 + $0x2d50] sm:$0xff]
  %v5247 = vld [vmem:[%s5 + $0x2d58] sm:$0xff]
  %v5248 = vld [vmem:[%s5 + $0x2d60] sm:$0xff]
  %v5249 = vld [vmem:[%s5 + $0x2d68] sm:$0xff]
  %v5250 = vld [vmem:[%s5 + $0x2d70] sm:$0xff]
  %v5251 = vld [vmem:[%s5 + $0x2d78] sm:$0xff]
  %v5252 = vld [vmem:[%s5 + $0x2d80] sm:$0xff]
  %v5253 = vld [vmem:[%s5 + $0x2d88] sm:$0xff]
  %v5254 = vld [vmem:[%s5 + $0x2d90] sm:$0xff]
  %v5255 = vld [vmem:[%s5 + $0x2d98] sm:$0xff]
  %v5256 = vld [vmem:[%s5 + $0x2da0] sm:$0xff]
  %v5257 = vld [vmem:[%s5 + $0x2da8] sm:$0xff]
  %v5258 = vld [vmem:[%s5 + $0x2db0] sm:$0xff]
  %v5259 = vld [vmem:[%s5 + $0x2db8] sm:$0xff]
  %v5260 = vld [vmem:[%s5 + $0x2dc0] sm:$0xff]
  %v5261 = vld [vmem:[%s5 + $0x2dc8] sm:$0xff]
  %v5262 = vld [vmem:[%s5 + $0x2dd0] sm:$0xff]
  %v5263 = vld [vmem:[%s5 + $0x2dd8] sm:$0xff]
  %v5264 = vld [vmem:[%s5 + $0x2de0] sm:$0xff]
  %v5265 = vld [vmem:[%s5 + $0x2de8] sm:$0xff]
  %v5266 = vld [vmem:[%s5 + $0x2df0] sm:$0xff]
  %v5267 = vld [vmem:[%s5 + $0x2df8] sm:$0xff]
  %v5268 = vld [vmem:[%s5 + $0x2e00] sm:$0xff]
  %v5269 = vld [vmem:[%s5 + $0x2e08] sm:$0xff]
  %v5270 = vld [vmem:[%s5 + $0x2e10] sm:$0xff]
  %v5271 = vld [vmem:[%s5 + $0x2e18] sm:$0xff]
  %v5272 = vld [vmem:[%s5 + $0x2e20] sm:$0xff]
  %v5273 = vld [vmem:[%s5 + $0x2e28] sm:$0xff]
  %v5274 = vld [vmem:[%s5 + $0x2e30] sm:$0xff]
  %v5275 = vld [vmem:[%s5 + $0x2e38] sm:$0xff]
  %v5276 = vld [vmem:[%s5 + $0x2e40] sm:$0xff]
  %v5277 = vld [vmem:[%s5 + $0x2e48] sm:$0xff]
  %v5278 = vld [vmem:[%s5 + $0x2e50] sm:$0xff]
  %v5279 = vld [vmem:[%s5 + $0x2e58] sm:$0xff]
  %v5280 = vld [vmem:[%s5 + $0x2e60] sm:$0xff]
  %v5281 = vld [vmem:[%s5 + $0x2e68] sm:$0xff]
  %v5282 = vld [vmem:[%s5 + $0x2e70] sm:$0xff]
  %v5283 = vld [vmem:[%s5 + $0x2e78] sm:$0xff]
  %v5284 = vld [vmem:[%s5 + $0x2e80] sm:$0xff]
  %v5285 = vld [vmem:[%s5 + $0x2e88] sm:$0xff]
  %v5286 = vld [vmem:[%s5 + $0x2e90] sm:$0xff]
  %v5287 = vld [vmem:[%s5 + $0x2e98] sm:$0xff]
  %v5288 = vld [vmem:[%s5 + $0x2ea0] sm:$0xff]
  %v5289 = vld [vmem:[%s5 + $0x2ea8] sm:$0xff]
  %v5290 = vld [vmem:[%s5 + $0x2eb0] sm:$0xff]
  %v5291 = vld [vmem:[%s5 + $0x2eb8] sm:$0xff]
  %v5292 = vld [vmem:[%s5 + $0x2ec0] sm:$0xff]
  %v5293 = vld [vmem:[%s5 + $0x2ec8] sm:$0xff]
  %v5294 = vld [vmem:[%s5 + $0x2ed0] sm:$0xff]
  %v5295 = vld [vmem:[%s5 + $0x2ed8] sm:$0xff]
  %v5296 = vld [vmem:[%s5 + $0x2ee0] sm:$0xff]
  %v5297 = vld [vmem:[%s5 + $0x2ee8] sm:$0xff]
  %v5298 = vld [vmem:[%s5 + $0x2ef0] sm:$0xff]
  %v5299 = vld [vmem:[%s5 + $0x2ef8] sm:$0xff]
  %v5300 = vld [vmem:[%s5 + $0x2f00] sm:$0xff]
  %v5301 = vld [vmem:[%s5 + $0x2f08] sm:$0xff]
  %v5302 = vld [vmem:[%s5 + $0x2f10] sm:$0xff]
  %v5303 = vld [vmem:[%s5 + $0x2f18] sm:$0xff]
  %v5304 = vld [vmem:[%s5 + $0x2f20] sm:$0xff]
  %v5305 = vld [vmem:[%s5 + $0x2f28] sm:$0xff]
  %v5306 = vld [vmem:[%s5 + $0x2f30] sm:$0xff]
  %v5307 = vld [vmem:[%s5 + $0x2f38] sm:$0xff]
  %v5308 = vld [vmem:[%s5 + $0x2f40] sm:$0xff]
  %v5309 = vld [vmem:[%s5 + $0x2f48] sm:$0xff]
  %v5310 = vld [vmem:[%s5 + $0x2f50] sm:$0xff]
  %v5311 = vld [vmem:[%s5 + $0x2f58] sm:$0xff]
  %v5312 = vld [vmem:[%s5 + $0x2f60] sm:$0xff]
  %v5313 = vld [vmem:[%s5 + $0x2f68] sm:$0xff]
  %v5314 = vld [vmem:[%s5 + $0x2f70] sm:$0xff]
  %v5315 = vld [vmem:[%s5 + $0x2f78] sm:$0xff]
  %v5316 = vld [vmem:[%s5 + $0x2f80] sm:$0xff]
  %v5317 = vld [vmem:[%s5 + $0x2f88] sm:$0xff]
  %v5318 = vld [vmem:[%s5 + $0x2f90] sm:$0xff]
  %v5319 = vld [vmem:[%s5 + $0x2f98] sm:$0xff]
  %v5320 = vld [vmem:[%s5 + $0x2fa0] sm:$0xff]
  %v5321 = vld [vmem:[%s5 + $0x2fa8] sm:$0xff]
  %v5322 = vld [vmem:[%s5 + $0x2fb0] sm:$0xff]
  %v5323 = vld [vmem:[%s5 + $0x2fb8] sm:$0xff]
  %v5324 = vld [vmem:[%s5 + $0x2fc0] sm:$0xff]
  %v5325 = vld [vmem:[%s5 + $0x2fc8] sm:$0xff]
  %v5326 = vld [vmem:[%s5 + $0x2fd0] sm:$0xff]
  %v5327 = vld [vmem:[%s5 + $0x2fd8] sm:$0xff]
  %v5328 = vld [vmem:[%s5 + $0x2fe0] sm:$0xff]
  %v5329 = vld [vmem:[%s5 + $0x2fe8] sm:$0xff]
  %v5330 = vld [vmem:[%s5 + $0x2ff0] sm:$0xff]
  %v5331 = vld [vmem:[%s5 + $0x2ff8] sm:$0xff]
  %v5332 = vld [vmem:[%s5 + $0x3000] sm:$0xff]
  %v5333 = vld [vmem:[%s5 + $0x3008] sm:$0xff]
  %v5334 = vld [vmem:[%s5 + $0x3010] sm:$0xff]
  %v5335 = vld [vmem:[%s5 + $0x3018] sm:$0xff]
  %v5336 = vld [vmem:[%s5 + $0x3020] sm:$0xff]
  %v5337 = vld [vmem:[%s5 + $0x3028] sm:$0xff]
  %v5338 = vld [vmem:[%s5 + $0x3030] sm:$0xff]
  %v5339 = vld [vmem:[%s5 + $0x3038] sm:$0xff]
  %v5340 = vld [vmem:[%s5 + $0x3040] sm:$0xff]
  %v5341 = vld [vmem:[%s5 + $0x3048] sm:$0xff]
  %v5342 = vld [vmem:[%s5 + $0x3050] sm:$0xff]
  %v5343 = vld [vmem:[%s5 + $0x3058] sm:$0xff]
  %v5344 = vld [vmem:[%s5 + $0x3060] sm:$0xff]
  %v5345 = vld [vmem:[%s5 + $0x3068] sm:$0xff]
  %v5346 = vld [vmem:[%s5 + $0x3070] sm:$0xff]
  %v5347 = vld [vmem:[%s5 + $0x3078] sm:$0xff]
  %v5348 = vld [vmem:[%s5 + $0x3080] sm:$0xff]
  %v5349 = vld [vmem:[%s5 + $0x3088] sm:$0xff]
  %v5350 = vld [vmem:[%s5 + $0x3090] sm:$0xff]
  %v5351 = vld [vmem:[%s5 + $0x3098] sm:$0xff]
  %v5352 = vld [vmem:[%s5 + $0x30a0] sm:$0xff]
  %v5353 = vld [vmem:[%s5 + $0x30a8] sm:$0xff]
  %v5354 = vld [vmem:[%s5 + $0x30b0] sm:$0xff]
  %v5355 = vld [vmem:[%s5 + $0x30b8] sm:$0xff]
  %v5356 = vld [vmem:[%s5 + $0x30c0] sm:$0xff]
  %v5357 = vld [vmem:[%s5 + $0x30c8] sm:$0xff]
  %v5358 = vld [vmem:[%s5 + $0x30d0] sm:$0xff]
  %v5359 = vld [vmem:[%s5 + $0x30d8] sm:$0xff]
  %v5360 = vld [vmem:[%s5 + $0x30e0] sm:$0xff]
  %v5361 = vld [vmem:[%s5 + $0x30e8] sm:$0xff]
  %v5362 = vld [vmem:[%s5 + $0x30f0] sm:$0xff]
  %v5363 = vld [vmem:[%s5 + $0x30f8] sm:$0xff]
  %v5364 = vld [vmem:[%s6] sm:$0xf]
  %v5366 = vperm.slane %v5364, 0
  %v5367 = vperm.slane %v5364, 1
  %v5368 = vperm.slane %v5364, 2
  %v5369 = vperm.slane %v5364, 3
  %5374 = vmatpush.msra.mxu0 %v3856
  %5375 = vmatpush.msra.mxu0 %v3852
  %5376 = vmatpush.msra.mxu0 %v3848
  %5377 = vmatpush.msra.mxu0 %v3844
  %5378 = vmatpush.msra.mxu0 %v3840
  %5379 = vmatpush.msra.mxu0 %v3836
  %5380 = vmatpush.msra.mxu0 %v3832
  %5381 = vmatpush.msra.mxu0 %v3828
  %5382 = vmatpush.msra.mxu0 %v3824
  %5383 = vmatpush.msra.mxu0 %v3820
  %5384 = vmatpush.msra.mxu0 %v3816
  %5385 = vmatpush.msra.mxu0 %v3812
  %5386 = vmatpush.msra.mxu0 %v3808
  %5387 = vmatpush.msra.mxu0 %v3804
  %5388 = vmatpush.msra.mxu0 %v3800
  %5389 = vmatpush.msra.mxu0 %v3796
  %5390 = vmatmul.f32.gmra.mxu0 %v35
  %v5391 = vpop.f32.mrf.mxu0
  %v5392 = vadd.f32 %v5366, %v5391
  %5393 = vdwg.mxu0
  %5394 = vmatpush.msra.mxu0 %v3920
  %5395 = vmatpush.msra.mxu0 %v3916
  %5396 = vmatpush.msra.mxu0 %v3912
  %5397 = vmatpush.msra.mxu0 %v3908
  %5398 = vmatpush.msra.mxu0 %v3904
  %5399 = vmatpush.msra.mxu0 %v3900
  %5400 = vmatpush.msra.mxu0 %v3896
  %5401 = vmatpush.msra.mxu0 %v3892
  %5402 = vmatpush.msra.mxu0 %v3888
  %5403 = vmatpush.msra.mxu0 %v3884
  %5404 = vmatpush.msra.mxu0 %v3880
  %5405 = vmatpush.msra.mxu0 %v3876
  %5406 = vmatpush.msra.mxu0 %v3872
  %5407 = vmatpush.msra.mxu0 %v3868
  %5408 = vmatpush.msra.mxu0 %v3864
  %5409 = vmatpush.msra.mxu0 %v3860
  %5410 = vmatmul.f32.gmra.mxu0 %v36
  %v5411 = vpop.f32.mrf.mxu0
  %v5412 = vadd.f32 %v5392, %v5411
  %5413 = vdwg.mxu0
  %5414 = vmatpush.msra.mxu0 %v3984
  %5415 = vmatpush.msra.mxu0 %v3980
  %5416 = vmatpush.msra.mxu0 %v3976
  %5417 = vmatpush.msra.mxu0 %v3972
  %5418 = vmatpush.msra.mxu0 %v3968
  %5419 = vmatpush.msra.mxu0 %v3964
  %5420 = vmatpush.msra.mxu0 %v3960
  %5421 = vmatpush.msra.mxu0 %v3956
  %5422 = vmatpush.msra.mxu0 %v3952
  %5423 = vmatpush.msra.mxu0 %v3948
  %5424 = vmatpush.msra.mxu0 %v3944
  %5425 = vmatpush.msra.mxu0 %v3940
  %5426 = vmatpush.msra.mxu0 %v3936
  %5427 = vmatpush.msra.mxu0 %v3932
  %5428 = vmatpush.msra.mxu0 %v3928
  %5429 = vmatpush.msra.mxu0 %v3924
  %5430 = vmatmul.f32.gmra.mxu0 %v37
  %v5431 = vpop.f32.mrf.mxu0
  %v5432 = vadd.f32 %v5412, %v5431
  %5433 = vdwg.mxu0
  %5434 = vmatpush.msra.mxu0 %v4048
  %5435 = vmatpush.msra.mxu0 %v4044
  %5436 = vmatpush.msra.mxu0 %v4040
  %5437 = vmatpush.msra.mxu0 %v4036
  %5438 = vmatpush.msra.mxu0 %v4032
  %5439 = vmatpush.msra.mxu0 %v4028
  %5440 = vmatpush.msra.mxu0 %v4024
  %5441 = vmatpush.msra.mxu0 %v4020
  %5442 = vmatpush.msra.mxu0 %v4016
  %5443 = vmatpush.msra.mxu0 %v4012
  %5444 = vmatpush.msra.mxu0 %v4008
  %5445 = vmatpush.msra.mxu0 %v4004
  %5446 = vmatpush.msra.mxu0 %v4000
  %5447 = vmatpush.msra.mxu0 %v3996
  %5448 = vmatpush.msra.mxu0 %v3992
  %5449 = vmatpush.msra.mxu0 %v3988
  %5450 = vmatmul.f32.gmra.mxu0 %v38
  %v5451 = vpop.f32.mrf.mxu0
  %v5452 = vadd.f32 %v5432, %v5451
  %5453 = vdwg.mxu0
  %5454 = vmatpush.msra.mxu0 %v4112
  %5455 = vmatpush.msra.mxu0 %v4108
  %5456 = vmatpush.msra.mxu0 %v4104
  %5457 = vmatpush.msra.mxu0 %v4100
  %5458 = vmatpush.msra.mxu0 %v4096
  %5459 = vmatpush.msra.mxu0 %v4092
  %5460 = vmatpush.msra.mxu0 %v4088
  %5461 = vmatpush.msra.mxu0 %v4084
  %5462 = vmatpush.msra.mxu0 %v4080
  %5463 = vmatpush.msra.mxu0 %v4076
  %5464 = vmatpush.msra.mxu0 %v4072
  %5465 = vmatpush.msra.mxu0 %v4068
  %5466 = vmatpush.msra.mxu0 %v4064
  %5467 = vmatpush.msra.mxu0 %v4060
  %5468 = vmatpush.msra.mxu0 %v4056
  %5469 = vmatpush.msra.mxu0 %v4052
  %5470 = vmatmul.f32.gmra.mxu0 %v39
  %v5471 = vpop.f32.mrf.mxu0
  %v5472 = vadd.f32 %v5452, %v5471
  %5473 = vdwg.mxu0
  %5474 = vmatpush.msra.mxu0 %v4176
  %5475 = vmatpush.msra.mxu0 %v4172
  %5476 = vmatpush.msra.mxu0 %v4168
  %5477 = vmatpush.msra.mxu0 %v4164
  %5478 = vmatpush.msra.mxu0 %v4160
  %5479 = vmatpush.msra.mxu0 %v4156
  %5480 = vmatpush.msra.mxu0 %v4152
  %5481 = vmatpush.msra.mxu0 %v4148
  %5482 = vmatpush.msra.mxu0 %v4144
  %5483 = vmatpush.msra.mxu0 %v4140
  %5484 = vmatpush.msra.mxu0 %v4136
  %5485 = vmatpush.msra.mxu0 %v4132
  %5486 = vmatpush.msra.mxu0 %v4128
  %5487 = vmatpush.msra.mxu0 %v4124
  %5488 = vmatpush.msra.mxu0 %v4120
  %5489 = vmatpush.msra.mxu0 %v4116
  %5490 = vmatmul.f32.gmra.mxu0 %v40
  %v5491 = vpop.f32.mrf.mxu0
  %v5492 = vadd.f32 %v5472, %v5491
  %5493 = vdwg.mxu0
  %5494 = vmatpush.msra.mxu0 %v4240
  %5495 = vmatpush.msra.mxu0 %v4236
  %5496 = vmatpush.msra.mxu0 %v4232
  %5497 = vmatpush.msra.mxu0 %v4228
  %5498 = vmatpush.msra.mxu0 %v4224
  %5499 = vmatpush.msra.mxu0 %v4220
  %5500 = vmatpush.msra.mxu0 %v4216
  %5501 = vmatpush.msra.mxu0 %v4212
  %5502 = vmatpush.msra.mxu0 %v4208
  %5503 = vmatpush.msra.mxu0 %v4204
  %5504 = vmatpush.msra.mxu0 %v4200
  %5505 = vmatpush.msra.mxu0 %v4196
  %5506 = vmatpush.msra.mxu0 %v4192
  %5507 = vmatpush.msra.mxu0 %v4188
  %5508 = vmatpush.msra.mxu0 %v4184
  %5509 = vmatpush.msra.mxu0 %v4180
  %5510 = vmatmul.f32.gmra.mxu0 %v41
  %v5511 = vpop.f32.mrf.mxu0
  %v5512 = vadd.f32 %v5492, %v5511
  %5513 = vdwg.mxu0
  %5514 = vmatpush.msra.mxu0 %v4304
  %5515 = vmatpush.msra.mxu0 %v4300
  %5516 = vmatpush.msra.mxu0 %v4296
  %5517 = vmatpush.msra.mxu0 %v4292
  %5518 = vmatpush.msra.mxu0 %v4288
  %5519 = vmatpush.msra.mxu0 %v4284
  %5520 = vmatpush.msra.mxu0 %v4280
  %5521 = vmatpush.msra.mxu0 %v4276
  %5522 = vmatpush.msra.mxu0 %v4272
  %5523 = vmatpush.msra.mxu0 %v4268
  %5524 = vmatpush.msra.mxu0 %v4264
  %5525 = vmatpush.msra.mxu0 %v4260
  %5526 = vmatpush.msra.mxu0 %v4256
  %5527 = vmatpush.msra.mxu0 %v4252
  %5528 = vmatpush.msra.mxu0 %v4248
  %5529 = vmatpush.msra.mxu0 %v4244
  %5530 = vmatmul.f32.gmra.mxu0 %v42
  %v5531 = vpop.f32.mrf.mxu0
  %v5532 = vadd.f32 %v5512, %v5531
  %5533 = vdwg.mxu0
  %5534 = vmatpush.msra.mxu0 %v4368
  %5535 = vmatpush.msra.mxu0 %v4364
  %5536 = vmatpush.msra.mxu0 %v4360
  %5537 = vmatpush.msra.mxu0 %v4356
  %5538 = vmatpush.msra.mxu0 %v4352
  %5539 = vmatpush.msra.mxu0 %v4348
  %5540 = vmatpush.msra.mxu0 %v4344
  %5541 = vmatpush.msra.mxu0 %v4340
  %5542 = vmatpush.msra.mxu0 %v4336
  %5543 = vmatpush.msra.mxu0 %v4332
  %5544 = vmatpush.msra.mxu0 %v4328
  %5545 = vmatpush.msra.mxu0 %v4324
  %5546 = vmatpush.msra.mxu0 %v4320
  %5547 = vmatpush.msra.mxu0 %v4316
  %5548 = vmatpush.msra.mxu0 %v4312
  %5549 = vmatpush.msra.mxu0 %v4308
  %5550 = vmatmul.f32.gmra.mxu0 %v43
  %v5551 = vpop.f32.mrf.mxu0
  %v5552 = vadd.f32 %v5532, %v5551
  %5553 = vdwg.mxu0
  %5554 = vmatpush.msra.mxu0 %v4432
  %5555 = vmatpush.msra.mxu0 %v4428
  %5556 = vmatpush.msra.mxu0 %v4424
  %5557 = vmatpush.msra.mxu0 %v4420
  %5558 = vmatpush.msra.mxu0 %v4416
  %5559 = vmatpush.msra.mxu0 %v4412
  %5560 = vmatpush.msra.mxu0 %v4408
  %5561 = vmatpush.msra.mxu0 %v4404
  %5562 = vmatpush.msra.mxu0 %v4400
  %5563 = vmatpush.msra.mxu0 %v4396
  %5564 = vmatpush.msra.mxu0 %v4392
  %5565 = vmatpush.msra.mxu0 %v4388
  %5566 = vmatpush.msra.mxu0 %v4384
  %5567 = vmatpush.msra.mxu0 %v4380
  %5568 = vmatpush.msra.mxu0 %v4376
  %5569 = vmatpush.msra.mxu0 %v4372
  %5570 = vmatmul.f32.gmra.mxu0 %v44
  %v5571 = vpop.f32.mrf.mxu0
  %v5572 = vadd.f32 %v5552, %v5571
  %5573 = vdwg.mxu0
  %5574 = vmatpush.msra.mxu0 %v4496
  %5575 = vmatpush.msra.mxu0 %v4492
  %5576 = vmatpush.msra.mxu0 %v4488
  %5577 = vmatpush.msra.mxu0 %v4484
  %5578 = vmatpush.msra.mxu0 %v4480
  %5579 = vmatpush.msra.mxu0 %v4476
  %5580 = vmatpush.msra.mxu0 %v4472
  %5581 = vmatpush.msra.mxu0 %v4468
  %5582 = vmatpush.msra.mxu0 %v4464
  %5583 = vmatpush.msra.mxu0 %v4460
  %5584 = vmatpush.msra.mxu0 %v4456
  %5585 = vmatpush.msra.mxu0 %v4452
  %5586 = vmatpush.msra.mxu0 %v4448
  %5587 = vmatpush.msra.mxu0 %v4444
  %5588 = vmatpush.msra.mxu0 %v4440
  %5589 = vmatpush.msra.mxu0 %v4436
  %5590 = vmatmul.f32.gmra.mxu0 %v45
  %v5591 = vpop.f32.mrf.mxu0
  %v5592 = vadd.f32 %v5572, %v5591
  %5593 = vdwg.mxu0
  %5594 = vmatpush.msra.mxu0 %v4560
  %5595 = vmatpush.msra.mxu0 %v4556
  %5596 = vmatpush.msra.mxu0 %v4552
  %5597 = vmatpush.msra.mxu0 %v4548
  %5598 = vmatpush.msra.mxu0 %v4544
  %5599 = vmatpush.msra.mxu0 %v4540
  %5600 = vmatpush.msra.mxu0 %v4536
  %5601 = vmatpush.msra.mxu0 %v4532
  %5602 = vmatpush.msra.mxu0 %v4528
  %5603 = vmatpush.msra.mxu0 %v4524
  %5604 = vmatpush.msra.mxu0 %v4520
  %5605 = vmatpush.msra.mxu0 %v4516
  %5606 = vmatpush.msra.mxu0 %v4512
  %5607 = vmatpush.msra.mxu0 %v4508
  %5608 = vmatpush.msra.mxu0 %v4504
  %5609 = vmatpush.msra.mxu0 %v4500
  %5610 = vmatmul.f32.gmra.mxu0 %v46
  %v5611 = vpop.f32.mrf.mxu0
  %v5612 = vadd.f32 %v5592, %v5611
  %5613 = vdwg.mxu0
  %5614 = vmatpush.msra.mxu0 %v4624
  %5615 = vmatpush.msra.mxu0 %v4620
  %5616 = vmatpush.msra.mxu0 %v4616
  %5617 = vmatpush.msra.mxu0 %v4612
  %5618 = vmatpush.msra.mxu0 %v4608
  %5619 = vmatpush.msra.mxu0 %v4604
  %5620 = vmatpush.msra.mxu0 %v4600
  %5621 = vmatpush.msra.mxu0 %v4596
  %5622 = vmatpush.msra.mxu0 %v4592
  %5623 = vmatpush.msra.mxu0 %v4588
  %5624 = vmatpush.msra.mxu0 %v4584
  %5625 = vmatpush.msra.mxu0 %v4580
  %5626 = vmatpush.msra.mxu0 %v4576
  %5627 = vmatpush.msra.mxu0 %v4572
  %5628 = vmatpush.msra.mxu0 %v4568
  %5629 = vmatpush.msra.mxu0 %v4564
  %5630 = vmatmul.f32.gmra.mxu0 %v47
  %v5631 = vpop.f32.mrf.mxu0
  %v5632 = vadd.f32 %v5612, %v5631
  %5633 = vdwg.mxu0
  %5634 = vmatpush.msra.mxu0 %v4688
  %5635 = vmatpush.msra.mxu0 %v4684
  %5636 = vmatpush.msra.mxu0 %v4680
  %5637 = vmatpush.msra.mxu0 %v4676
  %5638 = vmatpush.msra.mxu0 %v4672
  %5639 = vmatpush.msra.mxu0 %v4668
  %5640 = vmatpush.msra.mxu0 %v4664
  %5641 = vmatpush.msra.mxu0 %v4660
  %5642 = vmatpush.msra.mxu0 %v4656
  %5643 = vmatpush.msra.mxu0 %v4652
  %5644 = vmatpush.msra.mxu0 %v4648
  %5645 = vmatpush.msra.mxu0 %v4644
  %5646 = vmatpush.msra.mxu0 %v4640
  %5647 = vmatpush.msra.mxu0 %v4636
  %5648 = vmatpush.msra.mxu0 %v4632
  %5649 = vmatpush.msra.mxu0 %v4628
  %5650 = vmatmul.f32.gmra.mxu0 %v48
  %v5651 = vpop.f32.mrf.mxu0
  %v5652 = vadd.f32 %v5632, %v5651
  %5653 = vdwg.mxu0
  %5654 = vmatpush.msra.mxu0 %v4752
  %5655 = vmatpush.msra.mxu0 %v4748
  %5656 = vmatpush.msra.mxu0 %v4744
  %5657 = vmatpush.msra.mxu0 %v4740
  %5658 = vmatpush.msra.mxu0 %v4736
  %5659 = vmatpush.msra.mxu0 %v4732
  %5660 = vmatpush.msra.mxu0 %v4728
  %5661 = vmatpush.msra.mxu0 %v4724
  %5662 = vmatpush.msra.mxu0 %v4720
  %5663 = vmatpush.msra.mxu0 %v4716
  %5664 = vmatpush.msra.mxu0 %v4712
  %5665 = vmatpush.msra.mxu0 %v4708
  %5666 = vmatpush.msra.mxu0 %v4704
  %5667 = vmatpush.msra.mxu0 %v4700
  %5668 = vmatpush.msra.mxu0 %v4696
  %5669 = vmatpush.msra.mxu0 %v4692
  %5670 = vmatmul.f32.gmra.mxu0 %v49
  %v5671 = vpop.f32.mrf.mxu0
  %v5672 = vadd.f32 %v5652, %v5671
  %5673 = vdwg.mxu0
  %5674 = vmatpush.msra.mxu0 %v4816
  %5675 = vmatpush.msra.mxu0 %v4812
  %5676 = vmatpush.msra.mxu0 %v4808
  %5677 = vmatpush.msra.mxu0 %v4804
  %5678 = vmatpush.msra.mxu0 %v4800
  %5679 = vmatpush.msra.mxu0 %v4796
  %5680 = vmatpush.msra.mxu0 %v4792
  %5681 = vmatpush.msra.mxu0 %v4788
  %5682 = vmatpush.msra.mxu0 %v4784
  %5683 = vmatpush.msra.mxu0 %v4780
  %5684 = vmatpush.msra.mxu0 %v4776
  %5685 = vmatpush.msra.mxu0 %v4772
  %5686 = vmatpush.msra.mxu0 %v4768
  %5687 = vmatpush.msra.mxu0 %v4764
  %5688 = vmatpush.msra.mxu0 %v4760
  %5689 = vmatpush.msra.mxu0 %v4756
  %5690 = vmatmul.f32.gmra.mxu0 %v50
  %v5691 = vpop.f32.mrf.mxu0
  %v5692 = vadd.f32 %v5672, %v5691
  %5693 = vdwg.mxu0
  %5694 = vmatpush.msra.mxu0 %v4880
  %5695 = vmatpush.msra.mxu0 %v4876
  %5696 = vmatpush.msra.mxu0 %v4872
  %5697 = vmatpush.msra.mxu0 %v4868
  %5698 = vmatpush.msra.mxu0 %v4864
  %5699 = vmatpush.msra.mxu0 %v4860
  %5700 = vmatpush.msra.mxu0 %v4856
  %5701 = vmatpush.msra.mxu0 %v4852
  %5702 = vmatpush.msra.mxu0 %v4848
  %5703 = vmatpush.msra.mxu0 %v4844
  %5704 = vmatpush.msra.mxu0 %v4840
  %5705 = vmatpush.msra.mxu0 %v4836
  %5706 = vmatpush.msra.mxu0 %v4832
  %5707 = vmatpush.msra.mxu0 %v4828
  %5708 = vmatpush.msra.mxu0 %v4824
  %5709 = vmatpush.msra.mxu0 %v4820
  %5710 = vmatmul.f32.gmra.mxu0 %v51
  %v5711 = vpop.f32.mrf.mxu0
  %v5712 = vadd.f32 %v5692, %v5711
  %5713 = vdwg.mxu0
  %5714 = vmatpush.msra.mxu0 %v4944
  %5715 = vmatpush.msra.mxu0 %v4940
  %5716 = vmatpush.msra.mxu0 %v4936
  %5717 = vmatpush.msra.mxu0 %v4932
  %5718 = vmatpush.msra.mxu0 %v4928
  %5719 = vmatpush.msra.mxu0 %v4924
  %5720 = vmatpush.msra.mxu0 %v4920
  %5721 = vmatpush.msra.mxu0 %v4916
  %5722 = vmatpush.msra.mxu0 %v4912
  %5723 = vmatpush.msra.mxu0 %v4908
  %5724 = vmatpush.msra.mxu0 %v4904
  %5725 = vmatpush.msra.mxu0 %v4900
  %5726 = vmatpush.msra.mxu0 %v4896
  %5727 = vmatpush.msra.mxu0 %v4892
  %5728 = vmatpush.msra.mxu0 %v4888
  %5729 = vmatpush.msra.mxu0 %v4884
  %5730 = vmatmul.f32.gmra.mxu0 %v52
  %v5731 = vpop.f32.mrf.mxu0
  %v5732 = vadd.f32 %v5712, %v5731
  %5733 = vdwg.mxu0
  %5734 = vmatpush.msra.mxu0 %v5008
  %5735 = vmatpush.msra.mxu0 %v5004
  %5736 = vmatpush.msra.mxu0 %v5000
  %5737 = vmatpush.msra.mxu0 %v4996
  %5738 = vmatpush.msra.mxu0 %v4992
  %5739 = vmatpush.msra.mxu0 %v4988
  %5740 = vmatpush.msra.mxu0 %v4984
  %5741 = vmatpush.msra.mxu0 %v4980
  %5742 = vmatpush.msra.mxu0 %v4976
  %5743 = vmatpush.msra.mxu0 %v4972
  %5744 = vmatpush.msra.mxu0 %v4968
  %5745 = vmatpush.msra.mxu0 %v4964
  %5746 = vmatpush.msra.mxu0 %v4960
  %5747 = vmatpush.msra.mxu0 %v4956
  %5748 = vmatpush.msra.mxu0 %v4952
  %5749 = vmatpush.msra.mxu0 %v4948
  %5750 = vmatmul.f32.gmra.mxu0 %v53
  %v5751 = vpop.f32.mrf.mxu0
  %v5752 = vadd.f32 %v5732, %v5751
  %5753 = vdwg.mxu0
  %5754 = vmatpush.msra.mxu0 %v5072
  %5755 = vmatpush.msra.mxu0 %v5068
  %5756 = vmatpush.msra.mxu0 %v5064
  %5757 = vmatpush.msra.mxu0 %v5060
  %5758 = vmatpush.msra.mxu0 %v5056
  %5759 = vmatpush.msra.mxu0 %v5052
  %5760 = vmatpush.msra.mxu0 %v5048
  %5761 = vmatpush.msra.mxu0 %v5044
  %5762 = vmatpush.msra.mxu0 %v5040
  %5763 = vmatpush.msra.mxu0 %v5036
  %5764 = vmatpush.msra.mxu0 %v5032
  %5765 = vmatpush.msra.mxu0 %v5028
  %5766 = vmatpush.msra.mxu0 %v5024
  %5767 = vmatpush.msra.mxu0 %v5020
  %5768 = vmatpush.msra.mxu0 %v5016
  %5769 = vmatpush.msra.mxu0 %v5012
  %5770 = vmatmul.f32.gmra.mxu0 %v54
  %v5771 = vpop.f32.mrf.mxu0
  %v5772 = vadd.f32 %v5752, %v5771
  %5773 = vdwg.mxu0
  %5774 = vmatpush.msra.mxu0 %v5136
  %5775 = vmatpush.msra.mxu0 %v5132
  %5776 = vmatpush.msra.mxu0 %v5128
  %5777 = vmatpush.msra.mxu0 %v5124
  %5778 = vmatpush.msra.mxu0 %v5120
  %5779 = vmatpush.msra.mxu0 %v5116
  %5780 = vmatpush.msra.mxu0 %v5112
  %5781 = vmatpush.msra.mxu0 %v5108
  %5782 = vmatpush.msra.mxu0 %v5104
  %5783 = vmatpush.msra.mxu0 %v5100
  %5784 = vmatpush.msra.mxu0 %v5096
  %5785 = vmatpush.msra.mxu0 %v5092
  %5786 = vmatpush.msra.mxu0 %v5088
  %5787 = vmatpush.msra.mxu0 %v5084
  %5788 = vmatpush.msra.mxu0 %v5080
  %5789 = vmatpush.msra.mxu0 %v5076
  %5790 = vmatmul.f32.gmra.mxu0 %v55
  %v5791 = vpop.f32.mrf.mxu0
  %v5792 = vadd.f32 %v5772, %v5791
  %5793 = vdwg.mxu0
  %5794 = vmatpush.msra.mxu0 %v5200
  %5795 = vmatpush.msra.mxu0 %v5196
  %5796 = vmatpush.msra.mxu0 %v5192
  %5797 = vmatpush.msra.mxu0 %v5188
  %5798 = vmatpush.msra.mxu0 %v5184
  %5799 = vmatpush.msra.mxu0 %v5180
  %5800 = vmatpush.msra.mxu0 %v5176
  %5801 = vmatpush.msra.mxu0 %v5172
  %5802 = vmatpush.msra.mxu0 %v5168
  %5803 = vmatpush.msra.mxu0 %v5164
  %5804 = vmatpush.msra.mxu0 %v5160
  %5805 = vmatpush.msra.mxu0 %v5156
  %5806 = vmatpush.msra.mxu0 %v5152
  %5807 = vmatpush.msra.mxu0 %v5148
  %5808 = vmatpush.msra.mxu0 %v5144
  %5809 = vmatpush.msra.mxu0 %v5140
  %5810 = vmatmul.f32.gmra.mxu0 %v56
  %v5811 = vpop.f32.mrf.mxu0
  %v5812 = vadd.f32 %v5792, %v5811
  %5813 = vdwg.mxu0
  %5814 = vmatpush.msra.mxu0 %v5264
  %5815 = vmatpush.msra.mxu0 %v5260
  %5816 = vmatpush.msra.mxu0 %v5256
  %5817 = vmatpush.msra.mxu0 %v5252
  %5818 = vmatpush.msra.mxu0 %v5248
  %5819 = vmatpush.msra.mxu0 %v5244
  %5820 = vmatpush.msra.mxu0 %v5240
  %5821 = vmatpush.msra.mxu0 %v5236
  %5822 = vmatpush.msra.mxu0 %v5232
  %5823 = vmatpush.msra.mxu0 %v5228
  %5824 = vmatpush.msra.mxu0 %v5224
  %5825 = vmatpush.msra.mxu0 %v5220
  %5826 = vmatpush.msra.mxu0 %v5216
  %5827 = vmatpush.msra.mxu0 %v5212
  %5828 = vmatpush.msra.mxu0 %v5208
  %5829 = vmatpush.msra.mxu0 %v5204
  %5830 = vmatmul.f32.gmra.mxu0 %v57
  %v5831 = vpop.f32.mrf.mxu0
  %v5832 = vadd.f32 %v5812, %v5831
  %5833 = vdwg.mxu0
  %5834 = vmatpush.msra.mxu0 %v5328
  %5835 = vmatpush.msra.mxu0 %v5324
  %5836 = vmatpush.msra.mxu0 %v5320
  %5837 = vmatpush.msra.mxu0 %v5316
  %5838 = vmatpush.msra.mxu0 %v5312
  %5839 = vmatpush.msra.mxu0 %v5308
  %5840 = vmatpush.msra.mxu0 %v5304
  %5841 = vmatpush.msra.mxu0 %v5300
  %5842 = vmatpush.msra.mxu0 %v5296
  %5843 = vmatpush.msra.mxu0 %v5292
  %5844 = vmatpush.msra.mxu0 %v5288
  %5845 = vmatpush.msra.mxu0 %v5284
  %5846 = vmatpush.msra.mxu0 %v5280
  %5847 = vmatpush.msra.mxu0 %v5276
  %5848 = vmatpush.msra.mxu0 %v5272
  %5849 = vmatpush.msra.mxu0 %v5268
  %5850 = vmatmul.f32.gmra.mxu0 %v58
  %v5851 = vpop.f32.mrf.mxu0
  %v5852 = vadd.f32 %v5832, %v5851
  %5853 = vdwg.mxu0
  %5854 = vmatpush.msra.mxu0 0.0
  %5855 = vmatpush.msra.mxu0 0.0
  %5856 = vmatpush.msra.mxu0 0.0
  %5857 = vmatpush.msra.mxu0 0.0
  %5858 = vmatpush.msra.mxu0 0.0
  %5859 = vmatpush.msra.mxu0 0.0
  %5860 = vmatpush.msra.mxu0 0.0
  %5861 = vmatpush.msra.mxu0 0.0
  %5862 = vmatpush.msra.mxu0 %v5360
  %5863 = vmatpush.msra.mxu0 %v5356
  %5864 = vmatpush.msra.mxu0 %v5352
  %5865 = vmatpush.msra.mxu0 %v5348
  %5866 = vmatpush.msra.mxu0 %v5344
  %5867 = vmatpush.msra.mxu0 %v5340
  %5868 = vmatpush.msra.mxu0 %v5336
  %5869 = vmatpush.msra.mxu0 %v5332
  %5870 = vmatmul.f32.gmra.mxu0 %v1640
  %v5871 = vpop.f32.mrf.mxu0
  %v5872 = vadd.f32 %v5852, %v5871
  %5873 = vdwg.mxu0
  %5874 = vmatpush.msra.mxu0 %v3857
  %5875 = vmatpush.msra.mxu0 %v3853
  %5876 = vmatpush.msra.mxu0 %v3849
  %5877 = vmatpush.msra.mxu0 %v3845
  %5878 = vmatpush.msra.mxu0 %v3841
  %5879 = vmatpush.msra.mxu0 %v3837
  %5880 = vmatpush.msra.mxu0 %v3833
  %5881 = vmatpush.msra.mxu0 %v3829
  %5882 = vmatpush.msra.mxu0 %v3825
  %5883 = vmatpush.msra.mxu0 %v3821
  %5884 = vmatpush.msra.mxu0 %v3817
  %5885 = vmatpush.msra.mxu0 %v3813
  %5886 = vmatpush.msra.mxu0 %v3809
  %5887 = vmatpush.msra.mxu0 %v3805
  %5888 = vmatpush.msra.mxu0 %v3801
  %5889 = vmatpush.msra.mxu0 %v3797
  %5890 = vmatmul.f32.gmra.mxu0 %v35
  %v5891 = vpop.f32.mrf.mxu0
  %v5892 = vadd.f32 %v5367, %v5891
  %5893 = vdwg.mxu0
  %5894 = vmatpush.msra.mxu0 %v3921
  %5895 = vmatpush.msra.mxu0 %v3917
  %5896 = vmatpush.msra.mxu0 %v3913
  %5897 = vmatpush.msra.mxu0 %v3909
  %5898 = vmatpush.msra.mxu0 %v3905
  %5899 = vmatpush.msra.mxu0 %v3901
  %5900 = vmatpush.msra.mxu0 %v3897
  %5901 = vmatpush.msra.mxu0 %v3893
  %5902 = vmatpush.msra.mxu0 %v3889
  %5903 = vmatpush.msra.mxu0 %v3885
  %5904 = vmatpush.msra.mxu0 %v3881
  %5905 = vmatpush.msra.mxu0 %v3877
  %5906 = vmatpush.msra.mxu0 %v3873
  %5907 = vmatpush.msra.mxu0 %v3869
  %5908 = vmatpush.msra.mxu0 %v3865
  %5909 = vmatpush.msra.mxu0 %v3861
  %5910 = vmatmul.f32.gmra.mxu0 %v36
  %v5911 = vpop.f32.mrf.mxu0
  %v5912 = vadd.f32 %v5892, %v5911
  %5913 = vdwg.mxu0
  %5914 = vmatpush.msra.mxu0 %v3985
  %5915 = vmatpush.msra.mxu0 %v3981
  %5916 = vmatpush.msra.mxu0 %v3977
  %5917 = vmatpush.msra.mxu0 %v3973
  %5918 = vmatpush.msra.mxu0 %v3969
  %5919 = vmatpush.msra.mxu0 %v3965
  %5920 = vmatpush.msra.mxu0 %v3961
  %5921 = vmatpush.msra.mxu0 %v3957
  %5922 = vmatpush.msra.mxu0 %v3953
  %5923 = vmatpush.msra.mxu0 %v3949
  %5924 = vmatpush.msra.mxu0 %v3945
  %5925 = vmatpush.msra.mxu0 %v3941
  %5926 = vmatpush.msra.mxu0 %v3937
  %5927 = vmatpush.msra.mxu0 %v3933
  %5928 = vmatpush.msra.mxu0 %v3929
  %5929 = vmatpush.msra.mxu0 %v3925
  %5930 = vmatmul.f32.gmra.mxu0 %v37
  %v5931 = vpop.f32.mrf.mxu0
  %v5932 = vadd.f32 %v5912, %v5931
  %5933 = vdwg.mxu0
  %5934 = vmatpush.msra.mxu0 %v4049
  %5935 = vmatpush.msra.mxu0 %v4045
  %5936 = vmatpush.msra.mxu0 %v4041
  %5937 = vmatpush.msra.mxu0 %v4037
  %5938 = vmatpush.msra.mxu0 %v4033
  %5939 = vmatpush.msra.mxu0 %v4029
  %5940 = vmatpush.msra.mxu0 %v4025
  %5941 = vmatpush.msra.mxu0 %v4021
  %5942 = vmatpush.msra.mxu0 %v4017
  %5943 = vmatpush.msra.mxu0 %v4013
  %5944 = vmatpush.msra.mxu0 %v4009
  %5945 = vmatpush.msra.mxu0 %v4005
  %5946 = vmatpush.msra.mxu0 %v4001
  %5947 = vmatpush.msra.mxu0 %v3997
  %5948 = vmatpush.msra.mxu0 %v3993
  %5949 = vmatpush.msra.mxu0 %v3989
  %5950 = vmatmul.f32.gmra.mxu0 %v38
  %v5951 = vpop.f32.mrf.mxu0
  %v5952 = vadd.f32 %v5932, %v5951
  %5953 = vdwg.mxu0
  %5954 = vmatpush.msra.mxu0 %v4113
  %5955 = vmatpush.msra.mxu0 %v4109
  %5956 = vmatpush.msra.mxu0 %v4105
  %5957 = vmatpush.msra.mxu0 %v4101
  %5958 = vmatpush.msra.mxu0 %v4097
  %5959 = vmatpush.msra.mxu0 %v4093
  %5960 = vmatpush.msra.mxu0 %v4089
  %5961 = vmatpush.msra.mxu0 %v4085
  %5962 = vmatpush.msra.mxu0 %v4081
  %5963 = vmatpush.msra.mxu0 %v4077
  %5964 = vmatpush.msra.mxu0 %v4073
  %5965 = vmatpush.msra.mxu0 %v4069
  %5966 = vmatpush.msra.mxu0 %v4065
  %5967 = vmatpush.msra.mxu0 %v4061
  %5968 = vmatpush.msra.mxu0 %v4057
  %5969 = vmatpush.msra.mxu0 %v4053
  %5970 = vmatmul.f32.gmra.mxu0 %v39
  %v5971 = vpop.f32.mrf.mxu0
  %v5972 = vadd.f32 %v5952, %v5971
  %5973 = vdwg.mxu0
  %5974 = vmatpush.msra.mxu0 %v4177
  %5975 = vmatpush.msra.mxu0 %v4173
  %5976 = vmatpush.msra.mxu0 %v4169
  %5977 = vmatpush.msra.mxu0 %v4165
  %5978 = vmatpush.msra.mxu0 %v4161
  %5979 = vmatpush.msra.mxu0 %v4157
  %5980 = vmatpush.msra.mxu0 %v4153
  %5981 = vmatpush.msra.mxu0 %v4149
  %5982 = vmatpush.msra.mxu0 %v4145
  %5983 = vmatpush.msra.mxu0 %v4141
  %5984 = vmatpush.msra.mxu0 %v4137
  %5985 = vmatpush.msra.mxu0 %v4133
  %5986 = vmatpush.msra.mxu0 %v4129
  %5987 = vmatpush.msra.mxu0 %v4125
  %5988 = vmatpush.msra.mxu0 %v4121
  %5989 = vmatpush.msra.mxu0 %v4117
  %5990 = vmatmul.f32.gmra.mxu0 %v40
  %v5991 = vpop.f32.mrf.mxu0
  %v5992 = vadd.f32 %v5972, %v5991
  %5993 = vdwg.mxu0
  %5994 = vmatpush.msra.mxu0 %v4241
  %5995 = vmatpush.msra.mxu0 %v4237
  %5996 = vmatpush.msra.mxu0 %v4233
  %5997 = vmatpush.msra.mxu0 %v4229
  %5998 = vmatpush.msra.mxu0 %v4225
  %5999 = vmatpush.msra.mxu0 %v4221
  %6000 = vmatpush.msra.mxu0 %v4217
  %6001 = vmatpush.msra.mxu0 %v4213
  %6002 = vmatpush.msra.mxu0 %v4209
  %6003 = vmatpush.msra.mxu0 %v4205
  %6004 = vmatpush.msra.mxu0 %v4201
  %6005 = vmatpush.msra.mxu0 %v4197
  %6006 = vmatpush.msra.mxu0 %v4193
  %6007 = vmatpush.msra.mxu0 %v4189
  %6008 = vmatpush.msra.mxu0 %v4185
  %6009 = vmatpush.msra.mxu0 %v4181
  %6010 = vmatmul.f32.gmra.mxu0 %v41
  %v6011 = vpop.f32.mrf.mxu0
  %v6012 = vadd.f32 %v5992, %v6011
  %6013 = vdwg.mxu0
  %6014 = vmatpush.msra.mxu0 %v4305
  %6015 = vmatpush.msra.mxu0 %v4301
  %6016 = vmatpush.msra.mxu0 %v4297
  %6017 = vmatpush.msra.mxu0 %v4293
  %6018 = vmatpush.msra.mxu0 %v4289
  %6019 = vmatpush.msra.mxu0 %v4285
  %6020 = vmatpush.msra.mxu0 %v4281
  %6021 = vmatpush.msra.mxu0 %v4277
  %6022 = vmatpush.msra.mxu0 %v4273
  %6023 = vmatpush.msra.mxu0 %v4269
  %6024 = vmatpush.msra.mxu0 %v4265
  %6025 = vmatpush.msra.mxu0 %v4261
  %6026 = vmatpush.msra.mxu0 %v4257
  %6027 = vmatpush.msra.mxu0 %v4253
  %6028 = vmatpush.msra.mxu0 %v4249
  %6029 = vmatpush.msra.mxu0 %v4245
  %6030 = vmatmul.f32.gmra.mxu0 %v42
  %v6031 = vpop.f32.mrf.mxu0
  %v6032 = vadd.f32 %v6012, %v6031
  %6033 = vdwg.mxu0
  %6034 = vmatpush.msra.mxu0 %v4369
  %6035 = vmatpush.msra.mxu0 %v4365
  %6036 = vmatpush.msra.mxu0 %v4361
  %6037 = vmatpush.msra.mxu0 %v4357
  %6038 = vmatpush.msra.mxu0 %v4353
  %6039 = vmatpush.msra.mxu0 %v4349
  %6040 = vmatpush.msra.mxu0 %v4345
  %6041 = vmatpush.msra.mxu0 %v4341
  %6042 = vmatpush.msra.mxu0 %v4337
  %6043 = vmatpush.msra.mxu0 %v4333
  %6044 = vmatpush.msra.mxu0 %v4329
  %6045 = vmatpush.msra.mxu0 %v4325
  %6046 = vmatpush.msra.mxu0 %v4321
  %6047 = vmatpush.msra.mxu0 %v4317
  %6048 = vmatpush.msra.mxu0 %v4313
  %6049 = vmatpush.msra.mxu0 %v4309
  %6050 = vmatmul.f32.gmra.mxu0 %v43
  %v6051 = vpop.f32.mrf.mxu0
  %v6052 = vadd.f32 %v6032, %v6051
  %6053 = vdwg.mxu0
  %6054 = vmatpush.msra.mxu0 %v4433
  %6055 = vmatpush.msra.mxu0 %v4429
  %6056 = vmatpush.msra.mxu0 %v4425
  %6057 = vmatpush.msra.mxu0 %v4421
  %6058 = vmatpush.msra.mxu0 %v4417
  %6059 = vmatpush.msra.mxu0 %v4413
  %6060 = vmatpush.msra.mxu0 %v4409
  %6061 = vmatpush.msra.mxu0 %v4405
  %6062 = vmatpush.msra.mxu0 %v4401
  %6063 = vmatpush.msra.mxu0 %v4397
  %6064 = vmatpush.msra.mxu0 %v4393
  %6065 = vmatpush.msra.mxu0 %v4389
  %6066 = vmatpush.msra.mxu0 %v4385
  %6067 = vmatpush.msra.mxu0 %v4381
  %6068 = vmatpush.msra.mxu0 %v4377
  %6069 = vmatpush.msra.mxu0 %v4373
  %6070 = vmatmul.f32.gmra.mxu0 %v44
  %v6071 = vpop.f32.mrf.mxu0
  %v6072 = vadd.f32 %v6052, %v6071
  %6073 = vdwg.mxu0
  %6074 = vmatpush.msra.mxu0 %v4497
  %6075 = vmatpush.msra.mxu0 %v4493
  %6076 = vmatpush.msra.mxu0 %v4489
  %6077 = vmatpush.msra.mxu0 %v4485
  %6078 = vmatpush.msra.mxu0 %v4481
  %6079 = vmatpush.msra.mxu0 %v4477
  %6080 = vmatpush.msra.mxu0 %v4473
  %6081 = vmatpush.msra.mxu0 %v4469
  %6082 = vmatpush.msra.mxu0 %v4465
  %6083 = vmatpush.msra.mxu0 %v4461
  %6084 = vmatpush.msra.mxu0 %v4457
  %6085 = vmatpush.msra.mxu0 %v4453
  %6086 = vmatpush.msra.mxu0 %v4449
  %6087 = vmatpush.msra.mxu0 %v4445
  %6088 = vmatpush.msra.mxu0 %v4441
  %6089 = vmatpush.msra.mxu0 %v4437
  %6090 = vmatmul.f32.gmra.mxu0 %v45
  %v6091 = vpop.f32.mrf.mxu0
  %v6092 = vadd.f32 %v6072, %v6091
  %6093 = vdwg.mxu0
  %6094 = vmatpush.msra.mxu0 %v4561
  %6095 = vmatpush.msra.mxu0 %v4557
  %6096 = vmatpush.msra.mxu0 %v4553
  %6097 = vmatpush.msra.mxu0 %v4549
  %6098 = vmatpush.msra.mxu0 %v4545
  %6099 = vmatpush.msra.mxu0 %v4541
  %6100 = vmatpush.msra.mxu0 %v4537
  %6101 = vmatpush.msra.mxu0 %v4533
  %6102 = vmatpush.msra.mxu0 %v4529
  %6103 = vmatpush.msra.mxu0 %v4525
  %6104 = vmatpush.msra.mxu0 %v4521
  %6105 = vmatpush.msra.mxu0 %v4517
  %6106 = vmatpush.msra.mxu0 %v4513
  %6107 = vmatpush.msra.mxu0 %v4509
  %6108 = vmatpush.msra.mxu0 %v4505
  %6109 = vmatpush.msra.mxu0 %v4501
  %6110 = vmatmul.f32.gmra.mxu0 %v46
  %v6111 = vpop.f32.mrf.mxu0
  %v6112 = vadd.f32 %v6092, %v6111
  %6113 = vdwg.mxu0
  %6114 = vmatpush.msra.mxu0 %v4625
  %6115 = vmatpush.msra.mxu0 %v4621
  %6116 = vmatpush.msra.mxu0 %v4617
  %6117 = vmatpush.msra.mxu0 %v4613
  %6118 = vmatpush.msra.mxu0 %v4609
  %6119 = vmatpush.msra.mxu0 %v4605
  %6120 = vmatpush.msra.mxu0 %v4601
  %6121 = vmatpush.msra.mxu0 %v4597
  %6122 = vmatpush.msra.mxu0 %v4593
  %6123 = vmatpush.msra.mxu0 %v4589
  %6124 = vmatpush.msra.mxu0 %v4585
  %6125 = vmatpush.msra.mxu0 %v4581
  %6126 = vmatpush.msra.mxu0 %v4577
  %6127 = vmatpush.msra.mxu0 %v4573
  %6128 = vmatpush.msra.mxu0 %v4569
  %6129 = vmatpush.msra.mxu0 %v4565
  %6130 = vmatmul.f32.gmra.mxu0 %v47
  %v6131 = vpop.f32.mrf.mxu0
  %v6132 = vadd.f32 %v6112, %v6131
  %6133 = vdwg.mxu0
  %6134 = vmatpush.msra.mxu0 %v4689
  %6135 = vmatpush.msra.mxu0 %v4685
  %6136 = vmatpush.msra.mxu0 %v4681
  %6137 = vmatpush.msra.mxu0 %v4677
  %6138 = vmatpush.msra.mxu0 %v4673
  %6139 = vmatpush.msra.mxu0 %v4669
  %6140 = vmatpush.msra.mxu0 %v4665
  %6141 = vmatpush.msra.mxu0 %v4661
  %6142 = vmatpush.msra.mxu0 %v4657
  %6143 = vmatpush.msra.mxu0 %v4653
  %6144 = vmatpush.msra.mxu0 %v4649
  %6145 = vmatpush.msra.mxu0 %v4645
  %6146 = vmatpush.msra.mxu0 %v4641
  %6147 = vmatpush.msra.mxu0 %v4637
  %6148 = vmatpush.msra.mxu0 %v4633
  %6149 = vmatpush.msra.mxu0 %v4629
  %6150 = vmatmul.f32.gmra.mxu0 %v48
  %v6151 = vpop.f32.mrf.mxu0
  %v6152 = vadd.f32 %v6132, %v6151
  %6153 = vdwg.mxu0
  %6154 = vmatpush.msra.mxu0 %v4753
  %6155 = vmatpush.msra.mxu0 %v4749
  %6156 = vmatpush.msra.mxu0 %v4745
  %6157 = vmatpush.msra.mxu0 %v4741
  %6158 = vmatpush.msra.mxu0 %v4737
  %6159 = vmatpush.msra.mxu0 %v4733
  %6160 = vmatpush.msra.mxu0 %v4729
  %6161 = vmatpush.msra.mxu0 %v4725
  %6162 = vmatpush.msra.mxu0 %v4721
  %6163 = vmatpush.msra.mxu0 %v4717
  %6164 = vmatpush.msra.mxu0 %v4713
  %6165 = vmatpush.msra.mxu0 %v4709
  %6166 = vmatpush.msra.mxu0 %v4705
  %6167 = vmatpush.msra.mxu0 %v4701
  %6168 = vmatpush.msra.mxu0 %v4697
  %6169 = vmatpush.msra.mxu0 %v4693
  %6170 = vmatmul.f32.gmra.mxu0 %v49
  %v6171 = vpop.f32.mrf.mxu0
  %v6172 = vadd.f32 %v6152, %v6171
  %6173 = vdwg.mxu0
  %6174 = vmatpush.msra.mxu0 %v4817
  %6175 = vmatpush.msra.mxu0 %v4813
  %6176 = vmatpush.msra.mxu0 %v4809
  %6177 = vmatpush.msra.mxu0 %v4805
  %6178 = vmatpush.msra.mxu0 %v4801
  %6179 = vmatpush.msra.mxu0 %v4797
  %6180 = vmatpush.msra.mxu0 %v4793
  %6181 = vmatpush.msra.mxu0 %v4789
  %6182 = vmatpush.msra.mxu0 %v4785
  %6183 = vmatpush.msra.mxu0 %v4781
  %6184 = vmatpush.msra.mxu0 %v4777
  %6185 = vmatpush.msra.mxu0 %v4773
  %6186 = vmatpush.msra.mxu0 %v4769
  %6187 = vmatpush.msra.mxu0 %v4765
  %6188 = vmatpush.msra.mxu0 %v4761
  %6189 = vmatpush.msra.mxu0 %v4757
  %6190 = vmatmul.f32.gmra.mxu0 %v50
  %v6191 = vpop.f32.mrf.mxu0
  %v6192 = vadd.f32 %v6172, %v6191
  %6193 = vdwg.mxu0
  %6194 = vmatpush.msra.mxu0 %v4881
  %6195 = vmatpush.msra.mxu0 %v4877
  %6196 = vmatpush.msra.mxu0 %v4873
  %6197 = vmatpush.msra.mxu0 %v4869
  %6198 = vmatpush.msra.mxu0 %v4865
  %6199 = vmatpush.msra.mxu0 %v4861
  %6200 = vmatpush.msra.mxu0 %v4857
  %6201 = vmatpush.msra.mxu0 %v4853
  %6202 = vmatpush.msra.mxu0 %v4849
  %6203 = vmatpush.msra.mxu0 %v4845
  %6204 = vmatpush.msra.mxu0 %v4841
  %6205 = vmatpush.msra.mxu0 %v4837
  %6206 = vmatpush.msra.mxu0 %v4833
  %6207 = vmatpush.msra.mxu0 %v4829
  %6208 = vmatpush.msra.mxu0 %v4825
  %6209 = vmatpush.msra.mxu0 %v4821
  %6210 = vmatmul.f32.gmra.mxu0 %v51
  %v6211 = vpop.f32.mrf.mxu0
  %v6212 = vadd.f32 %v6192, %v6211
  %6213 = vdwg.mxu0
  %6214 = vmatpush.msra.mxu0 %v4945
  %6215 = vmatpush.msra.mxu0 %v4941
  %6216 = vmatpush.msra.mxu0 %v4937
  %6217 = vmatpush.msra.mxu0 %v4933
  %6218 = vmatpush.msra.mxu0 %v4929
  %6219 = vmatpush.msra.mxu0 %v4925
  %6220 = vmatpush.msra.mxu0 %v4921
  %6221 = vmatpush.msra.mxu0 %v4917
  %6222 = vmatpush.msra.mxu0 %v4913
  %6223 = vmatpush.msra.mxu0 %v4909
  %6224 = vmatpush.msra.mxu0 %v4905
  %6225 = vmatpush.msra.mxu0 %v4901
  %6226 = vmatpush.msra.mxu0 %v4897
  %6227 = vmatpush.msra.mxu0 %v4893
  %6228 = vmatpush.msra.mxu0 %v4889
  %6229 = vmatpush.msra.mxu0 %v4885
  %6230 = vmatmul.f32.gmra.mxu0 %v52
  %v6231 = vpop.f32.mrf.mxu0
  %v6232 = vadd.f32 %v6212, %v6231
  %6233 = vdwg.mxu0
  %6234 = vmatpush.msra.mxu0 %v5009
  %6235 = vmatpush.msra.mxu0 %v5005
  %6236 = vmatpush.msra.mxu0 %v5001
  %6237 = vmatpush.msra.mxu0 %v4997
  %6238 = vmatpush.msra.mxu0 %v4993
  %6239 = vmatpush.msra.mxu0 %v4989
  %6240 = vmatpush.msra.mxu0 %v4985
  %6241 = vmatpush.msra.mxu0 %v4981
  %6242 = vmatpush.msra.mxu0 %v4977
  %6243 = vmatpush.msra.mxu0 %v4973
  %6244 = vmatpush.msra.mxu0 %v4969
  %6245 = vmatpush.msra.mxu0 %v4965
  %6246 = vmatpush.msra.mxu0 %v4961
  %6247 = vmatpush.msra.mxu0 %v4957
  %6248 = vmatpush.msra.mxu0 %v4953
  %6249 = vmatpush.msra.mxu0 %v4949
  %6250 = vmatmul.f32.gmra.mxu0 %v53
  %v6251 = vpop.f32.mrf.mxu0
  %v6252 = vadd.f32 %v6232, %v6251
  %6253 = vdwg.mxu0
  %6254 = vmatpush.msra.mxu0 %v5073
  %6255 = vmatpush.msra.mxu0 %v5069
  %6256 = vmatpush.msra.mxu0 %v5065
  %6257 = vmatpush.msra.mxu0 %v5061
  %6258 = vmatpush.msra.mxu0 %v5057
  %6259 = vmatpush.msra.mxu0 %v5053
  %6260 = vmatpush.msra.mxu0 %v5049
  %6261 = vmatpush.msra.mxu0 %v5045
  %6262 = vmatpush.msra.mxu0 %v5041
  %6263 = vmatpush.msra.mxu0 %v5037
  %6264 = vmatpush.msra.mxu0 %v5033
  %6265 = vmatpush.msra.mxu0 %v5029
  %6266 = vmatpush.msra.mxu0 %v5025
  %6267 = vmatpush.msra.mxu0 %v5021
  %6268 = vmatpush.msra.mxu0 %v5017
  %6269 = vmatpush.msra.mxu0 %v5013
  %6270 = vmatmul.f32.gmra.mxu0 %v54
  %v6271 = vpop.f32.mrf.mxu0
  %v6272 = vadd.f32 %v6252, %v6271
  %6273 = vdwg.mxu0
  %6274 = vmatpush.msra.mxu0 %v5137
  %6275 = vmatpush.msra.mxu0 %v5133
  %6276 = vmatpush.msra.mxu0 %v5129
  %6277 = vmatpush.msra.mxu0 %v5125
  %6278 = vmatpush.msra.mxu0 %v5121
  %6279 = vmatpush.msra.mxu0 %v5117
  %6280 = vmatpush.msra.mxu0 %v5113
  %6281 = vmatpush.msra.mxu0 %v5109
  %6282 = vmatpush.msra.mxu0 %v5105
  %6283 = vmatpush.msra.mxu0 %v5101
  %6284 = vmatpush.msra.mxu0 %v5097
  %6285 = vmatpush.msra.mxu0 %v5093
  %6286 = vmatpush.msra.mxu0 %v5089
  %6287 = vmatpush.msra.mxu0 %v5085
  %6288 = vmatpush.msra.mxu0 %v5081
  %6289 = vmatpush.msra.mxu0 %v5077
  %6290 = vmatmul.f32.gmra.mxu0 %v55
  %v6291 = vpop.f32.mrf.mxu0
  %v6292 = vadd.f32 %v6272, %v6291
  %6293 = vdwg.mxu0
  %6294 = vmatpush.msra.mxu0 %v5201
  %6295 = vmatpush.msra.mxu0 %v5197
  %6296 = vmatpush.msra.mxu0 %v5193
  %6297 = vmatpush.msra.mxu0 %v5189
  %6298 = vmatpush.msra.mxu0 %v5185
  %6299 = vmatpush.msra.mxu0 %v5181
  %6300 = vmatpush.msra.mxu0 %v5177
  %6301 = vmatpush.msra.mxu0 %v5173
  %6302 = vmatpush.msra.mxu0 %v5169
  %6303 = vmatpush.msra.mxu0 %v5165
  %6304 = vmatpush.msra.mxu0 %v5161
  %6305 = vmatpush.msra.mxu0 %v5157
  %6306 = vmatpush.msra.mxu0 %v5153
  %6307 = vmatpush.msra.mxu0 %v5149
  %6308 = vmatpush.msra.mxu0 %v5145
  %6309 = vmatpush.msra.mxu0 %v5141
  %6310 = vmatmul.f32.gmra.mxu0 %v56
  %v6311 = vpop.f32.mrf.mxu0
  %v6312 = vadd.f32 %v6292, %v6311
  %6313 = vdwg.mxu0
  %6314 = vmatpush.msra.mxu0 %v5265
  %6315 = vmatpush.msra.mxu0 %v5261
  %6316 = vmatpush.msra.mxu0 %v5257
  %6317 = vmatpush.msra.mxu0 %v5253
  %6318 = vmatpush.msra.mxu0 %v5249
  %6319 = vmatpush.msra.mxu0 %v5245
  %6320 = vmatpush.msra.mxu0 %v5241
  %6321 = vmatpush.msra.mxu0 %v5237
  %6322 = vmatpush.msra.mxu0 %v5233
  %6323 = vmatpush.msra.mxu0 %v5229
  %6324 = vmatpush.msra.mxu0 %v5225
  %6325 = vmatpush.msra.mxu0 %v5221
  %6326 = vmatpush.msra.mxu0 %v5217
  %6327 = vmatpush.msra.mxu0 %v5213
  %6328 = vmatpush.msra.mxu0 %v5209
  %6329 = vmatpush.msra.mxu0 %v5205
  %6330 = vmatmul.f32.gmra.mxu0 %v57
  %v6331 = vpop.f32.mrf.mxu0
  %v6332 = vadd.f32 %v6312, %v6331
  %6333 = vdwg.mxu0
  %6334 = vmatpush.msra.mxu0 %v5329
  %6335 = vmatpush.msra.mxu0 %v5325
  %6336 = vmatpush.msra.mxu0 %v5321
  %6337 = vmatpush.msra.mxu0 %v5317
  %6338 = vmatpush.msra.mxu0 %v5313
  %6339 = vmatpush.msra.mxu0 %v5309
  %6340 = vmatpush.msra.mxu0 %v5305
  %6341 = vmatpush.msra.mxu0 %v5301
  %6342 = vmatpush.msra.mxu0 %v5297
  %6343 = vmatpush.msra.mxu0 %v5293
  %6344 = vmatpush.msra.mxu0 %v5289
  %6345 = vmatpush.msra.mxu0 %v5285
  %6346 = vmatpush.msra.mxu0 %v5281
  %6347 = vmatpush.msra.mxu0 %v5277
  %6348 = vmatpush.msra.mxu0 %v5273
  %6349 = vmatpush.msra.mxu0 %v5269
  %6350 = vmatmul.f32.gmra.mxu0 %v58
  %v6351 = vpop.f32.mrf.mxu0
  %v6352 = vadd.f32 %v6332, %v6351
  %6353 = vdwg.mxu0
  %6354 = vmatpush.msra.mxu0 0.0
  %6355 = vmatpush.msra.mxu0 0.0
  %6356 = vmatpush.msra.mxu0 0.0
  %6357 = vmatpush.msra.mxu0 0.0
  %6358 = vmatpush.msra.mxu0 0.0
  %6359 = vmatpush.msra.mxu0 0.0
  %6360 = vmatpush.msra.mxu0 0.0
  %6361 = vmatpush.msra.mxu0 0.0
  %6362 = vmatpush.msra.mxu0 %v5361
  %6363 = vmatpush.msra.mxu0 %v5357
  %6364 = vmatpush.msra.mxu0 %v5353
  %6365 = vmatpush.msra.mxu0 %v5349
  %6366 = vmatpush.msra.mxu0 %v5345
  %6367 = vmatpush.msra.mxu0 %v5341
  %6368 = vmatpush.msra.mxu0 %v5337
  %6369 = vmatpush.msra.mxu0 %v5333
  %6370 = vmatmul.f32.gmra.mxu0 %v1640
  %v6371 = vpop.f32.mrf.mxu0
  %v6372 = vadd.f32 %v6352, %v6371
  %6373 = vdwg.mxu0
  %6374 = vmatpush.msra.mxu0 %v3858
  %6375 = vmatpush.msra.mxu0 %v3854
  %6376 = vmatpush.msra.mxu0 %v3850
  %6377 = vmatpush.msra.mxu0 %v3846
  %6378 = vmatpush.msra.mxu0 %v3842
  %6379 = vmatpush.msra.mxu0 %v3838
  %6380 = vmatpush.msra.mxu0 %v3834
  %6381 = vmatpush.msra.mxu0 %v3830
  %6382 = vmatpush.msra.mxu0 %v3826
  %6383 = vmatpush.msra.mxu0 %v3822
  %6384 = vmatpush.msra.mxu0 %v3818
  %6385 = vmatpush.msra.mxu0 %v3814
  %6386 = vmatpush.msra.mxu0 %v3810
  %6387 = vmatpush.msra.mxu0 %v3806
  %6388 = vmatpush.msra.mxu0 %v3802
  %6389 = vmatpush.msra.mxu0 %v3798
  %6390 = vmatmul.f32.gmra.mxu0 %v35
  %v6391 = vpop.f32.mrf.mxu0
  %v6392 = vadd.f32 %v5368, %v6391
  %6393 = vdwg.mxu0
  %6394 = vmatpush.msra.mxu0 %v3922
  %6395 = vmatpush.msra.mxu0 %v3918
  %6396 = vmatpush.msra.mxu0 %v3914
  %6397 = vmatpush.msra.mxu0 %v3910
  %6398 = vmatpush.msra.mxu0 %v3906
  %6399 = vmatpush.msra.mxu0 %v3902
  %6400 = vmatpush.msra.mxu0 %v3898
  %6401 = vmatpush.msra.mxu0 %v3894
  %6402 = vmatpush.msra.mxu0 %v3890
  %6403 = vmatpush.msra.mxu0 %v3886
  %6404 = vmatpush.msra.mxu0 %v3882
  %6405 = vmatpush.msra.mxu0 %v3878
  %6406 = vmatpush.msra.mxu0 %v3874
  %6407 = vmatpush.msra.mxu0 %v3870
  %6408 = vmatpush.msra.mxu0 %v3866
  %6409 = vmatpush.msra.mxu0 %v3862
  %6410 = vmatmul.f32.gmra.mxu0 %v36
  %v6411 = vpop.f32.mrf.mxu0
  %v6412 = vadd.f32 %v6392, %v6411
  %6413 = vdwg.mxu0
  %6414 = vmatpush.msra.mxu0 %v3986
  %6415 = vmatpush.msra.mxu0 %v3982
  %6416 = vmatpush.msra.mxu0 %v3978
  %6417 = vmatpush.msra.mxu0 %v3974
  %6418 = vmatpush.msra.mxu0 %v3970
  %6419 = vmatpush.msra.mxu0 %v3966
  %6420 = vmatpush.msra.mxu0 %v3962
  %6421 = vmatpush.msra.mxu0 %v3958
  %6422 = vmatpush.msra.mxu0 %v3954
  %6423 = vmatpush.msra.mxu0 %v3950
  %6424 = vmatpush.msra.mxu0 %v3946
  %6425 = vmatpush.msra.mxu0 %v3942
  %6426 = vmatpush.msra.mxu0 %v3938
  %6427 = vmatpush.msra.mxu0 %v3934
  %6428 = vmatpush.msra.mxu0 %v3930
  %6429 = vmatpush.msra.mxu0 %v3926
  %6430 = vmatmul.f32.gmra.mxu0 %v37
  %v6431 = vpop.f32.mrf.mxu0
  %v6432 = vadd.f32 %v6412, %v6431
  %6433 = vdwg.mxu0
  %6434 = vmatpush.msra.mxu0 %v4050
  %6435 = vmatpush.msra.mxu0 %v4046
  %6436 = vmatpush.msra.mxu0 %v4042
  %6437 = vmatpush.msra.mxu0 %v4038
  %6438 = vmatpush.msra.mxu0 %v4034
  %6439 = vmatpush.msra.mxu0 %v4030
  %6440 = vmatpush.msra.mxu0 %v4026
  %6441 = vmatpush.msra.mxu0 %v4022
  %6442 = vmatpush.msra.mxu0 %v4018
  %6443 = vmatpush.msra.mxu0 %v4014
  %6444 = vmatpush.msra.mxu0 %v4010
  %6445 = vmatpush.msra.mxu0 %v4006
  %6446 = vmatpush.msra.mxu0 %v4002
  %6447 = vmatpush.msra.mxu0 %v3998
  %6448 = vmatpush.msra.mxu0 %v3994
  %6449 = vmatpush.msra.mxu0 %v3990
  %6450 = vmatmul.f32.gmra.mxu0 %v38
  %v6451 = vpop.f32.mrf.mxu0
  %v6452 = vadd.f32 %v6432, %v6451
  %6453 = vdwg.mxu0
  %6454 = vmatpush.msra.mxu0 %v4114
  %6455 = vmatpush.msra.mxu0 %v4110
  %6456 = vmatpush.msra.mxu0 %v4106
  %6457 = vmatpush.msra.mxu0 %v4102
  %6458 = vmatpush.msra.mxu0 %v4098
  %6459 = vmatpush.msra.mxu0 %v4094
  %6460 = vmatpush.msra.mxu0 %v4090
  %6461 = vmatpush.msra.mxu0 %v4086
  %6462 = vmatpush.msra.mxu0 %v4082
  %6463 = vmatpush.msra.mxu0 %v4078
  %6464 = vmatpush.msra.mxu0 %v4074
  %6465 = vmatpush.msra.mxu0 %v4070
  %6466 = vmatpush.msra.mxu0 %v4066
  %6467 = vmatpush.msra.mxu0 %v4062
  %6468 = vmatpush.msra.mxu0 %v4058
  %6469 = vmatpush.msra.mxu0 %v4054
  %6470 = vmatmul.f32.gmra.mxu0 %v39
  %v6471 = vpop.f32.mrf.mxu0
  %v6472 = vadd.f32 %v6452, %v6471
  %6473 = vdwg.mxu0
  %6474 = vmatpush.msra.mxu0 %v4178
  %6475 = vmatpush.msra.mxu0 %v4174
  %6476 = vmatpush.msra.mxu0 %v4170
  %6477 = vmatpush.msra.mxu0 %v4166
  %6478 = vmatpush.msra.mxu0 %v4162
  %6479 = vmatpush.msra.mxu0 %v4158
  %6480 = vmatpush.msra.mxu0 %v4154
  %6481 = vmatpush.msra.mxu0 %v4150
  %6482 = vmatpush.msra.mxu0 %v4146
  %6483 = vmatpush.msra.mxu0 %v4142
  %6484 = vmatpush.msra.mxu0 %v4138
  %6485 = vmatpush.msra.mxu0 %v4134
  %6486 = vmatpush.msra.mxu0 %v4130
  %6487 = vmatpush.msra.mxu0 %v4126
  %6488 = vmatpush.msra.mxu0 %v4122
  %6489 = vmatpush.msra.mxu0 %v4118
  %6490 = vmatmul.f32.gmra.mxu0 %v40
  %v6491 = vpop.f32.mrf.mxu0
  %v6492 = vadd.f32 %v6472, %v6491
  %6493 = vdwg.mxu0
  %6494 = vmatpush.msra.mxu0 %v4242
  %6495 = vmatpush.msra.mxu0 %v4238
  %6496 = vmatpush.msra.mxu0 %v4234
  %6497 = vmatpush.msra.mxu0 %v4230
  %6498 = vmatpush.msra.mxu0 %v4226
  %6499 = vmatpush.msra.mxu0 %v4222
  %6500 = vmatpush.msra.mxu0 %v4218
  %6501 = vmatpush.msra.mxu0 %v4214
  %6502 = vmatpush.msra.mxu0 %v4210
  %6503 = vmatpush.msra.mxu0 %v4206
  %6504 = vmatpush.msra.mxu0 %v4202
  %6505 = vmatpush.msra.mxu0 %v4198
  %6506 = vmatpush.msra.mxu0 %v4194
  %6507 = vmatpush.msra.mxu0 %v4190
  %6508 = vmatpush.msra.mxu0 %v4186
  %6509 = vmatpush.msra.mxu0 %v4182
  %6510 = vmatmul.f32.gmra.mxu0 %v41
  %v6511 = vpop.f32.mrf.mxu0
  %v6512 = vadd.f32 %v6492, %v6511
  %6513 = vdwg.mxu0
  %6514 = vmatpush.msra.mxu0 %v4306
  %6515 = vmatpush.msra.mxu0 %v4302
  %6516 = vmatpush.msra.mxu0 %v4298
  %6517 = vmatpush.msra.mxu0 %v4294
  %6518 = vmatpush.msra.mxu0 %v4290
  %6519 = vmatpush.msra.mxu0 %v4286
  %6520 = vmatpush.msra.mxu0 %v4282
  %6521 = vmatpush.msra.mxu0 %v4278
  %6522 = vmatpush.msra.mxu0 %v4274
  %6523 = vmatpush.msra.mxu0 %v4270
  %6524 = vmatpush.msra.mxu0 %v4266
  %6525 = vmatpush.msra.mxu0 %v4262
  %6526 = vmatpush.msra.mxu0 %v4258
  %6527 = vmatpush.msra.mxu0 %v4254
  %6528 = vmatpush.msra.mxu0 %v4250
  %6529 = vmatpush.msra.mxu0 %v4246
  %6530 = vmatmul.f32.gmra.mxu0 %v42
  %v6531 = vpop.f32.mrf.mxu0
  %v6532 = vadd.f32 %v6512, %v6531
  %6533 = vdwg.mxu0
  %6534 = vmatpush.msra.mxu0 %v4370
  %6535 = vmatpush.msra.mxu0 %v4366
  %6536 = vmatpush.msra.mxu0 %v4362
  %6537 = vmatpush.msra.mxu0 %v4358
  %6538 = vmatpush.msra.mxu0 %v4354
  %6539 = vmatpush.msra.mxu0 %v4350
  %6540 = vmatpush.msra.mxu0 %v4346
  %6541 = vmatpush.msra.mxu0 %v4342
  %6542 = vmatpush.msra.mxu0 %v4338
  %6543 = vmatpush.msra.mxu0 %v4334
  %6544 = vmatpush.msra.mxu0 %v4330
  %6545 = vmatpush.msra.mxu0 %v4326
  %6546 = vmatpush.msra.mxu0 %v4322
  %6547 = vmatpush.msra.mxu0 %v4318
  %6548 = vmatpush.msra.mxu0 %v4314
  %6549 = vmatpush.msra.mxu0 %v4310
  %6550 = vmatmul.f32.gmra.mxu0 %v43
  %v6551 = vpop.f32.mrf.mxu0
  %v6552 = vadd.f32 %v6532, %v6551
  %6553 = vdwg.mxu0
  %6554 = vmatpush.msra.mxu0 %v4434
  %6555 = vmatpush.msra.mxu0 %v4430
  %6556 = vmatpush.msra.mxu0 %v4426
  %6557 = vmatpush.msra.mxu0 %v4422
  %6558 = vmatpush.msra.mxu0 %v4418
  %6559 = vmatpush.msra.mxu0 %v4414
  %6560 = vmatpush.msra.mxu0 %v4410
  %6561 = vmatpush.msra.mxu0 %v4406
  %6562 = vmatpush.msra.mxu0 %v4402
  %6563 = vmatpush.msra.mxu0 %v4398
  %6564 = vmatpush.msra.mxu0 %v4394
  %6565 = vmatpush.msra.mxu0 %v4390
  %6566 = vmatpush.msra.mxu0 %v4386
  %6567 = vmatpush.msra.mxu0 %v4382
  %6568 = vmatpush.msra.mxu0 %v4378
  %6569 = vmatpush.msra.mxu0 %v4374
  %6570 = vmatmul.f32.gmra.mxu0 %v44
  %v6571 = vpop.f32.mrf.mxu0
  %v6572 = vadd.f32 %v6552, %v6571
  %6573 = vdwg.mxu0
  %6574 = vmatpush.msra.mxu0 %v4498
  %6575 = vmatpush.msra.mxu0 %v4494
  %6576 = vmatpush.msra.mxu0 %v4490
  %6577 = vmatpush.msra.mxu0 %v4486
  %6578 = vmatpush.msra.mxu0 %v4482
  %6579 = vmatpush.msra.mxu0 %v4478
  %6580 = vmatpush.msra.mxu0 %v4474
  %6581 = vmatpush.msra.mxu0 %v4470
  %6582 = vmatpush.msra.mxu0 %v4466
  %6583 = vmatpush.msra.mxu0 %v4462
  %6584 = vmatpush.msra.mxu0 %v4458
  %6585 = vmatpush.msra.mxu0 %v4454
  %6586 = vmatpush.msra.mxu0 %v4450
  %6587 = vmatpush.msra.mxu0 %v4446
  %6588 = vmatpush.msra.mxu0 %v4442
  %6589 = vmatpush.msra.mxu0 %v4438
  %6590 = vmatmul.f32.gmra.mxu0 %v45
  %v6591 = vpop.f32.mrf.mxu0
  %v6592 = vadd.f32 %v6572, %v6591
  %6593 = vdwg.mxu0
  %6594 = vmatpush.msra.mxu0 %v4562
  %6595 = vmatpush.msra.mxu0 %v4558
  %6596 = vmatpush.msra.mxu0 %v4554
  %6597 = vmatpush.msra.mxu0 %v4550
  %6598 = vmatpush.msra.mxu0 %v4546
  %6599 = vmatpush.msra.mxu0 %v4542
  %6600 = vmatpush.msra.mxu0 %v4538
  %6601 = vmatpush.msra.mxu0 %v4534
  %6602 = vmatpush.msra.mxu0 %v4530
  %6603 = vmatpush.msra.mxu0 %v4526
  %6604 = vmatpush.msra.mxu0 %v4522
  %6605 = vmatpush.msra.mxu0 %v4518
  %6606 = vmatpush.msra.mxu0 %v4514
  %6607 = vmatpush.msra.mxu0 %v4510
  %6608 = vmatpush.msra.mxu0 %v4506
  %6609 = vmatpush.msra.mxu0 %v4502
  %6610 = vmatmul.f32.gmra.mxu0 %v46
  %v6611 = vpop.f32.mrf.mxu0
  %v6612 = vadd.f32 %v6592, %v6611
  %6613 = vdwg.mxu0
  %6614 = vmatpush.msra.mxu0 %v4626
  %6615 = vmatpush.msra.mxu0 %v4622
  %6616 = vmatpush.msra.mxu0 %v4618
  %6617 = vmatpush.msra.mxu0 %v4614
  %6618 = vmatpush.msra.mxu0 %v4610
  %6619 = vmatpush.msra.mxu0 %v4606
  %6620 = vmatpush.msra.mxu0 %v4602
  %6621 = vmatpush.msra.mxu0 %v4598
  %6622 = vmatpush.msra.mxu0 %v4594
  %6623 = vmatpush.msra.mxu0 %v4590
  %6624 = vmatpush.msra.mxu0 %v4586
  %6625 = vmatpush.msra.mxu0 %v4582
  %6626 = vmatpush.msra.mxu0 %v4578
  %6627 = vmatpush.msra.mxu0 %v4574
  %6628 = vmatpush.msra.mxu0 %v4570
  %6629 = vmatpush.msra.mxu0 %v4566
  %6630 = vmatmul.f32.gmra.mxu0 %v47
  %v6631 = vpop.f32.mrf.mxu0
  %v6632 = vadd.f32 %v6612, %v6631
  %6633 = vdwg.mxu0
  %6634 = vmatpush.msra.mxu0 %v4690
  %6635 = vmatpush.msra.mxu0 %v4686
  %6636 = vmatpush.msra.mxu0 %v4682
  %6637 = vmatpush.msra.mxu0 %v4678
  %6638 = vmatpush.msra.mxu0 %v4674
  %6639 = vmatpush.msra.mxu0 %v4670
  %6640 = vmatpush.msra.mxu0 %v4666
  %6641 = vmatpush.msra.mxu0 %v4662
  %6642 = vmatpush.msra.mxu0 %v4658
  %6643 = vmatpush.msra.mxu0 %v4654
  %6644 = vmatpush.msra.mxu0 %v4650
  %6645 = vmatpush.msra.mxu0 %v4646
  %6646 = vmatpush.msra.mxu0 %v4642
  %6647 = vmatpush.msra.mxu0 %v4638
  %6648 = vmatpush.msra.mxu0 %v4634
  %6649 = vmatpush.msra.mxu0 %v4630
  %6650 = vmatmul.f32.gmra.mxu0 %v48
  %v6651 = vpop.f32.mrf.mxu0
  %v6652 = vadd.f32 %v6632, %v6651
  %6653 = vdwg.mxu0
  %6654 = vmatpush.msra.mxu0 %v4754
  %6655 = vmatpush.msra.mxu0 %v4750
  %6656 = vmatpush.msra.mxu0 %v4746
  %6657 = vmatpush.msra.mxu0 %v4742
  %6658 = vmatpush.msra.mxu0 %v4738
  %6659 = vmatpush.msra.mxu0 %v4734
  %6660 = vmatpush.msra.mxu0 %v4730
  %6661 = vmatpush.msra.mxu0 %v4726
  %6662 = vmatpush.msra.mxu0 %v4722
  %6663 = vmatpush.msra.mxu0 %v4718
  %6664 = vmatpush.msra.mxu0 %v4714
  %6665 = vmatpush.msra.mxu0 %v4710
  %6666 = vmatpush.msra.mxu0 %v4706
  %6667 = vmatpush.msra.mxu0 %v4702
  %6668 = vmatpush.msra.mxu0 %v4698
  %6669 = vmatpush.msra.mxu0 %v4694
  %6670 = vmatmul.f32.gmra.mxu0 %v49
  %v6671 = vpop.f32.mrf.mxu0
  %v6672 = vadd.f32 %v6652, %v6671
  %6673 = vdwg.mxu0
  %6674 = vmatpush.msra.mxu0 %v4818
  %6675 = vmatpush.msra.mxu0 %v4814
  %6676 = vmatpush.msra.mxu0 %v4810
  %6677 = vmatpush.msra.mxu0 %v4806
  %6678 = vmatpush.msra.mxu0 %v4802
  %6679 = vmatpush.msra.mxu0 %v4798
  %6680 = vmatpush.msra.mxu0 %v4794
  %6681 = vmatpush.msra.mxu0 %v4790
  %6682 = vmatpush.msra.mxu0 %v4786
  %6683 = vmatpush.msra.mxu0 %v4782
  %6684 = vmatpush.msra.mxu0 %v4778
  %6685 = vmatpush.msra.mxu0 %v4774
  %6686 = vmatpush.msra.mxu0 %v4770
  %6687 = vmatpush.msra.mxu0 %v4766
  %6688 = vmatpush.msra.mxu0 %v4762
  %6689 = vmatpush.msra.mxu0 %v4758
  %6690 = vmatmul.f32.gmra.mxu0 %v50
  %v6691 = vpop.f32.mrf.mxu0
  %v6692 = vadd.f32 %v6672, %v6691
  %6693 = vdwg.mxu0
  %6694 = vmatpush.msra.mxu0 %v4882
  %6695 = vmatpush.msra.mxu0 %v4878
  %6696 = vmatpush.msra.mxu0 %v4874
  %6697 = vmatpush.msra.mxu0 %v4870
  %6698 = vmatpush.msra.mxu0 %v4866
  %6699 = vmatpush.msra.mxu0 %v4862
  %6700 = vmatpush.msra.mxu0 %v4858
  %6701 = vmatpush.msra.mxu0 %v4854
  %6702 = vmatpush.msra.mxu0 %v4850
  %6703 = vmatpush.msra.mxu0 %v4846
  %6704 = vmatpush.msra.mxu0 %v4842
  %6705 = vmatpush.msra.mxu0 %v4838
  %6706 = vmatpush.msra.mxu0 %v4834
  %6707 = vmatpush.msra.mxu0 %v4830
  %6708 = vmatpush.msra.mxu0 %v4826
  %6709 = vmatpush.msra.mxu0 %v4822
  %6710 = vmatmul.f32.gmra.mxu0 %v51
  %v6711 = vpop.f32.mrf.mxu0
  %v6712 = vadd.f32 %v6692, %v6711
  %6713 = vdwg.mxu0
  %6714 = vmatpush.msra.mxu0 %v4946
  %6715 = vmatpush.msra.mxu0 %v4942
  %6716 = vmatpush.msra.mxu0 %v4938
  %6717 = vmatpush.msra.mxu0 %v4934
  %6718 = vmatpush.msra.mxu0 %v4930
  %6719 = vmatpush.msra.mxu0 %v4926
  %6720 = vmatpush.msra.mxu0 %v4922
  %6721 = vmatpush.msra.mxu0 %v4918
  %6722 = vmatpush.msra.mxu0 %v4914
  %6723 = vmatpush.msra.mxu0 %v4910
  %6724 = vmatpush.msra.mxu0 %v4906
  %6725 = vmatpush.msra.mxu0 %v4902
  %6726 = vmatpush.msra.mxu0 %v4898
  %6727 = vmatpush.msra.mxu0 %v4894
  %6728 = vmatpush.msra.mxu0 %v4890
  %6729 = vmatpush.msra.mxu0 %v4886
  %6730 = vmatmul.f32.gmra.mxu0 %v52
  %v6731 = vpop.f32.mrf.mxu0
  %v6732 = vadd.f32 %v6712, %v6731
  %6733 = vdwg.mxu0
  %6734 = vmatpush.msra.mxu0 %v5010
  %6735 = vmatpush.msra.mxu0 %v5006
  %6736 = vmatpush.msra.mxu0 %v5002
  %6737 = vmatpush.msra.mxu0 %v4998
  %6738 = vmatpush.msra.mxu0 %v4994
  %6739 = vmatpush.msra.mxu0 %v4990
  %6740 = vmatpush.msra.mxu0 %v4986
  %6741 = vmatpush.msra.mxu0 %v4982
  %6742 = vmatpush.msra.mxu0 %v4978
  %6743 = vmatpush.msra.mxu0 %v4974
  %6744 = vmatpush.msra.mxu0 %v4970
  %6745 = vmatpush.msra.mxu0 %v4966
  %6746 = vmatpush.msra.mxu0 %v4962
  %6747 = vmatpush.msra.mxu0 %v4958
  %6748 = vmatpush.msra.mxu0 %v4954
  %6749 = vmatpush.msra.mxu0 %v4950
  %6750 = vmatmul.f32.gmra.mxu0 %v53
  %v6751 = vpop.f32.mrf.mxu0
  %v6752 = vadd.f32 %v6732, %v6751
  %6753 = vdwg.mxu0
  %6754 = vmatpush.msra.mxu0 %v5074
  %6755 = vmatpush.msra.mxu0 %v5070
  %6756 = vmatpush.msra.mxu0 %v5066
  %6757 = vmatpush.msra.mxu0 %v5062
  %6758 = vmatpush.msra.mxu0 %v5058
  %6759 = vmatpush.msra.mxu0 %v5054
  %6760 = vmatpush.msra.mxu0 %v5050
  %6761 = vmatpush.msra.mxu0 %v5046
  %6762 = vmatpush.msra.mxu0 %v5042
  %6763 = vmatpush.msra.mxu0 %v5038
  %6764 = vmatpush.msra.mxu0 %v5034
  %6765 = vmatpush.msra.mxu0 %v5030
  %6766 = vmatpush.msra.mxu0 %v5026
  %6767 = vmatpush.msra.mxu0 %v5022
  %6768 = vmatpush.msra.mxu0 %v5018
  %6769 = vmatpush.msra.mxu0 %v5014
  %6770 = vmatmul.f32.gmra.mxu0 %v54
  %v6771 = vpop.f32.mrf.mxu0
  %v6772 = vadd.f32 %v6752, %v6771
  %6773 = vdwg.mxu0
  %6774 = vmatpush.msra.mxu0 %v5138
  %6775 = vmatpush.msra.mxu0 %v5134
  %6776 = vmatpush.msra.mxu0 %v5130
  %6777 = vmatpush.msra.mxu0 %v5126
  %6778 = vmatpush.msra.mxu0 %v5122
  %6779 = vmatpush.msra.mxu0 %v5118
  %6780 = vmatpush.msra.mxu0 %v5114
  %6781 = vmatpush.msra.mxu0 %v5110
  %6782 = vmatpush.msra.mxu0 %v5106
  %6783 = vmatpush.msra.mxu0 %v5102
  %6784 = vmatpush.msra.mxu0 %v5098
  %6785 = vmatpush.msra.mxu0 %v5094
  %6786 = vmatpush.msra.mxu0 %v5090
  %6787 = vmatpush.msra.mxu0 %v5086
  %6788 = vmatpush.msra.mxu0 %v5082
  %6789 = vmatpush.msra.mxu0 %v5078
  %6790 = vmatmul.f32.gmra.mxu0 %v55
  %v6791 = vpop.f32.mrf.mxu0
  %v6792 = vadd.f32 %v6772, %v6791
  %6793 = vdwg.mxu0
  %6794 = vmatpush.msra.mxu0 %v5202
  %6795 = vmatpush.msra.mxu0 %v5198
  %6796 = vmatpush.msra.mxu0 %v5194
  %6797 = vmatpush.msra.mxu0 %v5190
  %6798 = vmatpush.msra.mxu0 %v5186
  %6799 = vmatpush.msra.mxu0 %v5182
  %6800 = vmatpush.msra.mxu0 %v5178
  %6801 = vmatpush.msra.mxu0 %v5174
  %6802 = vmatpush.msra.mxu0 %v5170
  %6803 = vmatpush.msra.mxu0 %v5166
  %6804 = vmatpush.msra.mxu0 %v5162
  %6805 = vmatpush.msra.mxu0 %v5158
  %6806 = vmatpush.msra.mxu0 %v5154
  %6807 = vmatpush.msra.mxu0 %v5150
  %6808 = vmatpush.msra.mxu0 %v5146
  %6809 = vmatpush.msra.mxu0 %v5142
  %6810 = vmatmul.f32.gmra.mxu0 %v56
  %v6811 = vpop.f32.mrf.mxu0
  %v6812 = vadd.f32 %v6792, %v6811
  %6813 = vdwg.mxu0
  %6814 = vmatpush.msra.mxu0 %v5266
  %6815 = vmatpush.msra.mxu0 %v5262
  %6816 = vmatpush.msra.mxu0 %v5258
  %6817 = vmatpush.msra.mxu0 %v5254
  %6818 = vmatpush.msra.mxu0 %v5250
  %6819 = vmatpush.msra.mxu0 %v5246
  %6820 = vmatpush.msra.mxu0 %v5242
  %6821 = vmatpush.msra.mxu0 %v5238
  %6822 = vmatpush.msra.mxu0 %v5234
  %6823 = vmatpush.msra.mxu0 %v5230
  %6824 = vmatpush.msra.mxu0 %v5226
  %6825 = vmatpush.msra.mxu0 %v5222
  %6826 = vmatpush.msra.mxu0 %v5218
  %6827 = vmatpush.msra.mxu0 %v5214
  %6828 = vmatpush.msra.mxu0 %v5210
  %6829 = vmatpush.msra.mxu0 %v5206
  %6830 = vmatmul.f32.gmra.mxu0 %v57
  %v6831 = vpop.f32.mrf.mxu0
  %v6832 = vadd.f32 %v6812, %v6831
  %6833 = vdwg.mxu0
  %6834 = vmatpush.msra.mxu0 %v5330
  %6835 = vmatpush.msra.mxu0 %v5326
  %6836 = vmatpush.msra.mxu0 %v5322
  %6837 = vmatpush.msra.mxu0 %v5318
  %6838 = vmatpush.msra.mxu0 %v5314
  %6839 = vmatpush.msra.mxu0 %v5310
  %6840 = vmatpush.msra.mxu0 %v5306
  %6841 = vmatpush.msra.mxu0 %v5302
  %6842 = vmatpush.msra.mxu0 %v5298
  %6843 = vmatpush.msra.mxu0 %v5294
  %6844 = vmatpush.msra.mxu0 %v5290
  %6845 = vmatpush.msra.mxu0 %v5286
  %6846 = vmatpush.msra.mxu0 %v5282
  %6847 = vmatpush.msra.mxu0 %v5278
  %6848 = vmatpush.msra.mxu0 %v5274
  %6849 = vmatpush.msra.mxu0 %v5270
  %6850 = vmatmul.f32.gmra.mxu0 %v58
  %v6851 = vpop.f32.mrf.mxu0
  %v6852 = vadd.f32 %v6832, %v6851
  %6853 = vdwg.mxu0
  %6854 = vmatpush.msra.mxu0 0.0
  %6855 = vmatpush.msra.mxu0 0.0
  %6856 = vmatpush.msra.mxu0 0.0
  %6857 = vmatpush.msra.mxu0 0.0
  %6858 = vmatpush.msra.mxu0 0.0
  %6859 = vmatpush.msra.mxu0 0.0
  %6860 = vmatpush.msra.mxu0 0.0
  %6861 = vmatpush.msra.mxu0 0.0
  %6862 = vmatpush.msra.mxu0 %v5362
  %6863 = vmatpush.msra.mxu0 %v5358
  %6864 = vmatpush.msra.mxu0 %v5354
  %6865 = vmatpush.msra.mxu0 %v5350
  %6866 = vmatpush.msra.mxu0 %v5346
  %6867 = vmatpush.msra.mxu0 %v5342
  %6868 = vmatpush.msra.mxu0 %v5338
  %6869 = vmatpush.msra.mxu0 %v5334
  %6870 = vmatmul.f32.gmra.mxu0 %v1640
  %v6871 = vpop.f32.mrf.mxu0
  %v6872 = vadd.f32 %v6852, %v6871
  %6873 = vdwg.mxu0
  %6874 = vmatpush.msra.mxu0 %v3859
  %6875 = vmatpush.msra.mxu0 %v3855
  %6876 = vmatpush.msra.mxu0 %v3851
  %6877 = vmatpush.msra.mxu0 %v3847
  %6878 = vmatpush.msra.mxu0 %v3843
  %6879 = vmatpush.msra.mxu0 %v3839
  %6880 = vmatpush.msra.mxu0 %v3835
  %6881 = vmatpush.msra.mxu0 %v3831
  %6882 = vmatpush.msra.mxu0 %v3827
  %6883 = vmatpush.msra.mxu0 %v3823
  %6884 = vmatpush.msra.mxu0 %v3819
  %6885 = vmatpush.msra.mxu0 %v3815
  %6886 = vmatpush.msra.mxu0 %v3811
  %6887 = vmatpush.msra.mxu0 %v3807
  %6888 = vmatpush.msra.mxu0 %v3803
  %6889 = vmatpush.msra.mxu0 %v3799
  %6890 = vmatmul.f32.gmra.mxu0 %v35
  %v6891 = vpop.f32.mrf.mxu0
  %v6892 = vadd.f32 %v5369, %v6891
  %6893 = vdwg.mxu0
  %6894 = vmatpush.msra.mxu0 %v3923
  %6895 = vmatpush.msra.mxu0 %v3919
  %6896 = vmatpush.msra.mxu0 %v3915
  %6897 = vmatpush.msra.mxu0 %v3911
  %6898 = vmatpush.msra.mxu0 %v3907
  %6899 = vmatpush.msra.mxu0 %v3903
  %6900 = vmatpush.msra.mxu0 %v3899
  %6901 = vmatpush.msra.mxu0 %v3895
  %6902 = vmatpush.msra.mxu0 %v3891
  %6903 = vmatpush.msra.mxu0 %v3887
  %6904 = vmatpush.msra.mxu0 %v3883
  %6905 = vmatpush.msra.mxu0 %v3879
  %6906 = vmatpush.msra.mxu0 %v3875
  %6907 = vmatpush.msra.mxu0 %v3871
  %6908 = vmatpush.msra.mxu0 %v3867
  %6909 = vmatpush.msra.mxu0 %v3863
  %6910 = vmatmul.f32.gmra.mxu0 %v36
  %v6911 = vpop.f32.mrf.mxu0
  %v6912 = vadd.f32 %v6892, %v6911
  %6913 = vdwg.mxu0
  %6914 = vmatpush.msra.mxu0 %v3987
  %6915 = vmatpush.msra.mxu0 %v3983
  %6916 = vmatpush.msra.mxu0 %v3979
  %6917 = vmatpush.msra.mxu0 %v3975
  %6918 = vmatpush.msra.mxu0 %v3971
  %6919 = vmatpush.msra.mxu0 %v3967
  %6920 = vmatpush.msra.mxu0 %v3963
  %6921 = vmatpush.msra.mxu0 %v3959
  %6922 = vmatpush.msra.mxu0 %v3955
  %6923 = vmatpush.msra.mxu0 %v3951
  %6924 = vmatpush.msra.mxu0 %v3947
  %6925 = vmatpush.msra.mxu0 %v3943
  %6926 = vmatpush.msra.mxu0 %v3939
  %6927 = vmatpush.msra.mxu0 %v3935
  %6928 = vmatpush.msra.mxu0 %v3931
  %6929 = vmatpush.msra.mxu0 %v3927
  %6930 = vmatmul.f32.gmra.mxu0 %v37
  %v6931 = vpop.f32.mrf.mxu0
  %v6932 = vadd.f32 %v6912, %v6931
  %6933 = vdwg.mxu0
  %6934 = vmatpush.msra.mxu0 %v4051
  %6935 = vmatpush.msra.mxu0 %v4047
  %6936 = vmatpush.msra.mxu0 %v4043
  %6937 = vmatpush.msra.mxu0 %v4039
  %6938 = vmatpush.msra.mxu0 %v4035
  %6939 = vmatpush.msra.mxu0 %v4031
  %6940 = vmatpush.msra.mxu0 %v4027
  %6941 = vmatpush.msra.mxu0 %v4023
  %6942 = vmatpush.msra.mxu0 %v4019
  %6943 = vmatpush.msra.mxu0 %v4015
  %6944 = vmatpush.msra.mxu0 %v4011
  %6945 = vmatpush.msra.mxu0 %v4007
  %6946 = vmatpush.msra.mxu0 %v4003
  %6947 = vmatpush.msra.mxu0 %v3999
  %6948 = vmatpush.msra.mxu0 %v3995
  %6949 = vmatpush.msra.mxu0 %v3991
  %6950 = vmatmul.f32.gmra.mxu0 %v38
  %v6951 = vpop.f32.mrf.mxu0
  %v6952 = vadd.f32 %v6932, %v6951
  %6953 = vdwg.mxu0
  %6954 = vmatpush.msra.mxu0 %v4115
  %6955 = vmatpush.msra.mxu0 %v4111
  %6956 = vmatpush.msra.mxu0 %v4107
  %6957 = vmatpush.msra.mxu0 %v4103
  %6958 = vmatpush.msra.mxu0 %v4099
  %6959 = vmatpush.msra.mxu0 %v4095
  %6960 = vmatpush.msra.mxu0 %v4091
  %6961 = vmatpush.msra.mxu0 %v4087
  %6962 = vmatpush.msra.mxu0 %v4083
  %6963 = vmatpush.msra.mxu0 %v4079
  %6964 = vmatpush.msra.mxu0 %v4075
  %6965 = vmatpush.msra.mxu0 %v4071
  %6966 = vmatpush.msra.mxu0 %v4067
  %6967 = vmatpush.msra.mxu0 %v4063
  %6968 = vmatpush.msra.mxu0 %v4059
  %6969 = vmatpush.msra.mxu0 %v4055
  %6970 = vmatmul.f32.gmra.mxu0 %v39
  %v6971 = vpop.f32.mrf.mxu0
  %v6972 = vadd.f32 %v6952, %v6971
  %6973 = vdwg.mxu0
  %6974 = vmatpush.msra.mxu0 %v4179
  %6975 = vmatpush.msra.mxu0 %v4175
  %6976 = vmatpush.msra.mxu0 %v4171
  %6977 = vmatpush.msra.mxu0 %v4167
  %6978 = vmatpush.msra.mxu0 %v4163
  %6979 = vmatpush.msra.mxu0 %v4159
  %6980 = vmatpush.msra.mxu0 %v4155
  %6981 = vmatpush.msra.mxu0 %v4151
  %6982 = vmatpush.msra.mxu0 %v4147
  %6983 = vmatpush.msra.mxu0 %v4143
  %6984 = vmatpush.msra.mxu0 %v4139
  %6985 = vmatpush.msra.mxu0 %v4135
  %6986 = vmatpush.msra.mxu0 %v4131
  %6987 = vmatpush.msra.mxu0 %v4127
  %6988 = vmatpush.msra.mxu0 %v4123
  %6989 = vmatpush.msra.mxu0 %v4119
  %6990 = vmatmul.f32.gmra.mxu0 %v40
  %v6991 = vpop.f32.mrf.mxu0
  %v6992 = vadd.f32 %v6972, %v6991
  %6993 = vdwg.mxu0
  %6994 = vmatpush.msra.mxu0 %v4243
  %6995 = vmatpush.msra.mxu0 %v4239
  %6996 = vmatpush.msra.mxu0 %v4235
  %6997 = vmatpush.msra.mxu0 %v4231
  %6998 = vmatpush.msra.mxu0 %v4227
  %6999 = vmatpush.msra.mxu0 %v4223
  %7000 = vmatpush.msra.mxu0 %v4219
  %7001 = vmatpush.msra.mxu0 %v4215
  %7002 = vmatpush.msra.mxu0 %v4211
  %7003 = vmatpush.msra.mxu0 %v4207
  %7004 = vmatpush.msra.mxu0 %v4203
  %7005 = vmatpush.msra.mxu0 %v4199
  %7006 = vmatpush.msra.mxu0 %v4195
  %7007 = vmatpush.msra.mxu0 %v4191
  %7008 = vmatpush.msra.mxu0 %v4187
  %7009 = vmatpush.msra.mxu0 %v4183
  %7010 = vmatmul.f32.gmra.mxu0 %v41
  %v7011 = vpop.f32.mrf.mxu0
  %v7012 = vadd.f32 %v6992, %v7011
  %7013 = vdwg.mxu0
  %7014 = vmatpush.msra.mxu0 %v4307
  %7015 = vmatpush.msra.mxu0 %v4303
  %7016 = vmatpush.msra.mxu0 %v4299
  %7017 = vmatpush.msra.mxu0 %v4295
  %7018 = vmatpush.msra.mxu0 %v4291
  %7019 = vmatpush.msra.mxu0 %v4287
  %7020 = vmatpush.msra.mxu0 %v4283
  %7021 = vmatpush.msra.mxu0 %v4279
  %7022 = vmatpush.msra.mxu0 %v4275
  %7023 = vmatpush.msra.mxu0 %v4271
  %7024 = vmatpush.msra.mxu0 %v4267
  %7025 = vmatpush.msra.mxu0 %v4263
  %7026 = vmatpush.msra.mxu0 %v4259
  %7027 = vmatpush.msra.mxu0 %v4255
  %7028 = vmatpush.msra.mxu0 %v4251
  %7029 = vmatpush.msra.mxu0 %v4247
  %7030 = vmatmul.f32.gmra.mxu0 %v42
  %v7031 = vpop.f32.mrf.mxu0
  %v7032 = vadd.f32 %v7012, %v7031
  %7033 = vdwg.mxu0
  %7034 = vmatpush.msra.mxu0 %v4371
  %7035 = vmatpush.msra.mxu0 %v4367
  %7036 = vmatpush.msra.mxu0 %v4363
  %7037 = vmatpush.msra.mxu0 %v4359
  %7038 = vmatpush.msra.mxu0 %v4355
  %7039 = vmatpush.msra.mxu0 %v4351
  %7040 = vmatpush.msra.mxu0 %v4347
  %7041 = vmatpush.msra.mxu0 %v4343
  %7042 = vmatpush.msra.mxu0 %v4339
  %7043 = vmatpush.msra.mxu0 %v4335
  %7044 = vmatpush.msra.mxu0 %v4331
  %7045 = vmatpush.msra.mxu0 %v4327
  %7046 = vmatpush.msra.mxu0 %v4323
  %7047 = vmatpush.msra.mxu0 %v4319
  %7048 = vmatpush.msra.mxu0 %v4315
  %7049 = vmatpush.msra.mxu0 %v4311
  %7050 = vmatmul.f32.gmra.mxu0 %v43
  %v7051 = vpop.f32.mrf.mxu0
  %v7052 = vadd.f32 %v7032, %v7051
  %7053 = vdwg.mxu0
  %7054 = vmatpush.msra.mxu0 %v4435
  %7055 = vmatpush.msra.mxu0 %v4431
  %7056 = vmatpush.msra.mxu0 %v4427
  %7057 = vmatpush.msra.mxu0 %v4423
  %7058 = vmatpush.msra.mxu0 %v4419
  %7059 = vmatpush.msra.mxu0 %v4415
  %7060 = vmatpush.msra.mxu0 %v4411
  %7061 = vmatpush.msra.mxu0 %v4407
  %7062 = vmatpush.msra.mxu0 %v4403
  %7063 = vmatpush.msra.mxu0 %v4399
  %7064 = vmatpush.msra.mxu0 %v4395
  %7065 = vmatpush.msra.mxu0 %v4391
  %7066 = vmatpush.msra.mxu0 %v4387
  %7067 = vmatpush.msra.mxu0 %v4383
  %7068 = vmatpush.msra.mxu0 %v4379
  %7069 = vmatpush.msra.mxu0 %v4375
  %7070 = vmatmul.f32.gmra.mxu0 %v44
  %v7071 = vpop.f32.mrf.mxu0
  %v7072 = vadd.f32 %v7052, %v7071
  %7073 = vdwg.mxu0
  %7074 = vmatpush.msra.mxu0 %v4499
  %7075 = vmatpush.msra.mxu0 %v4495
  %7076 = vmatpush.msra.mxu0 %v4491
  %7077 = vmatpush.msra.mxu0 %v4487
  %7078 = vmatpush.msra.mxu0 %v4483
  %7079 = vmatpush.msra.mxu0 %v4479
  %7080 = vmatpush.msra.mxu0 %v4475
  %7081 = vmatpush.msra.mxu0 %v4471
  %7082 = vmatpush.msra.mxu0 %v4467
  %7083 = vmatpush.msra.mxu0 %v4463
  %7084 = vmatpush.msra.mxu0 %v4459
  %7085 = vmatpush.msra.mxu0 %v4455
  %7086 = vmatpush.msra.mxu0 %v4451
  %7087 = vmatpush.msra.mxu0 %v4447
  %7088 = vmatpush.msra.mxu0 %v4443
  %7089 = vmatpush.msra.mxu0 %v4439
  %7090 = vmatmul.f32.gmra.mxu0 %v45
  %v7091 = vpop.f32.mrf.mxu0
  %v7092 = vadd.f32 %v7072, %v7091
  %7093 = vdwg.mxu0
  %7094 = vmatpush.msra.mxu0 %v4563
  %7095 = vmatpush.msra.mxu0 %v4559
  %7096 = vmatpush.msra.mxu0 %v4555
  %7097 = vmatpush.msra.mxu0 %v4551
  %7098 = vmatpush.msra.mxu0 %v4547
  %7099 = vmatpush.msra.mxu0 %v4543
  %7100 = vmatpush.msra.mxu0 %v4539
  %7101 = vmatpush.msra.mxu0 %v4535
  %7102 = vmatpush.msra.mxu0 %v4531
  %7103 = vmatpush.msra.mxu0 %v4527
  %7104 = vmatpush.msra.mxu0 %v4523
  %7105 = vmatpush.msra.mxu0 %v4519
  %7106 = vmatpush.msra.mxu0 %v4515
  %7107 = vmatpush.msra.mxu0 %v4511
  %7108 = vmatpush.msra.mxu0 %v4507
  %7109 = vmatpush.msra.mxu0 %v4503
  %7110 = vmatmul.f32.gmra.mxu0 %v46
  %v7111 = vpop.f32.mrf.mxu0
  %v7112 = vadd.f32 %v7092, %v7111
  %7113 = vdwg.mxu0
  %7114 = vmatpush.msra.mxu0 %v4627
  %7115 = vmatpush.msra.mxu0 %v4623
  %7116 = vmatpush.msra.mxu0 %v4619
  %7117 = vmatpush.msra.mxu0 %v4615
  %7118 = vmatpush.msra.mxu0 %v4611
  %7119 = vmatpush.msra.mxu0 %v4607
  %7120 = vmatpush.msra.mxu0 %v4603
  %7121 = vmatpush.msra.mxu0 %v4599
  %7122 = vmatpush.msra.mxu0 %v4595
  %7123 = vmatpush.msra.mxu0 %v4591
  %7124 = vmatpush.msra.mxu0 %v4587
  %7125 = vmatpush.msra.mxu0 %v4583
  %7126 = vmatpush.msra.mxu0 %v4579
  %7127 = vmatpush.msra.mxu0 %v4575
  %7128 = vmatpush.msra.mxu0 %v4571
  %7129 = vmatpush.msra.mxu0 %v4567
  %7130 = vmatmul.f32.gmra.mxu0 %v47
  %v7131 = vpop.f32.mrf.mxu0
  %v7132 = vadd.f32 %v7112, %v7131
  %7133 = vdwg.mxu0
  %7134 = vmatpush.msra.mxu0 %v4691
  %7135 = vmatpush.msra.mxu0 %v4687
  %7136 = vmatpush.msra.mxu0 %v4683
  %7137 = vmatpush.msra.mxu0 %v4679
  %7138 = vmatpush.msra.mxu0 %v4675
  %7139 = vmatpush.msra.mxu0 %v4671
  %7140 = vmatpush.msra.mxu0 %v4667
  %7141 = vmatpush.msra.mxu0 %v4663
  %7142 = vmatpush.msra.mxu0 %v4659
  %7143 = vmatpush.msra.mxu0 %v4655
  %7144 = vmatpush.msra.mxu0 %v4651
  %7145 = vmatpush.msra.mxu0 %v4647
  %7146 = vmatpush.msra.mxu0 %v4643
  %7147 = vmatpush.msra.mxu0 %v4639
  %7148 = vmatpush.msra.mxu0 %v4635
  %7149 = vmatpush.msra.mxu0 %v4631
  %7150 = vmatmul.f32.gmra.mxu0 %v48
  %v7151 = vpop.f32.mrf.mxu0
  %v7152 = vadd.f32 %v7132, %v7151
  %7153 = vdwg.mxu0
  %7154 = vmatpush.msra.mxu0 %v4755
  %7155 = vmatpush.msra.mxu0 %v4751
  %7156 = vmatpush.msra.mxu0 %v4747
  %7157 = vmatpush.msra.mxu0 %v4743
  %7158 = vmatpush.msra.mxu0 %v4739
  %7159 = vmatpush.msra.mxu0 %v4735
  %7160 = vmatpush.msra.mxu0 %v4731
  %7161 = vmatpush.msra.mxu0 %v4727
  %7162 = vmatpush.msra.mxu0 %v4723
  %7163 = vmatpush.msra.mxu0 %v4719
  %7164 = vmatpush.msra.mxu0 %v4715
  %7165 = vmatpush.msra.mxu0 %v4711
  %7166 = vmatpush.msra.mxu0 %v4707
  %7167 = vmatpush.msra.mxu0 %v4703
  %7168 = vmatpush.msra.mxu0 %v4699
  %7169 = vmatpush.msra.mxu0 %v4695
  %7170 = vmatmul.f32.gmra.mxu0 %v49
  %v7171 = vpop.f32.mrf.mxu0
  %v7172 = vadd.f32 %v7152, %v7171
  %7173 = vdwg.mxu0
  %7174 = vmatpush.msra.mxu0 %v4819
  %7175 = vmatpush.msra.mxu0 %v4815
  %7176 = vmatpush.msra.mxu0 %v4811
  %7177 = vmatpush.msra.mxu0 %v4807
  %7178 = vmatpush.msra.mxu0 %v4803
  %7179 = vmatpush.msra.mxu0 %v4799
  %7180 = vmatpush.msra.mxu0 %v4795
  %7181 = vmatpush.msra.mxu0 %v4791
  %7182 = vmatpush.msra.mxu0 %v4787
  %7183 = vmatpush.msra.mxu0 %v4783
  %7184 = vmatpush.msra.mxu0 %v4779
  %7185 = vmatpush.msra.mxu0 %v4775
  %7186 = vmatpush.msra.mxu0 %v4771
  %7187 = vmatpush.msra.mxu0 %v4767
  %7188 = vmatpush.msra.mxu0 %v4763
  %7189 = vmatpush.msra.mxu0 %v4759
  %7190 = vmatmul.f32.gmra.mxu0 %v50
  %v7191 = vpop.f32.mrf.mxu0
  %v7192 = vadd.f32 %v7172, %v7191
  %7193 = vdwg.mxu0
  %7194 = vmatpush.msra.mxu0 %v4883
  %7195 = vmatpush.msra.mxu0 %v4879
  %7196 = vmatpush.msra.mxu0 %v4875
  %7197 = vmatpush.msra.mxu0 %v4871
  %7198 = vmatpush.msra.mxu0 %v4867
  %7199 = vmatpush.msra.mxu0 %v4863
  %7200 = vmatpush.msra.mxu0 %v4859
  %7201 = vmatpush.msra.mxu0 %v4855
  %7202 = vmatpush.msra.mxu0 %v4851
  %7203 = vmatpush.msra.mxu0 %v4847
  %7204 = vmatpush.msra.mxu0 %v4843
  %7205 = vmatpush.msra.mxu0 %v4839
  %7206 = vmatpush.msra.mxu0 %v4835
  %7207 = vmatpush.msra.mxu0 %v4831
  %7208 = vmatpush.msra.mxu0 %v4827
  %7209 = vmatpush.msra.mxu0 %v4823
  %7210 = vmatmul.f32.gmra.mxu0 %v51
  %v7211 = vpop.f32.mrf.mxu0
  %v7212 = vadd.f32 %v7192, %v7211
  %7213 = vdwg.mxu0
  %7214 = vmatpush.msra.mxu0 %v4947
  %7215 = vmatpush.msra.mxu0 %v4943
  %7216 = vmatpush.msra.mxu0 %v4939
  %7217 = vmatpush.msra.mxu0 %v4935
  %7218 = vmatpush.msra.mxu0 %v4931
  %7219 = vmatpush.msra.mxu0 %v4927
  %7220 = vmatpush.msra.mxu0 %v4923
  %7221 = vmatpush.msra.mxu0 %v4919
  %7222 = vmatpush.msra.mxu0 %v4915
  %7223 = vmatpush.msra.mxu0 %v4911
  %7224 = vmatpush.msra.mxu0 %v4907
  %7225 = vmatpush.msra.mxu0 %v4903
  %7226 = vmatpush.msra.mxu0 %v4899
  %7227 = vmatpush.msra.mxu0 %v4895
  %7228 = vmatpush.msra.mxu0 %v4891
  %7229 = vmatpush.msra.mxu0 %v4887
  %7230 = vmatmul.f32.gmra.mxu0 %v52
  %v7231 = vpop.f32.mrf.mxu0
  %v7232 = vadd.f32 %v7212, %v7231
  %7233 = vdwg.mxu0
  %7234 = vmatpush.msra.mxu0 %v5011
  %7235 = vmatpush.msra.mxu0 %v5007
  %7236 = vmatpush.msra.mxu0 %v5003
  %7237 = vmatpush.msra.mxu0 %v4999
  %7238 = vmatpush.msra.mxu0 %v4995
  %7239 = vmatpush.msra.mxu0 %v4991
  %7240 = vmatpush.msra.mxu0 %v4987
  %7241 = vmatpush.msra.mxu0 %v4983
  %7242 = vmatpush.msra.mxu0 %v4979
  %7243 = vmatpush.msra.mxu0 %v4975
  %7244 = vmatpush.msra.mxu0 %v4971
  %7245 = vmatpush.msra.mxu0 %v4967
  %7246 = vmatpush.msra.mxu0 %v4963
  %7247 = vmatpush.msra.mxu0 %v4959
  %7248 = vmatpush.msra.mxu0 %v4955
  %7249 = vmatpush.msra.mxu0 %v4951
  %7250 = vmatmul.f32.gmra.mxu0 %v53
  %v7251 = vpop.f32.mrf.mxu0
  %v7252 = vadd.f32 %v7232, %v7251
  %7253 = vdwg.mxu0
  %7254 = vmatpush.msra.mxu0 %v5075
  %7255 = vmatpush.msra.mxu0 %v5071
  %7256 = vmatpush.msra.mxu0 %v5067
  %7257 = vmatpush.msra.mxu0 %v5063
  %7258 = vmatpush.msra.mxu0 %v5059
  %7259 = vmatpush.msra.mxu0 %v5055
  %7260 = vmatpush.msra.mxu0 %v5051
  %7261 = vmatpush.msra.mxu0 %v5047
  %7262 = vmatpush.msra.mxu0 %v5043
  %7263 = vmatpush.msra.mxu0 %v5039
  %7264 = vmatpush.msra.mxu0 %v5035
  %7265 = vmatpush.msra.mxu0 %v5031
  %7266 = vmatpush.msra.mxu0 %v5027
  %7267 = vmatpush.msra.mxu0 %v5023
  %7268 = vmatpush.msra.mxu0 %v5019
  %7269 = vmatpush.msra.mxu0 %v5015
  %7270 = vmatmul.f32.gmra.mxu0 %v54
  %v7271 = vpop.f32.mrf.mxu0
  %v7272 = vadd.f32 %v7252, %v7271
  %7273 = vdwg.mxu0
  %7274 = vmatpush.msra.mxu0 %v5139
  %7275 = vmatpush.msra.mxu0 %v5135
  %7276 = vmatpush.msra.mxu0 %v5131
  %7277 = vmatpush.msra.mxu0 %v5127
  %7278 = vmatpush.msra.mxu0 %v5123
  %7279 = vmatpush.msra.mxu0 %v5119
  %7280 = vmatpush.msra.mxu0 %v5115
  %7281 = vmatpush.msra.mxu0 %v5111
  %7282 = vmatpush.msra.mxu0 %v5107
  %7283 = vmatpush.msra.mxu0 %v5103
  %7284 = vmatpush.msra.mxu0 %v5099
  %7285 = vmatpush.msra.mxu0 %v5095
  %7286 = vmatpush.msra.mxu0 %v5091
  %7287 = vmatpush.msra.mxu0 %v5087
  %7288 = vmatpush.msra.mxu0 %v5083
  %7289 = vmatpush.msra.mxu0 %v5079
  %7290 = vmatmul.f32.gmra.mxu0 %v55
  %v7291 = vpop.f32.mrf.mxu0
  %v7292 = vadd.f32 %v7272, %v7291
  %7293 = vdwg.mxu0
  %7294 = vmatpush.msra.mxu0 %v5203
  %7295 = vmatpush.msra.mxu0 %v5199
  %7296 = vmatpush.msra.mxu0 %v5195
  %7297 = vmatpush.msra.mxu0 %v5191
  %7298 = vmatpush.msra.mxu0 %v5187
  %7299 = vmatpush.msra.mxu0 %v5183
  %7300 = vmatpush.msra.mxu0 %v5179
  %7301 = vmatpush.msra.mxu0 %v5175
  %7302 = vmatpush.msra.mxu0 %v5171
  %7303 = vmatpush.msra.mxu0 %v5167
  %7304 = vmatpush.msra.mxu0 %v5163
  %7305 = vmatpush.msra.mxu0 %v5159
  %7306 = vmatpush.msra.mxu0 %v5155
  %7307 = vmatpush.msra.mxu0 %v5151
  %7308 = vmatpush.msra.mxu0 %v5147
  %7309 = vmatpush.msra.mxu0 %v5143
  %7310 = vmatmul.f32.gmra.mxu0 %v56
  %v7311 = vpop.f32.mrf.mxu0
  %v7312 = vadd.f32 %v7292, %v7311
  %7313 = vdwg.mxu0
  %7314 = vmatpush.msra.mxu0 %v5267
  %7315 = vmatpush.msra.mxu0 %v5263
  %7316 = vmatpush.msra.mxu0 %v5259
  %7317 = vmatpush.msra.mxu0 %v5255
  %7318 = vmatpush.msra.mxu0 %v5251
  %7319 = vmatpush.msra.mxu0 %v5247
  %7320 = vmatpush.msra.mxu0 %v5243
  %7321 = vmatpush.msra.mxu0 %v5239
  %7322 = vmatpush.msra.mxu0 %v5235
  %7323 = vmatpush.msra.mxu0 %v5231
  %7324 = vmatpush.msra.mxu0 %v5227
  %7325 = vmatpush.msra.mxu0 %v5223
  %7326 = vmatpush.msra.mxu0 %v5219
  %7327 = vmatpush.msra.mxu0 %v5215
  %7328 = vmatpush.msra.mxu0 %v5211
  %7329 = vmatpush.msra.mxu0 %v5207
  %7330 = vmatmul.f32.gmra.mxu0 %v57
  %v7331 = vpop.f32.mrf.mxu0
  %v7332 = vadd.f32 %v7312, %v7331
  %7333 = vdwg.mxu0
  %7334 = vmatpush.msra.mxu0 %v5331
  %7335 = vmatpush.msra.mxu0 %v5327
  %7336 = vmatpush.msra.mxu0 %v5323
  %7337 = vmatpush.msra.mxu0 %v5319
  %7338 = vmatpush.msra.mxu0 %v5315
  %7339 = vmatpush.msra.mxu0 %v5311
  %7340 = vmatpush.msra.mxu0 %v5307
  %7341 = vmatpush.msra.mxu0 %v5303
  %7342 = vmatpush.msra.mxu0 %v5299
  %7343 = vmatpush.msra.mxu0 %v5295
  %7344 = vmatpush.msra.mxu0 %v5291
  %7345 = vmatpush.msra.mxu0 %v5287
  %7346 = vmatpush.msra.mxu0 %v5283
  %7347 = vmatpush.msra.mxu0 %v5279
  %7348 = vmatpush.msra.mxu0 %v5275
  %7349 = vmatpush.msra.mxu0 %v5271
  %7350 = vmatmul.f32.gmra.mxu0 %v58
  %v7351 = vpop.f32.mrf.mxu0
  %v7352 = vadd.f32 %v7332, %v7351
  %7353 = vdwg.mxu0
  %7354 = vmatpush.msra.mxu0 0.0
  %7355 = vmatpush.msra.mxu0 0.0
  %7356 = vmatpush.msra.mxu0 0.0
  %7357 = vmatpush.msra.mxu0 0.0
  %7358 = vmatpush.msra.mxu0 0.0
  %7359 = vmatpush.msra.mxu0 0.0
  %7360 = vmatpush.msra.mxu0 0.0
  %7361 = vmatpush.msra.mxu0 0.0
  %7362 = vmatpush.msra.mxu0 %v5363
  %7363 = vmatpush.msra.mxu0 %v5359
  %7364 = vmatpush.msra.mxu0 %v5355
  %7365 = vmatpush.msra.mxu0 %v5351
  %7366 = vmatpush.msra.mxu0 %v5347
  %7367 = vmatpush.msra.mxu0 %v5343
  %7368 = vmatpush.msra.mxu0 %v5339
  %7369 = vmatpush.msra.mxu0 %v5335
  %7370 = vmatmul.f32.gmra.mxu0 %v1640
  %v7371 = vpop.f32.mrf.mxu0
  %v7372 = vadd.f32 %v7352, %v7371
  %7373 = vdwg.mxu0
  %v7374 = vmax.f32 %v5872, 0.0
  %v7375 = vmax.f32 %v6372, 0.0
  %v7376 = vmax.f32 %v6872, 0.0
  %v7377 = vmax.f32 %v7372, 0.0
  %v7378 = vld [vmem:[%s7] sm:$0xff]
  %v7379 = vld [vmem:[%s7 + $0x8] sm:$0xff]
  %v7380 = vld [vmem:[%s7 + $0x10] sm:$0xff]
  %v7381 = vld [vmem:[%s7 + $0x18] sm:$0xff]
  %v7382 = vld [vmem:[%s7 + $0x20] sm:$0xff]
  %v7383 = vld [vmem:[%s7 + $0x28] sm:$0xff]
  %v7384 = vld [vmem:[%s7 + $0x30] sm:$0xff]
  %v7385 = vld [vmem:[%s7 + $0x38] sm:$0xff]
  %v7386 = vld [vmem:[%s7 + $0x40] sm:$0xff]
  %v7387 = vld [vmem:[%s7 + $0x48] sm:$0xff]
  %v7388 = vld [vmem:[%s7 + $0x50] sm:$0xff]
  %v7389 = vld [vmem:[%s7 + $0x58] sm:$0xff]
  %v7390 = vld [vmem:[%s7 + $0x60] sm:$0xff]
  %v7391 = vld [vmem:[%s7 + $0x68] sm:$0xff]
  %v7392 = vld [vmem:[%s7 + $0x70] sm:$0xff]
  %v7393 = vld [vmem:[%s7 + $0x78] sm:$0xff]
  %v7394 = vld [vmem:[%s7 + $0x80] sm:$0xff]
  %v7395 = vld [vmem:[%s7 + $0x88] sm:$0xff]
  %v7396 = vld [vmem:[%s7 + $0x90] sm:$0xff]
  %v7397 = vld [vmem:[%s7 + $0x98] sm:$0xff]
  %v7398 = vld [vmem:[%s7 + $0xa0] sm:$0xff]
  %v7399 = vld [vmem:[%s7 + $0xa8] sm:$0xff]
  %v7400 = vld [vmem:[%s7 + $0xb0] sm:$0xff]
  %v7401 = vld [vmem:[%s7 + $0xb8] sm:$0xff]
  %v7402 = vld [vmem:[%s7 + $0xc0] sm:$0xff]
  %v7403 = vld [vmem:[%s7 + $0xc8] sm:$0xff]
  %v7404 = vld [vmem:[%s7 + $0xd0] sm:$0xff]
  %v7405 = vld [vmem:[%s7 + $0xd8] sm:$0xff]
  %v7406 = vld [vmem:[%s7 + $0xe0] sm:$0xff]
  %v7407 = vld [vmem:[%s7 + $0xe8] sm:$0xff]
  %v7408 = vld [vmem:[%s7 + $0xf0] sm:$0xff]
  %v7409 = vld [vmem:[%s7 + $0xf8] sm:$0xff]
  %v7410 = vld [vmem:[%s7 + $0x100] sm:$0xff]
  %v7411 = vld [vmem:[%s7 + $0x108] sm:$0xff]
  %v7412 = vld [vmem:[%s7 + $0x110] sm:$0xff]
  %v7413 = vld [vmem:[%s7 + $0x118] sm:$0xff]
  %v7414 = vld [vmem:[%s7 + $0x120] sm:$0xff]
  %v7415 = vld [vmem:[%s7 + $0x128] sm:$0xff]
  %v7416 = vld [vmem:[%s7 + $0x130] sm:$0xff]
  %v7417 = vld [vmem:[%s7 + $0x138] sm:$0xff]
  %v7418 = vld [vmem:[%s7 + $0x140] sm:$0xff]
  %v7419 = vld [vmem:[%s7 + $0x148] sm:$0xff]
  %v7420 = vld [vmem:[%s7 + $0x150] sm:$0xff]
  %v7421 = vld [vmem:[%s7 + $0x158] sm:$0xff]
  %v7422 = vld [vmem:[%s7 + $0x160] sm:$0xff]
  %v7423 = vld [vmem:[%s7 + $0x168] sm:$0xff]
  %v7424 = vld [vmem:[%s7 + $0x170] sm:$0xff]
  %v7425 = vld [vmem:[%s7 + $0x178] sm:$0xff]
  %v7426 = vld [vmem:[%s7 + $0x180] sm:$0xff]
  %v7427 = vld [vmem:[%s7 + $0x188] sm:$0xff]
  %v7428 = vld [vmem:[%s7 + $0x190] sm:$0xff]
  %v7429 = vld [vmem:[%s7 + $0x198] sm:$0xff]
  %v7430 = vld [vmem:[%s7 + $0x1a0] sm:$0xff]
  %v7431 = vld [vmem:[%s7 + $0x1a8] sm:$0xff]
  %v7432 = vld [vmem:[%s7 + $0x1b0] sm:$0xff]
  %v7433 = vld [vmem:[%s7 + $0x1b8] sm:$0xff]
  %v7434 = vld [vmem:[%s7 + $0x1c0] sm:$0xff]
  %v7435 = vld [vmem:[%s7 + $0x1c8] sm:$0xff]
  %v7436 = vld [vmem:[%s7 + $0x1d0] sm:$0xff]
  %v7437 = vld [vmem:[%s7 + $0x1d8] sm:$0xff]
  %v7438 = vld [vmem:[%s7 + $0x1e0] sm:$0xff]
  %v7439 = vld [vmem:[%s7 + $0x1e8] sm:$0xff]
  %v7440 = vld [vmem:[%s7 + $0x1f0] sm:$0xff]
  %v7441 = vld [vmem:[%s7 + $0x1f8] sm:$0xff]
  %v7442 = vld [vmem:[%s8] sm:$0x1]
  %v7444 = vperm.slane %v7442, 0
  %7446 = vmatpush.msra.mxu0 %v7393
  %7447 = vmatpush.msra.mxu0 %v7392
  %7448 = vmatpush.msra.mxu0 %v7391
  %7449 = vmatpush.msra.mxu0 %v7390
  %7450 = vmatpush.msra.mxu0 %v7389
  %7451 = vmatpush.msra.mxu0 %v7388
  %7452 = vmatpush.msra.mxu0 %v7387
  %7453 = vmatpush.msra.mxu0 %v7386
  %7454 = vmatpush.msra.mxu0 %v7385
  %7455 = vmatpush.msra.mxu0 %v7384
  %7456 = vmatpush.msra.mxu0 %v7383
  %7457 = vmatpush.msra.mxu0 %v7382
  %7458 = vmatpush.msra.mxu0 %v7381
  %7459 = vmatpush.msra.mxu0 %v7380
  %7460 = vmatpush.msra.mxu0 %v7379
  %7461 = vmatpush.msra.mxu0 %v7378
  %7462 = vmatmul.f32.gmra.mxu0 %v7374
  %v7463 = vpop.f32.mrf.mxu0
  %v7464 = vadd.f32 %v7444, %v7463
  %7465 = vdwg.mxu0
  %7466 = vmatpush.msra.mxu0 %v7409
  %7467 = vmatpush.msra.mxu0 %v7408
  %7468 = vmatpush.msra.mxu0 %v7407
  %7469 = vmatpush.msra.mxu0 %v7406
  %7470 = vmatpush.msra.mxu0 %v7405
  %7471 = vmatpush.msra.mxu0 %v7404
  %7472 = vmatpush.msra.mxu0 %v7403
  %7473 = vmatpush.msra.mxu0 %v7402
  %7474 = vmatpush.msra.mxu0 %v7401
  %7475 = vmatpush.msra.mxu0 %v7400
  %7476 = vmatpush.msra.mxu0 %v7399
  %7477 = vmatpush.msra.mxu0 %v7398
  %7478 = vmatpush.msra.mxu0 %v7397
  %7479 = vmatpush.msra.mxu0 %v7396
  %7480 = vmatpush.msra.mxu0 %v7395
  %7481 = vmatpush.msra.mxu0 %v7394
  %7482 = vmatmul.f32.gmra.mxu0 %v7375
  %v7483 = vpop.f32.mrf.mxu0
  %v7484 = vadd.f32 %v7464, %v7483
  %7485 = vdwg.mxu0
  %7486 = vmatpush.msra.mxu0 %v7425
  %7487 = vmatpush.msra.mxu0 %v7424
  %7488 = vmatpush.msra.mxu0 %v7423
  %7489 = vmatpush.msra.mxu0 %v7422
  %7490 = vmatpush.msra.mxu0 %v7421
  %7491 = vmatpush.msra.mxu0 %v7420
  %7492 = vmatpush.msra.mxu0 %v7419
  %7493 = vmatpush.msra.mxu0 %v7418
  %7494 = vmatpush.msra.mxu0 %v7417
  %7495 = vmatpush.msra.mxu0 %v7416
  %7496 = vmatpush.msra.mxu0 %v7415
  %7497 = vmatpush.msra.mxu0 %v7414
  %7498 = vmatpush.msra.mxu0 %v7413
  %7499 = vmatpush.msra.mxu0 %v7412
  %7500 = vmatpush.msra.mxu0 %v7411
  %7501 = vmatpush.msra.mxu0 %v7410
  %7502 = vmatmul.f32.gmra.mxu0 %v7376
  %v7503 = vpop.f32.mrf.mxu0
  %v7504 = vadd.f32 %v7484, %v7503
  %7505 = vdwg.mxu0
  %7506 = vmatpush.msra.mxu0 %v7441
  %7507 = vmatpush.msra.mxu0 %v7440
  %7508 = vmatpush.msra.mxu0 %v7439
  %7509 = vmatpush.msra.mxu0 %v7438
  %7510 = vmatpush.msra.mxu0 %v7437
  %7511 = vmatpush.msra.mxu0 %v7436
  %7512 = vmatpush.msra.mxu0 %v7435
  %7513 = vmatpush.msra.mxu0 %v7434
  %7514 = vmatpush.msra.mxu0 %v7433
  %7515 = vmatpush.msra.mxu0 %v7432
  %7516 = vmatpush.msra.mxu0 %v7431
  %7517 = vmatpush.msra.mxu0 %v7430
  %7518 = vmatpush.msra.mxu0 %v7429
  %7519 = vmatpush.msra.mxu0 %v7428
  %7520 = vmatpush.msra.mxu0 %v7427
  %7521 = vmatpush.msra.mxu0 %v7426
  %7522 = vmatmul.f32.gmra.mxu0 %v7377
  %v7523 = vpop.f32.mrf.mxu0
  %v7524 = vadd.f32 %v7504, %v7523
  %7525 = vdwg.mxu0
  %7526 = vst.msk [vmem:[%s11] sm:$0xff] %vm3794, %v7524
  %v7527 = vsel %vm3794, %v7524, -inf
  %7528 = vmax.xlane.f32.xlu0 %v7527
  %v7529 = vpop.xlane.xlu0 %7528
  %v7530 = vsub.f32 %v7524, %v7529
  %v7531 = vmul.f32 %v7530, 1.442695
  %v7532 = vpow.pop %v7531
  %v7533 = vsel %vm3794, %v7532, 0.0
  %7534 = vadd.xlane.f32.xlu0 %v7533
  %v7535 = vpop.xlane.xlu0 %7534
  %v7536 = vlog2.pop %v7535
  %v7537 = vmul.f32 %v7536, 0.6931472
  %v7538 = vsub.f32 %v7530, %v7537
  %7539 = vst.msk [vmem:[%s10] sm:$0xff] %vm3794, %v7538
  // Predicated region
  $region38: #{conv_q_forward.7} parent=0 // pred_check
    _
  $region39: #{conv_q_forward.7} parent=0 // pred_check_branch
    %7541 = sbr.rel (0) target = $region41
  $region40: #{conv_q_forward.7} parent=0 // pred_region
    _
  $region41: #{conv_q_forward.7} parent=0 // pred_fallthru
    _
  // Predicated region
  $region42: #{conv_q_forward.7} parent=0 // pred_check
    _
  $region43: #{conv_q_forward.7} parent=0 // pred_check_branch
    %7543 = sbr.rel (0) target = $region45
  $region44: #{conv_q_forward.7} parent=0 // pred_region
    _
  $region45: #{conv_q_forward.7} parent=0 // pred_fallthru
    _
  // Predicated region
  $region46: #{conv_q_forward.7} parent=0 // pred_check
    _
  $region47: #{conv_q_forward.7} parent=0 // pred_check_branch
    %7545 = sbr.rel (0) target = $region49
  $region48: #{conv_q_forward.7} parent=0 // pred_region
    _
  $region49: #{conv_q_forward.7} parent=0 // pred_fallthru
    _
  // Predicated region
  $region50: #{conv_q_forward.7} parent=0 // pred_check
    _
  $region51: #{conv_q_forward.7} parent=0 // pred_check_branch
    %7547 = sbr.rel (0) target = $region53
  $region52: #{conv_q_forward.7} parent=0 // pred_region
    _
  $region53: #{conv_q_forward.7} parent=0 // pred_fallthru
    _
  // Predicated region
  $region54: #{conv_q_forward.7} parent=0 // pred_check
    _
  $region55: #{conv_q_forward.7} parent=0 // pred_check_branch
    %7549 = sbr.rel (0) target = $region57
  $region56: #{conv_q_forward.7} parent=0 // pred_region
    _
  $region57: #{conv_q_forward.7} parent=0 // pred_fallthru
    _
  // Predicated region
  $region58: #{conv_q_forward.7} parent=0 // pred_check
    _
  $region59: #{conv_q_forward.7} parent=0 // pred_check_branch
    %7551 = sbr.rel (0) target = $region61
  $region60: #{conv_q_forward.7} parent=0 // pred_region
    _
  $region61: #{conv_q_forward.7} parent=0 // pred_fallthru
    _

</llo_original>
